<compile_context>
chip_gen: v7x
topology: tpu7x:2x2x1
jax: 0.10.0
libtpu: 0.0.40
codegen_flags: <defaults>
</compile_context>

<pallas_src>
import jax
import jax.numpy as jnp
from jax import lax
from jax.experimental import pallas as pl
from jax.experimental.pallas import tpu as pltpu


def first_block_kernel(x_ref, w1_ref, b1_ref, w2_ref, b2_ref, o_ref, y1_scr):
    """Fused Conv3x3+ReLU -> Conv3x3+ReLU -> MaxPool2d(2,2) for one batch block.

    x_ref:  (Nb, H+2, W+2, Cin)      zero-padded NHWC input block
    w1_ref: (9*Cin, CP)              im2col conv1 weights, Cout zero-padded to CP (=128) lanes
    b1_ref: (1, CP)
    w2_ref: (9, CP, CP)              per-tap conv2 weights (in/out channels padded to CP)
    b2_ref: (1, CP)
    o_ref:  (Nb, H//2, W//2, CP)     pooled output block (lane-dense, padded channels)
    y1_scr: (Nb, H+2, W+2, CP) f32   zero-framed scratch holding the conv1 activation
    """
    Nb, Hp, Wp, Cin = x_ref.shape
    H, W = Hp - 2, Wp - 2
    _, Hh, Wh, CP = o_ref.shape

    # ---- conv1 + bias + ReLU: single im2col MXU matmul, K = 9*Cin ----
    x = x_ref[...]
    cols = [x[:, ky:ky + H, kx:kx + W, :] for ky in range(3) for kx in range(3)]
    patches = jnp.concatenate(cols, axis=-1).reshape(Nb * H * W, 9 * Cin)
    y1 = jnp.dot(patches, w1_ref[...], preferred_element_type=jnp.float32)
    y1 = jnp.maximum(y1 + b1_ref[...], 0.0).reshape(Nb, H, W, CP)

    # ---- stage conv1 activation in a zero-framed VMEM scratch ('same' padding for conv2) ----
    # Re-zeroed every step so each grid step is fully independent (safe under megacore parallel).
    y1_scr[...] = jnp.zeros_like(y1_scr)
    y1_scr[:, 1:H + 1, 1:W + 1, :] = y1

    # ---- conv2 + bias + ReLU, fused with the column half of MaxPool2d(2,2) ----
    # Even / odd output columns come from stride-2 windows of the scratch ref, so the column
    # reduction of the pool is a pure elementwise max (no strided value relayout, no extra
    # scratch round trip).  Each tap is a full-depth (M,128)x(128,128) MXU matmul -> no concat.
    M2 = Nb * H * Wh

    def conv2_columns(parity):
        acc = jnp.zeros((M2, CP), jnp.float32)
        for ky in range(3):
            for kx in range(3):
                v = y1_scr[:, pl.ds(ky, H), pl.ds(kx + parity, Wh, stride=2), :]
                acc = acc + jnp.dot(v.reshape(M2, CP), w2_ref[ky * 3 + kx],
                                    preferred_element_type=jnp.float32)
        return jnp.maximum(acc + b2_ref[...], 0.0)

    y2 = jnp.maximum(conv2_columns(0), conv2_columns(1))           # column-pooled, (M2, CP)

    # ---- row half of MaxPool2d(2,2): pairwise max over h (layout-trivial leading-dim split) ----
    y2 = y2.reshape(Nb, Hh, 2, Wh, CP)
    o_ref[...] = jnp.maximum(y2[:, :, 0], y2[:, :, 1]).astype(o_ref.dtype)


def _pick_batch_block(n):
    """Largest divisor of n that is <= 8 while keeping >= 2 grid steps when n >= 2
    (feeds both TensorCores on v7x and amortises per-step overhead for larger batches)."""
    cap = min(8, n if n < 2 else max(1, n // 2))
    return max(d for d in range(1, cap + 1) if n % d == 0)


def first_block_forward(x_nchw, params, block_n=None):
    """Equivalent of FirstBlock.forward: (N, Cin, H, W) -> (N, Cout, H//2, W//2)."""
    N, Cin, H, W = x_nchw.shape
    w1, b1, w2, b2 = params["w1"], params["b1"], params["w2"], params["b2"]
    Cout = w1.shape[-1]
    assert H % 2 == 0 and W % 2 == 0, "this MaxPool2d(2,2) kernel requires even H, W"
    assert W % 8 == 0, "W must be a multiple of 8 so the im2col flatten stays layout-trivial"
    Hh, Wh = H // 2, W // 2
    CP = ((Cout + 127) // 128) * 128            # lane-dense channel padding
    if block_n is None:
        block_n = _pick_batch_block(N)
    assert N % block_n == 0
    grid = (N // block_n,)

    # NCHW -> NHWC + 'same' zero padding (boundary glue, fused by XLA)
    xp = jnp.pad(jnp.transpose(x_nchw, (0, 2, 3, 1)), ((0, 0), (1, 1), (1, 1), (0, 0)))
    # conv1: HWIO (3,3,Ci,Co) -> im2col (9*Ci, CP); row index = (ky*3+kx)*Ci + ci
    w1f = jnp.pad(w1.reshape(9 * Cin, Cout), ((0, 0), (0, CP - Cout)))
    b1f = jnp.pad(b1.reshape(1, Cout), ((0, 0), (0, CP - Cout)))
    # conv2: HWIO (3,3,Co,Co) -> per-tap (9, CP, CP), both channel axes zero-padded
    w2f = jnp.pad(w2, ((0, 0), (0, 0), (0, CP - Cout), (0, CP - Cout))).reshape(9, CP, CP)
    b2f = jnp.pad(b2.reshape(1, Cout), ((0, 0), (0, CP - Cout)))

    out_nhwc = pl.pallas_call(
        first_block_kernel,
        out_shape=jax.ShapeDtypeStruct((N, Hh, Wh, CP), x_nchw.dtype),
        grid_spec=pltpu.PrefetchScalarGridSpec(
            num_scalar_prefetch=0,
            grid=grid,
            in_specs=[
                pl.BlockSpec((block_n, H + 2, W + 2, Cin), lambda n: (n, 0, 0, 0)),
                pl.BlockSpec((9 * Cin, CP), lambda n: (0, 0)),
                pl.BlockSpec((1, CP), lambda n: (0, 0)),
                pl.BlockSpec((9, CP, CP), lambda n: (0, 0, 0)),
                pl.BlockSpec((1, CP), lambda n: (0, 0)),
            ],
            out_specs=pl.BlockSpec((block_n, Hh, Wh, CP), lambda n: (n, 0, 0, 0)),
            scratch_shapes=[pltpu.VMEM((block_n, H + 2, W + 2, CP), jnp.float32)],
        ),
        compiler_params=pltpu.CompilerParams(dimension_semantics=("parallel",)),
    )(xp, w1f, b1f, w2f, b2f)

    # Drop lane padding and return NCHW to match the PyTorch module.
    # (If the downstream consumer accepts NHWC, return out_nhwc[..., :Cout] and save a HBM pass.)
    return jnp.transpose(out_nhwc[..., :Cout], (0, 3, 1, 2))


def _reference(x_nchw, w1_oihw, b1, w2_oihw, b2):
    dn = ("NCHW", "OIHW", "NCHW")
    y = lax.conv_general_dilated(x_nchw, w1_oihw, (1, 1), "SAME", dimension_numbers=dn)
    y = jnp.maximum(y + b1[None, :, None, None], 0.0)
    y = lax.conv_general_dilated(y, w2_oihw, (1, 1), "SAME", dimension_numbers=dn)
    y = jnp.maximum(y + b2[None, :, None, None], 0.0)
    return lax.reduce_window(y, -jnp.inf, lax.max, (1, 1, 2, 2), (1, 1, 2, 2), "VALID")


if __name__ == "__main__":
    # N=4 exercises both batch blocking (block_n=2) and >=2 parallel grid steps.
    N, Cin, Cout, H, W = 4, 4, 8, 16, 16

    key = jax.random.PRNGKey(0)
    kx, kw1, kb1, kw2, kb2 = jax.random.split(key, 5)
    x = jax.random.normal(kx, (N, Cin, H, W), jnp.float32)
    # Deterministic synthetic parameters (PyTorch Conv2d weight layout OIHW).
    w1_oihw = 0.1 * jax.random.normal(kw1, (Cout, Cin, 3, 3), jnp.float32)
    b1 = 0.1 * jax.random.normal(kb1, (Cout,), jnp.float32)
    w2_oihw = 0.1 * jax.random.normal(kw2, (Cout, Cout, 3, 3), jnp.float32)
    b2 = 0.1 * jax.random.normal(kb2, (Cout,), jnp.float32)

    params = {
        "w1": jnp.transpose(w1_oihw, (2, 3, 1, 0)),  # OIHW -> HWIO
        "b1": b1,
        "w2": jnp.transpose(w2_oihw, (2, 3, 1, 0)),
        "b2": b2,
    }

    out = jax.jit(first_block_forward)(x, params)
    out = jax.block_until_ready(out)

    ref = _reference(x, w1_oihw, b1, w2_oihw, b2)
    assert out.shape == (N, Cout, H // 2, W // 2), out.shape
    assert jnp.allclose(out, ref, atol=2e-4, rtol=2e-4), float(jnp.max(jnp.abs(out - ref)))
    print("KERNEL_OK")
</pallas_src>

<mosaic_0001>
module attributes {stable_mosaic.version = 11 : i64} {
  func.func @first_block_kernel(%arg0: i32, %arg1: memref<2x18x18x4xf32, #tpu.memory_space<vmem>>, %arg2: memref<36x128xf32, #tpu.memory_space<vmem>>, %arg3: memref<1x128xf32, #tpu.memory_space<vmem>>, %arg4: memref<9x128x128xf32, #tpu.memory_space<vmem>>, %arg5: memref<1x128xf32, #tpu.memory_space<vmem>>, %arg6: memref<2x8x8x128xf32, #tpu.memory_space<vmem>>, %arg7: memref<2x18x18x128xf32, #tpu.memory_space<vmem>>) attributes {dimension_semantics = [#tpu.dimension_semantics<parallel>], iteration_bounds = array<i64: 2>, scalar_prefetch = 0 : i64, scratch_operands = 1 : i64, tpu.core_type = #tpu.core_type<tc>, window_params = [{transform_indices = @transform_0, window_bounds = array<i64: 2, 18, 18, 4>}, {pipeline_mode = #tpu.pipeline_mode<synchronous>, transform_indices = @transform_1, window_bounds = array<i64: 36, 128>}, {pipeline_mode = #tpu.pipeline_mode<synchronous>, transform_indices = @transform_2, window_bounds = array<i64: 1, 128>}, {pipeline_mode = #tpu.pipeline_mode<synchronous>, transform_indices = @transform_3, window_bounds = array<i64: 9, 128, 128>}, {pipeline_mode = #tpu.pipeline_mode<synchronous>, transform_indices = @transform_4, window_bounds = array<i64: 1, 128>}, {transform_indices = @transform_5, window_bounds = array<i64: 2, 8, 8, 128>}]} {
    %c0 = arith.constant 0 : index
    %c0_0 = arith.constant 0 : index
    %c0_1 = arith.constant 0 : index
    %c0_2 = arith.constant 0 : index
    %0 = vector.load %arg1[%c0, %c0_0, %c0_1, %c0_2] : memref<2x18x18x4xf32, #tpu.memory_space<vmem>>, vector<2x18x18x4xf32>
    %1 = vector.extract_strided_slice %0 {offsets = [0, 0, 0, 0], sizes = [2, 16, 16, 4], strides = [1, 1, 1, 1]} : vector<2x18x18x4xf32> to vector<2x16x16x4xf32>
    %2 = vector.extract_strided_slice %0 {offsets = [0, 0, 1, 0], sizes = [2, 16, 16, 4], strides = [1, 1, 1, 1]} : vector<2x18x18x4xf32> to vector<2x16x16x4xf32>
    %3 = vector.extract_strided_slice %0 {offsets = [0, 0, 2, 0], sizes = [2, 16, 16, 4], strides = [1, 1, 1, 1]} : vector<2x18x18x4xf32> to vector<2x16x16x4xf32>
    %4 = vector.extract_strided_slice %0 {offsets = [0, 1, 0, 0], sizes = [2, 16, 16, 4], strides = [1, 1, 1, 1]} : vector<2x18x18x4xf32> to vector<2x16x16x4xf32>
    %5 = vector.extract_strided_slice %0 {offsets = [0, 1, 1, 0], sizes = [2, 16, 16, 4], strides = [1, 1, 1, 1]} : vector<2x18x18x4xf32> to vector<2x16x16x4xf32>
    %6 = vector.extract_strided_slice %0 {offsets = [0, 1, 2, 0], sizes = [2, 16, 16, 4], strides = [1, 1, 1, 1]} : vector<2x18x18x4xf32> to vector<2x16x16x4xf32>
    %7 = vector.extract_strided_slice %0 {offsets = [0, 2, 0, 0], sizes = [2, 16, 16, 4], strides = [1, 1, 1, 1]} : vector<2x18x18x4xf32> to vector<2x16x16x4xf32>
    %8 = vector.extract_strided_slice %0 {offsets = [0, 2, 1, 0], sizes = [2, 16, 16, 4], strides = [1, 1, 1, 1]} : vector<2x18x18x4xf32> to vector<2x16x16x4xf32>
    %9 = vector.extract_strided_slice %0 {offsets = [0, 2, 2, 0], sizes = [2, 16, 16, 4], strides = [1, 1, 1, 1]} : vector<2x18x18x4xf32> to vector<2x16x16x4xf32>
    %10 = tpu.concatenate %1, %2, %3, %4, %5, %6, %7, %8, %9 in 3 : vector<2x16x16x4xf32>, vector<2x16x16x4xf32>, vector<2x16x16x4xf32>, vector<2x16x16x4xf32>, vector<2x16x16x4xf32>, vector<2x16x16x4xf32>, vector<2x16x16x4xf32>, vector<2x16x16x4xf32>, vector<2x16x16x4xf32> -> vector<2x16x16x36xf32>
    %11 = vector.shape_cast %10 : vector<2x16x16x36xf32> to vector<512x36xf32>
    %c0_3 = arith.constant 0 : index
    %c0_4 = arith.constant 0 : index
    %12 = vector.load %arg2[%c0_3, %c0_4] : memref<36x128xf32, #tpu.memory_space<vmem>>, vector<36x128xf32>
    %cst = arith.constant dense<0.000000e+00> : vector<512x128xf32>
    %13 = tpu.matmul %11, %12, %cst {dimension_numbers = #tpu.dot_dimension_numbers<[1], [0], [0], [1], [0, 0, 1, 1], [], []>} : vector<512x36xf32>, vector<36x128xf32>, vector<512x128xf32> -> vector<512x128xf32>
    %c0_5 = arith.constant 0 : index
    %c0_6 = arith.constant 0 : index
    %14 = vector.load %arg3[%c0_5, %c0_6] : memref<1x128xf32, #tpu.memory_space<vmem>>, vector<1x128xf32>
    %15 = vector.broadcast %14 : vector<1x128xf32> to vector<512x128xf32>
    %16 = arith.addf %13, %15 : vector<512x128xf32>
    %cst_7 = arith.constant 0.000000e+00 : f32
    %17 = vector.broadcast %cst_7 : f32 to vector<512x128xf32>
    %18 = arith.maximumf %16, %17 : vector<512x128xf32>
    %19 = vector.shape_cast %18 : vector<512x128xf32> to vector<2x16x16x128xf32>
    %cst_8 = arith.constant 0.000000e+00 : f32
    %20 = vector.broadcast %cst_8 : f32 to vector<2x18x18x128xf32>
    %c0_9 = arith.constant 0 : index
    %c0_10 = arith.constant 0 : index
    %c0_11 = arith.constant 0 : index
    %c0_12 = arith.constant 0 : index
    %21 = vector.load %arg7[%c0_9, %c0_10, %c0_11, %c0_12] : memref<2x18x18x128xf32, #tpu.memory_space<vmem>>, vector<2x18x18x128xf32>
    tpu.vector_store %arg7[%c0_9, %c0_10, %c0_11, %c0_12], %20 {strides = array<i32>} : memref<2x18x18x128xf32, #tpu.memory_space<vmem>>, vector<2x18x18x128xf32>,
    %c0_13 = arith.constant 0 : index
    %c1 = arith.constant 1 : index
    %c1_14 = arith.constant 1 : index
    %c0_15 = arith.constant 0 : index
    %22 = vector.load %arg7[%c0_13, %c1, %c1_14, %c0_15] : memref<2x18x18x128xf32, #tpu.memory_space<vmem>>, vector<2x16x16x128xf32>
    tpu.vector_store %arg7[%c0_13, %c1, %c1_14, %c0_15], %19 {strides = array<i32>} : memref<2x18x18x128xf32, #tpu.memory_space<vmem>>, vector<2x16x16x128xf32>,
    %cst_16 = arith.constant 0.000000e+00 : f32
    %23 = vector.broadcast %cst_16 : f32 to vector<256x128xf32>
    %c0_17 = arith.constant 0 : index
    %c0_18 = arith.constant 0 : index
    %c0_19 = arith.constant 0 : index
    %c0_20 = arith.constant 0 : index
    %24 = tpu.strided_load %arg7[%c0_17, %c0_18, %c0_19, %c0_20] {strides = array<i32: 1, 1, 2, 1>} : memref<2x18x18x128xf32, #tpu.memory_space<vmem>>, vector<2x16x8x128xf32>
    %25 = vector.shape_cast %24 : vector<2x16x8x128xf32> to vector<256x128xf32>
    %c0_21 = arith.constant 0 : index
    %c0_22 = arith.constant 0 : index
    %c0_23 = arith.constant 0 : index
    %26 = vector.load %arg4[%c0_21, %c0_22, %c0_23] : memref<9x128x128xf32, #tpu.memory_space<vmem>>, vector<1x128x128xf32>
    %27 = vector.shape_cast %26 : vector<1x128x128xf32> to vector<128x128xf32>
    %cst_24 = arith.constant dense<0.000000e+00> : vector<256x128xf32>
    %28 = tpu.matmul %25, %27, %cst_24 {dimension_numbers = #tpu.dot_dimension_numbers<[1], [0], [0], [1], [0, 0, 1, 1], [], []>} : vector<256x128xf32>, vector<128x128xf32>, vector<256x128xf32> -> vector<256x128xf32>
    %29 = arith.addf %23, %28 : vector<256x128xf32>
    %c0_25 = arith.constant 0 : index
    %c0_26 = arith.constant 0 : index
    %c1_27 = arith.constant 1 : index
    %c0_28 = arith.constant 0 : index
    %30 = tpu.strided_load %arg7[%c0_25, %c0_26, %c1_27, %c0_28] {strides = array<i32: 1, 1, 2, 1>} : memref<2x18x18x128xf32, #tpu.memory_space<vmem>>, vector<2x16x8x128xf32>
    %31 = vector.shape_cast %30 : vector<2x16x8x128xf32> to vector<256x128xf32>
    %c1_29 = arith.constant 1 : index
    %c0_30 = arith.constant 0 : index
    %c0_31 = arith.constant 0 : index
    %32 = vector.load %arg4[%c1_29, %c0_30, %c0_31] : memref<9x128x128xf32, #tpu.memory_space<vmem>>, vector<1x128x128xf32>
    %33 = vector.shape_cast %32 : vector<1x128x128xf32> to vector<128x128xf32>
    %cst_32 = arith.constant dense<0.000000e+00> : vector<256x128xf32>
    %34 = tpu.matmul %31, %33, %cst_32 {dimension_numbers = #tpu.dot_dimension_numbers<[1], [0], [0], [1], [0, 0, 1, 1], [], []>} : vector<256x128xf32>, vector<128x128xf32>, vector<256x128xf32> -> vector<256x128xf32>
    %35 = arith.addf %29, %34 : vector<256x128xf32>
    %c0_33 = arith.constant 0 : index
    %c0_34 = arith.constant 0 : index
    %c2 = arith.constant 2 : index
    %c0_35 = arith.constant 0 : index
    %36 = tpu.strided_load %arg7[%c0_33, %c0_34, %c2, %c0_35] {strides = array<i32: 1, 1, 2, 1>} : memref<2x18x18x128xf32, #tpu.memory_space<vmem>>, vector<2x16x8x128xf32>
    %37 = vector.shape_cast %36 : vector<2x16x8x128xf32> to vector<256x128xf32>
    %c2_36 = arith.constant 2 : index
    %c0_37 = arith.constant 0 : index
    %c0_38 = arith.constant 0 : index
    %38 = vector.load %arg4[%c2_36, %c0_37, %c0_38] : memref<9x128x128xf32, #tpu.memory_space<vmem>>, vector<1x128x128xf32>
    %39 = vector.shape_cast %38 : vector<1x128x128xf32> to vector<128x128xf32>
    %cst_39 = arith.constant dense<0.000000e+00> : vector<256x128xf32>
    %40 = tpu.matmul %37, %39, %cst_39 {dimension_numbers = #tpu.dot_dimension_numbers<[1], [0], [0], [1], [0, 0, 1, 1], [], []>} : vector<256x128xf32>, vector<128x128xf32>, vector<256x128xf32> -> vector<256x128xf32>
    %41 = arith.addf %35, %40 : vector<256x128xf32>
    %c0_40 = arith.constant 0 : index
    %c1_41 = arith.constant 1 : index
    %c0_42 = arith.constant 0 : index
    %c0_43 = arith.constant 0 : index
    %42 = tpu.strided_load %arg7[%c0_40, %c1_41, %c0_42, %c0_43] {strides = array<i32: 1, 1, 2, 1>} : memref<2x18x18x128xf32, #tpu.memory_space<vmem>>, vector<2x16x8x128xf32>
    %43 = vector.shape_cast %42 : vector<2x16x8x128xf32> to vector<256x128xf32>
    %c3 = arith.constant 3 : index
    %c0_44 = arith.constant 0 : index
    %c0_45 = arith.constant 0 : index
    %44 = vector.load %arg4[%c3, %c0_44, %c0_45] : memref<9x128x128xf32, #tpu.memory_space<vmem>>, vector<1x128x128xf32>
    %45 = vector.shape_cast %44 : vector<1x128x128xf32> to vector<128x128xf32>
    %cst_46 = arith.constant dense<0.000000e+00> : vector<256x128xf32>
    %46 = tpu.matmul %43, %45, %cst_46 {dimension_numbers = #tpu.dot_dimension_numbers<[1], [0], [0], [1], [0, 0, 1, 1], [], []>} : vector<256x128xf32>, vector<128x128xf32>, vector<256x128xf32> -> vector<256x128xf32>
    %47 = arith.addf %41, %46 : vector<256x128xf32>
    %c0_47 = arith.constant 0 : index
    %c1_48 = arith.constant 1 : index
    %c1_49 = arith.constant 1 : index
    %c0_50 = arith.constant 0 : index
    %48 = tpu.strided_load %arg7[%c0_47, %c1_48, %c1_49, %c0_50] {strides = array<i32: 1, 1, 2, 1>} : memref<2x18x18x128xf32, #tpu.memory_space<vmem>>, vector<2x16x8x128xf32>
    %49 = vector.shape_cast %48 : vector<2x16x8x128xf32> to vector<256x128xf32>
    %c4 = arith.constant 4 : index
    %c0_51 = arith.constant 0 : index
    %c0_52 = arith.constant 0 : index
    %50 = vector.load %arg4[%c4, %c0_51, %c0_52] : memref<9x128x128xf32, #tpu.memory_space<vmem>>, vector<1x128x128xf32>
    %51 = vector.shape_cast %50 : vector<1x128x128xf32> to vector<128x128xf32>
    %cst_53 = arith.constant dense<0.000000e+00> : vector<256x128xf32>
    %52 = tpu.matmul %49, %51, %cst_53 {dimension_numbers = #tpu.dot_dimension_numbers<[1], [0], [0], [1], [0, 0, 1, 1], [], []>} : vector<256x128xf32>, vector<128x128xf32>, vector<256x128xf32> -> vector<256x128xf32>
    %53 = arith.addf %47, %52 : vector<256x128xf32>
    %c0_54 = arith.constant 0 : index
    %c1_55 = arith.constant 1 : index
    %c2_56 = arith.constant 2 : index
    %c0_57 = arith.constant 0 : index
    %54 = tpu.strided_load %arg7[%c0_54, %c1_55, %c2_56, %c0_57] {strides = array<i32: 1, 1, 2, 1>} : memref<2x18x18x128xf32, #tpu.memory_space<vmem>>, vector<2x16x8x128xf32>
    %55 = vector.shape_cast %54 : vector<2x16x8x128xf32> to vector<256x128xf32>
    %c5 = arith.constant 5 : index
    %c0_58 = arith.constant 0 : index
    %c0_59 = arith.constant 0 : index
    %56 = vector.load %arg4[%c5, %c0_58, %c0_59] : memref<9x128x128xf32, #tpu.memory_space<vmem>>, vector<1x128x128xf32>
    %57 = vector.shape_cast %56 : vector<1x128x128xf32> to vector<128x128xf32>
    %cst_60 = arith.constant dense<0.000000e+00> : vector<256x128xf32>
    %58 = tpu.matmul %55, %57, %cst_60 {dimension_numbers = #tpu.dot_dimension_numbers<[1], [0], [0], [1], [0, 0, 1, 1], [], []>} : vector<256x128xf32>, vector<128x128xf32>, vector<256x128xf32> -> vector<256x128xf32>
    %59 = arith.addf %53, %58 : vector<256x128xf32>
    %c0_61 = arith.constant 0 : index
    %c2_62 = arith.constant 2 : index
    %c0_63 = arith.constant 0 : index
    %c0_64 = arith.constant 0 : index
    %60 = tpu.strided_load %arg7[%c0_61, %c2_62, %c0_63, %c0_64] {strides = array<i32: 1, 1, 2, 1>} : memref<2x18x18x128xf32, #tpu.memory_space<vmem>>, vector<2x16x8x128xf32>
    %61 = vector.shape_cast %60 : vector<2x16x8x128xf32> to vector<256x128xf32>
    %c6 = arith.constant 6 : index
    %c0_65 = arith.constant 0 : index
    %c0_66 = arith.constant 0 : index
    %62 = vector.load %arg4[%c6, %c0_65, %c0_66] : memref<9x128x128xf32, #tpu.memory_space<vmem>>, vector<1x128x128xf32>
    %63 = vector.shape_cast %62 : vector<1x128x128xf32> to vector<128x128xf32>
    %cst_67 = arith.constant dense<0.000000e+00> : vector<256x128xf32>
    %64 = tpu.matmul %61, %63, %cst_67 {dimension_numbers = #tpu.dot_dimension_numbers<[1], [0], [0], [1], [0, 0, 1, 1], [], []>} : vector<256x128xf32>, vector<128x128xf32>, vector<256x128xf32> -> vector<256x128xf32>
    %65 = arith.addf %59, %64 : vector<256x128xf32>
    %c0_68 = arith.constant 0 : index
    %c2_69 = arith.constant 2 : index
    %c1_70 = arith.constant 1 : index
    %c0_71 = arith.constant 0 : index
    %66 = tpu.strided_load %arg7[%c0_68, %c2_69, %c1_70, %c0_71] {strides = array<i32: 1, 1, 2, 1>} : memref<2x18x18x128xf32, #tpu.memory_space<vmem>>, vector<2x16x8x128xf32>
    %67 = vector.shape_cast %66 : vector<2x16x8x128xf32> to vector<256x128xf32>
    %c7 = arith.constant 7 : index
    %c0_72 = arith.constant 0 : index
    %c0_73 = arith.constant 0 : index
    %68 = vector.load %arg4[%c7, %c0_72, %c0_73] : memref<9x128x128xf32, #tpu.memory_space<vmem>>, vector<1x128x128xf32>
    %69 = vector.shape_cast %68 : vector<1x128x128xf32> to vector<128x128xf32>
    %cst_74 = arith.constant dense<0.000000e+00> : vector<256x128xf32>
    %70 = tpu.matmul %67, %69, %cst_74 {dimension_numbers = #tpu.dot_dimension_numbers<[1], [0], [0], [1], [0, 0, 1, 1], [], []>} : vector<256x128xf32>, vector<128x128xf32>, vector<256x128xf32> -> vector<256x128xf32>
    %71 = arith.addf %65, %70 : vector<256x128xf32>
    %c0_75 = arith.constant 0 : index
    %c2_76 = arith.constant 2 : index
    %c2_77 = arith.constant 2 : index
    %c0_78 = arith.constant 0 : index
    %72 = tpu.strided_load %arg7[%c0_75, %c2_76, %c2_77, %c0_78] {strides = array<i32: 1, 1, 2, 1>} : memref<2x18x18x128xf32, #tpu.memory_space<vmem>>, vector<2x16x8x128xf32>
    %73 = vector.shape_cast %72 : vector<2x16x8x128xf32> to vector<256x128xf32>
    %c8 = arith.constant 8 : index
    %c0_79 = arith.constant 0 : index
    %c0_80 = arith.constant 0 : index
    %74 = vector.load %arg4[%c8, %c0_79, %c0_80] : memref<9x128x128xf32, #tpu.memory_space<vmem>>, vector<1x128x128xf32>
    %75 = vector.shape_cast %74 : vector<1x128x128xf32> to vector<128x128xf32>
    %cst_81 = arith.constant dense<0.000000e+00> : vector<256x128xf32>
    %76 = tpu.matmul %73, %75, %cst_81 {dimension_numbers = #tpu.dot_dimension_numbers<[1], [0], [0], [1], [0, 0, 1, 1], [], []>} : vector<256x128xf32>, vector<128x128xf32>, vector<256x128xf32> -> vector<256x128xf32>
    %77 = arith.addf %71, %76 : vector<256x128xf32>
    %c0_82 = arith.constant 0 : index
    %c0_83 = arith.constant 0 : index
    %78 = vector.load %arg5[%c0_82, %c0_83] : memref<1x128xf32, #tpu.memory_space<vmem>>, vector<1x128xf32>
    %79 = vector.broadcast %78 : vector<1x128xf32> to vector<256x128xf32>
    %80 = arith.addf %77, %79 : vector<256x128xf32>
    %cst_84 = arith.constant 0.000000e+00 : f32
    %81 = vector.broadcast %cst_84 : f32 to vector<256x128xf32>
    %82 = arith.maximumf %80, %81 : vector<256x128xf32>
    %cst_85 = arith.constant 0.000000e+00 : f32
    %83 = vector.broadcast %cst_85 : f32 to vector<256x128xf32>
    %c0_86 = arith.constant 0 : index
    %c0_87 = arith.constant 0 : index
    %c1_88 = arith.constant 1 : index
    %c0_89 = arith.constant 0 : index
    %84 = tpu.strided_load %arg7[%c0_86, %c0_87, %c1_88, %c0_89] {strides = array<i32: 1, 1, 2, 1>} : memref<2x18x18x128xf32, #tpu.memory_space<vmem>>, vector<2x16x8x128xf32>
    %85 = vector.shape_cast %84 : vector<2x16x8x128xf32> to vector<256x128xf32>
    %c0_90 = arith.constant 0 : index
    %c0_91 = arith.constant 0 : index
    %c0_92 = arith.constant 0 : index
    %86 = vector.load %arg4[%c0_90, %c0_91, %c0_92] : memref<9x128x128xf32, #tpu.memory_space<vmem>>, vector<1x128x128xf32>
    %87 = vector.shape_cast %86 : vector<1x128x128xf32> to vector<128x128xf32>
    %cst_93 = arith.constant dense<0.000000e+00> : vector<256x128xf32>
    %88 = tpu.matmul %85, %87, %cst_93 {dimension_numbers = #tpu.dot_dimension_numbers<[1], [0], [0], [1], [0, 0, 1, 1], [], []>} : vector<256x128xf32>, vector<128x128xf32>, vector<256x128xf32> -> vector<256x128xf32>
    %89 = arith.addf %83, %88 : vector<256x128xf32>
    %c0_94 = arith.constant 0 : index
    %c0_95 = arith.constant 0 : index
    %c2_96 = arith.constant 2 : index
    %c0_97 = arith.constant 0 : index
    %90 = tpu.strided_load %arg7[%c0_94, %c0_95, %c2_96, %c0_97] {strides = array<i32: 1, 1, 2, 1>} : memref<2x18x18x128xf32, #tpu.memory_space<vmem>>, vector<2x16x8x128xf32>
    %91 = vector.shape_cast %90 : vector<2x16x8x128xf32> to vector<256x128xf32>
    %c1_98 = arith.constant 1 : index
    %c0_99 = arith.constant 0 : index
    %c0_100 = arith.constant 0 : index
    %92 = vector.load %arg4[%c1_98, %c0_99, %c0_100] : memref<9x128x128xf32, #tpu.memory_space<vmem>>, vector<1x128x128xf32>
    %93 = vector.shape_cast %92 : vector<1x128x128xf32> to vector<128x128xf32>
    %cst_101 = arith.constant dense<0.000000e+00> : vector<256x128xf32>
    %94 = tpu.matmul %91, %93, %cst_101 {dimension_numbers = #tpu.dot_dimension_numbers<[1], [0], [0], [1], [0, 0, 1, 1], [], []>} : vector<256x128xf32>, vector<128x128xf32>, vector<256x128xf32> -> vector<256x128xf32>
    %95 = arith.addf %89, %94 : vector<256x128xf32>
    %c0_102 = arith.constant 0 : index
    %c0_103 = arith.constant 0 : index
    %c3_104 = arith.constant 3 : index
    %c0_105 = arith.constant 0 : index
    %96 = tpu.strided_load %arg7[%c0_102, %c0_103, %c3_104, %c0_105] {strides = array<i32: 1, 1, 2, 1>} : memref<2x18x18x128xf32, #tpu.memory_space<vmem>>, vector<2x16x8x128xf32>
    %97 = vector.shape_cast %96 : vector<2x16x8x128xf32> to vector<256x128xf32>
    %c2_106 = arith.constant 2 : index
    %c0_107 = arith.constant 0 : index
    %c0_108 = arith.constant 0 : index
    %98 = vector.load %arg4[%c2_106, %c0_107, %c0_108] : memref<9x128x128xf32, #tpu.memory_space<vmem>>, vector<1x128x128xf32>
    %99 = vector.shape_cast %98 : vector<1x128x128xf32> to vector<128x128xf32>
    %cst_109 = arith.constant dense<0.000000e+00> : vector<256x128xf32>
    %100 = tpu.matmul %97, %99, %cst_109 {dimension_numbers = #tpu.dot_dimension_numbers<[1], [0], [0], [1], [0, 0, 1, 1], [], []>} : vector<256x128xf32>, vector<128x128xf32>, vector<256x128xf32> -> vector<256x128xf32>
    %101 = arith.addf %95, %100 : vector<256x128xf32>
    %c0_110 = arith.constant 0 : index
    %c1_111 = arith.constant 1 : index
    %c1_112 = arith.constant 1 : index
    %c0_113 = arith.constant 0 : index
    %102 = tpu.strided_load %arg7[%c0_110, %c1_111, %c1_112, %c0_113] {strides = array<i32: 1, 1, 2, 1>} : memref<2x18x18x128xf32, #tpu.memory_space<vmem>>, vector<2x16x8x128xf32>
    %103 = vector.shape_cast %102 : vector<2x16x8x128xf32> to vector<256x128xf32>
    %c3_114 = arith.constant 3 : index
    %c0_115 = arith.constant 0 : index
    %c0_116 = arith.constant 0 : index
    %104 = vector.load %arg4[%c3_114, %c0_115, %c0_116] : memref<9x128x128xf32, #tpu.memory_space<vmem>>, vector<1x128x128xf32>
    %105 = vector.shape_cast %104 : vector<1x128x128xf32> to vector<128x128xf32>
    %cst_117 = arith.constant dense<0.000000e+00> : vector<256x128xf32>
    %106 = tpu.matmul %103, %105, %cst_117 {dimension_numbers = #tpu.dot_dimension_numbers<[1], [0], [0], [1], [0, 0, 1, 1], [], []>} : vector<256x128xf32>, vector<128x128xf32>, vector<256x128xf32> -> vector<256x128xf32>
    %107 = arith.addf %101, %106 : vector<256x128xf32>
    %c0_118 = arith.constant 0 : index
    %c1_119 = arith.constant 1 : index
    %c2_120 = arith.constant 2 : index
    %c0_121 = arith.constant 0 : index
    %108 = tpu.strided_load %arg7[%c0_118, %c1_119, %c2_120, %c0_121] {strides = array<i32: 1, 1, 2, 1>} : memref<2x18x18x128xf32, #tpu.memory_space<vmem>>, vector<2x16x8x128xf32>
    %109 = vector.shape_cast %108 : vector<2x16x8x128xf32> to vector<256x128xf32>
    %c4_122 = arith.constant 4 : index
    %c0_123 = arith.constant 0 : index
    %c0_124 = arith.constant 0 : index
    %110 = vector.load %arg4[%c4_122, %c0_123, %c0_124] : memref<9x128x128xf32, #tpu.memory_space<vmem>>, vector<1x128x128xf32>
    %111 = vector.shape_cast %110 : vector<1x128x128xf32> to vector<128x128xf32>
    %cst_125 = arith.constant dense<0.000000e+00> : vector<256x128xf32>
    %112 = tpu.matmul %109, %111, %cst_125 {dimension_numbers = #tpu.dot_dimension_numbers<[1], [0], [0], [1], [0, 0, 1, 1], [], []>} : vector<256x128xf32>, vector<128x128xf32>, vector<256x128xf32> -> vector<256x128xf32>
    %113 = arith.addf %107, %112 : vector<256x128xf32>
    %c0_126 = arith.constant 0 : index
    %c1_127 = arith.constant 1 : index
    %c3_128 = arith.constant 3 : index
    %c0_129 = arith.constant 0 : index
    %114 = tpu.strided_load %arg7[%c0_126, %c1_127, %c3_128, %c0_129] {strides = array<i32: 1, 1, 2, 1>} : memref<2x18x18x128xf32, #tpu.memory_space<vmem>>, vector<2x16x8x128xf32>
    %115 = vector.shape_cast %114 : vector<2x16x8x128xf32> to vector<256x128xf32>
    %c5_130 = arith.constant 5 : index
    %c0_131 = arith.constant 0 : index
    %c0_132 = arith.constant 0 : index
    %116 = vector.load %arg4[%c5_130, %c0_131, %c0_132] : memref<9x128x128xf32, #tpu.memory_space<vmem>>, vector<1x128x128xf32>
    %117 = vector.shape_cast %116 : vector<1x128x128xf32> to vector<128x128xf32>
    %cst_133 = arith.constant dense<0.000000e+00> : vector<256x128xf32>
    %118 = tpu.matmul %115, %117, %cst_133 {dimension_numbers = #tpu.dot_dimension_numbers<[1], [0], [0], [1], [0, 0, 1, 1], [], []>} : vector<256x128xf32>, vector<128x128xf32>, vector<256x128xf32> -> vector<256x128xf32>
    %119 = arith.addf %113, %118 : vector<256x128xf32>
    %c0_134 = arith.constant 0 : index
    %c2_135 = arith.constant 2 : index
    %c1_136 = arith.constant 1 : index
    %c0_137 = arith.constant 0 : index
    %120 = tpu.strided_load %arg7[%c0_134, %c2_135, %c1_136, %c0_137] {strides = array<i32: 1, 1, 2, 1>} : memref<2x18x18x128xf32, #tpu.memory_space<vmem>>, vector<2x16x8x128xf32>
    %121 = vector.shape_cast %120 : vector<2x16x8x128xf32> to vector<256x128xf32>
    %c6_138 = arith.constant 6 : index
    %c0_139 = arith.constant 0 : index
    %c0_140 = arith.constant 0 : index
    %122 = vector.load %arg4[%c6_138, %c0_139, %c0_140] : memref<9x128x128xf32, #tpu.memory_space<vmem>>, vector<1x128x128xf32>
    %123 = vector.shape_cast %122 : vector<1x128x128xf32> to vector<128x128xf32>
    %cst_141 = arith.constant dense<0.000000e+00> : vector<256x128xf32>
    %124 = tpu.matmul %121, %123, %cst_141 {dimension_numbers = #tpu.dot_dimension_numbers<[1], [0], [0], [1], [0, 0, 1, 1], [], []>} : vector<256x128xf32>, vector<128x128xf32>, vector<256x128xf32> -> vector<256x128xf32>
    %125 = arith.addf %119, %124 : vector<256x128xf32>
    %c0_142 = arith.constant 0 : index
    %c2_143 = arith.constant 2 : index
    %c2_144 = arith.constant 2 : index
    %c0_145 = arith.constant 0 : index
    %126 = tpu.strided_load %arg7[%c0_142, %c2_143, %c2_144, %c0_145] {strides = array<i32: 1, 1, 2, 1>} : memref<2x18x18x128xf32, #tpu.memory_space<vmem>>, vector<2x16x8x128xf32>
    %127 = vector.shape_cast %126 : vector<2x16x8x128xf32> to vector<256x128xf32>
    %c7_146 = arith.constant 7 : index
    %c0_147 = arith.constant 0 : index
    %c0_148 = arith.constant 0 : index
    %128 = vector.load %arg4[%c7_146, %c0_147, %c0_148] : memref<9x128x128xf32, #tpu.memory_space<vmem>>, vector<1x128x128xf32>
    %129 = vector.shape_cast %128 : vector<1x128x128xf32> to vector<128x128xf32>
    %cst_149 = arith.constant dense<0.000000e+00> : vector<256x128xf32>
    %130 = tpu.matmul %127, %129, %cst_149 {dimension_numbers = #tpu.dot_dimension_numbers<[1], [0], [0], [1], [0, 0, 1, 1], [], []>} : vector<256x128xf32>, vector<128x128xf32>, vector<256x128xf32> -> vector<256x128xf32>
    %131 = arith.addf %125, %130 : vector<256x128xf32>
    %c0_150 = arith.constant 0 : index
    %c2_151 = arith.constant 2 : index
    %c3_152 = arith.constant 3 : index
    %c0_153 = arith.constant 0 : index
    %132 = tpu.strided_load %arg7[%c0_150, %c2_151, %c3_152, %c0_153] {strides = array<i32: 1, 1, 2, 1>} : memref<2x18x18x128xf32, #tpu.memory_space<vmem>>, vector<2x16x8x128xf32>
    %133 = vector.shape_cast %132 : vector<2x16x8x128xf32> to vector<256x128xf32>
    %c8_154 = arith.constant 8 : index
    %c0_155 = arith.constant 0 : index
    %c0_156 = arith.constant 0 : index
    %134 = vector.load %arg4[%c8_154, %c0_155, %c0_156] : memref<9x128x128xf32, #tpu.memory_space<vmem>>, vector<1x128x128xf32>
    %135 = vector.shape_cast %134 : vector<1x128x128xf32> to vector<128x128xf32>
    %cst_157 = arith.constant dense<0.000000e+00> : vector<256x128xf32>
    %136 = tpu.matmul %133, %135, %cst_157 {dimension_numbers = #tpu.dot_dimension_numbers<[1], [0], [0], [1], [0, 0, 1, 1], [], []>} : vector<256x128xf32>, vector<128x128xf32>, vector<256x128xf32> -> vector<256x128xf32>
    %137 = arith.addf %131, %136 : vector<256x128xf32>
    %c0_158 = arith.constant 0 : index
    %c0_159 = arith.constant 0 : index
    %138 = vector.load %arg5[%c0_158, %c0_159] : memref<1x128xf32, #tpu.memory_space<vmem>>, vector<1x128xf32>
    %139 = vector.broadcast %138 : vector<1x128xf32> to vector<256x128xf32>
    %140 = arith.addf %137, %139 : vector<256x128xf32>
    %cst_160 = arith.constant 0.000000e+00 : f32
    %141 = vector.broadcast %cst_160 : f32 to vector<256x128xf32>
    %142 = arith.maximumf %140, %141 : vector<256x128xf32>
    %143 = arith.maximumf %82, %142 : vector<256x128xf32>
    %144 = vector.shape_cast %143 : vector<256x128xf32> to vector<2x8x2x8x128xf32>
    %145 = vector.extract_strided_slice %144 {offsets = [0, 0, 0, 0, 0], sizes = [2, 8, 1, 8, 128], strides = [1, 1, 1, 1, 1]} : vector<2x8x2x8x128xf32> to vector<2x8x1x8x128xf32>
    %146 = vector.shape_cast %145 : vector<2x8x1x8x128xf32> to vector<2x8x8x128xf32>
    %147 = vector.extract_strided_slice %144 {offsets = [0, 0, 1, 0, 0], sizes = [2, 8, 1, 8, 128], strides = [1, 1, 1, 1, 1]} : vector<2x8x2x8x128xf32> to vector<2x8x1x8x128xf32>
    %148 = vector.shape_cast %147 : vector<2x8x1x8x128xf32> to vector<2x8x8x128xf32>
    %149 = arith.maximumf %146, %148 : vector<2x8x8x128xf32>
    %c0_161 = arith.constant 0 : index
    %c0_162 = arith.constant 0 : index
    %c0_163 = arith.constant 0 : index
    %c0_164 = arith.constant 0 : index
    %150 = vector.load %arg6[%c0_161, %c0_162, %c0_163, %c0_164] : memref<2x8x8x128xf32, #tpu.memory_space<vmem>>, vector<2x8x8x128xf32>
    tpu.vector_store %arg6[%c0_161, %c0_162, %c0_163, %c0_164], %149 {strides = array<i32>} : memref<2x8x8x128xf32, #tpu.memory_space<vmem>>, vector<2x8x8x128xf32>,
    return
  }
  func.func @transform_0(%arg0: i32) -> (i32, i32, i32, i32) {
    %c0_i32 = arith.constant 0 : i32
    %c0_i32_0 = arith.constant 0 : i32
    %c0_i32_1 = arith.constant 0 : i32
    %c0_i32_2 = arith.constant 0 : i32
    return %arg0, %c0_i32, %c0_i32_0, %c0_i32_1 : i32, i32, i32, i32
  }
  func.func @transform_1(%arg0: i32) -> (i32, i32) {
    %c0_i32 = arith.constant 0 : i32
    %c0_i32_0 = arith.constant 0 : i32
    %c0_i32_1 = arith.constant 0 : i32
    return %c0_i32, %c0_i32_0 : i32, i32
  }
  func.func @transform_2(%arg0: i32) -> (i32, i32) {
    %c0_i32 = arith.constant 0 : i32
    %c0_i32_0 = arith.constant 0 : i32
    %c0_i32_1 = arith.constant 0 : i32
    return %c0_i32, %c0_i32_0 : i32, i32
  }
  func.func @transform_3(%arg0: i32) -> (i32, i32, i32) {
    %c0_i32 = arith.constant 0 : i32
    %c0_i32_0 = arith.constant 0 : i32
    %c0_i32_1 = arith.constant 0 : i32
    %c0_i32_2 = arith.constant 0 : i32
    return %c0_i32, %c0_i32_0, %c0_i32_1 : i32, i32, i32
  }
  func.func @transform_4(%arg0: i32) -> (i32, i32) {
    %c0_i32 = arith.constant 0 : i32
    %c0_i32_0 = arith.constant 0 : i32
    %c0_i32_1 = arith.constant 0 : i32
    return %c0_i32, %c0_i32_0 : i32, i32
  }
  func.func @transform_5(%arg0: i32) -> (i32, i32, i32, i32) {
    %c0_i32 = arith.constant 0 : i32
    %c0_i32_0 = arith.constant 0 : i32
    %c0_i32_1 = arith.constant 0 : i32
    %c0_i32_2 = arith.constant 0 : i32
    return %arg0, %c0_i32, %c0_i32_0, %c0_i32_1 : i32, i32, i32, i32
  }
}

</mosaic_0001>

<llo_original>
// kernel: first_block_forward.1
$region0: #{first_block_forward.1}
  #allocation0 [shape = 'u32[]', space=smem, size = 0x4, offset = 0x4, fixed_abs, tag = 'smem constant byte address 0x4 - core index']
  #allocation1 [shape = 'u32[144,128]{1,0:T(1,128)}', space=vmem, size = 0x12000, scoped, tag = 'internal scratch']
  #allocation2 [shape = 'f32[2,18,18,128]{3,2,1,0:T(8,128)}', space=vmem, size = 0x6c000, scoped, tag = 'scratch operand']
  %s0 = inlined_call_operand.vmem [shape: f32[4,18,18,4], index: 0, kind: input, shape index: {}]
  %s1 = inlined_call_operand.vmem [shape: f32[36,128], index: 1, kind: input, shape index: {}]
  %s2 = inlined_call_operand.vmem [shape: f32[1,128], index: 2, kind: input, shape index: {}]
  %s3 = inlined_call_operand.vmem [shape: f32[9,128,128], index: 3, kind: input, shape index: {}]
  %s4 = inlined_call_operand.vmem [shape: f32[1,128], index: 4, kind: input, shape index: {}]
  %s5 = inlined_call_operand.vmem [shape: f32[4,8,8,128], index: 5, kind: output, shape index: {}]
  %s6 = sld [smem:[#allocation0]]
  $region53: #{first_block_forward.1} parent=0
    _
  %s8 = ssub.s32 1, %s6
  %s9 = scalar_select 0, %s8, %s6
  loop: start=0, step=1, limit=4
  $region2: #{first_block_forward.1} parent=0 // loop_pre_header
    _
  $region3: #{first_block_forward.1} parent=0 // loop_header
    %s11 = sphi 0, %s15
    %p12 = scmp.ge.s32.totalorder %s11, 4
    %s21 = sphi 0, %s23
    %s24 = sphi 0, %s21
    %s25 = sphi 0, %s24
    %s41 = sphi 0, %s25
    %s45 = sphi 0, %s45
    %s47 = sphi 0, %s45
    %s48 = sphi 0, %s47
    %s62 = sphi 0, %s48
    %s66 = sphi 0, %s66
    %s68 = sphi 0, %s66
    %s69 = sphi 0, %s68
    %s83 = sphi 0, %s69
    %s87 = sphi 0, %s87
    %s89 = sphi 0, %s87
    %s90 = sphi 0, %s89
    %s104 = sphi 0, %s90
    %s108 = sphi 0, %s108
    %s110 = sphi 0, %s108
    %s111 = sphi 0, %s110
    %s125 = sphi 0, %s111
    %s131 = sphi 0, %s133
    %s134 = sphi 0, %s131
    %s135 = sphi 0, %s134
    %s151 = sphi 0, %s135
  $region4: #{first_block_forward.1} parent=0 // loop_header_branch
    %14 = sbr.rel (%p12) target = $region8
  $region5: #{first_block_forward.1} parent=0 // loop_body
    %s16 = ssub.s32 %s11, 1
    %s17 = ssub.s32 %s11, 2
    %s18 = sadd.s32 %s11, 1
    %s19 = ssub.s32 %s11, %s18
    %p20 = scmp.eq.s32.totalorder %s19, 0
    %s22 = sadd.s32 %s21, 1
    %s23 = scalar_select %p20, %s21, %s22
    %p26 = pneg %p20
    %p27 = scmp.eq.s32.totalorder %s11, 1
    %p28 = por %p26, %p27
    %p29 = scmp.ne.s32.totalorder %s21, %s24
    %p30 = scmp.eq.s32.totalorder %s11, 0
    %p31 = por %p29, %p30
    %p32 = scmp.ne.s32.totalorder %s21, %s24
    %p33 = scmp.eq.s32.totalorder %s16, 1
    %p34 = por %p32, %p33
    %p35 = scmp.ne.s32.totalorder %s24, %s25
    %p36 = scmp.eq.s32.totalorder %s16, 0
    %p37 = por %p35, %p36
    %p38 = scmp.ne.s32.totalorder %s24, %s25
    %p39 = scmp.eq.s32.totalorder %s17, 1
    %p40 = por %p38, %p39
    %p42 = scmp.ne.s32.totalorder %s25, %s41
    %p43 = scmp.eq.s32.totalorder %s17, 0
    %p44 = por %p42, %p43
    %s46 = sadd.s32 %s45, 1
    %p49 = scmp.eq.s32.totalorder %s11, 1
    %p50 = scmp.ne.s32.totalorder %s45, %s47
    %p51 = scmp.eq.s32.totalorder %s11, 0
    %p52 = por %p50, %p51
    %p53 = scmp.ne.s32.totalorder %s45, %s47
    %p54 = scmp.eq.s32.totalorder %s16, 1
    %p55 = por %p53, %p54
    %p56 = scmp.ne.s32.totalorder %s47, %s48
    %p57 = scmp.eq.s32.totalorder %s16, 0
    %p58 = por %p56, %p57
    %p59 = scmp.ne.s32.totalorder %s47, %s48
    %p60 = scmp.eq.s32.totalorder %s17, 1
    %p61 = por %p59, %p60
    %p63 = scmp.ne.s32.totalorder %s48, %s62
    %p64 = scmp.eq.s32.totalorder %s17, 0
    %p65 = por %p63, %p64
    %s67 = sadd.s32 %s66, 1
    %p70 = scmp.eq.s32.totalorder %s11, 1
    %p71 = scmp.ne.s32.totalorder %s66, %s68
    %p72 = scmp.eq.s32.totalorder %s11, 0
    %p73 = por %p71, %p72
    %p74 = scmp.ne.s32.totalorder %s66, %s68
    %p75 = scmp.eq.s32.totalorder %s16, 1
    %p76 = por %p74, %p75
    %p77 = scmp.ne.s32.totalorder %s68, %s69
    %p78 = scmp.eq.s32.totalorder %s16, 0
    %p79 = por %p77, %p78
    %p80 = scmp.ne.s32.totalorder %s68, %s69
    %p81 = scmp.eq.s32.totalorder %s17, 1
    %p82 = por %p80, %p81
    %p84 = scmp.ne.s32.totalorder %s69, %s83
    %p85 = scmp.eq.s32.totalorder %s17, 0
    %p86 = por %p84, %p85
    %s88 = sadd.s32 %s87, 1
    %p91 = scmp.eq.s32.totalorder %s11, 1
    %p92 = scmp.ne.s32.totalorder %s87, %s89
    %p93 = scmp.eq.s32.totalorder %s11, 0
    %p94 = por %p92, %p93
    %p95 = scmp.ne.s32.totalorder %s87, %s89
    %p96 = scmp.eq.s32.totalorder %s16, 1
    %p97 = por %p95, %p96
    %p98 = scmp.ne.s32.totalorder %s89, %s90
    %p99 = scmp.eq.s32.totalorder %s16, 0
    %p100 = por %p98, %p99
    %p101 = scmp.ne.s32.totalorder %s89, %s90
    %p102 = scmp.eq.s32.totalorder %s17, 1
    %p103 = por %p101, %p102
    %p105 = scmp.ne.s32.totalorder %s90, %s104
    %p106 = scmp.eq.s32.totalorder %s17, 0
    %p107 = por %p105, %p106
    %s109 = sadd.s32 %s108, 1
    %p112 = scmp.eq.s32.totalorder %s11, 1
    %p113 = scmp.ne.s32.totalorder %s108, %s110
    %p114 = scmp.eq.s32.totalorder %s11, 0
    %p115 = por %p113, %p114
    %p116 = scmp.ne.s32.totalorder %s108, %s110
    %p117 = scmp.eq.s32.totalorder %s16, 1
    %p118 = por %p116, %p117
    %p119 = scmp.ne.s32.totalorder %s110, %s111
    %p120 = scmp.eq.s32.totalorder %s16, 0
    %p121 = por %p119, %p120
    %p122 = scmp.ne.s32.totalorder %s110, %s111
    %p123 = scmp.eq.s32.totalorder %s17, 1
    %p124 = por %p122, %p123
    %p126 = scmp.ne.s32.totalorder %s111, %s125
    %p127 = scmp.eq.s32.totalorder %s17, 0
    %p128 = por %p126, %p127
    %s129 = ssub.s32 %s11, %s18
    %p130 = scmp.eq.s32.totalorder %s129, 0
    %s132 = sadd.s32 %s131, 1
    %s133 = scalar_select %p130, %s131, %s132
    %p136 = pneg %p130
    %p137 = scmp.eq.s32.totalorder %s11, 1
    %p138 = por %p136, %p137
    %p139 = scmp.ne.s32.totalorder %s131, %s134
    %p140 = scmp.eq.s32.totalorder %s11, 0
    %p141 = por %p139, %p140
    %p142 = scmp.ne.s32.totalorder %s131, %s134
    %p143 = scmp.eq.s32.totalorder %s16, 1
    %p144 = por %p142, %p143
    %p145 = scmp.ne.s32.totalorder %s134, %s135
    %p146 = scmp.eq.s32.totalorder %s16, 0
    %p147 = por %p145, %p146
    %p148 = scmp.ne.s32.totalorder %s134, %s135
    %p149 = scmp.eq.s32.totalorder %s17, 1
    %p150 = por %p148, %p149
    %p152 = scmp.ne.s32.totalorder %s135, %s151
    %p153 = scmp.eq.s32.totalorder %s17, 0
    %p154 = por %p152, %p153
    %p155 = scmp.le.s32.totalorder 1, %s11
    %p156 = scmp.lt.s32.totalorder %s11, 3
    %p157 = pnand %p155, %p156
    %p158 = pneg %p157
    // Predicated region
    $region9: #{first_block_forward.1} parent=5 // pred_check
      _
    $region10: #{first_block_forward.1} parent=5 // pred_check_branch
      %160 = sbr.rel (%p157) target = $region12
    $region11: #{first_block_forward.1} parent=5 // pred_region
      %s161 = ssub.s32 %s11, 1
      // Predicated region
      $region13: #{first_block_forward.1} parent=11 // pred_check
        %p162 = pneg %p58
      $region14: #{first_block_forward.1} parent=11 // pred_check_branch
        %164 = sbr.rel (%p162) target = $region16
      $region15: #{first_block_forward.1} parent=11 // pred_region
        _
      $region16: #{first_block_forward.1} parent=11 // pred_fallthru
        _
      // Predicated region
      $region17: #{first_block_forward.1} parent=11 // pred_check
        %p165 = pneg %p79
      $region18: #{first_block_forward.1} parent=11 // pred_check_branch
        %167 = sbr.rel (%p165) target = $region20
      $region19: #{first_block_forward.1} parent=11 // pred_region
        _
      $region20: #{first_block_forward.1} parent=11 // pred_fallthru
        _
      // Predicated region
      $region21: #{first_block_forward.1} parent=11 // pred_check
        %p168 = pneg %p100
      $region22: #{first_block_forward.1} parent=11 // pred_check_branch
        %170 = sbr.rel (%p168) target = $region24
      $region23: #{first_block_forward.1} parent=11 // pred_region
        _
      $region24: #{first_block_forward.1} parent=11 // pred_fallthru
        _
      // Predicated region
      $region25: #{first_block_forward.1} parent=11 // pred_check
        %p171 = pneg %p121
      $region26: #{first_block_forward.1} parent=11 // pred_check_branch
        %173 = sbr.rel (%p171) target = $region28
      $region27: #{first_block_forward.1} parent=11 // pred_region
        _
      $region28: #{first_block_forward.1} parent=11 // pred_fallthru
        _
    $region12: #{first_block_forward.1} parent=5 // pred_fallthru
      _
    %p174 = scmp.lt.s32.totalorder %s11, 2
    // Predicated region
    $region29: #{first_block_forward.1} parent=5 // pred_check
      %p175 = pneg %p174
    $region30: #{first_block_forward.1} parent=5 // pred_check_branch
      %177 = sbr.rel (%p175) target = $region32
    $region31: #{first_block_forward.1} parent=5 // pred_region
      // Predicated region
      $region33: #{first_block_forward.1} parent=31 // pred_check
        %p178 = pneg %p31
      $region34: #{first_block_forward.1} parent=31 // pred_check_branch
        %180 = sbr.rel (%p178) target = $region36
      $region35: #{first_block_forward.1} parent=31 // pred_region
        %s181 = smul.u32 2, %s11
        %p182 = scmp.lt.s32.totalorder %s181, 3
        %s183 = scalar_select %p182, %s181, 3
        %s184 = smul.addr %s183, 54
        %s185 = smul.addr %s184, 8
        %s186 = scalar_lea.vmem %s0, %s185
        %s187 = smul.u32 2, %s11
      $region36: #{first_block_forward.1} parent=31 // pred_fallthru
        _
    $region32: #{first_block_forward.1} parent=5 // pred_fallthru
      _
    %p188 = scmp.le.s32.totalorder 1, %s11
    %p189 = scmp.lt.s32.totalorder %s11, 3
    %p190 = pnand %p188, %p189
    %p191 = pneg %p190
    // Predicated region
    $region37: #{first_block_forward.1} parent=5 // pred_check
      _
    $region38: #{first_block_forward.1} parent=5 // pred_check_branch
      %193 = sbr.rel (%p190) target = $region40
    $region39: #{first_block_forward.1} parent=5 // pred_region
      %s194 = ssub.s32 %s11, 1
      %s195 = smul.u32 2, %s16
      %p196 = scmp.lt.s32.totalorder %s195, 3
      %s197 = scalar_select %p196, %s195, 3
      %s198 = smul.addr %s197, 54
      %s199 = smul.addr %s198, 8
      %s200 = scalar_lea.vmem %s0, %s199
      %p201 = pneg %p37
      %p202 = pneg %p34
      %p203 = pneg %p58
      %p204 = pneg %p55
      %p205 = pneg %p79
      %p206 = pneg %p76
      %p207 = pneg %p100
      %p208 = pneg %p97
      %p209 = pneg %p121
      %p210 = pneg %p118
      %p211 = pneg %p147
      %p212 = pneg %p144
      %s213 = smul.u32 2, %s16
      %p214 = scmp.lt.s32.totalorder %s213, 3
      %s215 = scalar_select %p214, %s213, 3
      %s216 = smul.addr %s215, 8
      %s217 = smul.addr %s216, 8
      %s218 = scalar_lea.vmem %s5, %s217
      %s219 = smul.u32 2, %s16
      %p220 = scmp.lt.s32.totalorder %s219, 3
      %s221 = scalar_select %p220, %s219, 3
      %s222 = smul.addr %s221, 54
      %s223 = smul.addr %s222, 8
      %s224 = scalar_lea.vmem %s0, %s223
      %s225 = smul.u32 2, %s16
      %s226 = smul.u32 2, %s16
      %p227 = scmp.lt.s32.totalorder %s226, 3
      %s228 = scalar_select %p227, %s226, 3
      %s229 = smul.addr %s228, 8
      %s230 = smul.addr %s229, 8
      %s231 = scalar_lea.vmem %s5, %s230
      %s232 = smul.u32 2, %s16
      %v233 = vld [vmem:[%s224] sm:$0xff]
      %v234 = vld [vmem:[%s224 + $0x8] sm:$0xff]
      %v235 = vld [vmem:[%s224 + $0x10] sm:$0x3]
      %v236 = vld [vmem:[%s224 + $0x18] sm:$0xff]
      %v237 = vld [vmem:[%s224 + $0x20] sm:$0xff]
      %v238 = vld [vmem:[%s224 + $0x28] sm:$0x3]
      %v239 = vld [vmem:[%s224 + $0x30] sm:$0xff]
      %v240 = vld [vmem:[%s224 + $0x38] sm:$0xff]
      %v241 = vld [vmem:[%s224 + $0x40] sm:$0x3]
      %v242 = vld [vmem:[%s224 + $0x48] sm:$0xff]
      %v243 = vld [vmem:[%s224 + $0x50] sm:$0xff]
      %v244 = vld [vmem:[%s224 + $0x58] sm:$0x3]
      %v245 = vld [vmem:[%s224 + $0x60] sm:$0xff]
      %v246 = vld [vmem:[%s224 + $0x68] sm:$0xff]
      %v247 = vld [vmem:[%s224 + $0x70] sm:$0x3]
      %v248 = vld [vmem:[%s224 + $0x78] sm:$0xff]
      %v249 = vld [vmem:[%s224 + $0x80] sm:$0xff]
      %v250 = vld [vmem:[%s224 + $0x88] sm:$0x3]
      %v251 = vld [vmem:[%s224 + $0x90] sm:$0xff]
      %v252 = vld [vmem:[%s224 + $0x98] sm:$0xff]
      %v253 = vld [vmem:[%s224 + $0xa0] sm:$0x3]
      %v254 = vld [vmem:[%s224 + $0xa8] sm:$0xff]
      %v255 = vld [vmem:[%s224 + $0xb0] sm:$0xff]
      %v256 = vld [vmem:[%s224 + $0xb8] sm:$0x3]
      %v257 = vld [vmem:[%s224 + $0xc0] sm:$0xff]
      %v258 = vld [vmem:[%s224 + $0xc8] sm:$0xff]
      %v259 = vld [vmem:[%s224 + $0xd0] sm:$0x3]
      %v260 = vld [vmem:[%s224 + $0xd8] sm:$0xff]
      %v261 = vld [vmem:[%s224 + $0xe0] sm:$0xff]
      %v262 = vld [vmem:[%s224 + $0xe8] sm:$0x3]
      %v263 = vld [vmem:[%s224 + $0xf0] sm:$0xff]
      %v264 = vld [vmem:[%s224 + $0xf8] sm:$0xff]
      %v265 = vld [vmem:[%s224 + $0x100] sm:$0x3]
      %v266 = vld [vmem:[%s224 + $0x108] sm:$0xff]
      %v267 = vld [vmem:[%s224 + $0x110] sm:$0xff]
      %v268 = vld [vmem:[%s224 + $0x118] sm:$0x3]
      %v269 = vld [vmem:[%s224 + $0x120] sm:$0xff]
      %v270 = vld [vmem:[%s224 + $0x128] sm:$0xff]
      %v271 = vld [vmem:[%s224 + $0x130] sm:$0x3]
      %v272 = vld [vmem:[%s224 + $0x138] sm:$0xff]
      %v273 = vld [vmem:[%s224 + $0x140] sm:$0xff]
      %v274 = vld [vmem:[%s224 + $0x148] sm:$0x3]
      %v275 = vld [vmem:[%s224 + $0x150] sm:$0xff]
      %v276 = vld [vmem:[%s224 + $0x158] sm:$0xff]
      %v277 = vld [vmem:[%s224 + $0x160] sm:$0x3]
      %v278 = vld [vmem:[%s224 + $0x168] sm:$0xff]
      %v279 = vld [vmem:[%s224 + $0x170] sm:$0xff]
      %v280 = vld [vmem:[%s224 + $0x178] sm:$0x3]
      %v281 = vld [vmem:[%s224 + $0x180] sm:$0xff]
      %v282 = vld [vmem:[%s224 + $0x188] sm:$0xff]
      %v283 = vld [vmem:[%s224 + $0x190] sm:$0x3]
      %v284 = vld [vmem:[%s224 + $0x198] sm:$0xff]
      %v285 = vld [vmem:[%s224 + $0x1a0] sm:$0xff]
      %v286 = vld [vmem:[%s224 + $0x1a8] sm:$0x3]
      %v287 = vld [vmem:[%s224 + $0x1b0] sm:$0xff]
      %v288 = vld [vmem:[%s224 + $0x1b8] sm:$0xff]
      %v289 = vld [vmem:[%s224 + $0x1c0] sm:$0x3]
      %v290 = vld [vmem:[%s224 + $0x1c8] sm:$0xff]
      %v291 = vld [vmem:[%s224 + $0x1d0] sm:$0xff]
      %v292 = vld [vmem:[%s224 + $0x1d8] sm:$0x3]
      %v293 = vld [vmem:[%s224 + $0x1e0] sm:$0xff]
      %v294 = vld [vmem:[%s224 + $0x1e8] sm:$0xff]
      %v295 = vld [vmem:[%s224 + $0x1f0] sm:$0x3]
      %v296 = vld [vmem:[%s224 + $0x1f8] sm:$0xff]
      %v297 = vld [vmem:[%s224 + $0x200] sm:$0xff]
      %v298 = vld [vmem:[%s224 + $0x208] sm:$0x3]
      %v299 = vld [vmem:[%s224 + $0x210] sm:$0xff]
      %v300 = vld [vmem:[%s224 + $0x218] sm:$0xff]
      %v301 = vld [vmem:[%s224 + $0x220] sm:$0x3]
      %v302 = vld [vmem:[%s224 + $0x228] sm:$0xff]
      %v303 = vld [vmem:[%s224 + $0x230] sm:$0xff]
      %v304 = vld [vmem:[%s224 + $0x238] sm:$0x3]
      %v305 = vld [vmem:[%s224 + $0x240] sm:$0xff]
      %v306 = vld [vmem:[%s224 + $0x248] sm:$0xff]
      %v307 = vld [vmem:[%s224 + $0x250] sm:$0x3]
      %v308 = vld [vmem:[%s224 + $0x258] sm:$0xff]
      %v309 = vld [vmem:[%s224 + $0x260] sm:$0xff]
      %v310 = vld [vmem:[%s224 + $0x268] sm:$0x3]
      %v311 = vld [vmem:[%s224 + $0x270] sm:$0xff]
      %v312 = vld [vmem:[%s224 + $0x278] sm:$0xff]
      %v313 = vld [vmem:[%s224 + $0x280] sm:$0x3]
      %v314 = vld [vmem:[%s224 + $0x288] sm:$0xff]
      %v315 = vld [vmem:[%s224 + $0x290] sm:$0xff]
      %v316 = vld [vmem:[%s224 + $0x298] sm:$0x3]
      %v317 = vld [vmem:[%s224 + $0x2a0] sm:$0xff]
      %v318 = vld [vmem:[%s224 + $0x2a8] sm:$0xff]
      %v319 = vld [vmem:[%s224 + $0x2b0] sm:$0x3]
      %v320 = vld [vmem:[%s224 + $0x2b8] sm:$0xff]
      %v321 = vld [vmem:[%s224 + $0x2c0] sm:$0xff]
      %v322 = vld [vmem:[%s224 + $0x2c8] sm:$0x3]
      %v323 = vld [vmem:[%s224 + $0x2d0] sm:$0xff]
      %v324 = vld [vmem:[%s224 + $0x2d8] sm:$0xff]
      %v325 = vld [vmem:[%s224 + $0x2e0] sm:$0x3]
      %v326 = vld [vmem:[%s224 + $0x2e8] sm:$0xff]
      %v327 = vld [vmem:[%s224 + $0x2f0] sm:$0xff]
      %v328 = vld [vmem:[%s224 + $0x2f8] sm:$0x3]
      %v329 = vld [vmem:[%s224 + $0x300] sm:$0xff]
      %v330 = vld [vmem:[%s224 + $0x308] sm:$0xff]
      %v331 = vld [vmem:[%s224 + $0x310] sm:$0x3]
      %v332 = vld [vmem:[%s224 + $0x318] sm:$0xff]
      %v333 = vld [vmem:[%s224 + $0x320] sm:$0xff]
      %v334 = vld [vmem:[%s224 + $0x328] sm:$0x3]
      %v335 = vld [vmem:[%s224 + $0x330] sm:$0xff]
      %v336 = vld [vmem:[%s224 + $0x338] sm:$0xff]
      %v337 = vld [vmem:[%s224 + $0x340] sm:$0x3]
      %v338 = vld [vmem:[%s224 + $0x348] sm:$0xff]
      %v339 = vld [vmem:[%s224 + $0x350] sm:$0xff]
      %v340 = vld [vmem:[%s224 + $0x358] sm:$0x3]
      %vm437 = vcmask 1046528
      %v438 = vrot.slane %v233, 1
      %v439 = vrot.slane %v234, 1
      %v440 = vsel %vm437, %v438, %v439
      %v441 = vrot.slane %v235, 1
      %v442 = vsel %vm437, %v439, %v441
      %v443 = vrot.slane %v236, 1
      %v444 = vrot.slane %v237, 1
      %v445 = vsel %vm437, %v443, %v444
      %v446 = vrot.slane %v238, 1
      %v447 = vsel %vm437, %v444, %v446
      %v448 = vrot.slane %v239, 1
      %v449 = vrot.slane %v240, 1
      %v450 = vsel %vm437, %v448, %v449
      %v451 = vrot.slane %v241, 1
      %v452 = vsel %vm437, %v449, %v451
      %v453 = vrot.slane %v242, 1
      %v454 = vrot.slane %v243, 1
      %v455 = vsel %vm437, %v453, %v454
      %v456 = vrot.slane %v244, 1
      %v457 = vsel %vm437, %v454, %v456
      %v458 = vrot.slane %v245, 1
      %v459 = vrot.slane %v246, 1
      %v460 = vsel %vm437, %v458, %v459
      %v461 = vrot.slane %v247, 1
      %v462 = vsel %vm437, %v459, %v461
      %v463 = vrot.slane %v248, 1
      %v464 = vrot.slane %v249, 1
      %v465 = vsel %vm437, %v463, %v464
      %v466 = vrot.slane %v250, 1
      %v467 = vsel %vm437, %v464, %v466
      %v468 = vrot.slane %v251, 1
      %v469 = vrot.slane %v252, 1
      %v470 = vsel %vm437, %v468, %v469
      %v471 = vrot.slane %v253, 1
      %v472 = vsel %vm437, %v469, %v471
      %v473 = vrot.slane %v254, 1
      %v474 = vrot.slane %v255, 1
      %v475 = vsel %vm437, %v473, %v474
      %v476 = vrot.slane %v256, 1
      %v477 = vsel %vm437, %v474, %v476
      %v478 = vrot.slane %v257, 1
      %v479 = vrot.slane %v258, 1
      %v480 = vsel %vm437, %v478, %v479
      %v481 = vrot.slane %v259, 1
      %v482 = vsel %vm437, %v479, %v481
      %v483 = vrot.slane %v260, 1
      %v484 = vrot.slane %v261, 1
      %v485 = vsel %vm437, %v483, %v484
      %v486 = vrot.slane %v262, 1
      %v487 = vsel %vm437, %v484, %v486
      %v488 = vrot.slane %v263, 1
      %v489 = vrot.slane %v264, 1
      %v490 = vsel %vm437, %v488, %v489
      %v491 = vrot.slane %v265, 1
      %v492 = vsel %vm437, %v489, %v491
      %v493 = vrot.slane %v266, 1
      %v494 = vrot.slane %v267, 1
      %v495 = vsel %vm437, %v493, %v494
      %v496 = vrot.slane %v268, 1
      %v497 = vsel %vm437, %v494, %v496
      %v498 = vrot.slane %v269, 1
      %v499 = vrot.slane %v270, 1
      %v500 = vsel %vm437, %v498, %v499
      %v501 = vrot.slane %v271, 1
      %v502 = vsel %vm437, %v499, %v501
      %v503 = vrot.slane %v272, 1
      %v504 = vrot.slane %v273, 1
      %v505 = vsel %vm437, %v503, %v504
      %v506 = vrot.slane %v274, 1
      %v507 = vsel %vm437, %v504, %v506
      %v508 = vrot.slane %v275, 1
      %v509 = vrot.slane %v276, 1
      %v510 = vsel %vm437, %v508, %v509
      %v511 = vrot.slane %v277, 1
      %v512 = vsel %vm437, %v509, %v511
      %v513 = vrot.slane %v278, 1
      %v514 = vrot.slane %v279, 1
      %v515 = vsel %vm437, %v513, %v514
      %v516 = vrot.slane %v280, 1
      %v517 = vsel %vm437, %v514, %v516
      %v518 = vrot.slane %v287, 1
      %v519 = vrot.slane %v288, 1
      %v520 = vsel %vm437, %v518, %v519
      %v521 = vrot.slane %v289, 1
      %v522 = vsel %vm437, %v519, %v521
      %v523 = vrot.slane %v290, 1
      %v524 = vrot.slane %v291, 1
      %v525 = vsel %vm437, %v523, %v524
      %v526 = vrot.slane %v292, 1
      %v527 = vsel %vm437, %v524, %v526
      %v528 = vrot.slane %v293, 1
      %v529 = vrot.slane %v294, 1
      %v530 = vsel %vm437, %v528, %v529
      %v531 = vrot.slane %v295, 1
      %v532 = vsel %vm437, %v529, %v531
      %v533 = vrot.slane %v296, 1
      %v534 = vrot.slane %v297, 1
      %v535 = vsel %vm437, %v533, %v534
      %v536 = vrot.slane %v298, 1
      %v537 = vsel %vm437, %v534, %v536
      %v538 = vrot.slane %v299, 1
      %v539 = vrot.slane %v300, 1
      %v540 = vsel %vm437, %v538, %v539
      %v541 = vrot.slane %v301, 1
      %v542 = vsel %vm437, %v539, %v541
      %v543 = vrot.slane %v302, 1
      %v544 = vrot.slane %v303, 1
      %v545 = vsel %vm437, %v543, %v544
      %v546 = vrot.slane %v304, 1
      %v547 = vsel %vm437, %v544, %v546
      %v548 = vrot.slane %v305, 1
      %v549 = vrot.slane %v306, 1
      %v550 = vsel %vm437, %v548, %v549
      %v551 = vrot.slane %v307, 1
      %v552 = vsel %vm437, %v549, %v551
      %v553 = vrot.slane %v308, 1
      %v554 = vrot.slane %v309, 1
      %v555 = vsel %vm437, %v553, %v554
      %v556 = vrot.slane %v310, 1
      %v557 = vsel %vm437, %v554, %v556
      %v558 = vrot.slane %v311, 1
      %v559 = vrot.slane %v312, 1
      %v560 = vsel %vm437, %v558, %v559
      %v561 = vrot.slane %v313, 1
      %v562 = vsel %vm437, %v559, %v561
      %v563 = vrot.slane %v314, 1
      %v564 = vrot.slane %v315, 1
      %v565 = vsel %vm437, %v563, %v564
      %v566 = vrot.slane %v316, 1
      %v567 = vsel %vm437, %v564, %v566
      %v568 = vrot.slane %v317, 1
      %v569 = vrot.slane %v318, 1
      %v570 = vsel %vm437, %v568, %v569
      %v571 = vrot.slane %v319, 1
      %v572 = vsel %vm437, %v569, %v571
      %v573 = vrot.slane %v320, 1
      %v574 = vrot.slane %v321, 1
      %v575 = vsel %vm437, %v573, %v574
      %v576 = vrot.slane %v322, 1
      %v577 = vsel %vm437, %v574, %v576
      %v578 = vrot.slane %v323, 1
      %v579 = vrot.slane %v324, 1
      %v580 = vsel %vm437, %v578, %v579
      %v581 = vrot.slane %v325, 1
      %v582 = vsel %vm437, %v579, %v581
      %v583 = vrot.slane %v326, 1
      %v584 = vrot.slane %v327, 1
      %v585 = vsel %vm437, %v583, %v584
      %v586 = vrot.slane %v328, 1
      %v587 = vsel %vm437, %v584, %v586
      %v588 = vrot.slane %v329, 1
      %v589 = vrot.slane %v330, 1
      %v590 = vsel %vm437, %v588, %v589
      %v591 = vrot.slane %v331, 1
      %v592 = vsel %vm437, %v589, %v591
      %v593 = vrot.slane %v332, 1
      %v594 = vrot.slane %v333, 1
      %v595 = vsel %vm437, %v593, %v594
      %v596 = vrot.slane %v334, 1
      %v597 = vsel %vm437, %v594, %v596
      %598 = vrot.lane.b32.xlu0 %v440, 4
      %v599 = vpop.permute.xlu0 %598
      %600 = vrot.lane.b32.xlu0 %v442, 4
      %v601 = vpop.permute.xlu0 %600
      %602 = vrot.lane.b32.xlu0 %v445, 4
      %v603 = vpop.permute.xlu0 %602
      %604 = vrot.lane.b32.xlu0 %v447, 4
      %v605 = vpop.permute.xlu0 %604
      %606 = vrot.lane.b32.xlu0 %v450, 4
      %v607 = vpop.permute.xlu0 %606
      %608 = vrot.lane.b32.xlu0 %v452, 4
      %v609 = vpop.permute.xlu0 %608
      %610 = vrot.lane.b32.xlu0 %v455, 4
      %v611 = vpop.permute.xlu0 %610
      %612 = vrot.lane.b32.xlu0 %v457, 4
      %v613 = vpop.permute.xlu0 %612
      %614 = vrot.lane.b32.xlu0 %v460, 4
      %v615 = vpop.permute.xlu0 %614
      %616 = vrot.lane.b32.xlu0 %v462, 4
      %v617 = vpop.permute.xlu0 %616
      %618 = vrot.lane.b32.xlu0 %v465, 4
      %v619 = vpop.permute.xlu0 %618
      %620 = vrot.lane.b32.xlu0 %v467, 4
      %v621 = vpop.permute.xlu0 %620
      %622 = vrot.lane.b32.xlu0 %v470, 4
      %v623 = vpop.permute.xlu0 %622
      %624 = vrot.lane.b32.xlu0 %v472, 4
      %v625 = vpop.permute.xlu0 %624
      %626 = vrot.lane.b32.xlu0 %v475, 4
      %v627 = vpop.permute.xlu0 %626
      %628 = vrot.lane.b32.xlu0 %v477, 4
      %v629 = vpop.permute.xlu0 %628
      %630 = vrot.lane.b32.xlu0 %v480, 4
      %v631 = vpop.permute.xlu0 %630
      %632 = vrot.lane.b32.xlu0 %v482, 4
      %v633 = vpop.permute.xlu0 %632
      %634 = vrot.lane.b32.xlu0 %v485, 4
      %v635 = vpop.permute.xlu0 %634
      %636 = vrot.lane.b32.xlu0 %v487, 4
      %v637 = vpop.permute.xlu0 %636
      %638 = vrot.lane.b32.xlu0 %v490, 4
      %v639 = vpop.permute.xlu0 %638
      %640 = vrot.lane.b32.xlu0 %v492, 4
      %v641 = vpop.permute.xlu0 %640
      %642 = vrot.lane.b32.xlu0 %v495, 4
      %v643 = vpop.permute.xlu0 %642
      %644 = vrot.lane.b32.xlu0 %v497, 4
      %v645 = vpop.permute.xlu0 %644
      %646 = vrot.lane.b32.xlu0 %v500, 4
      %v647 = vpop.permute.xlu0 %646
      %648 = vrot.lane.b32.xlu0 %v502, 4
      %v649 = vpop.permute.xlu0 %648
      %650 = vrot.lane.b32.xlu0 %v505, 4
      %v651 = vpop.permute.xlu0 %650
      %652 = vrot.lane.b32.xlu0 %v507, 4
      %v653 = vpop.permute.xlu0 %652
      %654 = vrot.lane.b32.xlu0 %v510, 4
      %v655 = vpop.permute.xlu0 %654
      %656 = vrot.lane.b32.xlu0 %v512, 4
      %v657 = vpop.permute.xlu0 %656
      %658 = vrot.lane.b32.xlu0 %v515, 4
      %v659 = vpop.permute.xlu0 %658
      %660 = vrot.lane.b32.xlu0 %v517, 4
      %v661 = vpop.permute.xlu0 %660
      %662 = vrot.lane.b32.xlu0 %v520, 4
      %v663 = vpop.permute.xlu0 %662
      %664 = vrot.lane.b32.xlu0 %v522, 4
      %v665 = vpop.permute.xlu0 %664
      %666 = vrot.lane.b32.xlu0 %v525, 4
      %v667 = vpop.permute.xlu0 %666
      %668 = vrot.lane.b32.xlu0 %v527, 4
      %v669 = vpop.permute.xlu0 %668
      %670 = vrot.lane.b32.xlu0 %v530, 4
      %v671 = vpop.permute.xlu0 %670
      %672 = vrot.lane.b32.xlu0 %v532, 4
      %v673 = vpop.permute.xlu0 %672
      %674 = vrot.lane.b32.xlu0 %v535, 4
      %v675 = vpop.permute.xlu0 %674
      %676 = vrot.lane.b32.xlu0 %v537, 4
      %v677 = vpop.permute.xlu0 %676
      %678 = vrot.lane.b32.xlu0 %v540, 4
      %v679 = vpop.permute.xlu0 %678
      %680 = vrot.lane.b32.xlu0 %v542, 4
      %v681 = vpop.permute.xlu0 %680
      %682 = vrot.lane.b32.xlu0 %v545, 4
      %v683 = vpop.permute.xlu0 %682
      %684 = vrot.lane.b32.xlu0 %v547, 4
      %v685 = vpop.permute.xlu0 %684
      %686 = vrot.lane.b32.xlu0 %v550, 4
      %v687 = vpop.permute.xlu0 %686
      %688 = vrot.lane.b32.xlu0 %v552, 4
      %v689 = vpop.permute.xlu0 %688
      %690 = vrot.lane.b32.xlu0 %v555, 4
      %v691 = vpop.permute.xlu0 %690
      %692 = vrot.lane.b32.xlu0 %v557, 4
      %v693 = vpop.permute.xlu0 %692
      %694 = vrot.lane.b32.xlu0 %v560, 4
      %v695 = vpop.permute.xlu0 %694
      %696 = vrot.lane.b32.xlu0 %v562, 4
      %v697 = vpop.permute.xlu0 %696
      %698 = vrot.lane.b32.xlu0 %v565, 4
      %v699 = vpop.permute.xlu0 %698
      %700 = vrot.lane.b32.xlu0 %v567, 4
      %v701 = vpop.permute.xlu0 %700
      %702 = vrot.lane.b32.xlu0 %v570, 4
      %v703 = vpop.permute.xlu0 %702
      %704 = vrot.lane.b32.xlu0 %v572, 4
      %v705 = vpop.permute.xlu0 %704
      %706 = vrot.lane.b32.xlu0 %v575, 4
      %v707 = vpop.permute.xlu0 %706
      %708 = vrot.lane.b32.xlu0 %v577, 4
      %v709 = vpop.permute.xlu0 %708
      %710 = vrot.lane.b32.xlu0 %v580, 4
      %v711 = vpop.permute.xlu0 %710
      %712 = vrot.lane.b32.xlu0 %v582, 4
      %v713 = vpop.permute.xlu0 %712
      %714 = vrot.lane.b32.xlu0 %v585, 4
      %v715 = vpop.permute.xlu0 %714
      %716 = vrot.lane.b32.xlu0 %v587, 4
      %v717 = vpop.permute.xlu0 %716
      %718 = vrot.lane.b32.xlu0 %v590, 4
      %v719 = vpop.permute.xlu0 %718
      %720 = vrot.lane.b32.xlu0 %v592, 4
      %v721 = vpop.permute.xlu0 %720
      %722 = vrot.lane.b32.xlu0 %v595, 4
      %v723 = vpop.permute.xlu0 %722
      %724 = vrot.lane.b32.xlu0 %v597, 4
      %v725 = vpop.permute.xlu0 %724
      %vm790 = vcmask 1045504
      %v791 = vrot.slane %v233, 2
      %v792 = vrot.slane %v234, 2
      %v793 = vsel %vm790, %v791, %v792
      %v794 = vrot.slane %v235, 2
      %v795 = vsel %vm790, %v792, %v794
      %v796 = vrot.slane %v236, 2
      %v797 = vrot.slane %v237, 2
      %v798 = vsel %vm790, %v796, %v797
      %v799 = vrot.slane %v238, 2
      %v800 = vsel %vm790, %v797, %v799
      %v801 = vrot.slane %v239, 2
      %v802 = vrot.slane %v240, 2
      %v803 = vsel %vm790, %v801, %v802
      %v804 = vrot.slane %v241, 2
      %v805 = vsel %vm790, %v802, %v804
      %v806 = vrot.slane %v242, 2
      %v807 = vrot.slane %v243, 2
      %v808 = vsel %vm790, %v806, %v807
      %v809 = vrot.slane %v244, 2
      %v810 = vsel %vm790, %v807, %v809
      %v811 = vrot.slane %v245, 2
      %v812 = vrot.slane %v246, 2
      %v813 = vsel %vm790, %v811, %v812
      %v814 = vrot.slane %v247, 2
      %v815 = vsel %vm790, %v812, %v814
      %v816 = vrot.slane %v248, 2
      %v817 = vrot.slane %v249, 2
      %v818 = vsel %vm790, %v816, %v817
      %v819 = vrot.slane %v250, 2
      %v820 = vsel %vm790, %v817, %v819
      %v821 = vrot.slane %v251, 2
      %v822 = vrot.slane %v252, 2
      %v823 = vsel %vm790, %v821, %v822
      %v824 = vrot.slane %v253, 2
      %v825 = vsel %vm790, %v822, %v824
      %v826 = vrot.slane %v254, 2
      %v827 = vrot.slane %v255, 2
      %v828 = vsel %vm790, %v826, %v827
      %v829 = vrot.slane %v256, 2
      %v830 = vsel %vm790, %v827, %v829
      %v831 = vrot.slane %v257, 2
      %v832 = vrot.slane %v258, 2
      %v833 = vsel %vm790, %v831, %v832
      %v834 = vrot.slane %v259, 2
      %v835 = vsel %vm790, %v832, %v834
      %v836 = vrot.slane %v260, 2
      %v837 = vrot.slane %v261, 2
      %v838 = vsel %vm790, %v836, %v837
      %v839 = vrot.slane %v262, 2
      %v840 = vsel %vm790, %v837, %v839
      %v841 = vrot.slane %v263, 2
      %v842 = vrot.slane %v264, 2
      %v843 = vsel %vm790, %v841, %v842
      %v844 = vrot.slane %v265, 2
      %v845 = vsel %vm790, %v842, %v844
      %v846 = vrot.slane %v266, 2
      %v847 = vrot.slane %v267, 2
      %v848 = vsel %vm790, %v846, %v847
      %v849 = vrot.slane %v268, 2
      %v850 = vsel %vm790, %v847, %v849
      %v851 = vrot.slane %v269, 2
      %v852 = vrot.slane %v270, 2
      %v853 = vsel %vm790, %v851, %v852
      %v854 = vrot.slane %v271, 2
      %v855 = vsel %vm790, %v852, %v854
      %v856 = vrot.slane %v272, 2
      %v857 = vrot.slane %v273, 2
      %v858 = vsel %vm790, %v856, %v857
      %v859 = vrot.slane %v274, 2
      %v860 = vsel %vm790, %v857, %v859
      %v861 = vrot.slane %v275, 2
      %v862 = vrot.slane %v276, 2
      %v863 = vsel %vm790, %v861, %v862
      %v864 = vrot.slane %v277, 2
      %v865 = vsel %vm790, %v862, %v864
      %v866 = vrot.slane %v278, 2
      %v867 = vrot.slane %v279, 2
      %v868 = vsel %vm790, %v866, %v867
      %v869 = vrot.slane %v280, 2
      %v870 = vsel %vm790, %v867, %v869
      %v871 = vrot.slane %v287, 2
      %v872 = vrot.slane %v288, 2
      %v873 = vsel %vm790, %v871, %v872
      %v874 = vrot.slane %v289, 2
      %v875 = vsel %vm790, %v872, %v874
      %v876 = vrot.slane %v290, 2
      %v877 = vrot.slane %v291, 2
      %v878 = vsel %vm790, %v876, %v877
      %v879 = vrot.slane %v292, 2
      %v880 = vsel %vm790, %v877, %v879
      %v881 = vrot.slane %v293, 2
      %v882 = vrot.slane %v294, 2
      %v883 = vsel %vm790, %v881, %v882
      %v884 = vrot.slane %v295, 2
      %v885 = vsel %vm790, %v882, %v884
      %v886 = vrot.slane %v296, 2
      %v887 = vrot.slane %v297, 2
      %v888 = vsel %vm790, %v886, %v887
      %v889 = vrot.slane %v298, 2
      %v890 = vsel %vm790, %v887, %v889
      %v891 = vrot.slane %v299, 2
      %v892 = vrot.slane %v300, 2
      %v893 = vsel %vm790, %v891, %v892
      %v894 = vrot.slane %v301, 2
      %v895 = vsel %vm790, %v892, %v894
      %v896 = vrot.slane %v302, 2
      %v897 = vrot.slane %v303, 2
      %v898 = vsel %vm790, %v896, %v897
      %v899 = vrot.slane %v304, 2
      %v900 = vsel %vm790, %v897, %v899
      %v901 = vrot.slane %v305, 2
      %v902 = vrot.slane %v306, 2
      %v903 = vsel %vm790, %v901, %v902
      %v904 = vrot.slane %v307, 2
      %v905 = vsel %vm790, %v902, %v904
      %v906 = vrot.slane %v308, 2
      %v907 = vrot.slane %v309, 2
      %v908 = vsel %vm790, %v906, %v907
      %v909 = vrot.slane %v310, 2
      %v910 = vsel %vm790, %v907, %v909
      %v911 = vrot.slane %v311, 2
      %v912 = vrot.slane %v312, 2
      %v913 = vsel %vm790, %v911, %v912
      %v914 = vrot.slane %v313, 2
      %v915 = vsel %vm790, %v912, %v914
      %v916 = vrot.slane %v314, 2
      %v917 = vrot.slane %v315, 2
      %v918 = vsel %vm790, %v916, %v917
      %v919 = vrot.slane %v316, 2
      %v920 = vsel %vm790, %v917, %v919
      %v921 = vrot.slane %v317, 2
      %v922 = vrot.slane %v318, 2
      %v923 = vsel %vm790, %v921, %v922
      %v924 = vrot.slane %v319, 2
      %v925 = vsel %vm790, %v922, %v924
      %v926 = vrot.slane %v320, 2
      %v927 = vrot.slane %v321, 2
      %v928 = vsel %vm790, %v926, %v927
      %v929 = vrot.slane %v322, 2
      %v930 = vsel %vm790, %v927, %v929
      %v931 = vrot.slane %v323, 2
      %v932 = vrot.slane %v324, 2
      %v933 = vsel %vm790, %v931, %v932
      %v934 = vrot.slane %v325, 2
      %v935 = vsel %vm790, %v932, %v934
      %v936 = vrot.slane %v326, 2
      %v937 = vrot.slane %v327, 2
      %v938 = vsel %vm790, %v936, %v937
      %v939 = vrot.slane %v328, 2
      %v940 = vsel %vm790, %v937, %v939
      %v941 = vrot.slane %v329, 2
      %v942 = vrot.slane %v330, 2
      %v943 = vsel %vm790, %v941, %v942
      %v944 = vrot.slane %v331, 2
      %v945 = vsel %vm790, %v942, %v944
      %v946 = vrot.slane %v332, 2
      %v947 = vrot.slane %v333, 2
      %v948 = vsel %vm790, %v946, %v947
      %v949 = vrot.slane %v334, 2
      %v950 = vsel %vm790, %v947, %v949
      %951 = vrot.lane.b32.xlu0 %v793, 8
      %v952 = vpop.permute.xlu0 %951
      %953 = vrot.lane.b32.xlu0 %v795, 8
      %v954 = vpop.permute.xlu0 %953
      %955 = vrot.lane.b32.xlu0 %v798, 8
      %v956 = vpop.permute.xlu0 %955
      %957 = vrot.lane.b32.xlu0 %v800, 8
      %v958 = vpop.permute.xlu0 %957
      %959 = vrot.lane.b32.xlu0 %v803, 8
      %v960 = vpop.permute.xlu0 %959
      %961 = vrot.lane.b32.xlu0 %v805, 8
      %v962 = vpop.permute.xlu0 %961
      %963 = vrot.lane.b32.xlu0 %v808, 8
      %v964 = vpop.permute.xlu0 %963
      %965 = vrot.lane.b32.xlu0 %v810, 8
      %v966 = vpop.permute.xlu0 %965
      %967 = vrot.lane.b32.xlu0 %v813, 8
      %v968 = vpop.permute.xlu0 %967
      %969 = vrot.lane.b32.xlu0 %v815, 8
      %v970 = vpop.permute.xlu0 %969
      %971 = vrot.lane.b32.xlu0 %v818, 8
      %v972 = vpop.permute.xlu0 %971
      %973 = vrot.lane.b32.xlu0 %v820, 8
      %v974 = vpop.permute.xlu0 %973
      %975 = vrot.lane.b32.xlu0 %v823, 8
      %v976 = vpop.permute.xlu0 %975
      %977 = vrot.lane.b32.xlu0 %v825, 8
      %v978 = vpop.permute.xlu0 %977
      %979 = vrot.lane.b32.xlu0 %v828, 8
      %v980 = vpop.permute.xlu0 %979
      %981 = vrot.lane.b32.xlu0 %v830, 8
      %v982 = vpop.permute.xlu0 %981
      %983 = vrot.lane.b32.xlu0 %v833, 8
      %v984 = vpop.permute.xlu0 %983
      %985 = vrot.lane.b32.xlu0 %v835, 8
      %v986 = vpop.permute.xlu0 %985
      %987 = vrot.lane.b32.xlu0 %v838, 8
      %v988 = vpop.permute.xlu0 %987
      %989 = vrot.lane.b32.xlu0 %v840, 8
      %v990 = vpop.permute.xlu0 %989
      %991 = vrot.lane.b32.xlu0 %v843, 8
      %v992 = vpop.permute.xlu0 %991
      %993 = vrot.lane.b32.xlu0 %v845, 8
      %v994 = vpop.permute.xlu0 %993
      %995 = vrot.lane.b32.xlu0 %v848, 8
      %v996 = vpop.permute.xlu0 %995
      %997 = vrot.lane.b32.xlu0 %v850, 8
      %v998 = vpop.permute.xlu0 %997
      %999 = vrot.lane.b32.xlu0 %v853, 8
      %v1000 = vpop.permute.xlu0 %999
      %1001 = vrot.lane.b32.xlu0 %v855, 8
      %v1002 = vpop.permute.xlu0 %1001
      %1003 = vrot.lane.b32.xlu0 %v858, 8
      %v1004 = vpop.permute.xlu0 %1003
      %1005 = vrot.lane.b32.xlu0 %v860, 8
      %v1006 = vpop.permute.xlu0 %1005
      %1007 = vrot.lane.b32.xlu0 %v863, 8
      %v1008 = vpop.permute.xlu0 %1007
      %1009 = vrot.lane.b32.xlu0 %v865, 8
      %v1010 = vpop.permute.xlu0 %1009
      %1011 = vrot.lane.b32.xlu0 %v868, 8
      %v1012 = vpop.permute.xlu0 %1011
      %1013 = vrot.lane.b32.xlu0 %v870, 8
      %v1014 = vpop.permute.xlu0 %1013
      %1015 = vrot.lane.b32.xlu0 %v873, 8
      %v1016 = vpop.permute.xlu0 %1015
      %1017 = vrot.lane.b32.xlu0 %v875, 8
      %v1018 = vpop.permute.xlu0 %1017
      %1019 = vrot.lane.b32.xlu0 %v878, 8
      %v1020 = vpop.permute.xlu0 %1019
      %1021 = vrot.lane.b32.xlu0 %v880, 8
      %v1022 = vpop.permute.xlu0 %1021
      %1023 = vrot.lane.b32.xlu0 %v883, 8
      %v1024 = vpop.permute.xlu0 %1023
      %1025 = vrot.lane.b32.xlu0 %v885, 8
      %v1026 = vpop.permute.xlu0 %1025
      %1027 = vrot.lane.b32.xlu0 %v888, 8
      %v1028 = vpop.permute.xlu0 %1027
      %1029 = vrot.lane.b32.xlu0 %v890, 8
      %v1030 = vpop.permute.xlu0 %1029
      %1031 = vrot.lane.b32.xlu0 %v893, 8
      %v1032 = vpop.permute.xlu0 %1031
      %1033 = vrot.lane.b32.xlu0 %v895, 8
      %v1034 = vpop.permute.xlu0 %1033
      %1035 = vrot.lane.b32.xlu0 %v898, 8
      %v1036 = vpop.permute.xlu0 %1035
      %1037 = vrot.lane.b32.xlu0 %v900, 8
      %v1038 = vpop.permute.xlu0 %1037
      %1039 = vrot.lane.b32.xlu0 %v903, 8
      %v1040 = vpop.permute.xlu0 %1039
      %1041 = vrot.lane.b32.xlu0 %v905, 8
      %v1042 = vpop.permute.xlu0 %1041
      %1043 = vrot.lane.b32.xlu0 %v908, 8
      %v1044 = vpop.permute.xlu0 %1043
      %1045 = vrot.lane.b32.xlu0 %v910, 8
      %v1046 = vpop.permute.xlu0 %1045
      %1047 = vrot.lane.b32.xlu0 %v913, 8
      %v1048 = vpop.permute.xlu0 %1047
      %1049 = vrot.lane.b32.xlu0 %v915, 8
      %v1050 = vpop.permute.xlu0 %1049
      %1051 = vrot.lane.b32.xlu0 %v918, 8
      %v1052 = vpop.permute.xlu0 %1051
      %1053 = vrot.lane.b32.xlu0 %v920, 8
      %v1054 = vpop.permute.xlu0 %1053
      %1055 = vrot.lane.b32.xlu0 %v923, 8
      %v1056 = vpop.permute.xlu0 %1055
      %1057 = vrot.lane.b32.xlu0 %v925, 8
      %v1058 = vpop.permute.xlu0 %1057
      %1059 = vrot.lane.b32.xlu0 %v928, 8
      %v1060 = vpop.permute.xlu0 %1059
      %1061 = vrot.lane.b32.xlu0 %v930, 8
      %v1062 = vpop.permute.xlu0 %1061
      %1063 = vrot.lane.b32.xlu0 %v933, 8
      %v1064 = vpop.permute.xlu0 %1063
      %1065 = vrot.lane.b32.xlu0 %v935, 8
      %v1066 = vpop.permute.xlu0 %1065
      %1067 = vrot.lane.b32.xlu0 %v938, 8
      %v1068 = vpop.permute.xlu0 %1067
      %1069 = vrot.lane.b32.xlu0 %v940, 8
      %v1070 = vpop.permute.xlu0 %1069
      %1071 = vrot.lane.b32.xlu0 %v943, 8
      %v1072 = vpop.permute.xlu0 %1071
      %1073 = vrot.lane.b32.xlu0 %v945, 8
      %v1074 = vpop.permute.xlu0 %1073
      %1075 = vrot.lane.b32.xlu0 %v948, 8
      %v1076 = vpop.permute.xlu0 %1075
      %1077 = vrot.lane.b32.xlu0 %v950, 8
      %v1078 = vpop.permute.xlu0 %1077
      %1147 = vrot.lane.b32.xlu0 %v236, 12
      %v1148 = vpop.permute.xlu0 %1147
      %1149 = vrot.lane.b32.xlu0 %v237, 12
      %v1150 = vpop.permute.xlu0 %1149
      %1151 = vrot.lane.b32.xlu0 %v239, 12
      %v1152 = vpop.permute.xlu0 %1151
      %1153 = vrot.lane.b32.xlu0 %v240, 12
      %v1154 = vpop.permute.xlu0 %1153
      %1155 = vrot.lane.b32.xlu0 %v242, 12
      %v1156 = vpop.permute.xlu0 %1155
      %1157 = vrot.lane.b32.xlu0 %v243, 12
      %v1158 = vpop.permute.xlu0 %1157
      %1159 = vrot.lane.b32.xlu0 %v245, 12
      %v1160 = vpop.permute.xlu0 %1159
      %1161 = vrot.lane.b32.xlu0 %v246, 12
      %v1162 = vpop.permute.xlu0 %1161
      %1163 = vrot.lane.b32.xlu0 %v248, 12
      %v1164 = vpop.permute.xlu0 %1163
      %1165 = vrot.lane.b32.xlu0 %v249, 12
      %v1166 = vpop.permute.xlu0 %1165
      %1167 = vrot.lane.b32.xlu0 %v251, 12
      %v1168 = vpop.permute.xlu0 %1167
      %1169 = vrot.lane.b32.xlu0 %v252, 12
      %v1170 = vpop.permute.xlu0 %1169
      %1171 = vrot.lane.b32.xlu0 %v254, 12
      %v1172 = vpop.permute.xlu0 %1171
      %1173 = vrot.lane.b32.xlu0 %v255, 12
      %v1174 = vpop.permute.xlu0 %1173
      %1175 = vrot.lane.b32.xlu0 %v257, 12
      %v1176 = vpop.permute.xlu0 %1175
      %1177 = vrot.lane.b32.xlu0 %v258, 12
      %v1178 = vpop.permute.xlu0 %1177
      %1179 = vrot.lane.b32.xlu0 %v260, 12
      %v1180 = vpop.permute.xlu0 %1179
      %1181 = vrot.lane.b32.xlu0 %v261, 12
      %v1182 = vpop.permute.xlu0 %1181
      %1183 = vrot.lane.b32.xlu0 %v263, 12
      %v1184 = vpop.permute.xlu0 %1183
      %1185 = vrot.lane.b32.xlu0 %v264, 12
      %v1186 = vpop.permute.xlu0 %1185
      %1187 = vrot.lane.b32.xlu0 %v266, 12
      %v1188 = vpop.permute.xlu0 %1187
      %1189 = vrot.lane.b32.xlu0 %v267, 12
      %v1190 = vpop.permute.xlu0 %1189
      %1191 = vrot.lane.b32.xlu0 %v269, 12
      %v1192 = vpop.permute.xlu0 %1191
      %1193 = vrot.lane.b32.xlu0 %v270, 12
      %v1194 = vpop.permute.xlu0 %1193
      %1195 = vrot.lane.b32.xlu0 %v272, 12
      %v1196 = vpop.permute.xlu0 %1195
      %1197 = vrot.lane.b32.xlu0 %v273, 12
      %v1198 = vpop.permute.xlu0 %1197
      %1199 = vrot.lane.b32.xlu0 %v275, 12
      %v1200 = vpop.permute.xlu0 %1199
      %1201 = vrot.lane.b32.xlu0 %v276, 12
      %v1202 = vpop.permute.xlu0 %1201
      %1203 = vrot.lane.b32.xlu0 %v278, 12
      %v1204 = vpop.permute.xlu0 %1203
      %1205 = vrot.lane.b32.xlu0 %v279, 12
      %v1206 = vpop.permute.xlu0 %1205
      %1207 = vrot.lane.b32.xlu0 %v281, 12
      %v1208 = vpop.permute.xlu0 %1207
      %1209 = vrot.lane.b32.xlu0 %v282, 12
      %v1210 = vpop.permute.xlu0 %1209
      %1211 = vrot.lane.b32.xlu0 %v290, 12
      %v1212 = vpop.permute.xlu0 %1211
      %1213 = vrot.lane.b32.xlu0 %v291, 12
      %v1214 = vpop.permute.xlu0 %1213
      %1215 = vrot.lane.b32.xlu0 %v293, 12
      %v1216 = vpop.permute.xlu0 %1215
      %1217 = vrot.lane.b32.xlu0 %v294, 12
      %v1218 = vpop.permute.xlu0 %1217
      %1219 = vrot.lane.b32.xlu0 %v296, 12
      %v1220 = vpop.permute.xlu0 %1219
      %1221 = vrot.lane.b32.xlu0 %v297, 12
      %v1222 = vpop.permute.xlu0 %1221
      %1223 = vrot.lane.b32.xlu0 %v299, 12
      %v1224 = vpop.permute.xlu0 %1223
      %1225 = vrot.lane.b32.xlu0 %v300, 12
      %v1226 = vpop.permute.xlu0 %1225
      %1227 = vrot.lane.b32.xlu0 %v302, 12
      %v1228 = vpop.permute.xlu0 %1227
      %1229 = vrot.lane.b32.xlu0 %v303, 12
      %v1230 = vpop.permute.xlu0 %1229
      %1231 = vrot.lane.b32.xlu0 %v305, 12
      %v1232 = vpop.permute.xlu0 %1231
      %1233 = vrot.lane.b32.xlu0 %v306, 12
      %v1234 = vpop.permute.xlu0 %1233
      %1235 = vrot.lane.b32.xlu0 %v308, 12
      %v1236 = vpop.permute.xlu0 %1235
      %1237 = vrot.lane.b32.xlu0 %v309, 12
      %v1238 = vpop.permute.xlu0 %1237
      %1239 = vrot.lane.b32.xlu0 %v311, 12
      %v1240 = vpop.permute.xlu0 %1239
      %1241 = vrot.lane.b32.xlu0 %v312, 12
      %v1242 = vpop.permute.xlu0 %1241
      %1243 = vrot.lane.b32.xlu0 %v314, 12
      %v1244 = vpop.permute.xlu0 %1243
      %1245 = vrot.lane.b32.xlu0 %v315, 12
      %v1246 = vpop.permute.xlu0 %1245
      %1247 = vrot.lane.b32.xlu0 %v317, 12
      %v1248 = vpop.permute.xlu0 %1247
      %1249 = vrot.lane.b32.xlu0 %v318, 12
      %v1250 = vpop.permute.xlu0 %1249
      %1251 = vrot.lane.b32.xlu0 %v320, 12
      %v1252 = vpop.permute.xlu0 %1251
      %1253 = vrot.lane.b32.xlu0 %v321, 12
      %v1254 = vpop.permute.xlu0 %1253
      %1255 = vrot.lane.b32.xlu0 %v323, 12
      %v1256 = vpop.permute.xlu0 %1255
      %1257 = vrot.lane.b32.xlu0 %v324, 12
      %v1258 = vpop.permute.xlu0 %1257
      %1259 = vrot.lane.b32.xlu0 %v326, 12
      %v1260 = vpop.permute.xlu0 %1259
      %1261 = vrot.lane.b32.xlu0 %v327, 12
      %v1262 = vpop.permute.xlu0 %1261
      %1263 = vrot.lane.b32.xlu0 %v329, 12
      %v1264 = vpop.permute.xlu0 %1263
      %1265 = vrot.lane.b32.xlu0 %v330, 12
      %v1266 = vpop.permute.xlu0 %1265
      %1267 = vrot.lane.b32.xlu0 %v332, 12
      %v1268 = vpop.permute.xlu0 %1267
      %1269 = vrot.lane.b32.xlu0 %v333, 12
      %v1270 = vpop.permute.xlu0 %1269
      %1271 = vrot.lane.b32.xlu0 %v335, 12
      %v1272 = vpop.permute.xlu0 %1271
      %1273 = vrot.lane.b32.xlu0 %v336, 12
      %v1274 = vpop.permute.xlu0 %1273
      %v1341 = vrot.slane %v281, 1
      %v1342 = vrot.slane %v282, 1
      %v1343 = vsel %vm437, %v1341, %v1342
      %v1344 = vrot.slane %v283, 1
      %v1345 = vsel %vm437, %v1342, %v1344
      %v1346 = vrot.slane %v335, 1
      %v1347 = vrot.slane %v336, 1
      %v1348 = vsel %vm437, %v1346, %v1347
      %v1349 = vrot.slane %v337, 1
      %v1350 = vsel %vm437, %v1347, %v1349
      %1351 = vrot.lane.b32.xlu0 %v445, 16
      %v1352 = vpop.permute.xlu0 %1351
      %1353 = vrot.lane.b32.xlu0 %v447, 16
      %v1354 = vpop.permute.xlu0 %1353
      %1355 = vrot.lane.b32.xlu0 %v450, 16
      %v1356 = vpop.permute.xlu0 %1355
      %1357 = vrot.lane.b32.xlu0 %v452, 16
      %v1358 = vpop.permute.xlu0 %1357
      %1359 = vrot.lane.b32.xlu0 %v455, 16
      %v1360 = vpop.permute.xlu0 %1359
      %1361 = vrot.lane.b32.xlu0 %v457, 16
      %v1362 = vpop.permute.xlu0 %1361
      %1363 = vrot.lane.b32.xlu0 %v460, 16
      %v1364 = vpop.permute.xlu0 %1363
      %1365 = vrot.lane.b32.xlu0 %v462, 16
      %v1366 = vpop.permute.xlu0 %1365
      %1367 = vrot.lane.b32.xlu0 %v465, 16
      %v1368 = vpop.permute.xlu0 %1367
      %1369 = vrot.lane.b32.xlu0 %v467, 16
      %v1370 = vpop.permute.xlu0 %1369
      %1371 = vrot.lane.b32.xlu0 %v470, 16
      %v1372 = vpop.permute.xlu0 %1371
      %1373 = vrot.lane.b32.xlu0 %v472, 16
      %v1374 = vpop.permute.xlu0 %1373
      %1375 = vrot.lane.b32.xlu0 %v475, 16
      %v1376 = vpop.permute.xlu0 %1375
      %1377 = vrot.lane.b32.xlu0 %v477, 16
      %v1378 = vpop.permute.xlu0 %1377
      %1379 = vrot.lane.b32.xlu0 %v480, 16
      %v1380 = vpop.permute.xlu0 %1379
      %1381 = vrot.lane.b32.xlu0 %v482, 16
      %v1382 = vpop.permute.xlu0 %1381
      %1383 = vrot.lane.b32.xlu0 %v485, 16
      %v1384 = vpop.permute.xlu0 %1383
      %1385 = vrot.lane.b32.xlu0 %v487, 16
      %v1386 = vpop.permute.xlu0 %1385
      %1387 = vrot.lane.b32.xlu0 %v490, 16
      %v1388 = vpop.permute.xlu0 %1387
      %1389 = vrot.lane.b32.xlu0 %v492, 16
      %v1390 = vpop.permute.xlu0 %1389
      %1391 = vrot.lane.b32.xlu0 %v495, 16
      %v1392 = vpop.permute.xlu0 %1391
      %1393 = vrot.lane.b32.xlu0 %v497, 16
      %v1394 = vpop.permute.xlu0 %1393
      %1395 = vrot.lane.b32.xlu0 %v500, 16
      %v1396 = vpop.permute.xlu0 %1395
      %1397 = vrot.lane.b32.xlu0 %v502, 16
      %v1398 = vpop.permute.xlu0 %1397
      %1399 = vrot.lane.b32.xlu0 %v505, 16
      %v1400 = vpop.permute.xlu0 %1399
      %1401 = vrot.lane.b32.xlu0 %v507, 16
      %v1402 = vpop.permute.xlu0 %1401
      %1403 = vrot.lane.b32.xlu0 %v510, 16
      %v1404 = vpop.permute.xlu0 %1403
      %1405 = vrot.lane.b32.xlu0 %v512, 16
      %v1406 = vpop.permute.xlu0 %1405
      %1407 = vrot.lane.b32.xlu0 %v515, 16
      %v1408 = vpop.permute.xlu0 %1407
      %1409 = vrot.lane.b32.xlu0 %v517, 16
      %v1410 = vpop.permute.xlu0 %1409
      %1411 = vrot.lane.b32.xlu0 %v1343, 16
      %v1412 = vpop.permute.xlu0 %1411
      %1413 = vrot.lane.b32.xlu0 %v1345, 16
      %v1414 = vpop.permute.xlu0 %1413
      %1415 = vrot.lane.b32.xlu0 %v525, 16
      %v1416 = vpop.permute.xlu0 %1415
      %1417 = vrot.lane.b32.xlu0 %v527, 16
      %v1418 = vpop.permute.xlu0 %1417
      %1419 = vrot.lane.b32.xlu0 %v530, 16
      %v1420 = vpop.permute.xlu0 %1419
      %1421 = vrot.lane.b32.xlu0 %v532, 16
      %v1422 = vpop.permute.xlu0 %1421
      %1423 = vrot.lane.b32.xlu0 %v535, 16
      %v1424 = vpop.permute.xlu0 %1423
      %1425 = vrot.lane.b32.xlu0 %v537, 16
      %v1426 = vpop.permute.xlu0 %1425
      %1427 = vrot.lane.b32.xlu0 %v540, 16
      %v1428 = vpop.permute.xlu0 %1427
      %1429 = vrot.lane.b32.xlu0 %v542, 16
      %v1430 = vpop.permute.xlu0 %1429
      %1431 = vrot.lane.b32.xlu0 %v545, 16
      %v1432 = vpop.permute.xlu0 %1431
      %1433 = vrot.lane.b32.xlu0 %v547, 16
      %v1434 = vpop.permute.xlu0 %1433
      %1435 = vrot.lane.b32.xlu0 %v550, 16
      %v1436 = vpop.permute.xlu0 %1435
      %1437 = vrot.lane.b32.xlu0 %v552, 16
      %v1438 = vpop.permute.xlu0 %1437
      %1439 = vrot.lane.b32.xlu0 %v555, 16
      %v1440 = vpop.permute.xlu0 %1439
      %1441 = vrot.lane.b32.xlu0 %v557, 16
      %v1442 = vpop.permute.xlu0 %1441
      %1443 = vrot.lane.b32.xlu0 %v560, 16
      %v1444 = vpop.permute.xlu0 %1443
      %1445 = vrot.lane.b32.xlu0 %v562, 16
      %v1446 = vpop.permute.xlu0 %1445
      %1447 = vrot.lane.b32.xlu0 %v565, 16
      %v1448 = vpop.permute.xlu0 %1447
      %1449 = vrot.lane.b32.xlu0 %v567, 16
      %v1450 = vpop.permute.xlu0 %1449
      %1451 = vrot.lane.b32.xlu0 %v570, 16
      %v1452 = vpop.permute.xlu0 %1451
      %1453 = vrot.lane.b32.xlu0 %v572, 16
      %v1454 = vpop.permute.xlu0 %1453
      %1455 = vrot.lane.b32.xlu0 %v575, 16
      %v1456 = vpop.permute.xlu0 %1455
      %1457 = vrot.lane.b32.xlu0 %v577, 16
      %v1458 = vpop.permute.xlu0 %1457
      %1459 = vrot.lane.b32.xlu0 %v580, 16
      %v1460 = vpop.permute.xlu0 %1459
      %1461 = vrot.lane.b32.xlu0 %v582, 16
      %v1462 = vpop.permute.xlu0 %1461
      %1463 = vrot.lane.b32.xlu0 %v585, 16
      %v1464 = vpop.permute.xlu0 %1463
      %1465 = vrot.lane.b32.xlu0 %v587, 16
      %v1466 = vpop.permute.xlu0 %1465
      %1467 = vrot.lane.b32.xlu0 %v590, 16
      %v1468 = vpop.permute.xlu0 %1467
      %1469 = vrot.lane.b32.xlu0 %v592, 16
      %v1470 = vpop.permute.xlu0 %1469
      %1471 = vrot.lane.b32.xlu0 %v595, 16
      %v1472 = vpop.permute.xlu0 %1471
      %1473 = vrot.lane.b32.xlu0 %v597, 16
      %v1474 = vpop.permute.xlu0 %1473
      %1475 = vrot.lane.b32.xlu0 %v1348, 16
      %v1476 = vpop.permute.xlu0 %1475
      %1477 = vrot.lane.b32.xlu0 %v1350, 16
      %v1478 = vpop.permute.xlu0 %1477
      %v1543 = vrot.slane %v281, 2
      %v1544 = vrot.slane %v282, 2
      %v1545 = vsel %vm790, %v1543, %v1544
      %v1546 = vrot.slane %v283, 2
      %v1547 = vsel %vm790, %v1544, %v1546
      %v1548 = vrot.slane %v335, 2
      %v1549 = vrot.slane %v336, 2
      %v1550 = vsel %vm790, %v1548, %v1549
      %v1551 = vrot.slane %v337, 2
      %v1552 = vsel %vm790, %v1549, %v1551
      %1553 = vrot.lane.b32.xlu0 %v798, 20
      %v1554 = vpop.permute.xlu0 %1553
      %1555 = vrot.lane.b32.xlu0 %v800, 20
      %v1556 = vpop.permute.xlu0 %1555
      %1557 = vrot.lane.b32.xlu0 %v803, 20
      %v1558 = vpop.permute.xlu0 %1557
      %1559 = vrot.lane.b32.xlu0 %v805, 20
      %v1560 = vpop.permute.xlu0 %1559
      %1561 = vrot.lane.b32.xlu0 %v808, 20
      %v1562 = vpop.permute.xlu0 %1561
      %1563 = vrot.lane.b32.xlu0 %v810, 20
      %v1564 = vpop.permute.xlu0 %1563
      %1565 = vrot.lane.b32.xlu0 %v813, 20
      %v1566 = vpop.permute.xlu0 %1565
      %1567 = vrot.lane.b32.xlu0 %v815, 20
      %v1568 = vpop.permute.xlu0 %1567
      %1569 = vrot.lane.b32.xlu0 %v818, 20
      %v1570 = vpop.permute.xlu0 %1569
      %1571 = vrot.lane.b32.xlu0 %v820, 20
      %v1572 = vpop.permute.xlu0 %1571
      %1573 = vrot.lane.b32.xlu0 %v823, 20
      %v1574 = vpop.permute.xlu0 %1573
      %1575 = vrot.lane.b32.xlu0 %v825, 20
      %v1576 = vpop.permute.xlu0 %1575
      %1577 = vrot.lane.b32.xlu0 %v828, 20
      %v1578 = vpop.permute.xlu0 %1577
      %1579 = vrot.lane.b32.xlu0 %v830, 20
      %v1580 = vpop.permute.xlu0 %1579
      %1581 = vrot.lane.b32.xlu0 %v833, 20
      %v1582 = vpop.permute.xlu0 %1581
      %1583 = vrot.lane.b32.xlu0 %v835, 20
      %v1584 = vpop.permute.xlu0 %1583
      %1585 = vrot.lane.b32.xlu0 %v838, 20
      %v1586 = vpop.permute.xlu0 %1585
      %1587 = vrot.lane.b32.xlu0 %v840, 20
      %v1588 = vpop.permute.xlu0 %1587
      %1589 = vrot.lane.b32.xlu0 %v843, 20
      %v1590 = vpop.permute.xlu0 %1589
      %1591 = vrot.lane.b32.xlu0 %v845, 20
      %v1592 = vpop.permute.xlu0 %1591
      %1593 = vrot.lane.b32.xlu0 %v848, 20
      %v1594 = vpop.permute.xlu0 %1593
      %1595 = vrot.lane.b32.xlu0 %v850, 20
      %v1596 = vpop.permute.xlu0 %1595
      %1597 = vrot.lane.b32.xlu0 %v853, 20
      %v1598 = vpop.permute.xlu0 %1597
      %1599 = vrot.lane.b32.xlu0 %v855, 20
      %v1600 = vpop.permute.xlu0 %1599
      %1601 = vrot.lane.b32.xlu0 %v858, 20
      %v1602 = vpop.permute.xlu0 %1601
      %1603 = vrot.lane.b32.xlu0 %v860, 20
      %v1604 = vpop.permute.xlu0 %1603
      %1605 = vrot.lane.b32.xlu0 %v863, 20
      %v1606 = vpop.permute.xlu0 %1605
      %1607 = vrot.lane.b32.xlu0 %v865, 20
      %v1608 = vpop.permute.xlu0 %1607
      %1609 = vrot.lane.b32.xlu0 %v868, 20
      %v1610 = vpop.permute.xlu0 %1609
      %1611 = vrot.lane.b32.xlu0 %v870, 20
      %v1612 = vpop.permute.xlu0 %1611
      %1613 = vrot.lane.b32.xlu0 %v1545, 20
      %v1614 = vpop.permute.xlu0 %1613
      %1615 = vrot.lane.b32.xlu0 %v1547, 20
      %v1616 = vpop.permute.xlu0 %1615
      %1617 = vrot.lane.b32.xlu0 %v878, 20
      %v1618 = vpop.permute.xlu0 %1617
      %1619 = vrot.lane.b32.xlu0 %v880, 20
      %v1620 = vpop.permute.xlu0 %1619
      %1621 = vrot.lane.b32.xlu0 %v883, 20
      %v1622 = vpop.permute.xlu0 %1621
      %1623 = vrot.lane.b32.xlu0 %v885, 20
      %v1624 = vpop.permute.xlu0 %1623
      %1625 = vrot.lane.b32.xlu0 %v888, 20
      %v1626 = vpop.permute.xlu0 %1625
      %1627 = vrot.lane.b32.xlu0 %v890, 20
      %v1628 = vpop.permute.xlu0 %1627
      %1629 = vrot.lane.b32.xlu0 %v893, 20
      %v1630 = vpop.permute.xlu0 %1629
      %1631 = vrot.lane.b32.xlu0 %v895, 20
      %v1632 = vpop.permute.xlu0 %1631
      %1633 = vrot.lane.b32.xlu0 %v898, 20
      %v1634 = vpop.permute.xlu0 %1633
      %1635 = vrot.lane.b32.xlu0 %v900, 20
      %v1636 = vpop.permute.xlu0 %1635
      %1637 = vrot.lane.b32.xlu0 %v903, 20
      %v1638 = vpop.permute.xlu0 %1637
      %1639 = vrot.lane.b32.xlu0 %v905, 20
      %v1640 = vpop.permute.xlu0 %1639
      %1641 = vrot.lane.b32.xlu0 %v908, 20
      %v1642 = vpop.permute.xlu0 %1641
      %1643 = vrot.lane.b32.xlu0 %v910, 20
      %v1644 = vpop.permute.xlu0 %1643
      %1645 = vrot.lane.b32.xlu0 %v913, 20
      %v1646 = vpop.permute.xlu0 %1645
      %1647 = vrot.lane.b32.xlu0 %v915, 20
      %v1648 = vpop.permute.xlu0 %1647
      %1649 = vrot.lane.b32.xlu0 %v918, 20
      %v1650 = vpop.permute.xlu0 %1649
      %1651 = vrot.lane.b32.xlu0 %v920, 20
      %v1652 = vpop.permute.xlu0 %1651
      %1653 = vrot.lane.b32.xlu0 %v923, 20
      %v1654 = vpop.permute.xlu0 %1653
      %1655 = vrot.lane.b32.xlu0 %v925, 20
      %v1656 = vpop.permute.xlu0 %1655
      %1657 = vrot.lane.b32.xlu0 %v928, 20
      %v1658 = vpop.permute.xlu0 %1657
      %1659 = vrot.lane.b32.xlu0 %v930, 20
      %v1660 = vpop.permute.xlu0 %1659
      %1661 = vrot.lane.b32.xlu0 %v933, 20
      %v1662 = vpop.permute.xlu0 %1661
      %1663 = vrot.lane.b32.xlu0 %v935, 20
      %v1664 = vpop.permute.xlu0 %1663
      %1665 = vrot.lane.b32.xlu0 %v938, 20
      %v1666 = vpop.permute.xlu0 %1665
      %1667 = vrot.lane.b32.xlu0 %v940, 20
      %v1668 = vpop.permute.xlu0 %1667
      %1669 = vrot.lane.b32.xlu0 %v943, 20
      %v1670 = vpop.permute.xlu0 %1669
      %1671 = vrot.lane.b32.xlu0 %v945, 20
      %v1672 = vpop.permute.xlu0 %1671
      %1673 = vrot.lane.b32.xlu0 %v948, 20
      %v1674 = vpop.permute.xlu0 %1673
      %1675 = vrot.lane.b32.xlu0 %v950, 20
      %v1676 = vpop.permute.xlu0 %1675
      %1677 = vrot.lane.b32.xlu0 %v1550, 20
      %v1678 = vpop.permute.xlu0 %1677
      %1679 = vrot.lane.b32.xlu0 %v1552, 20
      %v1680 = vpop.permute.xlu0 %1679
      %1749 = vrot.lane.b32.xlu0 %v239, 24
      %v1750 = vpop.permute.xlu0 %1749
      %1751 = vrot.lane.b32.xlu0 %v240, 24
      %v1752 = vpop.permute.xlu0 %1751
      %1753 = vrot.lane.b32.xlu0 %v242, 24
      %v1754 = vpop.permute.xlu0 %1753
      %1755 = vrot.lane.b32.xlu0 %v243, 24
      %v1756 = vpop.permute.xlu0 %1755
      %1757 = vrot.lane.b32.xlu0 %v245, 24
      %v1758 = vpop.permute.xlu0 %1757
      %1759 = vrot.lane.b32.xlu0 %v246, 24
      %v1760 = vpop.permute.xlu0 %1759
      %1761 = vrot.lane.b32.xlu0 %v248, 24
      %v1762 = vpop.permute.xlu0 %1761
      %1763 = vrot.lane.b32.xlu0 %v249, 24
      %v1764 = vpop.permute.xlu0 %1763
      %1765 = vrot.lane.b32.xlu0 %v251, 24
      %v1766 = vpop.permute.xlu0 %1765
      %1767 = vrot.lane.b32.xlu0 %v252, 24
      %v1768 = vpop.permute.xlu0 %1767
      %1769 = vrot.lane.b32.xlu0 %v254, 24
      %v1770 = vpop.permute.xlu0 %1769
      %1771 = vrot.lane.b32.xlu0 %v255, 24
      %v1772 = vpop.permute.xlu0 %1771
      %1773 = vrot.lane.b32.xlu0 %v257, 24
      %v1774 = vpop.permute.xlu0 %1773
      %1775 = vrot.lane.b32.xlu0 %v258, 24
      %v1776 = vpop.permute.xlu0 %1775
      %1777 = vrot.lane.b32.xlu0 %v260, 24
      %v1778 = vpop.permute.xlu0 %1777
      %1779 = vrot.lane.b32.xlu0 %v261, 24
      %v1780 = vpop.permute.xlu0 %1779
      %1781 = vrot.lane.b32.xlu0 %v263, 24
      %v1782 = vpop.permute.xlu0 %1781
      %1783 = vrot.lane.b32.xlu0 %v264, 24
      %v1784 = vpop.permute.xlu0 %1783
      %1785 = vrot.lane.b32.xlu0 %v266, 24
      %v1786 = vpop.permute.xlu0 %1785
      %1787 = vrot.lane.b32.xlu0 %v267, 24
      %v1788 = vpop.permute.xlu0 %1787
      %1789 = vrot.lane.b32.xlu0 %v269, 24
      %v1790 = vpop.permute.xlu0 %1789
      %1791 = vrot.lane.b32.xlu0 %v270, 24
      %v1792 = vpop.permute.xlu0 %1791
      %1793 = vrot.lane.b32.xlu0 %v272, 24
      %v1794 = vpop.permute.xlu0 %1793
      %1795 = vrot.lane.b32.xlu0 %v273, 24
      %v1796 = vpop.permute.xlu0 %1795
      %1797 = vrot.lane.b32.xlu0 %v275, 24
      %v1798 = vpop.permute.xlu0 %1797
      %1799 = vrot.lane.b32.xlu0 %v276, 24
      %v1800 = vpop.permute.xlu0 %1799
      %1801 = vrot.lane.b32.xlu0 %v278, 24
      %v1802 = vpop.permute.xlu0 %1801
      %1803 = vrot.lane.b32.xlu0 %v279, 24
      %v1804 = vpop.permute.xlu0 %1803
      %1805 = vrot.lane.b32.xlu0 %v281, 24
      %v1806 = vpop.permute.xlu0 %1805
      %1807 = vrot.lane.b32.xlu0 %v282, 24
      %v1808 = vpop.permute.xlu0 %1807
      %1809 = vrot.lane.b32.xlu0 %v284, 24
      %v1810 = vpop.permute.xlu0 %1809
      %1811 = vrot.lane.b32.xlu0 %v285, 24
      %v1812 = vpop.permute.xlu0 %1811
      %1813 = vrot.lane.b32.xlu0 %v293, 24
      %v1814 = vpop.permute.xlu0 %1813
      %1815 = vrot.lane.b32.xlu0 %v294, 24
      %v1816 = vpop.permute.xlu0 %1815
      %1817 = vrot.lane.b32.xlu0 %v296, 24
      %v1818 = vpop.permute.xlu0 %1817
      %1819 = vrot.lane.b32.xlu0 %v297, 24
      %v1820 = vpop.permute.xlu0 %1819
      %1821 = vrot.lane.b32.xlu0 %v299, 24
      %v1822 = vpop.permute.xlu0 %1821
      %1823 = vrot.lane.b32.xlu0 %v300, 24
      %v1824 = vpop.permute.xlu0 %1823
      %1825 = vrot.lane.b32.xlu0 %v302, 24
      %v1826 = vpop.permute.xlu0 %1825
      %1827 = vrot.lane.b32.xlu0 %v303, 24
      %v1828 = vpop.permute.xlu0 %1827
      %1829 = vrot.lane.b32.xlu0 %v305, 24
      %v1830 = vpop.permute.xlu0 %1829
      %1831 = vrot.lane.b32.xlu0 %v306, 24
      %v1832 = vpop.permute.xlu0 %1831
      %1833 = vrot.lane.b32.xlu0 %v308, 24
      %v1834 = vpop.permute.xlu0 %1833
      %1835 = vrot.lane.b32.xlu0 %v309, 24
      %v1836 = vpop.permute.xlu0 %1835
      %1837 = vrot.lane.b32.xlu0 %v311, 24
      %v1838 = vpop.permute.xlu0 %1837
      %1839 = vrot.lane.b32.xlu0 %v312, 24
      %v1840 = vpop.permute.xlu0 %1839
      %1841 = vrot.lane.b32.xlu0 %v314, 24
      %v1842 = vpop.permute.xlu0 %1841
      %1843 = vrot.lane.b32.xlu0 %v315, 24
      %v1844 = vpop.permute.xlu0 %1843
      %1845 = vrot.lane.b32.xlu0 %v317, 24
      %v1846 = vpop.permute.xlu0 %1845
      %1847 = vrot.lane.b32.xlu0 %v318, 24
      %v1848 = vpop.permute.xlu0 %1847
      %1849 = vrot.lane.b32.xlu0 %v320, 24
      %v1850 = vpop.permute.xlu0 %1849
      %1851 = vrot.lane.b32.xlu0 %v321, 24
      %v1852 = vpop.permute.xlu0 %1851
      %1853 = vrot.lane.b32.xlu0 %v323, 24
      %v1854 = vpop.permute.xlu0 %1853
      %1855 = vrot.lane.b32.xlu0 %v324, 24
      %v1856 = vpop.permute.xlu0 %1855
      %1857 = vrot.lane.b32.xlu0 %v326, 24
      %v1858 = vpop.permute.xlu0 %1857
      %1859 = vrot.lane.b32.xlu0 %v327, 24
      %v1860 = vpop.permute.xlu0 %1859
      %1861 = vrot.lane.b32.xlu0 %v329, 24
      %v1862 = vpop.permute.xlu0 %1861
      %1863 = vrot.lane.b32.xlu0 %v330, 24
      %v1864 = vpop.permute.xlu0 %1863
      %1865 = vrot.lane.b32.xlu0 %v332, 24
      %v1866 = vpop.permute.xlu0 %1865
      %1867 = vrot.lane.b32.xlu0 %v333, 24
      %v1868 = vpop.permute.xlu0 %1867
      %1869 = vrot.lane.b32.xlu0 %v335, 24
      %v1870 = vpop.permute.xlu0 %1869
      %1871 = vrot.lane.b32.xlu0 %v336, 24
      %v1872 = vpop.permute.xlu0 %1871
      %1873 = vrot.lane.b32.xlu0 %v338, 24
      %v1874 = vpop.permute.xlu0 %1873
      %1875 = vrot.lane.b32.xlu0 %v339, 24
      %v1876 = vpop.permute.xlu0 %1875
      %v1943 = vrot.slane %v284, 1
      %v1944 = vrot.slane %v285, 1
      %v1945 = vsel %vm437, %v1943, %v1944
      %v1946 = vrot.slane %v286, 1
      %v1947 = vsel %vm437, %v1944, %v1946
      %v1948 = vrot.slane %v338, 1
      %v1949 = vrot.slane %v339, 1
      %v1950 = vsel %vm437, %v1948, %v1949
      %v1951 = vrot.slane %v340, 1
      %v1952 = vsel %vm437, %v1949, %v1951
      %1953 = vrot.lane.b32.xlu0 %v450, 28
      %v1954 = vpop.permute.xlu0 %1953
      %1955 = vrot.lane.b32.xlu0 %v452, 28
      %v1956 = vpop.permute.xlu0 %1955
      %1957 = vrot.lane.b32.xlu0 %v455, 28
      %v1958 = vpop.permute.xlu0 %1957
      %1959 = vrot.lane.b32.xlu0 %v457, 28
      %v1960 = vpop.permute.xlu0 %1959
      %1961 = vrot.lane.b32.xlu0 %v460, 28
      %v1962 = vpop.permute.xlu0 %1961
      %1963 = vrot.lane.b32.xlu0 %v462, 28
      %v1964 = vpop.permute.xlu0 %1963
      %1965 = vrot.lane.b32.xlu0 %v465, 28
      %v1966 = vpop.permute.xlu0 %1965
      %1967 = vrot.lane.b32.xlu0 %v467, 28
      %v1968 = vpop.permute.xlu0 %1967
      %1969 = vrot.lane.b32.xlu0 %v470, 28
      %v1970 = vpop.permute.xlu0 %1969
      %1971 = vrot.lane.b32.xlu0 %v472, 28
      %v1972 = vpop.permute.xlu0 %1971
      %1973 = vrot.lane.b32.xlu0 %v475, 28
      %v1974 = vpop.permute.xlu0 %1973
      %1975 = vrot.lane.b32.xlu0 %v477, 28
      %v1976 = vpop.permute.xlu0 %1975
      %1977 = vrot.lane.b32.xlu0 %v480, 28
      %v1978 = vpop.permute.xlu0 %1977
      %1979 = vrot.lane.b32.xlu0 %v482, 28
      %v1980 = vpop.permute.xlu0 %1979
      %1981 = vrot.lane.b32.xlu0 %v485, 28
      %v1982 = vpop.permute.xlu0 %1981
      %1983 = vrot.lane.b32.xlu0 %v487, 28
      %v1984 = vpop.permute.xlu0 %1983
      %1985 = vrot.lane.b32.xlu0 %v490, 28
      %v1986 = vpop.permute.xlu0 %1985
      %1987 = vrot.lane.b32.xlu0 %v492, 28
      %v1988 = vpop.permute.xlu0 %1987
      %1989 = vrot.lane.b32.xlu0 %v495, 28
      %v1990 = vpop.permute.xlu0 %1989
      %1991 = vrot.lane.b32.xlu0 %v497, 28
      %v1992 = vpop.permute.xlu0 %1991
      %1993 = vrot.lane.b32.xlu0 %v500, 28
      %v1994 = vpop.permute.xlu0 %1993
      %1995 = vrot.lane.b32.xlu0 %v502, 28
      %v1996 = vpop.permute.xlu0 %1995
      %1997 = vrot.lane.b32.xlu0 %v505, 28
      %v1998 = vpop.permute.xlu0 %1997
      %1999 = vrot.lane.b32.xlu0 %v507, 28
      %v2000 = vpop.permute.xlu0 %1999
      %2001 = vrot.lane.b32.xlu0 %v510, 28
      %v2002 = vpop.permute.xlu0 %2001
      %2003 = vrot.lane.b32.xlu0 %v512, 28
      %v2004 = vpop.permute.xlu0 %2003
      %2005 = vrot.lane.b32.xlu0 %v515, 28
      %v2006 = vpop.permute.xlu0 %2005
      %2007 = vrot.lane.b32.xlu0 %v517, 28
      %v2008 = vpop.permute.xlu0 %2007
      %2009 = vrot.lane.b32.xlu0 %v1343, 28
      %v2010 = vpop.permute.xlu0 %2009
      %2011 = vrot.lane.b32.xlu0 %v1345, 28
      %v2012 = vpop.permute.xlu0 %2011
      %2013 = vrot.lane.b32.xlu0 %v1945, 28
      %v2014 = vpop.permute.xlu0 %2013
      %2015 = vrot.lane.b32.xlu0 %v1947, 28
      %v2016 = vpop.permute.xlu0 %2015
      %2017 = vrot.lane.b32.xlu0 %v530, 28
      %v2018 = vpop.permute.xlu0 %2017
      %2019 = vrot.lane.b32.xlu0 %v532, 28
      %v2020 = vpop.permute.xlu0 %2019
      %2021 = vrot.lane.b32.xlu0 %v535, 28
      %v2022 = vpop.permute.xlu0 %2021
      %2023 = vrot.lane.b32.xlu0 %v537, 28
      %v2024 = vpop.permute.xlu0 %2023
      %2025 = vrot.lane.b32.xlu0 %v540, 28
      %v2026 = vpop.permute.xlu0 %2025
      %2027 = vrot.lane.b32.xlu0 %v542, 28
      %v2028 = vpop.permute.xlu0 %2027
      %2029 = vrot.lane.b32.xlu0 %v545, 28
      %v2030 = vpop.permute.xlu0 %2029
      %2031 = vrot.lane.b32.xlu0 %v547, 28
      %v2032 = vpop.permute.xlu0 %2031
      %2033 = vrot.lane.b32.xlu0 %v550, 28
      %v2034 = vpop.permute.xlu0 %2033
      %2035 = vrot.lane.b32.xlu0 %v552, 28
      %v2036 = vpop.permute.xlu0 %2035
      %2037 = vrot.lane.b32.xlu0 %v555, 28
      %v2038 = vpop.permute.xlu0 %2037
      %2039 = vrot.lane.b32.xlu0 %v557, 28
      %v2040 = vpop.permute.xlu0 %2039
      %2041 = vrot.lane.b32.xlu0 %v560, 28
      %v2042 = vpop.permute.xlu0 %2041
      %2043 = vrot.lane.b32.xlu0 %v562, 28
      %v2044 = vpop.permute.xlu0 %2043
      %2045 = vrot.lane.b32.xlu0 %v565, 28
      %v2046 = vpop.permute.xlu0 %2045
      %2047 = vrot.lane.b32.xlu0 %v567, 28
      %v2048 = vpop.permute.xlu0 %2047
      %2049 = vrot.lane.b32.xlu0 %v570, 28
      %v2050 = vpop.permute.xlu0 %2049
      %2051 = vrot.lane.b32.xlu0 %v572, 28
      %v2052 = vpop.permute.xlu0 %2051
      %2053 = vrot.lane.b32.xlu0 %v575, 28
      %v2054 = vpop.permute.xlu0 %2053
      %2055 = vrot.lane.b32.xlu0 %v577, 28
      %v2056 = vpop.permute.xlu0 %2055
      %2057 = vrot.lane.b32.xlu0 %v580, 28
      %v2058 = vpop.permute.xlu0 %2057
      %2059 = vrot.lane.b32.xlu0 %v582, 28
      %v2060 = vpop.permute.xlu0 %2059
      %2061 = vrot.lane.b32.xlu0 %v585, 28
      %v2062 = vpop.permute.xlu0 %2061
      %2063 = vrot.lane.b32.xlu0 %v587, 28
      %v2064 = vpop.permute.xlu0 %2063
      %2065 = vrot.lane.b32.xlu0 %v590, 28
      %v2066 = vpop.permute.xlu0 %2065
      %2067 = vrot.lane.b32.xlu0 %v592, 28
      %v2068 = vpop.permute.xlu0 %2067
      %2069 = vrot.lane.b32.xlu0 %v595, 28
      %v2070 = vpop.permute.xlu0 %2069
      %2071 = vrot.lane.b32.xlu0 %v597, 28
      %v2072 = vpop.permute.xlu0 %2071
      %2073 = vrot.lane.b32.xlu0 %v1348, 28
      %v2074 = vpop.permute.xlu0 %2073
      %2075 = vrot.lane.b32.xlu0 %v1350, 28
      %v2076 = vpop.permute.xlu0 %2075
      %2077 = vrot.lane.b32.xlu0 %v1950, 28
      %v2078 = vpop.permute.xlu0 %2077
      %2079 = vrot.lane.b32.xlu0 %v1952, 28
      %v2080 = vpop.permute.xlu0 %2079
      %v2145 = vrot.slane %v284, 2
      %v2146 = vrot.slane %v285, 2
      %v2147 = vsel %vm790, %v2145, %v2146
      %v2148 = vrot.slane %v286, 2
      %v2149 = vsel %vm790, %v2146, %v2148
      %v2150 = vrot.slane %v338, 2
      %v2151 = vrot.slane %v339, 2
      %v2152 = vsel %vm790, %v2150, %v2151
      %v2153 = vrot.slane %v340, 2
      %v2154 = vsel %vm790, %v2151, %v2153
      %2155 = vrot.lane.b32.xlu0 %v803, 32
      %v2156 = vpop.permute.xlu0 %2155
      %2157 = vrot.lane.b32.xlu0 %v805, 32
      %v2158 = vpop.permute.xlu0 %2157
      %2159 = vrot.lane.b32.xlu0 %v808, 32
      %v2160 = vpop.permute.xlu0 %2159
      %2161 = vrot.lane.b32.xlu0 %v810, 32
      %v2162 = vpop.permute.xlu0 %2161
      %2163 = vrot.lane.b32.xlu0 %v813, 32
      %v2164 = vpop.permute.xlu0 %2163
      %2165 = vrot.lane.b32.xlu0 %v815, 32
      %v2166 = vpop.permute.xlu0 %2165
      %2167 = vrot.lane.b32.xlu0 %v818, 32
      %v2168 = vpop.permute.xlu0 %2167
      %2169 = vrot.lane.b32.xlu0 %v820, 32
      %v2170 = vpop.permute.xlu0 %2169
      %2171 = vrot.lane.b32.xlu0 %v823, 32
      %v2172 = vpop.permute.xlu0 %2171
      %2173 = vrot.lane.b32.xlu0 %v825, 32
      %v2174 = vpop.permute.xlu0 %2173
      %2175 = vrot.lane.b32.xlu0 %v828, 32
      %v2176 = vpop.permute.xlu0 %2175
      %2177 = vrot.lane.b32.xlu0 %v830, 32
      %v2178 = vpop.permute.xlu0 %2177
      %2179 = vrot.lane.b32.xlu0 %v833, 32
      %v2180 = vpop.permute.xlu0 %2179
      %2181 = vrot.lane.b32.xlu0 %v835, 32
      %v2182 = vpop.permute.xlu0 %2181
      %2183 = vrot.lane.b32.xlu0 %v838, 32
      %v2184 = vpop.permute.xlu0 %2183
      %2185 = vrot.lane.b32.xlu0 %v840, 32
      %v2186 = vpop.permute.xlu0 %2185
      %2187 = vrot.lane.b32.xlu0 %v843, 32
      %v2188 = vpop.permute.xlu0 %2187
      %2189 = vrot.lane.b32.xlu0 %v845, 32
      %v2190 = vpop.permute.xlu0 %2189
      %2191 = vrot.lane.b32.xlu0 %v848, 32
      %v2192 = vpop.permute.xlu0 %2191
      %2193 = vrot.lane.b32.xlu0 %v850, 32
      %v2194 = vpop.permute.xlu0 %2193
      %2195 = vrot.lane.b32.xlu0 %v853, 32
      %v2196 = vpop.permute.xlu0 %2195
      %2197 = vrot.lane.b32.xlu0 %v855, 32
      %v2198 = vpop.permute.xlu0 %2197
      %2199 = vrot.lane.b32.xlu0 %v858, 32
      %v2200 = vpop.permute.xlu0 %2199
      %2201 = vrot.lane.b32.xlu0 %v860, 32
      %v2202 = vpop.permute.xlu0 %2201
      %2203 = vrot.lane.b32.xlu0 %v863, 32
      %v2204 = vpop.permute.xlu0 %2203
      %2205 = vrot.lane.b32.xlu0 %v865, 32
      %v2206 = vpop.permute.xlu0 %2205
      %2207 = vrot.lane.b32.xlu0 %v868, 32
      %v2208 = vpop.permute.xlu0 %2207
      %2209 = vrot.lane.b32.xlu0 %v870, 32
      %v2210 = vpop.permute.xlu0 %2209
      %2211 = vrot.lane.b32.xlu0 %v1545, 32
      %v2212 = vpop.permute.xlu0 %2211
      %2213 = vrot.lane.b32.xlu0 %v1547, 32
      %v2214 = vpop.permute.xlu0 %2213
      %2215 = vrot.lane.b32.xlu0 %v2147, 32
      %v2216 = vpop.permute.xlu0 %2215
      %2217 = vrot.lane.b32.xlu0 %v2149, 32
      %v2218 = vpop.permute.xlu0 %2217
      %2219 = vrot.lane.b32.xlu0 %v883, 32
      %v2220 = vpop.permute.xlu0 %2219
      %2221 = vrot.lane.b32.xlu0 %v885, 32
      %v2222 = vpop.permute.xlu0 %2221
      %2223 = vrot.lane.b32.xlu0 %v888, 32
      %v2224 = vpop.permute.xlu0 %2223
      %2225 = vrot.lane.b32.xlu0 %v890, 32
      %v2226 = vpop.permute.xlu0 %2225
      %2227 = vrot.lane.b32.xlu0 %v893, 32
      %v2228 = vpop.permute.xlu0 %2227
      %2229 = vrot.lane.b32.xlu0 %v895, 32
      %v2230 = vpop.permute.xlu0 %2229
      %2231 = vrot.lane.b32.xlu0 %v898, 32
      %v2232 = vpop.permute.xlu0 %2231
      %2233 = vrot.lane.b32.xlu0 %v900, 32
      %v2234 = vpop.permute.xlu0 %2233
      %2235 = vrot.lane.b32.xlu0 %v903, 32
      %v2236 = vpop.permute.xlu0 %2235
      %2237 = vrot.lane.b32.xlu0 %v905, 32
      %v2238 = vpop.permute.xlu0 %2237
      %2239 = vrot.lane.b32.xlu0 %v908, 32
      %v2240 = vpop.permute.xlu0 %2239
      %2241 = vrot.lane.b32.xlu0 %v910, 32
      %v2242 = vpop.permute.xlu0 %2241
      %2243 = vrot.lane.b32.xlu0 %v913, 32
      %v2244 = vpop.permute.xlu0 %2243
      %2245 = vrot.lane.b32.xlu0 %v915, 32
      %v2246 = vpop.permute.xlu0 %2245
      %2247 = vrot.lane.b32.xlu0 %v918, 32
      %v2248 = vpop.permute.xlu0 %2247
      %2249 = vrot.lane.b32.xlu0 %v920, 32
      %v2250 = vpop.permute.xlu0 %2249
      %2251 = vrot.lane.b32.xlu0 %v923, 32
      %v2252 = vpop.permute.xlu0 %2251
      %2253 = vrot.lane.b32.xlu0 %v925, 32
      %v2254 = vpop.permute.xlu0 %2253
      %2255 = vrot.lane.b32.xlu0 %v928, 32
      %v2256 = vpop.permute.xlu0 %2255
      %2257 = vrot.lane.b32.xlu0 %v930, 32
      %v2258 = vpop.permute.xlu0 %2257
      %2259 = vrot.lane.b32.xlu0 %v933, 32
      %v2260 = vpop.permute.xlu0 %2259
      %2261 = vrot.lane.b32.xlu0 %v935, 32
      %v2262 = vpop.permute.xlu0 %2261
      %2263 = vrot.lane.b32.xlu0 %v938, 32
      %v2264 = vpop.permute.xlu0 %2263
      %2265 = vrot.lane.b32.xlu0 %v940, 32
      %v2266 = vpop.permute.xlu0 %2265
      %2267 = vrot.lane.b32.xlu0 %v943, 32
      %v2268 = vpop.permute.xlu0 %2267
      %2269 = vrot.lane.b32.xlu0 %v945, 32
      %v2270 = vpop.permute.xlu0 %2269
      %2271 = vrot.lane.b32.xlu0 %v948, 32
      %v2272 = vpop.permute.xlu0 %2271
      %2273 = vrot.lane.b32.xlu0 %v950, 32
      %v2274 = vpop.permute.xlu0 %2273
      %2275 = vrot.lane.b32.xlu0 %v1550, 32
      %v2276 = vpop.permute.xlu0 %2275
      %2277 = vrot.lane.b32.xlu0 %v1552, 32
      %v2278 = vpop.permute.xlu0 %2277
      %2279 = vrot.lane.b32.xlu0 %v2152, 32
      %v2280 = vpop.permute.xlu0 %2279
      %2281 = vrot.lane.b32.xlu0 %v2154, 32
      %v2282 = vpop.permute.xlu0 %2281
      %vm2347 = vcmask 31744
      %v2348 = vsel %vm2347, %v233, %v599
      %v2349 = vsel %vm2347, %v234, %v601
      %v2350 = vsel %vm2347, %v236, %v603
      %v2351 = vsel %vm2347, %v237, %v605
      %v2352 = vsel %vm2347, %v239, %v607
      %v2353 = vsel %vm2347, %v240, %v609
      %v2354 = vsel %vm2347, %v242, %v611
      %v2355 = vsel %vm2347, %v243, %v613
      %v2356 = vsel %vm2347, %v245, %v615
      %v2357 = vsel %vm2347, %v246, %v617
      %v2358 = vsel %vm2347, %v248, %v619
      %v2359 = vsel %vm2347, %v249, %v621
      %v2360 = vsel %vm2347, %v251, %v623
      %v2361 = vsel %vm2347, %v252, %v625
      %v2362 = vsel %vm2347, %v254, %v627
      %v2363 = vsel %vm2347, %v255, %v629
      %v2364 = vsel %vm2347, %v257, %v631
      %v2365 = vsel %vm2347, %v258, %v633
      %v2366 = vsel %vm2347, %v260, %v635
      %v2367 = vsel %vm2347, %v261, %v637
      %v2368 = vsel %vm2347, %v263, %v639
      %v2369 = vsel %vm2347, %v264, %v641
      %v2370 = vsel %vm2347, %v266, %v643
      %v2371 = vsel %vm2347, %v267, %v645
      %v2372 = vsel %vm2347, %v269, %v647
      %v2373 = vsel %vm2347, %v270, %v649
      %v2374 = vsel %vm2347, %v272, %v651
      %v2375 = vsel %vm2347, %v273, %v653
      %v2376 = vsel %vm2347, %v275, %v655
      %v2377 = vsel %vm2347, %v276, %v657
      %v2378 = vsel %vm2347, %v278, %v659
      %v2379 = vsel %vm2347, %v279, %v661
      %v2380 = vsel %vm2347, %v287, %v663
      %v2381 = vsel %vm2347, %v288, %v665
      %v2382 = vsel %vm2347, %v290, %v667
      %v2383 = vsel %vm2347, %v291, %v669
      %v2384 = vsel %vm2347, %v293, %v671
      %v2385 = vsel %vm2347, %v294, %v673
      %v2386 = vsel %vm2347, %v296, %v675
      %v2387 = vsel %vm2347, %v297, %v677
      %v2388 = vsel %vm2347, %v299, %v679
      %v2389 = vsel %vm2347, %v300, %v681
      %v2390 = vsel %vm2347, %v302, %v683
      %v2391 = vsel %vm2347, %v303, %v685
      %v2392 = vsel %vm2347, %v305, %v687
      %v2393 = vsel %vm2347, %v306, %v689
      %v2394 = vsel %vm2347, %v308, %v691
      %v2395 = vsel %vm2347, %v309, %v693
      %v2396 = vsel %vm2347, %v311, %v695
      %v2397 = vsel %vm2347, %v312, %v697
      %v2398 = vsel %vm2347, %v314, %v699
      %v2399 = vsel %vm2347, %v315, %v701
      %v2400 = vsel %vm2347, %v317, %v703
      %v2401 = vsel %vm2347, %v318, %v705
      %v2402 = vsel %vm2347, %v320, %v707
      %v2403 = vsel %vm2347, %v321, %v709
      %v2404 = vsel %vm2347, %v323, %v711
      %v2405 = vsel %vm2347, %v324, %v713
      %v2406 = vsel %vm2347, %v326, %v715
      %v2407 = vsel %vm2347, %v327, %v717
      %v2408 = vsel %vm2347, %v329, %v719
      %v2409 = vsel %vm2347, %v330, %v721
      %v2410 = vsel %vm2347, %v332, %v723
      %v2411 = vsel %vm2347, %v333, %v725
      %vm2412 = vcmask 64512
      %v2413 = vsel %vm2412, %v2348, %v952
      %v2414 = vsel %vm2412, %v2349, %v954
      %v2415 = vsel %vm2412, %v2350, %v956
      %v2416 = vsel %vm2412, %v2351, %v958
      %v2417 = vsel %vm2412, %v2352, %v960
      %v2418 = vsel %vm2412, %v2353, %v962
      %v2419 = vsel %vm2412, %v2354, %v964
      %v2420 = vsel %vm2412, %v2355, %v966
      %v2421 = vsel %vm2412, %v2356, %v968
      %v2422 = vsel %vm2412, %v2357, %v970
      %v2423 = vsel %vm2412, %v2358, %v972
      %v2424 = vsel %vm2412, %v2359, %v974
      %v2425 = vsel %vm2412, %v2360, %v976
      %v2426 = vsel %vm2412, %v2361, %v978
      %v2427 = vsel %vm2412, %v2362, %v980
      %v2428 = vsel %vm2412, %v2363, %v982
      %v2429 = vsel %vm2412, %v2364, %v984
      %v2430 = vsel %vm2412, %v2365, %v986
      %v2431 = vsel %vm2412, %v2366, %v988
      %v2432 = vsel %vm2412, %v2367, %v990
      %v2433 = vsel %vm2412, %v2368, %v992
      %v2434 = vsel %vm2412, %v2369, %v994
      %v2435 = vsel %vm2412, %v2370, %v996
      %v2436 = vsel %vm2412, %v2371, %v998
      %v2437 = vsel %vm2412, %v2372, %v1000
      %v2438 = vsel %vm2412, %v2373, %v1002
      %v2439 = vsel %vm2412, %v2374, %v1004
      %v2440 = vsel %vm2412, %v2375, %v1006
      %v2441 = vsel %vm2412, %v2376, %v1008
      %v2442 = vsel %vm2412, %v2377, %v1010
      %v2443 = vsel %vm2412, %v2378, %v1012
      %v2444 = vsel %vm2412, %v2379, %v1014
      %v2445 = vsel %vm2412, %v2380, %v1016
      %v2446 = vsel %vm2412, %v2381, %v1018
      %v2447 = vsel %vm2412, %v2382, %v1020
      %v2448 = vsel %vm2412, %v2383, %v1022
      %v2449 = vsel %vm2412, %v2384, %v1024
      %v2450 = vsel %vm2412, %v2385, %v1026
      %v2451 = vsel %vm2412, %v2386, %v1028
      %v2452 = vsel %vm2412, %v2387, %v1030
      %v2453 = vsel %vm2412, %v2388, %v1032
      %v2454 = vsel %vm2412, %v2389, %v1034
      %v2455 = vsel %vm2412, %v2390, %v1036
      %v2456 = vsel %vm2412, %v2391, %v1038
      %v2457 = vsel %vm2412, %v2392, %v1040
      %v2458 = vsel %vm2412, %v2393, %v1042
      %v2459 = vsel %vm2412, %v2394, %v1044
      %v2460 = vsel %vm2412, %v2395, %v1046
      %v2461 = vsel %vm2412, %v2396, %v1048
      %v2462 = vsel %vm2412, %v2397, %v1050
      %v2463 = vsel %vm2412, %v2398, %v1052
      %v2464 = vsel %vm2412, %v2399, %v1054
      %v2465 = vsel %vm2412, %v2400, %v1056
      %v2466 = vsel %vm2412, %v2401, %v1058
      %v2467 = vsel %vm2412, %v2402, %v1060
      %v2468 = vsel %vm2412, %v2403, %v1062
      %v2469 = vsel %vm2412, %v2404, %v1064
      %v2470 = vsel %vm2412, %v2405, %v1066
      %v2471 = vsel %vm2412, %v2406, %v1068
      %v2472 = vsel %vm2412, %v2407, %v1070
      %v2473 = vsel %vm2412, %v2408, %v1072
      %v2474 = vsel %vm2412, %v2409, %v1074
      %v2475 = vsel %vm2412, %v2410, %v1076
      %v2476 = vsel %vm2412, %v2411, %v1078
      %vm2477 = vcmask 97280
      %v2478 = vsel %vm2477, %v2413, %v1148
      %v2479 = vsel %vm2477, %v2414, %v1150
      %v2480 = vsel %vm2477, %v2415, %v1152
      %v2481 = vsel %vm2477, %v2416, %v1154
      %v2482 = vsel %vm2477, %v2417, %v1156
      %v2483 = vsel %vm2477, %v2418, %v1158
      %v2484 = vsel %vm2477, %v2419, %v1160
      %v2485 = vsel %vm2477, %v2420, %v1162
      %v2486 = vsel %vm2477, %v2421, %v1164
      %v2487 = vsel %vm2477, %v2422, %v1166
      %v2488 = vsel %vm2477, %v2423, %v1168
      %v2489 = vsel %vm2477, %v2424, %v1170
      %v2490 = vsel %vm2477, %v2425, %v1172
      %v2491 = vsel %vm2477, %v2426, %v1174
      %v2492 = vsel %vm2477, %v2427, %v1176
      %v2493 = vsel %vm2477, %v2428, %v1178
      %v2494 = vsel %vm2477, %v2429, %v1180
      %v2495 = vsel %vm2477, %v2430, %v1182
      %v2496 = vsel %vm2477, %v2431, %v1184
      %v2497 = vsel %vm2477, %v2432, %v1186
      %v2498 = vsel %vm2477, %v2433, %v1188
      %v2499 = vsel %vm2477, %v2434, %v1190
      %v2500 = vsel %vm2477, %v2435, %v1192
      %v2501 = vsel %vm2477, %v2436, %v1194
      %v2502 = vsel %vm2477, %v2437, %v1196
      %v2503 = vsel %vm2477, %v2438, %v1198
      %v2504 = vsel %vm2477, %v2439, %v1200
      %v2505 = vsel %vm2477, %v2440, %v1202
      %v2506 = vsel %vm2477, %v2441, %v1204
      %v2507 = vsel %vm2477, %v2442, %v1206
      %v2508 = vsel %vm2477, %v2443, %v1208
      %v2509 = vsel %vm2477, %v2444, %v1210
      %v2510 = vsel %vm2477, %v2445, %v1212
      %v2511 = vsel %vm2477, %v2446, %v1214
      %v2512 = vsel %vm2477, %v2447, %v1216
      %v2513 = vsel %vm2477, %v2448, %v1218
      %v2514 = vsel %vm2477, %v2449, %v1220
      %v2515 = vsel %vm2477, %v2450, %v1222
      %v2516 = vsel %vm2477, %v2451, %v1224
      %v2517 = vsel %vm2477, %v2452, %v1226
      %v2518 = vsel %vm2477, %v2453, %v1228
      %v2519 = vsel %vm2477, %v2454, %v1230
      %v2520 = vsel %vm2477, %v2455, %v1232
      %v2521 = vsel %vm2477, %v2456, %v1234
      %v2522 = vsel %vm2477, %v2457, %v1236
      %v2523 = vsel %vm2477, %v2458, %v1238
      %v2524 = vsel %vm2477, %v2459, %v1240
      %v2525 = vsel %vm2477, %v2460, %v1242
      %v2526 = vsel %vm2477, %v2461, %v1244
      %v2527 = vsel %vm2477, %v2462, %v1246
      %v2528 = vsel %vm2477, %v2463, %v1248
      %v2529 = vsel %vm2477, %v2464, %v1250
      %v2530 = vsel %vm2477, %v2465, %v1252
      %v2531 = vsel %vm2477, %v2466, %v1254
      %v2532 = vsel %vm2477, %v2467, %v1256
      %v2533 = vsel %vm2477, %v2468, %v1258
      %v2534 = vsel %vm2477, %v2469, %v1260
      %v2535 = vsel %vm2477, %v2470, %v1262
      %v2536 = vsel %vm2477, %v2471, %v1264
      %v2537 = vsel %vm2477, %v2472, %v1266
      %v2538 = vsel %vm2477, %v2473, %v1268
      %v2539 = vsel %vm2477, %v2474, %v1270
      %v2540 = vsel %vm2477, %v2475, %v1272
      %v2541 = vsel %vm2477, %v2476, %v1274
      %vm2542 = vcmask 130048
      %v2543 = vsel %vm2542, %v2478, %v1352
      %v2544 = vsel %vm2542, %v2479, %v1354
      %v2545 = vsel %vm2542, %v2480, %v1356
      %v2546 = vsel %vm2542, %v2481, %v1358
      %v2547 = vsel %vm2542, %v2482, %v1360
      %v2548 = vsel %vm2542, %v2483, %v1362
      %v2549 = vsel %vm2542, %v2484, %v1364
      %v2550 = vsel %vm2542, %v2485, %v1366
      %v2551 = vsel %vm2542, %v2486, %v1368
      %v2552 = vsel %vm2542, %v2487, %v1370
      %v2553 = vsel %vm2542, %v2488, %v1372
      %v2554 = vsel %vm2542, %v2489, %v1374
      %v2555 = vsel %vm2542, %v2490, %v1376
      %v2556 = vsel %vm2542, %v2491, %v1378
      %v2557 = vsel %vm2542, %v2492, %v1380
      %v2558 = vsel %vm2542, %v2493, %v1382
      %v2559 = vsel %vm2542, %v2494, %v1384
      %v2560 = vsel %vm2542, %v2495, %v1386
      %v2561 = vsel %vm2542, %v2496, %v1388
      %v2562 = vsel %vm2542, %v2497, %v1390
      %v2563 = vsel %vm2542, %v2498, %v1392
      %v2564 = vsel %vm2542, %v2499, %v1394
      %v2565 = vsel %vm2542, %v2500, %v1396
      %v2566 = vsel %vm2542, %v2501, %v1398
      %v2567 = vsel %vm2542, %v2502, %v1400
      %v2568 = vsel %vm2542, %v2503, %v1402
      %v2569 = vsel %vm2542, %v2504, %v1404
      %v2570 = vsel %vm2542, %v2505, %v1406
      %v2571 = vsel %vm2542, %v2506, %v1408
      %v2572 = vsel %vm2542, %v2507, %v1410
      %v2573 = vsel %vm2542, %v2508, %v1412
      %v2574 = vsel %vm2542, %v2509, %v1414
      %v2575 = vsel %vm2542, %v2510, %v1416
      %v2576 = vsel %vm2542, %v2511, %v1418
      %v2577 = vsel %vm2542, %v2512, %v1420
      %v2578 = vsel %vm2542, %v2513, %v1422
      %v2579 = vsel %vm2542, %v2514, %v1424
      %v2580 = vsel %vm2542, %v2515, %v1426
      %v2581 = vsel %vm2542, %v2516, %v1428
      %v2582 = vsel %vm2542, %v2517, %v1430
      %v2583 = vsel %vm2542, %v2518, %v1432
      %v2584 = vsel %vm2542, %v2519, %v1434
      %v2585 = vsel %vm2542, %v2520, %v1436
      %v2586 = vsel %vm2542, %v2521, %v1438
      %v2587 = vsel %vm2542, %v2522, %v1440
      %v2588 = vsel %vm2542, %v2523, %v1442
      %v2589 = vsel %vm2542, %v2524, %v1444
      %v2590 = vsel %vm2542, %v2525, %v1446
      %v2591 = vsel %vm2542, %v2526, %v1448
      %v2592 = vsel %vm2542, %v2527, %v1450
      %v2593 = vsel %vm2542, %v2528, %v1452
      %v2594 = vsel %vm2542, %v2529, %v1454
      %v2595 = vsel %vm2542, %v2530, %v1456
      %v2596 = vsel %vm2542, %v2531, %v1458
      %v2597 = vsel %vm2542, %v2532, %v1460
      %v2598 = vsel %vm2542, %v2533, %v1462
      %v2599 = vsel %vm2542, %v2534, %v1464
      %v2600 = vsel %vm2542, %v2535, %v1466
      %v2601 = vsel %vm2542, %v2536, %v1468
      %v2602 = vsel %vm2542, %v2537, %v1470
      %v2603 = vsel %vm2542, %v2538, %v1472
      %v2604 = vsel %vm2542, %v2539, %v1474
      %v2605 = vsel %vm2542, %v2540, %v1476
      %v2606 = vsel %vm2542, %v2541, %v1478
      %vm2607 = vcmask 162816
      %v2608 = vsel %vm2607, %v2543, %v1554
      %v2609 = vsel %vm2607, %v2544, %v1556
      %v2610 = vsel %vm2607, %v2545, %v1558
      %v2611 = vsel %vm2607, %v2546, %v1560
      %v2612 = vsel %vm2607, %v2547, %v1562
      %v2613 = vsel %vm2607, %v2548, %v1564
      %v2614 = vsel %vm2607, %v2549, %v1566
      %v2615 = vsel %vm2607, %v2550, %v1568
      %v2616 = vsel %vm2607, %v2551, %v1570
      %v2617 = vsel %vm2607, %v2552, %v1572
      %v2618 = vsel %vm2607, %v2553, %v1574
      %v2619 = vsel %vm2607, %v2554, %v1576
      %v2620 = vsel %vm2607, %v2555, %v1578
      %v2621 = vsel %vm2607, %v2556, %v1580
      %v2622 = vsel %vm2607, %v2557, %v1582
      %v2623 = vsel %vm2607, %v2558, %v1584
      %v2624 = vsel %vm2607, %v2559, %v1586
      %v2625 = vsel %vm2607, %v2560, %v1588
      %v2626 = vsel %vm2607, %v2561, %v1590
      %v2627 = vsel %vm2607, %v2562, %v1592
      %v2628 = vsel %vm2607, %v2563, %v1594
      %v2629 = vsel %vm2607, %v2564, %v1596
      %v2630 = vsel %vm2607, %v2565, %v1598
      %v2631 = vsel %vm2607, %v2566, %v1600
      %v2632 = vsel %vm2607, %v2567, %v1602
      %v2633 = vsel %vm2607, %v2568, %v1604
      %v2634 = vsel %vm2607, %v2569, %v1606
      %v2635 = vsel %vm2607, %v2570, %v1608
      %v2636 = vsel %vm2607, %v2571, %v1610
      %v2637 = vsel %vm2607, %v2572, %v1612
      %v2638 = vsel %vm2607, %v2573, %v1614
      %v2639 = vsel %vm2607, %v2574, %v1616
      %v2640 = vsel %vm2607, %v2575, %v1618
      %v2641 = vsel %vm2607, %v2576, %v1620
      %v2642 = vsel %vm2607, %v2577, %v1622
      %v2643 = vsel %vm2607, %v2578, %v1624
      %v2644 = vsel %vm2607, %v2579, %v1626
      %v2645 = vsel %vm2607, %v2580, %v1628
      %v2646 = vsel %vm2607, %v2581, %v1630
      %v2647 = vsel %vm2607, %v2582, %v1632
      %v2648 = vsel %vm2607, %v2583, %v1634
      %v2649 = vsel %vm2607, %v2584, %v1636
      %v2650 = vsel %vm2607, %v2585, %v1638
      %v2651 = vsel %vm2607, %v2586, %v1640
      %v2652 = vsel %vm2607, %v2587, %v1642
      %v2653 = vsel %vm2607, %v2588, %v1644
      %v2654 = vsel %vm2607, %v2589, %v1646
      %v2655 = vsel %vm2607, %v2590, %v1648
      %v2656 = vsel %vm2607, %v2591, %v1650
      %v2657 = vsel %vm2607, %v2592, %v1652
      %v2658 = vsel %vm2607, %v2593, %v1654
      %v2659 = vsel %vm2607, %v2594, %v1656
      %v2660 = vsel %vm2607, %v2595, %v1658
      %v2661 = vsel %vm2607, %v2596, %v1660
      %v2662 = vsel %vm2607, %v2597, %v1662
      %v2663 = vsel %vm2607, %v2598, %v1664
      %v2664 = vsel %vm2607, %v2599, %v1666
      %v2665 = vsel %vm2607, %v2600, %v1668
      %v2666 = vsel %vm2607, %v2601, %v1670
      %v2667 = vsel %vm2607, %v2602, %v1672
      %v2668 = vsel %vm2607, %v2603, %v1674
      %v2669 = vsel %vm2607, %v2604, %v1676
      %v2670 = vsel %vm2607, %v2605, %v1678
      %v2671 = vsel %vm2607, %v2606, %v1680
      %vm2672 = vcmask 195584
      %v2673 = vsel %vm2672, %v2608, %v1750
      %v2674 = vsel %vm2672, %v2609, %v1752
      %v2675 = vsel %vm2672, %v2610, %v1754
      %v2676 = vsel %vm2672, %v2611, %v1756
      %v2677 = vsel %vm2672, %v2612, %v1758
      %v2678 = vsel %vm2672, %v2613, %v1760
      %v2679 = vsel %vm2672, %v2614, %v1762
      %v2680 = vsel %vm2672, %v2615, %v1764
      %v2681 = vsel %vm2672, %v2616, %v1766
      %v2682 = vsel %vm2672, %v2617, %v1768
      %v2683 = vsel %vm2672, %v2618, %v1770
      %v2684 = vsel %vm2672, %v2619, %v1772
      %v2685 = vsel %vm2672, %v2620, %v1774
      %v2686 = vsel %vm2672, %v2621, %v1776
      %v2687 = vsel %vm2672, %v2622, %v1778
      %v2688 = vsel %vm2672, %v2623, %v1780
      %v2689 = vsel %vm2672, %v2624, %v1782
      %v2690 = vsel %vm2672, %v2625, %v1784
      %v2691 = vsel %vm2672, %v2626, %v1786
      %v2692 = vsel %vm2672, %v2627, %v1788
      %v2693 = vsel %vm2672, %v2628, %v1790
      %v2694 = vsel %vm2672, %v2629, %v1792
      %v2695 = vsel %vm2672, %v2630, %v1794
      %v2696 = vsel %vm2672, %v2631, %v1796
      %v2697 = vsel %vm2672, %v2632, %v1798
      %v2698 = vsel %vm2672, %v2633, %v1800
      %v2699 = vsel %vm2672, %v2634, %v1802
      %v2700 = vsel %vm2672, %v2635, %v1804
      %v2701 = vsel %vm2672, %v2636, %v1806
      %v2702 = vsel %vm2672, %v2637, %v1808
      %v2703 = vsel %vm2672, %v2638, %v1810
      %v2704 = vsel %vm2672, %v2639, %v1812
      %v2705 = vsel %vm2672, %v2640, %v1814
      %v2706 = vsel %vm2672, %v2641, %v1816
      %v2707 = vsel %vm2672, %v2642, %v1818
      %v2708 = vsel %vm2672, %v2643, %v1820
      %v2709 = vsel %vm2672, %v2644, %v1822
      %v2710 = vsel %vm2672, %v2645, %v1824
      %v2711 = vsel %vm2672, %v2646, %v1826
      %v2712 = vsel %vm2672, %v2647, %v1828
      %v2713 = vsel %vm2672, %v2648, %v1830
      %v2714 = vsel %vm2672, %v2649, %v1832
      %v2715 = vsel %vm2672, %v2650, %v1834
      %v2716 = vsel %vm2672, %v2651, %v1836
      %v2717 = vsel %vm2672, %v2652, %v1838
      %v2718 = vsel %vm2672, %v2653, %v1840
      %v2719 = vsel %vm2672, %v2654, %v1842
      %v2720 = vsel %vm2672, %v2655, %v1844
      %v2721 = vsel %vm2672, %v2656, %v1846
      %v2722 = vsel %vm2672, %v2657, %v1848
      %v2723 = vsel %vm2672, %v2658, %v1850
      %v2724 = vsel %vm2672, %v2659, %v1852
      %v2725 = vsel %vm2672, %v2660, %v1854
      %v2726 = vsel %vm2672, %v2661, %v1856
      %v2727 = vsel %vm2672, %v2662, %v1858
      %v2728 = vsel %vm2672, %v2663, %v1860
      %v2729 = vsel %vm2672, %v2664, %v1862
      %v2730 = vsel %vm2672, %v2665, %v1864
      %v2731 = vsel %vm2672, %v2666, %v1866
      %v2732 = vsel %vm2672, %v2667, %v1868
      %v2733 = vsel %vm2672, %v2668, %v1870
      %v2734 = vsel %vm2672, %v2669, %v1872
      %v2735 = vsel %vm2672, %v2670, %v1874
      %v2736 = vsel %vm2672, %v2671, %v1876
      %vm2737 = vcmask 228352
      %v2738 = vsel %vm2737, %v2673, %v1954
      %v2739 = vsel %vm2737, %v2674, %v1956
      %v2740 = vsel %vm2737, %v2675, %v1958
      %v2741 = vsel %vm2737, %v2676, %v1960
      %v2742 = vsel %vm2737, %v2677, %v1962
      %v2743 = vsel %vm2737, %v2678, %v1964
      %v2744 = vsel %vm2737, %v2679, %v1966
      %v2745 = vsel %vm2737, %v2680, %v1968
      %v2746 = vsel %vm2737, %v2681, %v1970
      %v2747 = vsel %vm2737, %v2682, %v1972
      %v2748 = vsel %vm2737, %v2683, %v1974
      %v2749 = vsel %vm2737, %v2684, %v1976
      %v2750 = vsel %vm2737, %v2685, %v1978
      %v2751 = vsel %vm2737, %v2686, %v1980
      %v2752 = vsel %vm2737, %v2687, %v1982
      %v2753 = vsel %vm2737, %v2688, %v1984
      %v2754 = vsel %vm2737, %v2689, %v1986
      %v2755 = vsel %vm2737, %v2690, %v1988
      %v2756 = vsel %vm2737, %v2691, %v1990
      %v2757 = vsel %vm2737, %v2692, %v1992
      %v2758 = vsel %vm2737, %v2693, %v1994
      %v2759 = vsel %vm2737, %v2694, %v1996
      %v2760 = vsel %vm2737, %v2695, %v1998
      %v2761 = vsel %vm2737, %v2696, %v2000
      %v2762 = vsel %vm2737, %v2697, %v2002
      %v2763 = vsel %vm2737, %v2698, %v2004
      %v2764 = vsel %vm2737, %v2699, %v2006
      %v2765 = vsel %vm2737, %v2700, %v2008
      %v2766 = vsel %vm2737, %v2701, %v2010
      %v2767 = vsel %vm2737, %v2702, %v2012
      %v2768 = vsel %vm2737, %v2703, %v2014
      %v2769 = vsel %vm2737, %v2704, %v2016
      %v2770 = vsel %vm2737, %v2705, %v2018
      %v2771 = vsel %vm2737, %v2706, %v2020
      %v2772 = vsel %vm2737, %v2707, %v2022
      %v2773 = vsel %vm2737, %v2708, %v2024
      %v2774 = vsel %vm2737, %v2709, %v2026
      %v2775 = vsel %vm2737, %v2710, %v2028
      %v2776 = vsel %vm2737, %v2711, %v2030
      %v2777 = vsel %vm2737, %v2712, %v2032
      %v2778 = vsel %vm2737, %v2713, %v2034
      %v2779 = vsel %vm2737, %v2714, %v2036
      %v2780 = vsel %vm2737, %v2715, %v2038
      %v2781 = vsel %vm2737, %v2716, %v2040
      %v2782 = vsel %vm2737, %v2717, %v2042
      %v2783 = vsel %vm2737, %v2718, %v2044
      %v2784 = vsel %vm2737, %v2719, %v2046
      %v2785 = vsel %vm2737, %v2720, %v2048
      %v2786 = vsel %vm2737, %v2721, %v2050
      %v2787 = vsel %vm2737, %v2722, %v2052
      %v2788 = vsel %vm2737, %v2723, %v2054
      %v2789 = vsel %vm2737, %v2724, %v2056
      %v2790 = vsel %vm2737, %v2725, %v2058
      %v2791 = vsel %vm2737, %v2726, %v2060
      %v2792 = vsel %vm2737, %v2727, %v2062
      %v2793 = vsel %vm2737, %v2728, %v2064
      %v2794 = vsel %vm2737, %v2729, %v2066
      %v2795 = vsel %vm2737, %v2730, %v2068
      %v2796 = vsel %vm2737, %v2731, %v2070
      %v2797 = vsel %vm2737, %v2732, %v2072
      %v2798 = vsel %vm2737, %v2733, %v2074
      %v2799 = vsel %vm2737, %v2734, %v2076
      %v2800 = vsel %vm2737, %v2735, %v2078
      %v2801 = vsel %vm2737, %v2736, %v2080
      %vm2802 = vcmask 261120
      %v2803 = vsel %vm2802, %v2738, %v2156
      %v2804 = vsel %vm2802, %v2739, %v2158
      %v2805 = vsel %vm2802, %v2740, %v2160
      %v2806 = vsel %vm2802, %v2741, %v2162
      %v2807 = vsel %vm2802, %v2742, %v2164
      %v2808 = vsel %vm2802, %v2743, %v2166
      %v2809 = vsel %vm2802, %v2744, %v2168
      %v2810 = vsel %vm2802, %v2745, %v2170
      %v2811 = vsel %vm2802, %v2746, %v2172
      %v2812 = vsel %vm2802, %v2747, %v2174
      %v2813 = vsel %vm2802, %v2748, %v2176
      %v2814 = vsel %vm2802, %v2749, %v2178
      %v2815 = vsel %vm2802, %v2750, %v2180
      %v2816 = vsel %vm2802, %v2751, %v2182
      %v2817 = vsel %vm2802, %v2752, %v2184
      %v2818 = vsel %vm2802, %v2753, %v2186
      %v2819 = vsel %vm2802, %v2754, %v2188
      %v2820 = vsel %vm2802, %v2755, %v2190
      %v2821 = vsel %vm2802, %v2756, %v2192
      %v2822 = vsel %vm2802, %v2757, %v2194
      %v2823 = vsel %vm2802, %v2758, %v2196
      %v2824 = vsel %vm2802, %v2759, %v2198
      %v2825 = vsel %vm2802, %v2760, %v2200
      %v2826 = vsel %vm2802, %v2761, %v2202
      %v2827 = vsel %vm2802, %v2762, %v2204
      %v2828 = vsel %vm2802, %v2763, %v2206
      %v2829 = vsel %vm2802, %v2764, %v2208
      %v2830 = vsel %vm2802, %v2765, %v2210
      %v2831 = vsel %vm2802, %v2766, %v2212
      %v2832 = vsel %vm2802, %v2767, %v2214
      %v2833 = vsel %vm2802, %v2768, %v2216
      %v2834 = vsel %vm2802, %v2769, %v2218
      %v2835 = vsel %vm2802, %v2770, %v2220
      %v2836 = vsel %vm2802, %v2771, %v2222
      %v2837 = vsel %vm2802, %v2772, %v2224
      %v2838 = vsel %vm2802, %v2773, %v2226
      %v2839 = vsel %vm2802, %v2774, %v2228
      %v2840 = vsel %vm2802, %v2775, %v2230
      %v2841 = vsel %vm2802, %v2776, %v2232
      %v2842 = vsel %vm2802, %v2777, %v2234
      %v2843 = vsel %vm2802, %v2778, %v2236
      %v2844 = vsel %vm2802, %v2779, %v2238
      %v2845 = vsel %vm2802, %v2780, %v2240
      %v2846 = vsel %vm2802, %v2781, %v2242
      %v2847 = vsel %vm2802, %v2782, %v2244
      %v2848 = vsel %vm2802, %v2783, %v2246
      %v2849 = vsel %vm2802, %v2784, %v2248
      %v2850 = vsel %vm2802, %v2785, %v2250
      %v2851 = vsel %vm2802, %v2786, %v2252
      %v2852 = vsel %vm2802, %v2787, %v2254
      %v2853 = vsel %vm2802, %v2788, %v2256
      %v2854 = vsel %vm2802, %v2789, %v2258
      %v2855 = vsel %vm2802, %v2790, %v2260
      %v2856 = vsel %vm2802, %v2791, %v2262
      %v2857 = vsel %vm2802, %v2792, %v2264
      %v2858 = vsel %vm2802, %v2793, %v2266
      %v2859 = vsel %vm2802, %v2794, %v2268
      %v2860 = vsel %vm2802, %v2795, %v2270
      %v2861 = vsel %vm2802, %v2796, %v2272
      %v2862 = vsel %vm2802, %v2797, %v2274
      %v2863 = vsel %vm2802, %v2798, %v2276
      %v2864 = vsel %vm2802, %v2799, %v2278
      %v2865 = vsel %vm2802, %v2800, %v2280
      %v2866 = vsel %vm2802, %v2801, %v2282
      %v2867 = vld [vmem:[%s1] sm:$0xff]
      %v2868 = vld [vmem:[%s1 + $0x8] sm:$0xff]
      %v2869 = vld [vmem:[%s1 + $0x10] sm:$0xff]
      %v2870 = vld [vmem:[%s1 + $0x18] sm:$0xff]
      %v2871 = vld [vmem:[%s1 + $0x20] sm:$0xf]
      %v2872 = vld [vmem:[%s2] sm:$0x1]
      %v2874 = vlaneseq
      %v2875 = vshrl.u32 %v2874, 7
      %v2876 = vsub.s32 0, %v2875
      %v2877 = vrot.slane %v2872, %v2876
      %vm2879 = vcmask 293888
      %v2881 = vsel %vm2879, %v2803, 0
      %v2884 = vsel %vm2879, %v2804, 0
      %v2887 = vsel %vm2879, %v2805, 0
      %v2890 = vsel %vm2879, %v2806, 0
      %v2893 = vsel %vm2879, %v2807, 0
      %v2896 = vsel %vm2879, %v2808, 0
      %v2899 = vsel %vm2879, %v2809, 0
      %v2902 = vsel %vm2879, %v2810, 0
      %v2905 = vsel %vm2879, %v2811, 0
      %v2908 = vsel %vm2879, %v2812, 0
      %v2911 = vsel %vm2879, %v2813, 0
      %v2914 = vsel %vm2879, %v2814, 0
      %v2917 = vsel %vm2879, %v2815, 0
      %v2920 = vsel %vm2879, %v2816, 0
      %v2923 = vsel %vm2879, %v2817, 0
      %v2926 = vsel %vm2879, %v2818, 0
      %v2929 = vsel %vm2879, %v2819, 0
      %v2932 = vsel %vm2879, %v2820, 0
      %v2935 = vsel %vm2879, %v2821, 0
      %v2938 = vsel %vm2879, %v2822, 0
      %v2941 = vsel %vm2879, %v2823, 0
      %v2944 = vsel %vm2879, %v2824, 0
      %v2947 = vsel %vm2879, %v2825, 0
      %v2950 = vsel %vm2879, %v2826, 0
      %v2953 = vsel %vm2879, %v2827, 0
      %v2956 = vsel %vm2879, %v2828, 0
      %v2959 = vsel %vm2879, %v2829, 0
      %v2962 = vsel %vm2879, %v2830, 0
      %v2965 = vsel %vm2879, %v2831, 0
      %v2968 = vsel %vm2879, %v2832, 0
      %v2971 = vsel %vm2879, %v2833, 0
      %v2974 = vsel %vm2879, %v2834, 0
      %v2977 = vsel %vm2879, %v2835, 0
      %v2980 = vsel %vm2879, %v2836, 0
      %v2983 = vsel %vm2879, %v2837, 0
      %v2986 = vsel %vm2879, %v2838, 0
      %v2989 = vsel %vm2879, %v2839, 0
      %v2992 = vsel %vm2879, %v2840, 0
      %v2995 = vsel %vm2879, %v2841, 0
      %v2998 = vsel %vm2879, %v2842, 0
      %v3001 = vsel %vm2879, %v2843, 0
      %v3004 = vsel %vm2879, %v2844, 0
      %v3007 = vsel %vm2879, %v2845, 0
      %v3010 = vsel %vm2879, %v2846, 0
      %v3013 = vsel %vm2879, %v2847, 0
      %v3016 = vsel %vm2879, %v2848, 0
      %v3019 = vsel %vm2879, %v2849, 0
      %v3022 = vsel %vm2879, %v2850, 0
      %v3025 = vsel %vm2879, %v2851, 0
      %v3028 = vsel %vm2879, %v2852, 0
      %v3031 = vsel %vm2879, %v2853, 0
      %v3034 = vsel %vm2879, %v2854, 0
      %v3037 = vsel %vm2879, %v2855, 0
      %v3040 = vsel %vm2879, %v2856, 0
      %v3043 = vsel %vm2879, %v2857, 0
      %v3046 = vsel %vm2879, %v2858, 0
      %v3049 = vsel %vm2879, %v2859, 0
      %v3052 = vsel %vm2879, %v2860, 0
      %v3055 = vsel %vm2879, %v2861, 0
      %v3058 = vsel %vm2879, %v2862, 0
      %v3061 = vsel %vm2879, %v2863, 0
      %v3064 = vsel %vm2879, %v2864, 0
      %v3067 = vsel %vm2879, %v2865, 0
      %v3070 = vsel %vm2879, %v2866, 0
      %vm3072 = vcmask 1043456
      %v3074 = vsel %vm3072, %v2871, 0
      %3076 = vmatprep.subr.mxu0 0.0
      %3077 = vmatpush1.msra.mxu0 %v2867
      %3078 = vmatprep.subr.mxu0 0.0
      %3079 = vmatpush1.msra.mxu0 %v2868
      %3080 = vmatprep.subr.mxu0 0.0
      %3081 = vmatpush1.msra.mxu0 %v2869
      %3082 = vmatprep.subr.mxu0 0.0
      %3083 = vmatpush1.msra.mxu0 %v2870
      %3084 = vmatprep.subr.mxu0 0.0
      %3085 = vmatpush1.msra.mxu0 %v3074
      %3086 = vmatprep.subr.mxu0 0.0
      %3087 = vmatpush1.msra.mxu0 0.0
      %3088 = vmatprep.subr.mxu0 0.0
      %3089 = vmatpush1.msra.mxu0 0.0
      %3090 = vmatprep.subr.mxu0 0.0
      %3091 = vmatpush1.msra.mxu0 0.0
      %3092 = vmatprep.subr.mxu0 0.0
      %3093 = vmatpush1.msra.mxu0 0.0
      %3094 = vmatprep.subr.mxu0 0.0
      %3095 = vmatpush1.msra.mxu0 0.0
      %3096 = vmatprep.subr.mxu0 0.0
      %3097 = vmatpush1.msra.mxu0 0.0
      %3098 = vmatprep.subr.mxu0 0.0
      %3099 = vmatpush1.msra.mxu0 0.0
      %3100 = vmatprep.subr.mxu0 0.0
      %3101 = vmatpush1.msra.mxu0 0.0
      %3102 = vmatprep.subr.mxu0 0.0
      %3103 = vmatpush1.msra.mxu0 0.0
      %3104 = vmatprep.subr.mxu0 0.0
      %3105 = vmatpush1.msra.mxu0 0.0
      %3106 = vmatprep.subr.mxu0 0.0
      %3107 = vmatpush1.msra.mxu0 0.0
      %3108 = vmatprep.subr.mxu0 0.0
      %3109 = vmatpush1.msra.mxu0 0.0
      %3110 = vmatprep.subr.mxu0 0.0
      %3111 = vmatpush1.msra.mxu0 0.0
      %3112 = vmatprep.subr.mxu0 0.0
      %3113 = vmatpush1.msra.mxu0 0.0
      %3114 = vmatprep.subr.mxu0 0.0
      %3115 = vmatpush1.msra.mxu0 0.0
      %3116 = vmatprep.subr.mxu0 0.0
      %3117 = vmatpush1.msra.mxu0 0.0
      %3118 = vmatprep.subr.mxu0 0.0
      %3119 = vmatpush1.msra.mxu0 0.0
      %3120 = vmatprep.subr.mxu0 0.0
      %3121 = vmatpush1.msra.mxu0 0.0
      %3122 = vmatprep.subr.mxu0 0.0
      %3123 = vmatpush1.msra.mxu0 0.0
      %3124 = vmatprep.subr.mxu0 0.0
      %3125 = vmatpush1.msra.mxu0 0.0
      %3126 = vmatprep.subr.mxu0 0.0
      %3127 = vmatpush1.msra.mxu0 0.0
      %3128 = vmatprep.subr.mxu0 0.0
      %3129 = vmatpush1.msra.mxu0 0.0
      %3130 = vmatprep.subr.mxu0 0.0
      %3131 = vmatpush1.msra.mxu0 0.0
      %3132 = vmatprep.subr.mxu0 0.0
      %3133 = vmatpush1.msra.mxu0 0.0
      %3134 = vmatprep.subr.mxu0 0.0
      %3135 = vmatpush1.msra.mxu0 0.0
      %3136 = vmatprep.subr.mxu0 0.0
      %3137 = vmatpush1.msra.mxu0 0.0
      %3138 = vmatprep.subr.mxu0 0.0
      %3139 = vmatpush1.msra.mxu0 0.0
      %3140 = vmatprep.mubr.f32.mxu0 0.0
      %3141 = vmatmul.mubr.f32.gmra.mrb[0].mxu0 %v2881
      %v3142 = vpop.f32.mrb[0].mxu0
      %v3143 = vadd.f32 %v2877, %v3142
      %v3144 = vpop.f32.mrb[0].mxu0
      %3145 = vmatprep.mubr.f32.mxu0 0.0
      %3146 = vmatmul.mubr.f32.gmra.mrb[0].mxu0 %v2884
      %v3147 = vpop.f32.mrb[0].mxu0
      %v3148 = vadd.f32 %v2877, %v3147
      %v3149 = vpop.f32.mrb[0].mxu0
      %3150 = vmatprep.mubr.f32.mxu0 0.0
      %3151 = vmatmul.mubr.f32.gmra.mrb[0].mxu0 %v2887
      %v3152 = vpop.f32.mrb[0].mxu0
      %v3153 = vadd.f32 %v2877, %v3152
      %v3154 = vpop.f32.mrb[0].mxu0
      %3155 = vmatprep.mubr.f32.mxu0 0.0
      %3156 = vmatmul.mubr.f32.gmra.mrb[0].mxu0 %v2890
      %v3157 = vpop.f32.mrb[0].mxu0
      %v3158 = vadd.f32 %v2877, %v3157
      %v3159 = vpop.f32.mrb[0].mxu0
      %3160 = vmatprep.mubr.f32.mxu0 0.0
      %3161 = vmatmul.mubr.f32.gmra.mrb[0].mxu0 %v2893
      %v3162 = vpop.f32.mrb[0].mxu0
      %v3163 = vadd.f32 %v2877, %v3162
      %v3164 = vpop.f32.mrb[0].mxu0
      %3165 = vmatprep.mubr.f32.mxu0 0.0
      %3166 = vmatmul.mubr.f32.gmra.mrb[0].mxu0 %v2896
      %v3167 = vpop.f32.mrb[0].mxu0
      %v3168 = vadd.f32 %v2877, %v3167
      %v3169 = vpop.f32.mrb[0].mxu0
      %3170 = vmatprep.mubr.f32.mxu0 0.0
      %3171 = vmatmul.mubr.f32.gmra.mrb[0].mxu0 %v2899
      %v3172 = vpop.f32.mrb[0].mxu0
      %v3173 = vadd.f32 %v2877, %v3172
      %v3174 = vpop.f32.mrb[0].mxu0
      %3175 = vmatprep.mubr.f32.mxu0 0.0
      %3176 = vmatmul.mubr.f32.gmra.mrb[0].mxu0 %v2902
      %v3177 = vpop.f32.mrb[0].mxu0
      %v3178 = vadd.f32 %v2877, %v3177
      %v3179 = vpop.f32.mrb[0].mxu0
      %3180 = vmatprep.mubr.f32.mxu0 0.0
      %3181 = vmatmul.mubr.f32.gmra.mrb[0].mxu0 %v2905
      %v3182 = vpop.f32.mrb[0].mxu0
      %v3183 = vadd.f32 %v2877, %v3182
      %v3184 = vpop.f32.mrb[0].mxu0
      %3185 = vmatprep.mubr.f32.mxu0 0.0
      %3186 = vmatmul.mubr.f32.gmra.mrb[0].mxu0 %v2908
      %v3187 = vpop.f32.mrb[0].mxu0
      %v3188 = vadd.f32 %v2877, %v3187
      %v3189 = vpop.f32.mrb[0].mxu0
      %3190 = vmatprep.mubr.f32.mxu0 0.0
      %3191 = vmatmul.mubr.f32.gmra.mrb[0].mxu0 %v2911
      %v3192 = vpop.f32.mrb[0].mxu0
      %v3193 = vadd.f32 %v2877, %v3192
      %v3194 = vpop.f32.mrb[0].mxu0
      %3195 = vmatprep.mubr.f32.mxu0 0.0
      %3196 = vmatmul.mubr.f32.gmra.mrb[0].mxu0 %v2914
      %v3197 = vpop.f32.mrb[0].mxu0
      %v3198 = vadd.f32 %v2877, %v3197
      %v3199 = vpop.f32.mrb[0].mxu0
      %3200 = vmatprep.mubr.f32.mxu0 0.0
      %3201 = vmatmul.mubr.f32.gmra.mrb[0].mxu0 %v2917
      %v3202 = vpop.f32.mrb[0].mxu0
      %v3203 = vadd.f32 %v2877, %v3202
      %v3204 = vpop.f32.mrb[0].mxu0
      %3205 = vmatprep.mubr.f32.mxu0 0.0
      %3206 = vmatmul.mubr.f32.gmra.mrb[0].mxu0 %v2920
      %v3207 = vpop.f32.mrb[0].mxu0
      %v3208 = vadd.f32 %v2877, %v3207
      %v3209 = vpop.f32.mrb[0].mxu0
      %3210 = vmatprep.mubr.f32.mxu0 0.0
      %3211 = vmatmul.mubr.f32.gmra.mrb[0].mxu0 %v2923
      %v3212 = vpop.f32.mrb[0].mxu0
      %v3213 = vadd.f32 %v2877, %v3212
      %v3214 = vpop.f32.mrb[0].mxu0
      %3215 = vmatprep.mubr.f32.mxu0 0.0
      %3216 = vmatmul.mubr.f32.gmra.mrb[0].mxu0 %v2926
      %v3217 = vpop.f32.mrb[0].mxu0
      %v3218 = vadd.f32 %v2877, %v3217
      %v3219 = vpop.f32.mrb[0].mxu0
      %3220 = vmatprep.mubr.f32.mxu0 0.0
      %3221 = vmatmul.mubr.f32.gmra.mrb[0].mxu0 %v2929
      %v3222 = vpop.f32.mrb[0].mxu0
      %v3223 = vadd.f32 %v2877, %v3222
      %v3224 = vpop.f32.mrb[0].mxu0
      %3225 = vmatprep.mubr.f32.mxu0 0.0
      %3226 = vmatmul.mubr.f32.gmra.mrb[0].mxu0 %v2932
      %v3227 = vpop.f32.mrb[0].mxu0
      %v3228 = vadd.f32 %v2877, %v3227
      %v3229 = vpop.f32.mrb[0].mxu0
      %3230 = vmatprep.mubr.f32.mxu0 0.0
      %3231 = vmatmul.mubr.f32.gmra.mrb[0].mxu0 %v2935
      %v3232 = vpop.f32.mrb[0].mxu0
      %v3233 = vadd.f32 %v2877, %v3232
      %v3234 = vpop.f32.mrb[0].mxu0
      %3235 = vmatprep.mubr.f32.mxu0 0.0
      %3236 = vmatmul.mubr.f32.gmra.mrb[0].mxu0 %v2938
      %v3237 = vpop.f32.mrb[0].mxu0
      %v3238 = vadd.f32 %v2877, %v3237
      %v3239 = vpop.f32.mrb[0].mxu0
      %3240 = vmatprep.mubr.f32.mxu0 0.0
      %3241 = vmatmul.mubr.f32.gmra.mrb[0].mxu0 %v2941
      %v3242 = vpop.f32.mrb[0].mxu0
      %v3243 = vadd.f32 %v2877, %v3242
      %v3244 = vpop.f32.mrb[0].mxu0
      %3245 = vmatprep.mubr.f32.mxu0 0.0
      %3246 = vmatmul.mubr.f32.gmra.mrb[0].mxu0 %v2944
      %v3247 = vpop.f32.mrb[0].mxu0
      %v3248 = vadd.f32 %v2877, %v3247
      %v3249 = vpop.f32.mrb[0].mxu0
      %3250 = vmatprep.mubr.f32.mxu0 0.0
      %3251 = vmatmul.mubr.f32.gmra.mrb[0].mxu0 %v2947
      %v3252 = vpop.f32.mrb[0].mxu0
      %v3253 = vadd.f32 %v2877, %v3252
      %v3254 = vpop.f32.mrb[0].mxu0
      %3255 = vmatprep.mubr.f32.mxu0 0.0
      %3256 = vmatmul.mubr.f32.gmra.mrb[0].mxu0 %v2950
      %v3257 = vpop.f32.mrb[0].mxu0
      %v3258 = vadd.f32 %v2877, %v3257
      %v3259 = vpop.f32.mrb[0].mxu0
      %3260 = vmatprep.mubr.f32.mxu0 0.0
      %3261 = vmatmul.mubr.f32.gmra.mrb[0].mxu0 %v2953
      %v3262 = vpop.f32.mrb[0].mxu0
      %v3263 = vadd.f32 %v2877, %v3262
      %v3264 = vpop.f32.mrb[0].mxu0
      %3265 = vmatprep.mubr.f32.mxu0 0.0
      %3266 = vmatmul.mubr.f32.gmra.mrb[0].mxu0 %v2956
      %v3267 = vpop.f32.mrb[0].mxu0
      %v3268 = vadd.f32 %v2877, %v3267
      %v3269 = vpop.f32.mrb[0].mxu0
      %3270 = vmatprep.mubr.f32.mxu0 0.0
      %3271 = vmatmul.mubr.f32.gmra.mrb[0].mxu0 %v2959
      %v3272 = vpop.f32.mrb[0].mxu0
      %v3273 = vadd.f32 %v2877, %v3272
      %v3274 = vpop.f32.mrb[0].mxu0
      %3275 = vmatprep.mubr.f32.mxu0 0.0
      %3276 = vmatmul.mubr.f32.gmra.mrb[0].mxu0 %v2962
      %v3277 = vpop.f32.mrb[0].mxu0
      %v3278 = vadd.f32 %v2877, %v3277
      %v3279 = vpop.f32.mrb[0].mxu0
      %3280 = vmatprep.mubr.f32.mxu0 0.0
      %3281 = vmatmul.mubr.f32.gmra.mrb[0].mxu0 %v2965
      %v3282 = vpop.f32.mrb[0].mxu0
      %v3283 = vadd.f32 %v2877, %v3282
      %v3284 = vpop.f32.mrb[0].mxu0
      %3285 = vmatprep.mubr.f32.mxu0 0.0
      %3286 = vmatmul.mubr.f32.gmra.mrb[0].mxu0 %v2968
      %v3287 = vpop.f32.mrb[0].mxu0
      %v3288 = vadd.f32 %v2877, %v3287
      %v3289 = vpop.f32.mrb[0].mxu0
      %3290 = vmatprep.mubr.f32.mxu0 0.0
      %3291 = vmatmul.mubr.f32.gmra.mrb[0].mxu0 %v2971
      %v3292 = vpop.f32.mrb[0].mxu0
      %v3293 = vadd.f32 %v2877, %v3292
      %v3294 = vpop.f32.mrb[0].mxu0
      %3295 = vmatprep.mubr.f32.mxu0 0.0
      %3296 = vmatmul.mubr.f32.gmra.mrb[0].mxu0 %v2974
      %v3297 = vpop.f32.mrb[0].mxu0
      %v3298 = vadd.f32 %v2877, %v3297
      %v3299 = vpop.f32.mrb[0].mxu0
      %3300 = vmatprep.mubr.f32.mxu0 0.0
      %3301 = vmatmul.mubr.f32.gmra.mrb[0].mxu0 %v2977
      %v3302 = vpop.f32.mrb[0].mxu0
      %v3303 = vadd.f32 %v2877, %v3302
      %v3304 = vpop.f32.mrb[0].mxu0
      %3305 = vmatprep.mubr.f32.mxu0 0.0
      %3306 = vmatmul.mubr.f32.gmra.mrb[0].mxu0 %v2980
      %v3307 = vpop.f32.mrb[0].mxu0
      %v3308 = vadd.f32 %v2877, %v3307
      %v3309 = vpop.f32.mrb[0].mxu0
      %3310 = vmatprep.mubr.f32.mxu0 0.0
      %3311 = vmatmul.mubr.f32.gmra.mrb[0].mxu0 %v2983
      %v3312 = vpop.f32.mrb[0].mxu0
      %v3313 = vadd.f32 %v2877, %v3312
      %v3314 = vpop.f32.mrb[0].mxu0
      %3315 = vmatprep.mubr.f32.mxu0 0.0
      %3316 = vmatmul.mubr.f32.gmra.mrb[0].mxu0 %v2986
      %v3317 = vpop.f32.mrb[0].mxu0
      %v3318 = vadd.f32 %v2877, %v3317
      %v3319 = vpop.f32.mrb[0].mxu0
      %3320 = vmatprep.mubr.f32.mxu0 0.0
      %3321 = vmatmul.mubr.f32.gmra.mrb[0].mxu0 %v2989
      %v3322 = vpop.f32.mrb[0].mxu0
      %v3323 = vadd.f32 %v2877, %v3322
      %v3324 = vpop.f32.mrb[0].mxu0
      %3325 = vmatprep.mubr.f32.mxu0 0.0
      %3326 = vmatmul.mubr.f32.gmra.mrb[0].mxu0 %v2992
      %v3327 = vpop.f32.mrb[0].mxu0
      %v3328 = vadd.f32 %v2877, %v3327
      %v3329 = vpop.f32.mrb[0].mxu0
      %3330 = vmatprep.mubr.f32.mxu0 0.0
      %3331 = vmatmul.mubr.f32.gmra.mrb[0].mxu0 %v2995
      %v3332 = vpop.f32.mrb[0].mxu0
      %v3333 = vadd.f32 %v2877, %v3332
      %v3334 = vpop.f32.mrb[0].mxu0
      %3335 = vmatprep.mubr.f32.mxu0 0.0
      %3336 = vmatmul.mubr.f32.gmra.mrb[0].mxu0 %v2998
      %v3337 = vpop.f32.mrb[0].mxu0
      %v3338 = vadd.f32 %v2877, %v3337
      %v3339 = vpop.f32.mrb[0].mxu0
      %3340 = vmatprep.mubr.f32.mxu0 0.0
      %3341 = vmatmul.mubr.f32.gmra.mrb[0].mxu0 %v3001
      %v3342 = vpop.f32.mrb[0].mxu0
      %v3343 = vadd.f32 %v2877, %v3342
      %v3344 = vpop.f32.mrb[0].mxu0
      %3345 = vmatprep.mubr.f32.mxu0 0.0
      %3346 = vmatmul.mubr.f32.gmra.mrb[0].mxu0 %v3004
      %v3347 = vpop.f32.mrb[0].mxu0
      %v3348 = vadd.f32 %v2877, %v3347
      %v3349 = vpop.f32.mrb[0].mxu0
      %3350 = vmatprep.mubr.f32.mxu0 0.0
      %3351 = vmatmul.mubr.f32.gmra.mrb[0].mxu0 %v3007
      %v3352 = vpop.f32.mrb[0].mxu0
      %v3353 = vadd.f32 %v2877, %v3352
      %v3354 = vpop.f32.mrb[0].mxu0
      %3355 = vmatprep.mubr.f32.mxu0 0.0
      %3356 = vmatmul.mubr.f32.gmra.mrb[0].mxu0 %v3010
      %v3357 = vpop.f32.mrb[0].mxu0
      %v3358 = vadd.f32 %v2877, %v3357
      %v3359 = vpop.f32.mrb[0].mxu0
      %3360 = vmatprep.mubr.f32.mxu0 0.0
      %3361 = vmatmul.mubr.f32.gmra.mrb[0].mxu0 %v3013
      %v3362 = vpop.f32.mrb[0].mxu0
      %v3363 = vadd.f32 %v2877, %v3362
      %v3364 = vpop.f32.mrb[0].mxu0
      %3365 = vmatprep.mubr.f32.mxu0 0.0
      %3366 = vmatmul.mubr.f32.gmra.mrb[0].mxu0 %v3016
      %v3367 = vpop.f32.mrb[0].mxu0
      %v3368 = vadd.f32 %v2877, %v3367
      %v3369 = vpop.f32.mrb[0].mxu0
      %3370 = vmatprep.mubr.f32.mxu0 0.0
      %3371 = vmatmul.mubr.f32.gmra.mrb[0].mxu0 %v3019
      %v3372 = vpop.f32.mrb[0].mxu0
      %v3373 = vadd.f32 %v2877, %v3372
      %v3374 = vpop.f32.mrb[0].mxu0
      %3375 = vmatprep.mubr.f32.mxu0 0.0
      %3376 = vmatmul.mubr.f32.gmra.mrb[0].mxu0 %v3022
      %v3377 = vpop.f32.mrb[0].mxu0
      %v3378 = vadd.f32 %v2877, %v3377
      %v3379 = vpop.f32.mrb[0].mxu0
      %3380 = vmatprep.mubr.f32.mxu0 0.0
      %3381 = vmatmul.mubr.f32.gmra.mrb[0].mxu0 %v3025
      %v3382 = vpop.f32.mrb[0].mxu0
      %v3383 = vadd.f32 %v2877, %v3382
      %v3384 = vpop.f32.mrb[0].mxu0
      %3385 = vmatprep.mubr.f32.mxu0 0.0
      %3386 = vmatmul.mubr.f32.gmra.mrb[0].mxu0 %v3028
      %v3387 = vpop.f32.mrb[0].mxu0
      %v3388 = vadd.f32 %v2877, %v3387
      %v3389 = vpop.f32.mrb[0].mxu0
      %3390 = vmatprep.mubr.f32.mxu0 0.0
      %3391 = vmatmul.mubr.f32.gmra.mrb[0].mxu0 %v3031
      %v3392 = vpop.f32.mrb[0].mxu0
      %v3393 = vadd.f32 %v2877, %v3392
      %v3394 = vpop.f32.mrb[0].mxu0
      %3395 = vmatprep.mubr.f32.mxu0 0.0
      %3396 = vmatmul.mubr.f32.gmra.mrb[0].mxu0 %v3034
      %v3397 = vpop.f32.mrb[0].mxu0
      %v3398 = vadd.f32 %v2877, %v3397
      %v3399 = vpop.f32.mrb[0].mxu0
      %3400 = vmatprep.mubr.f32.mxu0 0.0
      %3401 = vmatmul.mubr.f32.gmra.mrb[0].mxu0 %v3037
      %v3402 = vpop.f32.mrb[0].mxu0
      %v3403 = vadd.f32 %v2877, %v3402
      %v3404 = vpop.f32.mrb[0].mxu0
      %3405 = vmatprep.mubr.f32.mxu0 0.0
      %3406 = vmatmul.mubr.f32.gmra.mrb[0].mxu0 %v3040
      %v3407 = vpop.f32.mrb[0].mxu0
      %v3408 = vadd.f32 %v2877, %v3407
      %v3409 = vpop.f32.mrb[0].mxu0
      %3410 = vmatprep.mubr.f32.mxu0 0.0
      %3411 = vmatmul.mubr.f32.gmra.mrb[0].mxu0 %v3043
      %v3412 = vpop.f32.mrb[0].mxu0
      %v3413 = vadd.f32 %v2877, %v3412
      %v3414 = vpop.f32.mrb[0].mxu0
      %3415 = vmatprep.mubr.f32.mxu0 0.0
      %3416 = vmatmul.mubr.f32.gmra.mrb[0].mxu0 %v3046
      %v3417 = vpop.f32.mrb[0].mxu0
      %v3418 = vadd.f32 %v2877, %v3417
      %v3419 = vpop.f32.mrb[0].mxu0
      %3420 = vmatprep.mubr.f32.mxu0 0.0
      %3421 = vmatmul.mubr.f32.gmra.mrb[0].mxu0 %v3049
      %v3422 = vpop.f32.mrb[0].mxu0
      %v3423 = vadd.f32 %v2877, %v3422
      %v3424 = vpop.f32.mrb[0].mxu0
      %3425 = vmatprep.mubr.f32.mxu0 0.0
      %3426 = vmatmul.mubr.f32.gmra.mrb[0].mxu0 %v3052
      %v3427 = vpop.f32.mrb[0].mxu0
      %v3428 = vadd.f32 %v2877, %v3427
      %v3429 = vpop.f32.mrb[0].mxu0
      %3430 = vmatprep.mubr.f32.mxu0 0.0
      %3431 = vmatmul.mubr.f32.gmra.mrb[0].mxu0 %v3055
      %v3432 = vpop.f32.mrb[0].mxu0
      %v3433 = vadd.f32 %v2877, %v3432
      %v3434 = vpop.f32.mrb[0].mxu0
      %3435 = vmatprep.mubr.f32.mxu0 0.0
      %3436 = vmatmul.mubr.f32.gmra.mrb[0].mxu0 %v3058
      %v3437 = vpop.f32.mrb[0].mxu0
      %v3438 = vadd.f32 %v2877, %v3437
      %v3439 = vpop.f32.mrb[0].mxu0
      %3440 = vmatprep.mubr.f32.mxu0 0.0
      %3441 = vmatmul.mubr.f32.gmra.mrb[0].mxu0 %v3061
      %v3442 = vpop.f32.mrb[0].mxu0
      %v3443 = vadd.f32 %v2877, %v3442
      %v3444 = vpop.f32.mrb[0].mxu0
      %3445 = vmatprep.mubr.f32.mxu0 0.0
      %3446 = vmatmul.mubr.f32.gmra.mrb[0].mxu0 %v3064
      %v3447 = vpop.f32.mrb[0].mxu0
      %v3448 = vadd.f32 %v2877, %v3447
      %v3449 = vpop.f32.mrb[0].mxu0
      %3450 = vmatprep.mubr.f32.mxu0 0.0
      %3451 = vmatmul.mubr.f32.gmra.mrb[0].mxu0 %v3067
      %v3452 = vpop.f32.mrb[0].mxu0
      %v3453 = vadd.f32 %v2877, %v3452
      %v3454 = vpop.f32.mrb[0].mxu0
      %3455 = vmatprep.mubr.f32.mxu0 0.0
      %3456 = vmatmul.mubr.f32.gmra.mrb[0].mxu0 %v3070
      %v3457 = vpop.f32.mrb[0].mxu0
      %v3458 = vadd.f32 %v2877, %v3457
      %v3459 = vpop.f32.mrb[0].mxu0
      %3460 = vdwg.mxu0
      %v3461 = vmax.f32 %v3143, 0.0
      %v3462 = vmax.f32 %v3148, 0.0
      %v3463 = vmax.f32 %v3153, 0.0
      %v3464 = vmax.f32 %v3158, 0.0
      %v3465 = vmax.f32 %v3163, 0.0
      %v3466 = vmax.f32 %v3168, 0.0
      %v3467 = vmax.f32 %v3173, 0.0
      %v3468 = vmax.f32 %v3178, 0.0
      %v3469 = vmax.f32 %v3183, 0.0
      %v3470 = vmax.f32 %v3188, 0.0
      %v3471 = vmax.f32 %v3193, 0.0
      %v3472 = vmax.f32 %v3198, 0.0
      %v3473 = vmax.f32 %v3203, 0.0
      %v3474 = vmax.f32 %v3208, 0.0
      %v3475 = vmax.f32 %v3213, 0.0
      %v3476 = vmax.f32 %v3218, 0.0
      %v3477 = vmax.f32 %v3223, 0.0
      %v3478 = vmax.f32 %v3228, 0.0
      %v3479 = vmax.f32 %v3233, 0.0
      %v3480 = vmax.f32 %v3238, 0.0
      %v3481 = vmax.f32 %v3243, 0.0
      %v3482 = vmax.f32 %v3248, 0.0
      %v3483 = vmax.f32 %v3253, 0.0
      %v3484 = vmax.f32 %v3258, 0.0
      %v3485 = vmax.f32 %v3263, 0.0
      %v3486 = vmax.f32 %v3268, 0.0
      %v3487 = vmax.f32 %v3273, 0.0
      %v3488 = vmax.f32 %v3278, 0.0
      %v3489 = vmax.f32 %v3283, 0.0
      %v3490 = vmax.f32 %v3288, 0.0
      %v3491 = vmax.f32 %v3293, 0.0
      %v3492 = vmax.f32 %v3298, 0.0
      %v3493 = vmax.f32 %v3303, 0.0
      %v3494 = vmax.f32 %v3308, 0.0
      %v3495 = vmax.f32 %v3313, 0.0
      %v3496 = vmax.f32 %v3318, 0.0
      %v3497 = vmax.f32 %v3323, 0.0
      %v3498 = vmax.f32 %v3328, 0.0
      %v3499 = vmax.f32 %v3333, 0.0
      %v3500 = vmax.f32 %v3338, 0.0
      %v3501 = vmax.f32 %v3343, 0.0
      %v3502 = vmax.f32 %v3348, 0.0
      %v3503 = vmax.f32 %v3353, 0.0
      %v3504 = vmax.f32 %v3358, 0.0
      %v3505 = vmax.f32 %v3363, 0.0
      %v3506 = vmax.f32 %v3368, 0.0
      %v3507 = vmax.f32 %v3373, 0.0
      %v3508 = vmax.f32 %v3378, 0.0
      %v3509 = vmax.f32 %v3383, 0.0
      %v3510 = vmax.f32 %v3388, 0.0
      %v3511 = vmax.f32 %v3393, 0.0
      %v3512 = vmax.f32 %v3398, 0.0
      %v3513 = vmax.f32 %v3403, 0.0
      %v3514 = vmax.f32 %v3408, 0.0
      %v3515 = vmax.f32 %v3413, 0.0
      %v3516 = vmax.f32 %v3418, 0.0
      %v3517 = vmax.f32 %v3423, 0.0
      %v3518 = vmax.f32 %v3428, 0.0
      %v3519 = vmax.f32 %v3433, 0.0
      %v3520 = vmax.f32 %v3438, 0.0
      %v3521 = vmax.f32 %v3443, 0.0
      %v3522 = vmax.f32 %v3448, 0.0
      %v3523 = vmax.f32 %v3453, 0.0
      %v3524 = vmax.f32 %v3458, 0.0
      %3525 = vst [vmem:[#allocation2] sm:$0xff] 0.0
      %3526 = vst [vmem:[#allocation2 + $0x8] sm:$0xff] 0.0
      %3527 = vst [vmem:[#allocation2 + $0x10] sm:$0x3] 0.0
      %3528 = vst [vmem:[#allocation2 + $0x18] sm:$0xff] 0.0
      %3529 = vst [vmem:[#allocation2 + $0x20] sm:$0xff] 0.0
      %3530 = vst [vmem:[#allocation2 + $0x28] sm:$0x3] 0.0
      %3531 = vst [vmem:[#allocation2 + $0x30] sm:$0xff] 0.0
      %3532 = vst [vmem:[#allocation2 + $0x38] sm:$0xff] 0.0
      %3533 = vst [vmem:[#allocation2 + $0x40] sm:$0x3] 0.0
      %3534 = vst [vmem:[#allocation2 + $0x48] sm:$0xff] 0.0
      %3535 = vst [vmem:[#allocation2 + $0x50] sm:$0xff] 0.0
      %3536 = vst [vmem:[#allocation2 + $0x58] sm:$0x3] 0.0
      %3537 = vst [vmem:[#allocation2 + $0x60] sm:$0xff] 0.0
      %3538 = vst [vmem:[#allocation2 + $0x68] sm:$0xff] 0.0
      %3539 = vst [vmem:[#allocation2 + $0x70] sm:$0x3] 0.0
      %3540 = vst [vmem:[#allocation2 + $0x78] sm:$0xff] 0.0
      %3541 = vst [vmem:[#allocation2 + $0x80] sm:$0xff] 0.0
      %3542 = vst [vmem:[#allocation2 + $0x88] sm:$0x3] 0.0
      %3543 = vst [vmem:[#allocation2 + $0x90] sm:$0xff] 0.0
      %3544 = vst [vmem:[#allocation2 + $0x98] sm:$0xff] 0.0
      %3545 = vst [vmem:[#allocation2 + $0xa0] sm:$0x3] 0.0
      %3546 = vst [vmem:[#allocation2 + $0xa8] sm:$0xff] 0.0
      %3547 = vst [vmem:[#allocation2 + $0xb0] sm:$0xff] 0.0
      %3548 = vst [vmem:[#allocation2 + $0xb8] sm:$0x3] 0.0
      %3549 = vst [vmem:[#allocation2 + $0xc0] sm:$0xff] 0.0
      %3550 = vst [vmem:[#allocation2 + $0xc8] sm:$0xff] 0.0
      %3551 = vst [vmem:[#allocation2 + $0xd0] sm:$0x3] 0.0
      %3552 = vst [vmem:[#allocation2 + $0xd8] sm:$0xff] 0.0
      %3553 = vst [vmem:[#allocation2 + $0xe0] sm:$0xff] 0.0
      %3554 = vst [vmem:[#allocation2 + $0xe8] sm:$0x3] 0.0
      %3555 = vst [vmem:[#allocation2 + $0xf0] sm:$0xff] 0.0
      %3556 = vst [vmem:[#allocation2 + $0xf8] sm:$0xff] 0.0
      %3557 = vst [vmem:[#allocation2 + $0x100] sm:$0x3] 0.0
      %3558 = vst [vmem:[#allocation2 + $0x108] sm:$0xff] 0.0
      %3559 = vst [vmem:[#allocation2 + $0x110] sm:$0xff] 0.0
      %3560 = vst [vmem:[#allocation2 + $0x118] sm:$0x3] 0.0
      %3561 = vst [vmem:[#allocation2 + $0x120] sm:$0xff] 0.0
      %3562 = vst [vmem:[#allocation2 + $0x128] sm:$0xff] 0.0
      %3563 = vst [vmem:[#allocation2 + $0x130] sm:$0x3] 0.0
      %3564 = vst [vmem:[#allocation2 + $0x138] sm:$0xff] 0.0
      %3565 = vst [vmem:[#allocation2 + $0x140] sm:$0xff] 0.0
      %3566 = vst [vmem:[#allocation2 + $0x148] sm:$0x3] 0.0
      %3567 = vst [vmem:[#allocation2 + $0x150] sm:$0xff] 0.0
      %3568 = vst [vmem:[#allocation2 + $0x158] sm:$0xff] 0.0
      %3569 = vst [vmem:[#allocation2 + $0x160] sm:$0x3] 0.0
      %3570 = vst [vmem:[#allocation2 + $0x168] sm:$0xff] 0.0
      %3571 = vst [vmem:[#allocation2 + $0x170] sm:$0xff] 0.0
      %3572 = vst [vmem:[#allocation2 + $0x178] sm:$0x3] 0.0
      %3573 = vst [vmem:[#allocation2 + $0x180] sm:$0xff] 0.0
      %3574 = vst [vmem:[#allocation2 + $0x188] sm:$0xff] 0.0
      %3575 = vst [vmem:[#allocation2 + $0x190] sm:$0x3] 0.0
      %3576 = vst [vmem:[#allocation2 + $0x198] sm:$0xff] 0.0
      %3577 = vst [vmem:[#allocation2 + $0x1a0] sm:$0xff] 0.0
      %3578 = vst [vmem:[#allocation2 + $0x1a8] sm:$0x3] 0.0
      %3579 = vst [vmem:[#allocation2 + $0x1b0] sm:$0xff] 0.0
      %3580 = vst [vmem:[#allocation2 + $0x1b8] sm:$0xff] 0.0
      %3581 = vst [vmem:[#allocation2 + $0x1c0] sm:$0x3] 0.0
      %3582 = vst [vmem:[#allocation2 + $0x1c8] sm:$0xff] 0.0
      %3583 = vst [vmem:[#allocation2 + $0x1d0] sm:$0xff] 0.0
      %3584 = vst [vmem:[#allocation2 + $0x1d8] sm:$0x3] 0.0
      %3585 = vst [vmem:[#allocation2 + $0x1e0] sm:$0xff] 0.0
      %3586 = vst [vmem:[#allocation2 + $0x1e8] sm:$0xff] 0.0
      %3587 = vst [vmem:[#allocation2 + $0x1f0] sm:$0x3] 0.0
      %3588 = vst [vmem:[#allocation2 + $0x1f8] sm:$0xff] 0.0
      %3589 = vst [vmem:[#allocation2 + $0x200] sm:$0xff] 0.0
      %3590 = vst [vmem:[#allocation2 + $0x208] sm:$0x3] 0.0
      %3591 = vst [vmem:[#allocation2 + $0x210] sm:$0xff] 0.0
      %3592 = vst [vmem:[#allocation2 + $0x218] sm:$0xff] 0.0
      %3593 = vst [vmem:[#allocation2 + $0x220] sm:$0x3] 0.0
      %3594 = vst [vmem:[#allocation2 + $0x228] sm:$0xff] 0.0
      %3595 = vst [vmem:[#allocation2 + $0x230] sm:$0xff] 0.0
      %3596 = vst [vmem:[#allocation2 + $0x238] sm:$0x3] 0.0
      %3597 = vst [vmem:[#allocation2 + $0x240] sm:$0xff] 0.0
      %3598 = vst [vmem:[#allocation2 + $0x248] sm:$0xff] 0.0
      %3599 = vst [vmem:[#allocation2 + $0x250] sm:$0x3] 0.0
      %3600 = vst [vmem:[#allocation2 + $0x258] sm:$0xff] 0.0
      %3601 = vst [vmem:[#allocation2 + $0x260] sm:$0xff] 0.0
      %3602 = vst [vmem:[#allocation2 + $0x268] sm:$0x3] 0.0
      %3603 = vst [vmem:[#allocation2 + $0x270] sm:$0xff] 0.0
      %3604 = vst [vmem:[#allocation2 + $0x278] sm:$0xff] 0.0
      %3605 = vst [vmem:[#allocation2 + $0x280] sm:$0x3] 0.0
      %3606 = vst [vmem:[#allocation2 + $0x288] sm:$0xff] 0.0
      %3607 = vst [vmem:[#allocation2 + $0x290] sm:$0xff] 0.0
      %3608 = vst [vmem:[#allocation2 + $0x298] sm:$0x3] 0.0
      %3609 = vst [vmem:[#allocation2 + $0x2a0] sm:$0xff] 0.0
      %3610 = vst [vmem:[#allocation2 + $0x2a8] sm:$0xff] 0.0
      %3611 = vst [vmem:[#allocation2 + $0x2b0] sm:$0x3] 0.0
      %3612 = vst [vmem:[#allocation2 + $0x2b8] sm:$0xff] 0.0
      %3613 = vst [vmem:[#allocation2 + $0x2c0] sm:$0xff] 0.0
      %3614 = vst [vmem:[#allocation2 + $0x2c8] sm:$0x3] 0.0
      %3615 = vst [vmem:[#allocation2 + $0x2d0] sm:$0xff] 0.0
      %3616 = vst [vmem:[#allocation2 + $0x2d8] sm:$0xff] 0.0
      %3617 = vst [vmem:[#allocation2 + $0x2e0] sm:$0x3] 0.0
      %3618 = vst [vmem:[#allocation2 + $0x2e8] sm:$0xff] 0.0
      %3619 = vst [vmem:[#allocation2 + $0x2f0] sm:$0xff] 0.0
      %3620 = vst [vmem:[#allocation2 + $0x2f8] sm:$0x3] 0.0
      %3621 = vst [vmem:[#allocation2 + $0x300] sm:$0xff] 0.0
      %3622 = vst [vmem:[#allocation2 + $0x308] sm:$0xff] 0.0
      %3623 = vst [vmem:[#allocation2 + $0x310] sm:$0x3] 0.0
      %3624 = vst [vmem:[#allocation2 + $0x318] sm:$0xff] 0.0
      %3625 = vst [vmem:[#allocation2 + $0x320] sm:$0xff] 0.0
      %3626 = vst [vmem:[#allocation2 + $0x328] sm:$0x3] 0.0
      %3627 = vst [vmem:[#allocation2 + $0x330] sm:$0xff] 0.0
      %3628 = vst [vmem:[#allocation2 + $0x338] sm:$0xff] 0.0
      %3629 = vst [vmem:[#allocation2 + $0x340] sm:$0x3] 0.0
      %3630 = vst [vmem:[#allocation2 + $0x348] sm:$0xff] 0.0
      %3631 = vst [vmem:[#allocation2 + $0x350] sm:$0xff] 0.0
      %3632 = vst [vmem:[#allocation2 + $0x358] sm:$0x3] 0.0
      %s3633 = scalar_lea.vmem [#allocation2], 24
      %3634 = vst [vmem:[%s3633 + $0x1] sm:$0xff] %v3461
      %3635 = vst [vmem:[%s3633 + $0x9] sm:$0xff] %v3462
      %3636 = vst [vmem:[%s3633 + $0x19] sm:$0xff] %v3463
      %3637 = vst [vmem:[%s3633 + $0x21] sm:$0xff] %v3464
      %3638 = vst [vmem:[%s3633 + $0x31] sm:$0xff] %v3465
      %3639 = vst [vmem:[%s3633 + $0x39] sm:$0xff] %v3466
      %3640 = vst [vmem:[%s3633 + $0x49] sm:$0xff] %v3467
      %3641 = vst [vmem:[%s3633 + $0x51] sm:$0xff] %v3468
      %3642 = vst [vmem:[%s3633 + $0x61] sm:$0xff] %v3469
      %3643 = vst [vmem:[%s3633 + $0x69] sm:$0xff] %v3470
      %3644 = vst [vmem:[%s3633 + $0x79] sm:$0xff] %v3471
      %3645 = vst [vmem:[%s3633 + $0x81] sm:$0xff] %v3472
      %3646 = vst [vmem:[%s3633 + $0x91] sm:$0xff] %v3473
      %3647 = vst [vmem:[%s3633 + $0x99] sm:$0xff] %v3474
      %3648 = vst [vmem:[%s3633 + $0xa9] sm:$0xff] %v3475
      %3649 = vst [vmem:[%s3633 + $0xb1] sm:$0xff] %v3476
      %3650 = vst [vmem:[%s3633 + $0xc1] sm:$0xff] %v3477
      %3651 = vst [vmem:[%s3633 + $0xc9] sm:$0xff] %v3478
      %3652 = vst [vmem:[%s3633 + $0xd9] sm:$0xff] %v3479
      %3653 = vst [vmem:[%s3633 + $0xe1] sm:$0xff] %v3480
      %3654 = vst [vmem:[%s3633 + $0xf1] sm:$0xff] %v3481
      %3655 = vst [vmem:[%s3633 + $0xf9] sm:$0xff] %v3482
      %3656 = vst [vmem:[%s3633 + $0x109] sm:$0xff] %v3483
      %3657 = vst [vmem:[%s3633 + $0x111] sm:$0xff] %v3484
      %3658 = vst [vmem:[%s3633 + $0x121] sm:$0xff] %v3485
      %3659 = vst [vmem:[%s3633 + $0x129] sm:$0xff] %v3486
      %3660 = vst [vmem:[%s3633 + $0x139] sm:$0xff] %v3487
      %3661 = vst [vmem:[%s3633 + $0x141] sm:$0xff] %v3488
      %3662 = vst [vmem:[%s3633 + $0x151] sm:$0xff] %v3489
      %3663 = vst [vmem:[%s3633 + $0x159] sm:$0xff] %v3490
      %3664 = vst [vmem:[%s3633 + $0x169] sm:$0xff] %v3491
      %3665 = vst [vmem:[%s3633 + $0x171] sm:$0xff] %v3492
      %3666 = vst [vmem:[%s3633 + $0x1b1] sm:$0xff] %v3493
      %3667 = vst [vmem:[%s3633 + $0x1b9] sm:$0xff] %v3494
      %3668 = vst [vmem:[%s3633 + $0x1c9] sm:$0xff] %v3495
      %3669 = vst [vmem:[%s3633 + $0x1d1] sm:$0xff] %v3496
      %3670 = vst [vmem:[%s3633 + $0x1e1] sm:$0xff] %v3497
      %3671 = vst [vmem:[%s3633 + $0x1e9] sm:$0xff] %v3498
      %3672 = vst [vmem:[%s3633 + $0x1f9] sm:$0xff] %v3499
      %3673 = vst [vmem:[%s3633 + $0x201] sm:$0xff] %v3500
      %3674 = vst [vmem:[%s3633 + $0x211] sm:$0xff] %v3501
      %3675 = vst [vmem:[%s3633 + $0x219] sm:$0xff] %v3502
      %3676 = vst [vmem:[%s3633 + $0x229] sm:$0xff] %v3503
      %3677 = vst [vmem:[%s3633 + $0x231] sm:$0xff] %v3504
      %3678 = vst [vmem:[%s3633 + $0x241] sm:$0xff] %v3505
      %3679 = vst [vmem:[%s3633 + $0x249] sm:$0xff] %v3506
      %3680 = vst [vmem:[%s3633 + $0x259] sm:$0xff] %v3507
      %3681 = vst [vmem:[%s3633 + $0x261] sm:$0xff] %v3508
      %3682 = vst [vmem:[%s3633 + $0x271] sm:$0xff] %v3509
      %3683 = vst [vmem:[%s3633 + $0x279] sm:$0xff] %v3510
      %3684 = vst [vmem:[%s3633 + $0x289] sm:$0xff] %v3511
      %3685 = vst [vmem:[%s3633 + $0x291] sm:$0xff] %v3512
      %3686 = vst [vmem:[%s3633 + $0x2a1] sm:$0xff] %v3513
      %3687 = vst [vmem:[%s3633 + $0x2a9] sm:$0xff] %v3514
      %3688 = vst [vmem:[%s3633 + $0x2b9] sm:$0xff] %v3515
      %3689 = vst [vmem:[%s3633 + $0x2c1] sm:$0xff] %v3516
      %3690 = vst [vmem:[%s3633 + $0x2d1] sm:$0xff] %v3517
      %3691 = vst [vmem:[%s3633 + $0x2d9] sm:$0xff] %v3518
      %3692 = vst [vmem:[%s3633 + $0x2e9] sm:$0xff] %v3519
      %3693 = vst [vmem:[%s3633 + $0x2f1] sm:$0xff] %v3520
      %3694 = vst [vmem:[%s3633 + $0x301] sm:$0xff] %v3521
      %3695 = vst [vmem:[%s3633 + $0x309] sm:$0xff] %v3522
      %3696 = vst [vmem:[%s3633 + $0x319] sm:$0xff] %v3523
      %3697 = vst [vmem:[%s3633 + $0x321] sm:$0xff] %v3524
      %v3698 = vld [vmem:[#allocation2] ss:$2 sm:$0xff]
      %s3699 = scalar_lea.vmem [#allocation2], 24
      %v3700 = vld [vmem:[%s3699] ss:$2 sm:$0xff]
      %s3701 = scalar_lea.vmem [#allocation2], 48
      %v3702 = vld [vmem:[%s3701] ss:$2 sm:$0xff]
      %s3703 = scalar_lea.vmem [#allocation2], 72
      %v3704 = vld [vmem:[%s3703] ss:$2 sm:$0xff]
      %s3705 = scalar_lea.vmem [#allocation2], 96
      %v3706 = vld [vmem:[%s3705] ss:$2 sm:$0xff]
      %s3707 = scalar_lea.vmem [#allocation2], 120
      %v3708 = vld [vmem:[%s3707] ss:$2 sm:$0xff]
      %s3709 = scalar_lea.vmem [#allocation2], 144
      %v3710 = vld [vmem:[%s3709] ss:$2 sm:$0xff]
      %s3711 = scalar_lea.vmem [#allocation2], 168
      %v3712 = vld [vmem:[%s3711] ss:$2 sm:$0xff]
      %s3713 = scalar_lea.vmem [#allocation2], 192
      %v3714 = vld [vmem:[%s3713] ss:$2 sm:$0xff]
      %s3715 = scalar_lea.vmem [#allocation2], 216
      %v3716 = vld [vmem:[%s3715] ss:$2 sm:$0xff]
      %s3717 = scalar_lea.vmem [#allocation2], 240
      %v3718 = vld [vmem:[%s3717] ss:$2 sm:$0xff]
      %s3719 = scalar_lea.vmem [#allocation2], 264
      %v3720 = vld [vmem:[%s3719] ss:$2 sm:$0xff]
      %s3721 = scalar_lea.vmem [#allocation2], 288
      %v3722 = vld [vmem:[%s3721] ss:$2 sm:$0xff]
      %s3723 = scalar_lea.vmem [#allocation2], 312
      %v3724 = vld [vmem:[%s3723] ss:$2 sm:$0xff]
      %s3725 = scalar_lea.vmem [#allocation2], 336
      %v3726 = vld [vmem:[%s3725] ss:$2 sm:$0xff]
      %s3727 = scalar_lea.vmem [#allocation2], 360
      %v3728 = vld [vmem:[%s3727] ss:$2 sm:$0xff]
      %s3729 = scalar_lea.vmem [#allocation2], 432
      %v3730 = vld [vmem:[%s3729] ss:$2 sm:$0xff]
      %s3731 = scalar_lea.vmem [#allocation2], 456
      %v3732 = vld [vmem:[%s3731] ss:$2 sm:$0xff]
      %s3733 = scalar_lea.vmem [#allocation2], 480
      %v3734 = vld [vmem:[%s3733] ss:$2 sm:$0xff]
      %s3735 = scalar_lea.vmem [#allocation2], 504
      %v3736 = vld [vmem:[%s3735] ss:$2 sm:$0xff]
      %s3737 = scalar_lea.vmem [#allocation2], 528
      %v3738 = vld [vmem:[%s3737] ss:$2 sm:$0xff]
      %s3739 = scalar_lea.vmem [#allocation2], 552
      %v3740 = vld [vmem:[%s3739] ss:$2 sm:$0xff]
      %s3741 = scalar_lea.vmem [#allocation2], 576
      %v3742 = vld [vmem:[%s3741] ss:$2 sm:$0xff]
      %s3743 = scalar_lea.vmem [#allocation2], 600
      %v3744 = vld [vmem:[%s3743] ss:$2 sm:$0xff]
      %s3745 = scalar_lea.vmem [#allocation2], 624
      %v3746 = vld [vmem:[%s3745] ss:$2 sm:$0xff]
      %s3747 = scalar_lea.vmem [#allocation2], 648
      %v3748 = vld [vmem:[%s3747] ss:$2 sm:$0xff]
      %s3749 = scalar_lea.vmem [#allocation2], 672
      %v3750 = vld [vmem:[%s3749] ss:$2 sm:$0xff]
      %s3751 = scalar_lea.vmem [#allocation2], 696
      %v3752 = vld [vmem:[%s3751] ss:$2 sm:$0xff]
      %s3753 = scalar_lea.vmem [#allocation2], 720
      %v3754 = vld [vmem:[%s3753] ss:$2 sm:$0xff]
      %s3755 = scalar_lea.vmem [#allocation2], 744
      %v3756 = vld [vmem:[%s3755] ss:$2 sm:$0xff]
      %s3757 = scalar_lea.vmem [#allocation2], 768
      %v3758 = vld [vmem:[%s3757] ss:$2 sm:$0xff]
      %s3759 = scalar_lea.vmem [#allocation2], 792
      %v3760 = vld [vmem:[%s3759] ss:$2 sm:$0xff]
      %v3761 = vld [vmem:[%s3] sm:$0xff]
      %v3762 = vld [vmem:[%s3 + $0x8] sm:$0xff]
      %v3763 = vld [vmem:[%s3 + $0x10] sm:$0xff]
      %v3764 = vld [vmem:[%s3 + $0x18] sm:$0xff]
      %v3765 = vld [vmem:[%s3 + $0x20] sm:$0xff]
      %v3766 = vld [vmem:[%s3 + $0x28] sm:$0xff]
      %v3767 = vld [vmem:[%s3 + $0x30] sm:$0xff]
      %v3768 = vld [vmem:[%s3 + $0x38] sm:$0xff]
      %v3769 = vld [vmem:[%s3 + $0x40] sm:$0xff]
      %v3770 = vld [vmem:[%s3 + $0x48] sm:$0xff]
      %v3771 = vld [vmem:[%s3 + $0x50] sm:$0xff]
      %v3772 = vld [vmem:[%s3 + $0x58] sm:$0xff]
      %v3773 = vld [vmem:[%s3 + $0x60] sm:$0xff]
      %v3774 = vld [vmem:[%s3 + $0x68] sm:$0xff]
      %v3775 = vld [vmem:[%s3 + $0x70] sm:$0xff]
      %v3776 = vld [vmem:[%s3 + $0x78] sm:$0xff]
      %s3777 = scalar_lea.vmem [#allocation2], 1
      %v3778 = vld [vmem:[%s3777] ss:$2 sm:$0xff]
      %s3779 = scalar_lea.vmem [#allocation2], 25
      %v3780 = vld [vmem:[%s3779] ss:$2 sm:$0xff]
      %s3781 = scalar_lea.vmem [#allocation2], 49
      %v3782 = vld [vmem:[%s3781] ss:$2 sm:$0xff]
      %s3783 = scalar_lea.vmem [#allocation2], 73
      %v3784 = vld [vmem:[%s3783] ss:$2 sm:$0xff]
      %s3785 = scalar_lea.vmem [#allocation2], 97
      %v3786 = vld [vmem:[%s3785] ss:$2 sm:$0xff]
      %s3787 = scalar_lea.vmem [#allocation2], 121
      %v3788 = vld [vmem:[%s3787] ss:$2 sm:$0xff]
      %s3789 = scalar_lea.vmem [#allocation2], 145
      %v3790 = vld [vmem:[%s3789] ss:$2 sm:$0xff]
      %s3791 = scalar_lea.vmem [#allocation2], 169
      %v3792 = vld [vmem:[%s3791] ss:$2 sm:$0xff]
      %s3793 = scalar_lea.vmem [#allocation2], 193
      %v3794 = vld [vmem:[%s3793] ss:$2 sm:$0xff]
      %s3795 = scalar_lea.vmem [#allocation2], 217
      %v3796 = vld [vmem:[%s3795] ss:$2 sm:$0xff]
      %s3797 = scalar_lea.vmem [#allocation2], 241
      %v3798 = vld [vmem:[%s3797] ss:$2 sm:$0xff]
      %s3799 = scalar_lea.vmem [#allocation2], 265
      %v3800 = vld [vmem:[%s3799] ss:$2 sm:$0xff]
      %s3801 = scalar_lea.vmem [#allocation2], 289
      %v3802 = vld [vmem:[%s3801] ss:$2 sm:$0xff]
      %s3803 = scalar_lea.vmem [#allocation2], 313
      %v3804 = vld [vmem:[%s3803] ss:$2 sm:$0xff]
      %s3805 = scalar_lea.vmem [#allocation2], 337
      %v3806 = vld [vmem:[%s3805] ss:$2 sm:$0xff]
      %s3807 = scalar_lea.vmem [#allocation2], 361
      %v3808 = vld [vmem:[%s3807] ss:$2 sm:$0xff]
      %s3809 = scalar_lea.vmem [#allocation2], 433
      %v3810 = vld [vmem:[%s3809] ss:$2 sm:$0xff]
      %s3811 = scalar_lea.vmem [#allocation2], 457
      %v3812 = vld [vmem:[%s3811] ss:$2 sm:$0xff]
      %s3813 = scalar_lea.vmem [#allocation2], 481
      %v3814 = vld [vmem:[%s3813] ss:$2 sm:$0xff]
      %s3815 = scalar_lea.vmem [#allocation2], 505
      %v3816 = vld [vmem:[%s3815] ss:$2 sm:$0xff]
      %s3817 = scalar_lea.vmem [#allocation2], 529
      %v3818 = vld [vmem:[%s3817] ss:$2 sm:$0xff]
      %s3819 = scalar_lea.vmem [#allocation2], 553
      %v3820 = vld [vmem:[%s3819] ss:$2 sm:$0xff]
      %s3821 = scalar_lea.vmem [#allocation2], 577
      %v3822 = vld [vmem:[%s3821] ss:$2 sm:$0xff]
      %s3823 = scalar_lea.vmem [#allocation2], 601
      %v3824 = vld [vmem:[%s3823] ss:$2 sm:$0xff]
      %s3825 = scalar_lea.vmem [#allocation2], 625
      %v3826 = vld [vmem:[%s3825] ss:$2 sm:$0xff]
      %s3827 = scalar_lea.vmem [#allocation2], 649
      %v3828 = vld [vmem:[%s3827] ss:$2 sm:$0xff]
      %s3829 = scalar_lea.vmem [#allocation2], 673
      %v3830 = vld [vmem:[%s3829] ss:$2 sm:$0xff]
      %s3831 = scalar_lea.vmem [#allocation2], 697
      %v3832 = vld [vmem:[%s3831] ss:$2 sm:$0xff]
      %s3833 = scalar_lea.vmem [#allocation2], 721
      %v3834 = vld [vmem:[%s3833] ss:$2 sm:$0xff]
      %s3835 = scalar_lea.vmem [#allocation2], 745
      %v3836 = vld [vmem:[%s3835] ss:$2 sm:$0xff]
      %s3837 = scalar_lea.vmem [#allocation2], 769
      %v3838 = vld [vmem:[%s3837] ss:$2 sm:$0xff]
      %s3839 = scalar_lea.vmem [#allocation2], 793
      %v3840 = vld [vmem:[%s3839] ss:$2 sm:$0xff]
      %s3841 = scalar_lea.vmem %s3, 128
      %v3842 = vld [vmem:[%s3841] sm:$0xff]
      %v3843 = vld [vmem:[%s3841 + $0x8] sm:$0xff]
      %v3844 = vld [vmem:[%s3841 + $0x10] sm:$0xff]
      %v3845 = vld [vmem:[%s3841 + $0x18] sm:$0xff]
      %v3846 = vld [vmem:[%s3841 + $0x20] sm:$0xff]
      %v3847 = vld [vmem:[%s3841 + $0x28] sm:$0xff]
      %v3848 = vld [vmem:[%s3841 + $0x30] sm:$0xff]
      %v3849 = vld [vmem:[%s3841 + $0x38] sm:$0xff]
      %v3850 = vld [vmem:[%s3841 + $0x40] sm:$0xff]
      %v3851 = vld [vmem:[%s3841 + $0x48] sm:$0xff]
      %v3852 = vld [vmem:[%s3841 + $0x50] sm:$0xff]
      %v3853 = vld [vmem:[%s3841 + $0x58] sm:$0xff]
      %v3854 = vld [vmem:[%s3841 + $0x60] sm:$0xff]
      %v3855 = vld [vmem:[%s3841 + $0x68] sm:$0xff]
      %v3856 = vld [vmem:[%s3841 + $0x70] sm:$0xff]
      %v3857 = vld [vmem:[%s3841 + $0x78] sm:$0xff]
      %3858 = vmatprep.subr.mxu0 0.0
      %3859 = vmatpush1.msra.mxu0 %v3842
      %3860 = vmatprep.subr.mxu0 0.0
      %3861 = vmatpush1.msra.mxu0 %v3843
      %3862 = vmatprep.subr.mxu0 0.0
      %3863 = vmatpush1.msra.mxu0 %v3844
      %3864 = vmatprep.subr.mxu0 0.0
      %3865 = vmatpush1.msra.mxu0 %v3845
      %3866 = vmatprep.subr.mxu0 0.0
      %3867 = vmatpush1.msra.mxu0 %v3846
      %3868 = vmatprep.subr.mxu0 0.0
      %3869 = vmatpush1.msra.mxu0 %v3847
      %3870 = vmatprep.subr.mxu0 0.0
      %3871 = vmatpush1.msra.mxu0 %v3848
      %3872 = vmatprep.subr.mxu0 0.0
      %3873 = vmatpush1.msra.mxu0 %v3849
      %3874 = vmatprep.subr.mxu0 0.0
      %3875 = vmatpush1.msra.mxu0 %v3850
      %3876 = vmatprep.subr.mxu0 0.0
      %3877 = vmatpush1.msra.mxu0 %v3851
      %3878 = vmatprep.subr.mxu0 0.0
      %3879 = vmatpush1.msra.mxu0 %v3852
      %3880 = vmatprep.subr.mxu0 0.0
      %3881 = vmatpush1.msra.mxu0 %v3853
      %3882 = vmatprep.subr.mxu0 0.0
      %3883 = vmatpush1.msra.mxu0 %v3854
      %3884 = vmatprep.subr.mxu0 0.0
      %3885 = vmatpush1.msra.mxu0 %v3855
      %3886 = vmatprep.subr.mxu0 0.0
      %3887 = vmatpush1.msra.mxu0 %v3856
      %3888 = vmatprep.subr.mxu0 0.0
      %3889 = vmatpush1.msra.mxu0 %v3857
      %3890 = vmatprep.subr.mxu0 0.0
      %3891 = vmatpush1.msra.mxu0 0.0
      %3892 = vmatprep.subr.mxu0 0.0
      %3893 = vmatpush1.msra.mxu0 0.0
      %3894 = vmatprep.subr.mxu0 0.0
      %3895 = vmatpush1.msra.mxu0 0.0
      %3896 = vmatprep.subr.mxu0 0.0
      %3897 = vmatpush1.msra.mxu0 0.0
      %3898 = vmatprep.subr.mxu0 0.0
      %3899 = vmatpush1.msra.mxu0 0.0
      %3900 = vmatprep.subr.mxu0 0.0
      %3901 = vmatpush1.msra.mxu0 0.0
      %3902 = vmatprep.subr.mxu0 0.0
      %3903 = vmatpush1.msra.mxu0 0.0
      %3904 = vmatprep.subr.mxu0 0.0
      %3905 = vmatpush1.msra.mxu0 0.0
      %3906 = vmatprep.subr.mxu0 0.0
      %3907 = vmatpush1.msra.mxu0 0.0
      %3908 = vmatprep.subr.mxu0 0.0
      %3909 = vmatpush1.msra.mxu0 0.0
      %3910 = vmatprep.subr.mxu0 0.0
      %3911 = vmatpush1.msra.mxu0 0.0
      %3912 = vmatprep.subr.mxu0 0.0
      %3913 = vmatpush1.msra.mxu0 0.0
      %3914 = vmatprep.subr.mxu0 0.0
      %3915 = vmatpush1.msra.mxu0 0.0
      %3916 = vmatprep.subr.mxu0 0.0
      %3917 = vmatpush1.msra.mxu0 0.0
      %3918 = vmatprep.subr.mxu0 0.0
      %3919 = vmatpush1.msra.mxu0 0.0
      %3920 = vmatprep.subr.mxu0 0.0
      %3921 = vmatpush1.msra.mxu0 0.0
      %3922 = vmatprep.mubr.f32.mxu0 0.0
      %3923 = vmatmul.mubr.f32.gmra.mrb[0].mxu0 %v3778
      %v3924 = vpop.f32.mrb[0].mxu0
      %v3925 = vadd.f32 0.0, %v3924
      %v3926 = vpop.f32.mrb[0].mxu0
      %3927 = vmatprep.mubr.f32.mxu0 0.0
      %3928 = vmatmul.mubr.f32.gmra.mrb[0].mxu0 %v3780
      %v3929 = vpop.f32.mrb[0].mxu0
      %v3930 = vadd.f32 0.0, %v3929
      %v3931 = vpop.f32.mrb[0].mxu0
      %3932 = vmatprep.mubr.f32.mxu0 0.0
      %3933 = vmatmul.mubr.f32.gmra.mrb[0].mxu0 %v3782
      %v3934 = vpop.f32.mrb[0].mxu0
      %v3935 = vadd.f32 0.0, %v3934
      %v3936 = vpop.f32.mrb[0].mxu0
      %3937 = vmatprep.mubr.f32.mxu0 0.0
      %3938 = vmatmul.mubr.f32.gmra.mrb[0].mxu0 %v3784
      %v3939 = vpop.f32.mrb[0].mxu0
      %v3940 = vadd.f32 0.0, %v3939
      %v3941 = vpop.f32.mrb[0].mxu0
      %3942 = vmatprep.mubr.f32.mxu0 0.0
      %3943 = vmatmul.mubr.f32.gmra.mrb[0].mxu0 %v3786
      %v3944 = vpop.f32.mrb[0].mxu0
      %v3945 = vadd.f32 0.0, %v3944
      %v3946 = vpop.f32.mrb[0].mxu0
      %3947 = vmatprep.mubr.f32.mxu0 0.0
      %3948 = vmatmul.mubr.f32.gmra.mrb[0].mxu0 %v3788
      %v3949 = vpop.f32.mrb[0].mxu0
      %v3950 = vadd.f32 0.0, %v3949
      %v3951 = vpop.f32.mrb[0].mxu0
      %3952 = vmatprep.mubr.f32.mxu0 0.0
      %3953 = vmatmul.mubr.f32.gmra.mrb[0].mxu0 %v3790
      %v3954 = vpop.f32.mrb[0].mxu0
      %v3955 = vadd.f32 0.0, %v3954
      %v3956 = vpop.f32.mrb[0].mxu0
      %3957 = vmatprep.mubr.f32.mxu0 0.0
      %3958 = vmatmul.mubr.f32.gmra.mrb[0].mxu0 %v3792
      %v3959 = vpop.f32.mrb[0].mxu0
      %v3960 = vadd.f32 0.0, %v3959
      %v3961 = vpop.f32.mrb[0].mxu0
      %3962 = vmatprep.mubr.f32.mxu0 0.0
      %3963 = vmatmul.mubr.f32.gmra.mrb[0].mxu0 %v3794
      %v3964 = vpop.f32.mrb[0].mxu0
      %v3965 = vadd.f32 0.0, %v3964
      %v3966 = vpop.f32.mrb[0].mxu0
      %3967 = vmatprep.mubr.f32.mxu0 0.0
      %3968 = vmatmul.mubr.f32.gmra.mrb[0].mxu0 %v3796
      %v3969 = vpop.f32.mrb[0].mxu0
      %v3970 = vadd.f32 0.0, %v3969
      %v3971 = vpop.f32.mrb[0].mxu0
      %3972 = vmatprep.mubr.f32.mxu0 0.0
      %3973 = vmatmul.mubr.f32.gmra.mrb[0].mxu0 %v3798
      %v3974 = vpop.f32.mrb[0].mxu0
      %v3975 = vadd.f32 0.0, %v3974
      %v3976 = vpop.f32.mrb[0].mxu0
      %3977 = vmatprep.mubr.f32.mxu0 0.0
      %3978 = vmatmul.mubr.f32.gmra.mrb[0].mxu0 %v3800
      %v3979 = vpop.f32.mrb[0].mxu0
      %v3980 = vadd.f32 0.0, %v3979
      %v3981 = vpop.f32.mrb[0].mxu0
      %3982 = vmatprep.mubr.f32.mxu0 0.0
      %3983 = vmatmul.mubr.f32.gmra.mrb[0].mxu0 %v3802
      %v3984 = vpop.f32.mrb[0].mxu0
      %v3985 = vadd.f32 0.0, %v3984
      %v3986 = vpop.f32.mrb[0].mxu0
      %3987 = vmatprep.mubr.f32.mxu0 0.0
      %3988 = vmatmul.mubr.f32.gmra.mrb[0].mxu0 %v3804
      %v3989 = vpop.f32.mrb[0].mxu0
      %v3990 = vadd.f32 0.0, %v3989
      %v3991 = vpop.f32.mrb[0].mxu0
      %3992 = vmatprep.mubr.f32.mxu0 0.0
      %3993 = vmatmul.mubr.f32.gmra.mrb[0].mxu0 %v3806
      %v3994 = vpop.f32.mrb[0].mxu0
      %v3995 = vadd.f32 0.0, %v3994
      %v3996 = vpop.f32.mrb[0].mxu0
      %3997 = vmatprep.mubr.f32.mxu0 0.0
      %3998 = vmatmul.mubr.f32.gmra.mrb[0].mxu0 %v3808
      %v3999 = vpop.f32.mrb[0].mxu0
      %v4000 = vadd.f32 0.0, %v3999
      %v4001 = vpop.f32.mrb[0].mxu0
      %4002 = vmatprep.mubr.f32.mxu0 0.0
      %4003 = vmatmul.mubr.f32.gmra.mrb[0].mxu0 %v3810
      %v4004 = vpop.f32.mrb[0].mxu0
      %v4005 = vadd.f32 0.0, %v4004
      %v4006 = vpop.f32.mrb[0].mxu0
      %4007 = vmatprep.mubr.f32.mxu0 0.0
      %4008 = vmatmul.mubr.f32.gmra.mrb[0].mxu0 %v3812
      %v4009 = vpop.f32.mrb[0].mxu0
      %v4010 = vadd.f32 0.0, %v4009
      %v4011 = vpop.f32.mrb[0].mxu0
      %4012 = vmatprep.mubr.f32.mxu0 0.0
      %4013 = vmatmul.mubr.f32.gmra.mrb[0].mxu0 %v3814
      %v4014 = vpop.f32.mrb[0].mxu0
      %v4015 = vadd.f32 0.0, %v4014
      %v4016 = vpop.f32.mrb[0].mxu0
      %4017 = vmatprep.mubr.f32.mxu0 0.0
      %4018 = vmatmul.mubr.f32.gmra.mrb[0].mxu0 %v3816
      %v4019 = vpop.f32.mrb[0].mxu0
      %v4020 = vadd.f32 0.0, %v4019
      %v4021 = vpop.f32.mrb[0].mxu0
      %4022 = vmatprep.mubr.f32.mxu0 0.0
      %4023 = vmatmul.mubr.f32.gmra.mrb[0].mxu0 %v3818
      %v4024 = vpop.f32.mrb[0].mxu0
      %v4025 = vadd.f32 0.0, %v4024
      %v4026 = vpop.f32.mrb[0].mxu0
      %4027 = vmatprep.mubr.f32.mxu0 0.0
      %4028 = vmatmul.mubr.f32.gmra.mrb[0].mxu0 %v3820
      %v4029 = vpop.f32.mrb[0].mxu0
      %v4030 = vadd.f32 0.0, %v4029
      %v4031 = vpop.f32.mrb[0].mxu0
      %4032 = vmatprep.mubr.f32.mxu0 0.0
      %4033 = vmatmul.mubr.f32.gmra.mrb[0].mxu0 %v3822
      %v4034 = vpop.f32.mrb[0].mxu0
      %v4035 = vadd.f32 0.0, %v4034
      %v4036 = vpop.f32.mrb[0].mxu0
      %4037 = vmatprep.mubr.f32.mxu0 0.0
      %4038 = vmatmul.mubr.f32.gmra.mrb[0].mxu0 %v3824
      %v4039 = vpop.f32.mrb[0].mxu0
      %v4040 = vadd.f32 0.0, %v4039
      %v4041 = vpop.f32.mrb[0].mxu0
      %4042 = vmatprep.mubr.f32.mxu0 0.0
      %4043 = vmatmul.mubr.f32.gmra.mrb[0].mxu0 %v3826
      %v4044 = vpop.f32.mrb[0].mxu0
      %v4045 = vadd.f32 0.0, %v4044
      %v4046 = vpop.f32.mrb[0].mxu0
      %4047 = vmatprep.mubr.f32.mxu0 0.0
      %4048 = vmatmul.mubr.f32.gmra.mrb[0].mxu0 %v3828
      %v4049 = vpop.f32.mrb[0].mxu0
      %v4050 = vadd.f32 0.0, %v4049
      %v4051 = vpop.f32.mrb[0].mxu0
      %4052 = vmatprep.mubr.f32.mxu0 0.0
      %4053 = vmatmul.mubr.f32.gmra.mrb[0].mxu0 %v3830
      %v4054 = vpop.f32.mrb[0].mxu0
      %v4055 = vadd.f32 0.0, %v4054
      %v4056 = vpop.f32.mrb[0].mxu0
      %4057 = vmatprep.mubr.f32.mxu0 0.0
      %4058 = vmatmul.mubr.f32.gmra.mrb[0].mxu0 %v3832
      %v4059 = vpop.f32.mrb[0].mxu0
      %v4060 = vadd.f32 0.0, %v4059
      %v4061 = vpop.f32.mrb[0].mxu0
      %4062 = vmatprep.mubr.f32.mxu0 0.0
      %4063 = vmatmul.mubr.f32.gmra.mrb[0].mxu0 %v3834
      %v4064 = vpop.f32.mrb[0].mxu0
      %v4065 = vadd.f32 0.0, %v4064
      %v4066 = vpop.f32.mrb[0].mxu0
      %4067 = vmatprep.mubr.f32.mxu0 0.0
      %4068 = vmatmul.mubr.f32.gmra.mrb[0].mxu0 %v3836
      %v4069 = vpop.f32.mrb[0].mxu0
      %v4070 = vadd.f32 0.0, %v4069
      %v4071 = vpop.f32.mrb[0].mxu0
      %4072 = vmatprep.mubr.f32.mxu0 0.0
      %4073 = vmatmul.mubr.f32.gmra.mrb[0].mxu0 %v3838
      %v4074 = vpop.f32.mrb[0].mxu0
      %v4075 = vadd.f32 0.0, %v4074
      %v4076 = vpop.f32.mrb[0].mxu0
      %4077 = vmatprep.mubr.f32.mxu0 0.0
      %4078 = vmatmul.mubr.f32.gmra.mrb[0].mxu0 %v3840
      %v4079 = vpop.f32.mrb[0].mxu0
      %v4080 = vadd.f32 0.0, %v4079
      %v4081 = vpop.f32.mrb[0].mxu0
      %4082 = vdwg.mxu0
      %4083 = vmatprep.subr.mxu0 0.0
      %4084 = vmatpush1.msra.mxu0 %v3761
      %4085 = vmatprep.subr.mxu0 0.0
      %4086 = vmatpush1.msra.mxu0 %v3762
      %4087 = vmatprep.subr.mxu0 0.0
      %4088 = vmatpush1.msra.mxu0 %v3763
      %4089 = vmatprep.subr.mxu0 0.0
      %4090 = vmatpush1.msra.mxu0 %v3764
      %4091 = vmatprep.subr.mxu0 0.0
      %4092 = vmatpush1.msra.mxu0 %v3765
      %4093 = vmatprep.subr.mxu0 0.0
      %4094 = vmatpush1.msra.mxu0 %v3766
      %4095 = vmatprep.subr.mxu0 0.0
      %4096 = vmatpush1.msra.mxu0 %v3767
      %4097 = vmatprep.subr.mxu0 0.0
      %4098 = vmatpush1.msra.mxu0 %v3768
      %4099 = vmatprep.subr.mxu0 0.0
      %4100 = vmatpush1.msra.mxu0 %v3769
      %4101 = vmatprep.subr.mxu0 0.0
      %4102 = vmatpush1.msra.mxu0 %v3770
      %4103 = vmatprep.subr.mxu0 0.0
      %4104 = vmatpush1.msra.mxu0 %v3771
      %4105 = vmatprep.subr.mxu0 0.0
      %4106 = vmatpush1.msra.mxu0 %v3772
      %4107 = vmatprep.subr.mxu0 0.0
      %4108 = vmatpush1.msra.mxu0 %v3773
      %4109 = vmatprep.subr.mxu0 0.0
      %4110 = vmatpush1.msra.mxu0 %v3774
      %4111 = vmatprep.subr.mxu0 0.0
      %4112 = vmatpush1.msra.mxu0 %v3775
      %4113 = vmatprep.subr.mxu0 0.0
      %4114 = vmatpush1.msra.mxu0 %v3776
      %4115 = vmatprep.subr.mxu0 0.0
      %4116 = vmatpush1.msra.mxu0 0.0
      %4117 = vmatprep.subr.mxu0 0.0
      %4118 = vmatpush1.msra.mxu0 0.0
      %4119 = vmatprep.subr.mxu0 0.0
      %4120 = vmatpush1.msra.mxu0 0.0
      %4121 = vmatprep.subr.mxu0 0.0
      %4122 = vmatpush1.msra.mxu0 0.0
      %4123 = vmatprep.subr.mxu0 0.0
      %4124 = vmatpush1.msra.mxu0 0.0
      %4125 = vmatprep.subr.mxu0 0.0
      %4126 = vmatpush1.msra.mxu0 0.0
      %4127 = vmatprep.subr.mxu0 0.0
      %4128 = vmatpush1.msra.mxu0 0.0
      %4129 = vmatprep.subr.mxu0 0.0
      %4130 = vmatpush1.msra.mxu0 0.0
      %4131 = vmatprep.subr.mxu0 0.0
      %4132 = vmatpush1.msra.mxu0 0.0
      %4133 = vmatprep.subr.mxu0 0.0
      %4134 = vmatpush1.msra.mxu0 0.0
      %4135 = vmatprep.subr.mxu0 0.0
      %4136 = vmatpush1.msra.mxu0 0.0
      %4137 = vmatprep.subr.mxu0 0.0
      %4138 = vmatpush1.msra.mxu0 0.0
      %4139 = vmatprep.subr.mxu0 0.0
      %4140 = vmatpush1.msra.mxu0 0.0
      %4141 = vmatprep.subr.mxu0 0.0
      %4142 = vmatpush1.msra.mxu0 0.0
      %4143 = vmatprep.subr.mxu0 0.0
      %4144 = vmatpush1.msra.mxu0 0.0
      %4145 = vmatprep.subr.mxu0 0.0
      %4146 = vmatpush1.msra.mxu0 0.0
      %4147 = vmatprep.mubr.f32.mxu0 0.0
      %4148 = vmatmul.mubr.f32.gmra.mrb[0].mxu0 %v3698
      %v4149 = vpop.f32.mrb[0].mxu0
      %v4150 = vadd.f32 %v3925, %v4149
      %v4151 = vpop.f32.mrb[0].mxu0
      %4152 = vmatprep.mubr.f32.mxu0 0.0
      %4153 = vmatmul.mubr.f32.gmra.mrb[0].mxu0 %v3700
      %v4154 = vpop.f32.mrb[0].mxu0
      %v4155 = vadd.f32 %v3930, %v4154
      %v4156 = vpop.f32.mrb[0].mxu0
      %4157 = vmatprep.mubr.f32.mxu0 0.0
      %4158 = vmatmul.mubr.f32.gmra.mrb[0].mxu0 %v3702
      %v4159 = vpop.f32.mrb[0].mxu0
      %v4160 = vadd.f32 %v3935, %v4159
      %v4161 = vpop.f32.mrb[0].mxu0
      %4162 = vmatprep.mubr.f32.mxu0 0.0
      %4163 = vmatmul.mubr.f32.gmra.mrb[0].mxu0 %v3704
      %v4164 = vpop.f32.mrb[0].mxu0
      %v4165 = vadd.f32 %v3940, %v4164
      %v4166 = vpop.f32.mrb[0].mxu0
      %4167 = vmatprep.mubr.f32.mxu0 0.0
      %4168 = vmatmul.mubr.f32.gmra.mrb[0].mxu0 %v3706
      %v4169 = vpop.f32.mrb[0].mxu0
      %v4170 = vadd.f32 %v3945, %v4169
      %v4171 = vpop.f32.mrb[0].mxu0
      %4172 = vmatprep.mubr.f32.mxu0 0.0
      %4173 = vmatmul.mubr.f32.gmra.mrb[0].mxu0 %v3708
      %v4174 = vpop.f32.mrb[0].mxu0
      %v4175 = vadd.f32 %v3950, %v4174
      %v4176 = vpop.f32.mrb[0].mxu0
      %4177 = vmatprep.mubr.f32.mxu0 0.0
      %4178 = vmatmul.mubr.f32.gmra.mrb[0].mxu0 %v3710
      %v4179 = vpop.f32.mrb[0].mxu0
      %v4180 = vadd.f32 %v3955, %v4179
      %v4181 = vpop.f32.mrb[0].mxu0
      %4182 = vmatprep.mubr.f32.mxu0 0.0
      %4183 = vmatmul.mubr.f32.gmra.mrb[0].mxu0 %v3712
      %v4184 = vpop.f32.mrb[0].mxu0
      %v4185 = vadd.f32 %v3960, %v4184
      %v4186 = vpop.f32.mrb[0].mxu0
      %4187 = vmatprep.mubr.f32.mxu0 0.0
      %4188 = vmatmul.mubr.f32.gmra.mrb[0].mxu0 %v3714
      %v4189 = vpop.f32.mrb[0].mxu0
      %v4190 = vadd.f32 %v3965, %v4189
      %v4191 = vpop.f32.mrb[0].mxu0
      %4192 = vmatprep.mubr.f32.mxu0 0.0
      %4193 = vmatmul.mubr.f32.gmra.mrb[0].mxu0 %v3716
      %v4194 = vpop.f32.mrb[0].mxu0
      %v4195 = vadd.f32 %v3970, %v4194
      %v4196 = vpop.f32.mrb[0].mxu0
      %4197 = vmatprep.mubr.f32.mxu0 0.0
      %4198 = vmatmul.mubr.f32.gmra.mrb[0].mxu0 %v3718
      %v4199 = vpop.f32.mrb[0].mxu0
      %v4200 = vadd.f32 %v3975, %v4199
      %v4201 = vpop.f32.mrb[0].mxu0
      %4202 = vmatprep.mubr.f32.mxu0 0.0
      %4203 = vmatmul.mubr.f32.gmra.mrb[0].mxu0 %v3720
      %v4204 = vpop.f32.mrb[0].mxu0
      %v4205 = vadd.f32 %v3980, %v4204
      %v4206 = vpop.f32.mrb[0].mxu0
      %4207 = vmatprep.mubr.f32.mxu0 0.0
      %4208 = vmatmul.mubr.f32.gmra.mrb[0].mxu0 %v3722
      %v4209 = vpop.f32.mrb[0].mxu0
      %v4210 = vadd.f32 %v3985, %v4209
      %v4211 = vpop.f32.mrb[0].mxu0
      %4212 = vmatprep.mubr.f32.mxu0 0.0
      %4213 = vmatmul.mubr.f32.gmra.mrb[0].mxu0 %v3724
      %v4214 = vpop.f32.mrb[0].mxu0
      %v4215 = vadd.f32 %v3990, %v4214
      %v4216 = vpop.f32.mrb[0].mxu0
      %4217 = vmatprep.mubr.f32.mxu0 0.0
      %4218 = vmatmul.mubr.f32.gmra.mrb[0].mxu0 %v3726
      %v4219 = vpop.f32.mrb[0].mxu0
      %v4220 = vadd.f32 %v3995, %v4219
      %v4221 = vpop.f32.mrb[0].mxu0
      %4222 = vmatprep.mubr.f32.mxu0 0.0
      %4223 = vmatmul.mubr.f32.gmra.mrb[0].mxu0 %v3728
      %v4224 = vpop.f32.mrb[0].mxu0
      %v4225 = vadd.f32 %v4000, %v4224
      %v4226 = vpop.f32.mrb[0].mxu0
      %4227 = vmatprep.mubr.f32.mxu0 0.0
      %4228 = vmatmul.mubr.f32.gmra.mrb[0].mxu0 %v3730
      %v4229 = vpop.f32.mrb[0].mxu0
      %v4230 = vadd.f32 %v4005, %v4229
      %v4231 = vpop.f32.mrb[0].mxu0
      %4232 = vmatprep.mubr.f32.mxu0 0.0
      %4233 = vmatmul.mubr.f32.gmra.mrb[0].mxu0 %v3732
      %v4234 = vpop.f32.mrb[0].mxu0
      %v4235 = vadd.f32 %v4010, %v4234
      %v4236 = vpop.f32.mrb[0].mxu0
      %4237 = vmatprep.mubr.f32.mxu0 0.0
      %4238 = vmatmul.mubr.f32.gmra.mrb[0].mxu0 %v3734
      %v4239 = vpop.f32.mrb[0].mxu0
      %v4240 = vadd.f32 %v4015, %v4239
      %v4241 = vpop.f32.mrb[0].mxu0
      %4242 = vmatprep.mubr.f32.mxu0 0.0
      %4243 = vmatmul.mubr.f32.gmra.mrb[0].mxu0 %v3736
      %v4244 = vpop.f32.mrb[0].mxu0
      %v4245 = vadd.f32 %v4020, %v4244
      %v4246 = vpop.f32.mrb[0].mxu0
      %4247 = vmatprep.mubr.f32.mxu0 0.0
      %4248 = vmatmul.mubr.f32.gmra.mrb[0].mxu0 %v3738
      %v4249 = vpop.f32.mrb[0].mxu0
      %v4250 = vadd.f32 %v4025, %v4249
      %v4251 = vpop.f32.mrb[0].mxu0
      %4252 = vmatprep.mubr.f32.mxu0 0.0
      %4253 = vmatmul.mubr.f32.gmra.mrb[0].mxu0 %v3740
      %v4254 = vpop.f32.mrb[0].mxu0
      %v4255 = vadd.f32 %v4030, %v4254
      %v4256 = vpop.f32.mrb[0].mxu0
      %4257 = vmatprep.mubr.f32.mxu0 0.0
      %4258 = vmatmul.mubr.f32.gmra.mrb[0].mxu0 %v3742
      %v4259 = vpop.f32.mrb[0].mxu0
      %v4260 = vadd.f32 %v4035, %v4259
      %v4261 = vpop.f32.mrb[0].mxu0
      %4262 = vmatprep.mubr.f32.mxu0 0.0
      %4263 = vmatmul.mubr.f32.gmra.mrb[0].mxu0 %v3744
      %v4264 = vpop.f32.mrb[0].mxu0
      %v4265 = vadd.f32 %v4040, %v4264
      %v4266 = vpop.f32.mrb[0].mxu0
      %4267 = vmatprep.mubr.f32.mxu0 0.0
      %4268 = vmatmul.mubr.f32.gmra.mrb[0].mxu0 %v3746
      %v4269 = vpop.f32.mrb[0].mxu0
      %v4270 = vadd.f32 %v4045, %v4269
      %v4271 = vpop.f32.mrb[0].mxu0
      %4272 = vmatprep.mubr.f32.mxu0 0.0
      %4273 = vmatmul.mubr.f32.gmra.mrb[0].mxu0 %v3748
      %v4274 = vpop.f32.mrb[0].mxu0
      %v4275 = vadd.f32 %v4050, %v4274
      %v4276 = vpop.f32.mrb[0].mxu0
      %4277 = vmatprep.mubr.f32.mxu0 0.0
      %4278 = vmatmul.mubr.f32.gmra.mrb[0].mxu0 %v3750
      %v4279 = vpop.f32.mrb[0].mxu0
      %v4280 = vadd.f32 %v4055, %v4279
      %v4281 = vpop.f32.mrb[0].mxu0
      %4282 = vmatprep.mubr.f32.mxu0 0.0
      %4283 = vmatmul.mubr.f32.gmra.mrb[0].mxu0 %v3752
      %v4284 = vpop.f32.mrb[0].mxu0
      %v4285 = vadd.f32 %v4060, %v4284
      %v4286 = vpop.f32.mrb[0].mxu0
      %4287 = vmatprep.mubr.f32.mxu0 0.0
      %4288 = vmatmul.mubr.f32.gmra.mrb[0].mxu0 %v3754
      %v4289 = vpop.f32.mrb[0].mxu0
      %v4290 = vadd.f32 %v4065, %v4289
      %v4291 = vpop.f32.mrb[0].mxu0
      %4292 = vmatprep.mubr.f32.mxu0 0.0
      %4293 = vmatmul.mubr.f32.gmra.mrb[0].mxu0 %v3756
      %v4294 = vpop.f32.mrb[0].mxu0
      %v4295 = vadd.f32 %v4070, %v4294
      %v4296 = vpop.f32.mrb[0].mxu0
      %4297 = vmatprep.mubr.f32.mxu0 0.0
      %4298 = vmatmul.mubr.f32.gmra.mrb[0].mxu0 %v3758
      %v4299 = vpop.f32.mrb[0].mxu0
      %v4300 = vadd.f32 %v4075, %v4299
      %v4301 = vpop.f32.mrb[0].mxu0
      %4302 = vmatprep.mubr.f32.mxu0 0.0
      %4303 = vmatmul.mubr.f32.gmra.mrb[0].mxu0 %v3760
      %v4304 = vpop.f32.mrb[0].mxu0
      %v4305 = vadd.f32 %v4080, %v4304
      %v4306 = vpop.f32.mrb[0].mxu0
      %4307 = vdwg.mxu0
      %s4308 = scalar_lea.vmem [#allocation2], 2
      %v4309 = vld [vmem:[%s4308] ss:$2 sm:$0xff]
      %s4310 = scalar_lea.vmem [#allocation2], 26
      %v4311 = vld [vmem:[%s4310] ss:$2 sm:$0xff]
      %s4312 = scalar_lea.vmem [#allocation2], 50
      %v4313 = vld [vmem:[%s4312] ss:$2 sm:$0xff]
      %s4314 = scalar_lea.vmem [#allocation2], 74
      %v4315 = vld [vmem:[%s4314] ss:$2 sm:$0xff]
      %s4316 = scalar_lea.vmem [#allocation2], 98
      %v4317 = vld [vmem:[%s4316] ss:$2 sm:$0xff]
      %s4318 = scalar_lea.vmem [#allocation2], 122
      %v4319 = vld [vmem:[%s4318] ss:$2 sm:$0xff]
      %s4320 = scalar_lea.vmem [#allocation2], 146
      %v4321 = vld [vmem:[%s4320] ss:$2 sm:$0xff]
      %s4322 = scalar_lea.vmem [#allocation2], 170
      %v4323 = vld [vmem:[%s4322] ss:$2 sm:$0xff]
      %s4324 = scalar_lea.vmem [#allocation2], 194
      %v4325 = vld [vmem:[%s4324] ss:$2 sm:$0xff]
      %s4326 = scalar_lea.vmem [#allocation2], 218
      %v4327 = vld [vmem:[%s4326] ss:$2 sm:$0xff]
      %s4328 = scalar_lea.vmem [#allocation2], 242
      %v4329 = vld [vmem:[%s4328] ss:$2 sm:$0xff]
      %s4330 = scalar_lea.vmem [#allocation2], 266
      %v4331 = vld [vmem:[%s4330] ss:$2 sm:$0xff]
      %s4332 = scalar_lea.vmem [#allocation2], 290
      %v4333 = vld [vmem:[%s4332] ss:$2 sm:$0xff]
      %s4334 = scalar_lea.vmem [#allocation2], 314
      %v4335 = vld [vmem:[%s4334] ss:$2 sm:$0xff]
      %s4336 = scalar_lea.vmem [#allocation2], 338
      %v4337 = vld [vmem:[%s4336] ss:$2 sm:$0xff]
      %s4338 = scalar_lea.vmem [#allocation2], 362
      %v4339 = vld [vmem:[%s4338] ss:$2 sm:$0xff]
      %s4340 = scalar_lea.vmem [#allocation2], 434
      %v4341 = vld [vmem:[%s4340] ss:$2 sm:$0xff]
      %s4342 = scalar_lea.vmem [#allocation2], 458
      %v4343 = vld [vmem:[%s4342] ss:$2 sm:$0xff]
      %s4344 = scalar_lea.vmem [#allocation2], 482
      %v4345 = vld [vmem:[%s4344] ss:$2 sm:$0xff]
      %s4346 = scalar_lea.vmem [#allocation2], 506
      %v4347 = vld [vmem:[%s4346] ss:$2 sm:$0xff]
      %s4348 = scalar_lea.vmem [#allocation2], 530
      %v4349 = vld [vmem:[%s4348] ss:$2 sm:$0xff]
      %s4350 = scalar_lea.vmem [#allocation2], 554
      %v4351 = vld [vmem:[%s4350] ss:$2 sm:$0xff]
      %s4352 = scalar_lea.vmem [#allocation2], 578
      %v4353 = vld [vmem:[%s4352] ss:$2 sm:$0xff]
      %s4354 = scalar_lea.vmem [#allocation2], 602
      %v4355 = vld [vmem:[%s4354] ss:$2 sm:$0xff]
      %s4356 = scalar_lea.vmem [#allocation2], 626
      %v4357 = vld [vmem:[%s4356] ss:$2 sm:$0xff]
      %s4358 = scalar_lea.vmem [#allocation2], 650
      %v4359 = vld [vmem:[%s4358] ss:$2 sm:$0xff]
      %s4360 = scalar_lea.vmem [#allocation2], 674
      %v4361 = vld [vmem:[%s4360] ss:$2 sm:$0xff]
      %s4362 = scalar_lea.vmem [#allocation2], 698
      %v4363 = vld [vmem:[%s4362] ss:$2 sm:$0xff]
      %s4364 = scalar_lea.vmem [#allocation2], 722
      %v4365 = vld [vmem:[%s4364] ss:$2 sm:$0xff]
      %s4366 = scalar_lea.vmem [#allocation2], 746
      %v4367 = vld [vmem:[%s4366] ss:$2 sm:$0xff]
      %s4368 = scalar_lea.vmem [#allocation2], 770
      %v4369 = vld [vmem:[%s4368] ss:$2 sm:$0xff]
      %s4370 = scalar_lea.vmem [#allocation2], 794
      %v4371 = vld [vmem:[%s4370] ss:$2 sm:$0xff]
      %s4372 = scalar_lea.vmem %s3, 256
      %v4373 = vld [vmem:[%s4372] sm:$0xff]
      %v4374 = vld [vmem:[%s4372 + $0x8] sm:$0xff]
      %v4375 = vld [vmem:[%s4372 + $0x10] sm:$0xff]
      %v4376 = vld [vmem:[%s4372 + $0x18] sm:$0xff]
      %v4377 = vld [vmem:[%s4372 + $0x20] sm:$0xff]
      %v4378 = vld [vmem:[%s4372 + $0x28] sm:$0xff]
      %v4379 = vld [vmem:[%s4372 + $0x30] sm:$0xff]
      %v4380 = vld [vmem:[%s4372 + $0x38] sm:$0xff]
      %v4381 = vld [vmem:[%s4372 + $0x40] sm:$0xff]
      %v4382 = vld [vmem:[%s4372 + $0x48] sm:$0xff]
      %v4383 = vld [vmem:[%s4372 + $0x50] sm:$0xff]
      %v4384 = vld [vmem:[%s4372 + $0x58] sm:$0xff]
      %v4385 = vld [vmem:[%s4372 + $0x60] sm:$0xff]
      %v4386 = vld [vmem:[%s4372 + $0x68] sm:$0xff]
      %v4387 = vld [vmem:[%s4372 + $0x70] sm:$0xff]
      %v4388 = vld [vmem:[%s4372 + $0x78] sm:$0xff]
      %4389 = vmatprep.subr.mxu0 0.0
      %4390 = vmatpush1.msra.mxu0 %v4373
      %4391 = vmatprep.subr.mxu0 0.0
      %4392 = vmatpush1.msra.mxu0 %v4374
      %4393 = vmatprep.subr.mxu0 0.0
      %4394 = vmatpush1.msra.mxu0 %v4375
      %4395 = vmatprep.subr.mxu0 0.0
      %4396 = vmatpush1.msra.mxu0 %v4376
      %4397 = vmatprep.subr.mxu0 0.0
      %4398 = vmatpush1.msra.mxu0 %v4377
      %4399 = vmatprep.subr.mxu0 0.0
      %4400 = vmatpush1.msra.mxu0 %v4378
      %4401 = vmatprep.subr.mxu0 0.0
      %4402 = vmatpush1.msra.mxu0 %v4379
      %4403 = vmatprep.subr.mxu0 0.0
      %4404 = vmatpush1.msra.mxu0 %v4380
      %4405 = vmatprep.subr.mxu0 0.0
      %4406 = vmatpush1.msra.mxu0 %v4381
      %4407 = vmatprep.subr.mxu0 0.0
      %4408 = vmatpush1.msra.mxu0 %v4382
      %4409 = vmatprep.subr.mxu0 0.0
      %4410 = vmatpush1.msra.mxu0 %v4383
      %4411 = vmatprep.subr.mxu0 0.0
      %4412 = vmatpush1.msra.mxu0 %v4384
      %4413 = vmatprep.subr.mxu0 0.0
      %4414 = vmatpush1.msra.mxu0 %v4385
      %4415 = vmatprep.subr.mxu0 0.0
      %4416 = vmatpush1.msra.mxu0 %v4386
      %4417 = vmatprep.subr.mxu0 0.0
      %4418 = vmatpush1.msra.mxu0 %v4387
      %4419 = vmatprep.subr.mxu0 0.0
      %4420 = vmatpush1.msra.mxu0 %v4388
      %4421 = vmatprep.subr.mxu0 0.0
      %4422 = vmatpush1.msra.mxu0 0.0
      %4423 = vmatprep.subr.mxu0 0.0
      %4424 = vmatpush1.msra.mxu0 0.0
      %4425 = vmatprep.subr.mxu0 0.0
      %4426 = vmatpush1.msra.mxu0 0.0
      %4427 = vmatprep.subr.mxu0 0.0
      %4428 = vmatpush1.msra.mxu0 0.0
      %4429 = vmatprep.subr.mxu0 0.0
      %4430 = vmatpush1.msra.mxu0 0.0
      %4431 = vmatprep.subr.mxu0 0.0
      %4432 = vmatpush1.msra.mxu0 0.0
      %4433 = vmatprep.subr.mxu0 0.0
      %4434 = vmatpush1.msra.mxu0 0.0
      %4435 = vmatprep.subr.mxu0 0.0
      %4436 = vmatpush1.msra.mxu0 0.0
      %4437 = vmatprep.subr.mxu0 0.0
      %4438 = vmatpush1.msra.mxu0 0.0
      %4439 = vmatprep.subr.mxu0 0.0
      %4440 = vmatpush1.msra.mxu0 0.0
      %4441 = vmatprep.subr.mxu0 0.0
      %4442 = vmatpush1.msra.mxu0 0.0
      %4443 = vmatprep.subr.mxu0 0.0
      %4444 = vmatpush1.msra.mxu0 0.0
      %4445 = vmatprep.subr.mxu0 0.0
      %4446 = vmatpush1.msra.mxu0 0.0
      %4447 = vmatprep.subr.mxu0 0.0
      %4448 = vmatpush1.msra.mxu0 0.0
      %4449 = vmatprep.subr.mxu0 0.0
      %4450 = vmatpush1.msra.mxu0 0.0
      %4451 = vmatprep.subr.mxu0 0.0
      %4452 = vmatpush1.msra.mxu0 0.0
      %4453 = vmatprep.mubr.f32.mxu0 0.0
      %4454 = vmatmul.mubr.f32.gmra.mrb[0].mxu0 %v4309
      %v4455 = vpop.f32.mrb[0].mxu0
      %v4456 = vadd.f32 0.0, %v4455
      %v4457 = vpop.f32.mrb[0].mxu0
      %4458 = vmatprep.mubr.f32.mxu0 0.0
      %4459 = vmatmul.mubr.f32.gmra.mrb[0].mxu0 %v4311
      %v4460 = vpop.f32.mrb[0].mxu0
      %v4461 = vadd.f32 0.0, %v4460
      %v4462 = vpop.f32.mrb[0].mxu0
      %4463 = vmatprep.mubr.f32.mxu0 0.0
      %4464 = vmatmul.mubr.f32.gmra.mrb[0].mxu0 %v4313
      %v4465 = vpop.f32.mrb[0].mxu0
      %v4466 = vadd.f32 0.0, %v4465
      %v4467 = vpop.f32.mrb[0].mxu0
      %4468 = vmatprep.mubr.f32.mxu0 0.0
      %4469 = vmatmul.mubr.f32.gmra.mrb[0].mxu0 %v4315
      %v4470 = vpop.f32.mrb[0].mxu0
      %v4471 = vadd.f32 0.0, %v4470
      %v4472 = vpop.f32.mrb[0].mxu0
      %4473 = vmatprep.mubr.f32.mxu0 0.0
      %4474 = vmatmul.mubr.f32.gmra.mrb[0].mxu0 %v4317
      %v4475 = vpop.f32.mrb[0].mxu0
      %v4476 = vadd.f32 0.0, %v4475
      %v4477 = vpop.f32.mrb[0].mxu0
      %4478 = vmatprep.mubr.f32.mxu0 0.0
      %4479 = vmatmul.mubr.f32.gmra.mrb[0].mxu0 %v4319
      %v4480 = vpop.f32.mrb[0].mxu0
      %v4481 = vadd.f32 0.0, %v4480
      %v4482 = vpop.f32.mrb[0].mxu0
      %4483 = vmatprep.mubr.f32.mxu0 0.0
      %4484 = vmatmul.mubr.f32.gmra.mrb[0].mxu0 %v4321
      %v4485 = vpop.f32.mrb[0].mxu0
      %v4486 = vadd.f32 0.0, %v4485
      %v4487 = vpop.f32.mrb[0].mxu0
      %4488 = vmatprep.mubr.f32.mxu0 0.0
      %4489 = vmatmul.mubr.f32.gmra.mrb[0].mxu0 %v4323
      %v4490 = vpop.f32.mrb[0].mxu0
      %v4491 = vadd.f32 0.0, %v4490
      %v4492 = vpop.f32.mrb[0].mxu0
      %4493 = vmatprep.mubr.f32.mxu0 0.0
      %4494 = vmatmul.mubr.f32.gmra.mrb[0].mxu0 %v4325
      %v4495 = vpop.f32.mrb[0].mxu0
      %v4496 = vadd.f32 0.0, %v4495
      %v4497 = vpop.f32.mrb[0].mxu0
      %4498 = vmatprep.mubr.f32.mxu0 0.0
      %4499 = vmatmul.mubr.f32.gmra.mrb[0].mxu0 %v4327
      %v4500 = vpop.f32.mrb[0].mxu0
      %v4501 = vadd.f32 0.0, %v4500
      %v4502 = vpop.f32.mrb[0].mxu0
      %4503 = vmatprep.mubr.f32.mxu0 0.0
      %4504 = vmatmul.mubr.f32.gmra.mrb[0].mxu0 %v4329
      %v4505 = vpop.f32.mrb[0].mxu0
      %v4506 = vadd.f32 0.0, %v4505
      %v4507 = vpop.f32.mrb[0].mxu0
      %4508 = vmatprep.mubr.f32.mxu0 0.0
      %4509 = vmatmul.mubr.f32.gmra.mrb[0].mxu0 %v4331
      %v4510 = vpop.f32.mrb[0].mxu0
      %v4511 = vadd.f32 0.0, %v4510
      %v4512 = vpop.f32.mrb[0].mxu0
      %4513 = vmatprep.mubr.f32.mxu0 0.0
      %4514 = vmatmul.mubr.f32.gmra.mrb[0].mxu0 %v4333
      %v4515 = vpop.f32.mrb[0].mxu0
      %v4516 = vadd.f32 0.0, %v4515
      %v4517 = vpop.f32.mrb[0].mxu0
      %4518 = vmatprep.mubr.f32.mxu0 0.0
      %4519 = vmatmul.mubr.f32.gmra.mrb[0].mxu0 %v4335
      %v4520 = vpop.f32.mrb[0].mxu0
      %v4521 = vadd.f32 0.0, %v4520
      %v4522 = vpop.f32.mrb[0].mxu0
      %4523 = vmatprep.mubr.f32.mxu0 0.0
      %4524 = vmatmul.mubr.f32.gmra.mrb[0].mxu0 %v4337
      %v4525 = vpop.f32.mrb[0].mxu0
      %v4526 = vadd.f32 0.0, %v4525
      %v4527 = vpop.f32.mrb[0].mxu0
      %4528 = vmatprep.mubr.f32.mxu0 0.0
      %4529 = vmatmul.mubr.f32.gmra.mrb[0].mxu0 %v4339
      %v4530 = vpop.f32.mrb[0].mxu0
      %v4531 = vadd.f32 0.0, %v4530
      %v4532 = vpop.f32.mrb[0].mxu0
      %4533 = vmatprep.mubr.f32.mxu0 0.0
      %4534 = vmatmul.mubr.f32.gmra.mrb[0].mxu0 %v4341
      %v4535 = vpop.f32.mrb[0].mxu0
      %v4536 = vadd.f32 0.0, %v4535
      %v4537 = vpop.f32.mrb[0].mxu0
      %4538 = vmatprep.mubr.f32.mxu0 0.0
      %4539 = vmatmul.mubr.f32.gmra.mrb[0].mxu0 %v4343
      %v4540 = vpop.f32.mrb[0].mxu0
      %v4541 = vadd.f32 0.0, %v4540
      %v4542 = vpop.f32.mrb[0].mxu0
      %4543 = vmatprep.mubr.f32.mxu0 0.0
      %4544 = vmatmul.mubr.f32.gmra.mrb[0].mxu0 %v4345
      %v4545 = vpop.f32.mrb[0].mxu0
      %v4546 = vadd.f32 0.0, %v4545
      %v4547 = vpop.f32.mrb[0].mxu0
      %4548 = vmatprep.mubr.f32.mxu0 0.0
      %4549 = vmatmul.mubr.f32.gmra.mrb[0].mxu0 %v4347
      %v4550 = vpop.f32.mrb[0].mxu0
      %v4551 = vadd.f32 0.0, %v4550
      %v4552 = vpop.f32.mrb[0].mxu0
      %4553 = vmatprep.mubr.f32.mxu0 0.0
      %4554 = vmatmul.mubr.f32.gmra.mrb[0].mxu0 %v4349
      %v4555 = vpop.f32.mrb[0].mxu0
      %v4556 = vadd.f32 0.0, %v4555
      %v4557 = vpop.f32.mrb[0].mxu0
      %4558 = vmatprep.mubr.f32.mxu0 0.0
      %4559 = vmatmul.mubr.f32.gmra.mrb[0].mxu0 %v4351
      %v4560 = vpop.f32.mrb[0].mxu0
      %v4561 = vadd.f32 0.0, %v4560
      %v4562 = vpop.f32.mrb[0].mxu0
      %4563 = vmatprep.mubr.f32.mxu0 0.0
      %4564 = vmatmul.mubr.f32.gmra.mrb[0].mxu0 %v4353
      %v4565 = vpop.f32.mrb[0].mxu0
      %v4566 = vadd.f32 0.0, %v4565
      %v4567 = vpop.f32.mrb[0].mxu0
      %4568 = vmatprep.mubr.f32.mxu0 0.0
      %4569 = vmatmul.mubr.f32.gmra.mrb[0].mxu0 %v4355
      %v4570 = vpop.f32.mrb[0].mxu0
      %v4571 = vadd.f32 0.0, %v4570
      %v4572 = vpop.f32.mrb[0].mxu0
      %4573 = vmatprep.mubr.f32.mxu0 0.0
      %4574 = vmatmul.mubr.f32.gmra.mrb[0].mxu0 %v4357
      %v4575 = vpop.f32.mrb[0].mxu0
      %v4576 = vadd.f32 0.0, %v4575
      %v4577 = vpop.f32.mrb[0].mxu0
      %4578 = vmatprep.mubr.f32.mxu0 0.0
      %4579 = vmatmul.mubr.f32.gmra.mrb[0].mxu0 %v4359
      %v4580 = vpop.f32.mrb[0].mxu0
      %v4581 = vadd.f32 0.0, %v4580
      %v4582 = vpop.f32.mrb[0].mxu0
      %4583 = vmatprep.mubr.f32.mxu0 0.0
      %4584 = vmatmul.mubr.f32.gmra.mrb[0].mxu0 %v4361
      %v4585 = vpop.f32.mrb[0].mxu0
      %v4586 = vadd.f32 0.0, %v4585
      %v4587 = vpop.f32.mrb[0].mxu0
      %4588 = vmatprep.mubr.f32.mxu0 0.0
      %4589 = vmatmul.mubr.f32.gmra.mrb[0].mxu0 %v4363
      %v4590 = vpop.f32.mrb[0].mxu0
      %v4591 = vadd.f32 0.0, %v4590
      %v4592 = vpop.f32.mrb[0].mxu0
      %4593 = vmatprep.mubr.f32.mxu0 0.0
      %4594 = vmatmul.mubr.f32.gmra.mrb[0].mxu0 %v4365
      %v4595 = vpop.f32.mrb[0].mxu0
      %v4596 = vadd.f32 0.0, %v4595
      %v4597 = vpop.f32.mrb[0].mxu0
      %4598 = vmatprep.mubr.f32.mxu0 0.0
      %4599 = vmatmul.mubr.f32.gmra.mrb[0].mxu0 %v4367
      %v4600 = vpop.f32.mrb[0].mxu0
      %v4601 = vadd.f32 0.0, %v4600
      %v4602 = vpop.f32.mrb[0].mxu0
      %4603 = vmatprep.mubr.f32.mxu0 0.0
      %4604 = vmatmul.mubr.f32.gmra.mrb[0].mxu0 %v4369
      %v4605 = vpop.f32.mrb[0].mxu0
      %v4606 = vadd.f32 0.0, %v4605
      %v4607 = vpop.f32.mrb[0].mxu0
      %4608 = vmatprep.mubr.f32.mxu0 0.0
      %4609 = vmatmul.mubr.f32.gmra.mrb[0].mxu0 %v4371
      %v4610 = vpop.f32.mrb[0].mxu0
      %v4611 = vadd.f32 0.0, %v4610
      %v4612 = vpop.f32.mrb[0].mxu0
      %4613 = vdwg.mxu0
      %v4614 = vadd.f32 %v4150, %v4456
      %v4615 = vadd.f32 %v4155, %v4461
      %v4616 = vadd.f32 %v4160, %v4466
      %v4617 = vadd.f32 %v4165, %v4471
      %v4618 = vadd.f32 %v4170, %v4476
      %v4619 = vadd.f32 %v4175, %v4481
      %v4620 = vadd.f32 %v4180, %v4486
      %v4621 = vadd.f32 %v4185, %v4491
      %v4622 = vadd.f32 %v4190, %v4496
      %v4623 = vadd.f32 %v4195, %v4501
      %v4624 = vadd.f32 %v4200, %v4506
      %v4625 = vadd.f32 %v4205, %v4511
      %v4626 = vadd.f32 %v4210, %v4516
      %v4627 = vadd.f32 %v4215, %v4521
      %v4628 = vadd.f32 %v4220, %v4526
      %v4629 = vadd.f32 %v4225, %v4531
      %v4630 = vadd.f32 %v4230, %v4536
      %v4631 = vadd.f32 %v4235, %v4541
      %v4632 = vadd.f32 %v4240, %v4546
      %v4633 = vadd.f32 %v4245, %v4551
      %v4634 = vadd.f32 %v4250, %v4556
      %v4635 = vadd.f32 %v4255, %v4561
      %v4636 = vadd.f32 %v4260, %v4566
      %v4637 = vadd.f32 %v4265, %v4571
      %v4638 = vadd.f32 %v4270, %v4576
      %v4639 = vadd.f32 %v4275, %v4581
      %v4640 = vadd.f32 %v4280, %v4586
      %v4641 = vadd.f32 %v4285, %v4591
      %v4642 = vadd.f32 %v4290, %v4596
      %v4643 = vadd.f32 %v4295, %v4601
      %v4644 = vadd.f32 %v4300, %v4606
      %v4645 = vadd.f32 %v4305, %v4611
      %v4646 = vld [vmem:[%s3633] ss:$2 sm:$0xff]
      %s4647 = scalar_lea.vmem %s3633, 24 [#allocation2]
      %v4648 = vld [vmem:[%s4647] ss:$2 sm:$0xff]
      %s4649 = scalar_lea.vmem %s3633, 48 [#allocation2]
      %v4650 = vld [vmem:[%s4649] ss:$2 sm:$0xff]
      %s4651 = scalar_lea.vmem %s3633, 72 [#allocation2]
      %v4652 = vld [vmem:[%s4651] ss:$2 sm:$0xff]
      %s4653 = scalar_lea.vmem %s3633, 96 [#allocation2]
      %v4654 = vld [vmem:[%s4653] ss:$2 sm:$0xff]
      %s4655 = scalar_lea.vmem %s3633, 120 [#allocation2]
      %v4656 = vld [vmem:[%s4655] ss:$2 sm:$0xff]
      %s4657 = scalar_lea.vmem %s3633, 144 [#allocation2]
      %v4658 = vld [vmem:[%s4657] ss:$2 sm:$0xff]
      %s4659 = scalar_lea.vmem %s3633, 168 [#allocation2]
      %v4660 = vld [vmem:[%s4659] ss:$2 sm:$0xff]
      %s4661 = scalar_lea.vmem %s3633, 192 [#allocation2]
      %v4662 = vld [vmem:[%s4661] ss:$2 sm:$0xff]
      %s4663 = scalar_lea.vmem %s3633, 216 [#allocation2]
      %v4664 = vld [vmem:[%s4663] ss:$2 sm:$0xff]
      %s4665 = scalar_lea.vmem %s3633, 240 [#allocation2]
      %v4666 = vld [vmem:[%s4665] ss:$2 sm:$0xff]
      %s4667 = scalar_lea.vmem %s3633, 264 [#allocation2]
      %v4668 = vld [vmem:[%s4667] ss:$2 sm:$0xff]
      %s4669 = scalar_lea.vmem %s3633, 288 [#allocation2]
      %v4670 = vld [vmem:[%s4669] ss:$2 sm:$0xff]
      %s4671 = scalar_lea.vmem %s3633, 312 [#allocation2]
      %v4672 = vld [vmem:[%s4671] ss:$2 sm:$0xff]
      %s4673 = scalar_lea.vmem %s3633, 336 [#allocation2]
      %v4674 = vld [vmem:[%s4673] ss:$2 sm:$0xff]
      %s4675 = scalar_lea.vmem %s3633, 360 [#allocation2]
      %v4676 = vld [vmem:[%s4675] ss:$2 sm:$0xff]
      %s4677 = scalar_lea.vmem %s3633, 432 [#allocation2]
      %v4678 = vld [vmem:[%s4677] ss:$2 sm:$0xff]
      %s4679 = scalar_lea.vmem %s3633, 456 [#allocation2]
      %v4680 = vld [vmem:[%s4679] ss:$2 sm:$0xff]
      %s4681 = scalar_lea.vmem %s3633, 480 [#allocation2]
      %v4682 = vld [vmem:[%s4681] ss:$2 sm:$0xff]
      %s4683 = scalar_lea.vmem %s3633, 504 [#allocation2]
      %v4684 = vld [vmem:[%s4683] ss:$2 sm:$0xff]
      %s4685 = scalar_lea.vmem %s3633, 528 [#allocation2]
      %v4686 = vld [vmem:[%s4685] ss:$2 sm:$0xff]
      %s4687 = scalar_lea.vmem %s3633, 552 [#allocation2]
      %v4688 = vld [vmem:[%s4687] ss:$2 sm:$0xff]
      %s4689 = scalar_lea.vmem %s3633, 576 [#allocation2]
      %v4690 = vld [vmem:[%s4689] ss:$2 sm:$0xff]
      %s4691 = scalar_lea.vmem %s3633, 600 [#allocation2]
      %v4692 = vld [vmem:[%s4691] ss:$2 sm:$0xff]
      %s4693 = scalar_lea.vmem %s3633, 624 [#allocation2]
      %v4694 = vld [vmem:[%s4693] ss:$2 sm:$0xff]
      %s4695 = scalar_lea.vmem %s3633, 648 [#allocation2]
      %v4696 = vld [vmem:[%s4695] ss:$2 sm:$0xff]
      %s4697 = scalar_lea.vmem %s3633, 672 [#allocation2]
      %v4698 = vld [vmem:[%s4697] ss:$2 sm:$0xff]
      %s4699 = scalar_lea.vmem %s3633, 696 [#allocation2]
      %v4700 = vld [vmem:[%s4699] ss:$2 sm:$0xff]
      %s4701 = scalar_lea.vmem %s3633, 720 [#allocation2]
      %v4702 = vld [vmem:[%s4701] ss:$2 sm:$0xff]
      %s4703 = scalar_lea.vmem %s3633, 744 [#allocation2]
      %v4704 = vld [vmem:[%s4703] ss:$2 sm:$0xff]
      %s4705 = scalar_lea.vmem %s3633, 768 [#allocation2]
      %v4706 = vld [vmem:[%s4705] ss:$2 sm:$0xff]
      %s4707 = scalar_lea.vmem %s3633, 792 [#allocation2]
      %v4708 = vld [vmem:[%s4707] ss:$2 sm:$0xff]
      %s4709 = scalar_lea.vmem %s3, 384
      %v4710 = vld [vmem:[%s4709] sm:$0xff]
      %v4711 = vld [vmem:[%s4709 + $0x8] sm:$0xff]
      %v4712 = vld [vmem:[%s4709 + $0x10] sm:$0xff]
      %v4713 = vld [vmem:[%s4709 + $0x18] sm:$0xff]
      %v4714 = vld [vmem:[%s4709 + $0x20] sm:$0xff]
      %v4715 = vld [vmem:[%s4709 + $0x28] sm:$0xff]
      %v4716 = vld [vmem:[%s4709 + $0x30] sm:$0xff]
      %v4717 = vld [vmem:[%s4709 + $0x38] sm:$0xff]
      %v4718 = vld [vmem:[%s4709 + $0x40] sm:$0xff]
      %v4719 = vld [vmem:[%s4709 + $0x48] sm:$0xff]
      %v4720 = vld [vmem:[%s4709 + $0x50] sm:$0xff]
      %v4721 = vld [vmem:[%s4709 + $0x58] sm:$0xff]
      %v4722 = vld [vmem:[%s4709 + $0x60] sm:$0xff]
      %v4723 = vld [vmem:[%s4709 + $0x68] sm:$0xff]
      %v4724 = vld [vmem:[%s4709 + $0x70] sm:$0xff]
      %v4725 = vld [vmem:[%s4709 + $0x78] sm:$0xff]
      %4726 = vmatprep.subr.mxu0 0.0
      %4727 = vmatpush1.msra.mxu0 %v4710
      %4728 = vmatprep.subr.mxu0 0.0
      %4729 = vmatpush1.msra.mxu0 %v4711
      %4730 = vmatprep.subr.mxu0 0.0
      %4731 = vmatpush1.msra.mxu0 %v4712
      %4732 = vmatprep.subr.mxu0 0.0
      %4733 = vmatpush1.msra.mxu0 %v4713
      %4734 = vmatprep.subr.mxu0 0.0
      %4735 = vmatpush1.msra.mxu0 %v4714
      %4736 = vmatprep.subr.mxu0 0.0
      %4737 = vmatpush1.msra.mxu0 %v4715
      %4738 = vmatprep.subr.mxu0 0.0
      %4739 = vmatpush1.msra.mxu0 %v4716
      %4740 = vmatprep.subr.mxu0 0.0
      %4741 = vmatpush1.msra.mxu0 %v4717
      %4742 = vmatprep.subr.mxu0 0.0
      %4743 = vmatpush1.msra.mxu0 %v4718
      %4744 = vmatprep.subr.mxu0 0.0
      %4745 = vmatpush1.msra.mxu0 %v4719
      %4746 = vmatprep.subr.mxu0 0.0
      %4747 = vmatpush1.msra.mxu0 %v4720
      %4748 = vmatprep.subr.mxu0 0.0
      %4749 = vmatpush1.msra.mxu0 %v4721
      %4750 = vmatprep.subr.mxu0 0.0
      %4751 = vmatpush1.msra.mxu0 %v4722
      %4752 = vmatprep.subr.mxu0 0.0
      %4753 = vmatpush1.msra.mxu0 %v4723
      %4754 = vmatprep.subr.mxu0 0.0
      %4755 = vmatpush1.msra.mxu0 %v4724
      %4756 = vmatprep.subr.mxu0 0.0
      %4757 = vmatpush1.msra.mxu0 %v4725
      %4758 = vmatprep.subr.mxu0 0.0
      %4759 = vmatpush1.msra.mxu0 0.0
      %4760 = vmatprep.subr.mxu0 0.0
      %4761 = vmatpush1.msra.mxu0 0.0
      %4762 = vmatprep.subr.mxu0 0.0
      %4763 = vmatpush1.msra.mxu0 0.0
      %4764 = vmatprep.subr.mxu0 0.0
      %4765 = vmatpush1.msra.mxu0 0.0
      %4766 = vmatprep.subr.mxu0 0.0
      %4767 = vmatpush1.msra.mxu0 0.0
      %4768 = vmatprep.subr.mxu0 0.0
      %4769 = vmatpush1.msra.mxu0 0.0
      %4770 = vmatprep.subr.mxu0 0.0
      %4771 = vmatpush1.msra.mxu0 0.0
      %4772 = vmatprep.subr.mxu0 0.0
      %4773 = vmatpush1.msra.mxu0 0.0
      %4774 = vmatprep.subr.mxu0 0.0
      %4775 = vmatpush1.msra.mxu0 0.0
      %4776 = vmatprep.subr.mxu0 0.0
      %4777 = vmatpush1.msra.mxu0 0.0
      %4778 = vmatprep.subr.mxu0 0.0
      %4779 = vmatpush1.msra.mxu0 0.0
      %4780 = vmatprep.subr.mxu0 0.0
      %4781 = vmatpush1.msra.mxu0 0.0
      %4782 = vmatprep.subr.mxu0 0.0
      %4783 = vmatpush1.msra.mxu0 0.0
      %4784 = vmatprep.subr.mxu0 0.0
      %4785 = vmatpush1.msra.mxu0 0.0
      %4786 = vmatprep.subr.mxu0 0.0
      %4787 = vmatpush1.msra.mxu0 0.0
      %4788 = vmatprep.subr.mxu0 0.0
      %4789 = vmatpush1.msra.mxu0 0.0
      %4790 = vmatprep.mubr.f32.mxu0 0.0
      %4791 = vmatmul.mubr.f32.gmra.mrb[0].mxu0 %v4646
      %v4792 = vpop.f32.mrb[0].mxu0
      %v4793 = vadd.f32 0.0, %v4792
      %v4794 = vpop.f32.mrb[0].mxu0
      %4795 = vmatprep.mubr.f32.mxu0 0.0
      %4796 = vmatmul.mubr.f32.gmra.mrb[0].mxu0 %v4648
      %v4797 = vpop.f32.mrb[0].mxu0
      %v4798 = vadd.f32 0.0, %v4797
      %v4799 = vpop.f32.mrb[0].mxu0
      %4800 = vmatprep.mubr.f32.mxu0 0.0
      %4801 = vmatmul.mubr.f32.gmra.mrb[0].mxu0 %v4650
      %v4802 = vpop.f32.mrb[0].mxu0
      %v4803 = vadd.f32 0.0, %v4802
      %v4804 = vpop.f32.mrb[0].mxu0
      %4805 = vmatprep.mubr.f32.mxu0 0.0
      %4806 = vmatmul.mubr.f32.gmra.mrb[0].mxu0 %v4652
      %v4807 = vpop.f32.mrb[0].mxu0
      %v4808 = vadd.f32 0.0, %v4807
      %v4809 = vpop.f32.mrb[0].mxu0
      %4810 = vmatprep.mubr.f32.mxu0 0.0
      %4811 = vmatmul.mubr.f32.gmra.mrb[0].mxu0 %v4654
      %v4812 = vpop.f32.mrb[0].mxu0
      %v4813 = vadd.f32 0.0, %v4812
      %v4814 = vpop.f32.mrb[0].mxu0
      %4815 = vmatprep.mubr.f32.mxu0 0.0
      %4816 = vmatmul.mubr.f32.gmra.mrb[0].mxu0 %v4656
      %v4817 = vpop.f32.mrb[0].mxu0
      %v4818 = vadd.f32 0.0, %v4817
      %v4819 = vpop.f32.mrb[0].mxu0
      %4820 = vmatprep.mubr.f32.mxu0 0.0
      %4821 = vmatmul.mubr.f32.gmra.mrb[0].mxu0 %v4658
      %v4822 = vpop.f32.mrb[0].mxu0
      %v4823 = vadd.f32 0.0, %v4822
      %v4824 = vpop.f32.mrb[0].mxu0
      %4825 = vmatprep.mubr.f32.mxu0 0.0
      %4826 = vmatmul.mubr.f32.gmra.mrb[0].mxu0 %v4660
      %v4827 = vpop.f32.mrb[0].mxu0
      %v4828 = vadd.f32 0.0, %v4827
      %v4829 = vpop.f32.mrb[0].mxu0
      %4830 = vmatprep.mubr.f32.mxu0 0.0
      %4831 = vmatmul.mubr.f32.gmra.mrb[0].mxu0 %v4662
      %v4832 = vpop.f32.mrb[0].mxu0
      %v4833 = vadd.f32 0.0, %v4832
      %v4834 = vpop.f32.mrb[0].mxu0
      %4835 = vmatprep.mubr.f32.mxu0 0.0
      %4836 = vmatmul.mubr.f32.gmra.mrb[0].mxu0 %v4664
      %v4837 = vpop.f32.mrb[0].mxu0
      %v4838 = vadd.f32 0.0, %v4837
      %v4839 = vpop.f32.mrb[0].mxu0
      %4840 = vmatprep.mubr.f32.mxu0 0.0
      %4841 = vmatmul.mubr.f32.gmra.mrb[0].mxu0 %v4666
      %v4842 = vpop.f32.mrb[0].mxu0
      %v4843 = vadd.f32 0.0, %v4842
      %v4844 = vpop.f32.mrb[0].mxu0
      %4845 = vmatprep.mubr.f32.mxu0 0.0
      %4846 = vmatmul.mubr.f32.gmra.mrb[0].mxu0 %v4668
      %v4847 = vpop.f32.mrb[0].mxu0
      %v4848 = vadd.f32 0.0, %v4847
      %v4849 = vpop.f32.mrb[0].mxu0
      %4850 = vmatprep.mubr.f32.mxu0 0.0
      %4851 = vmatmul.mubr.f32.gmra.mrb[0].mxu0 %v4670
      %v4852 = vpop.f32.mrb[0].mxu0
      %v4853 = vadd.f32 0.0, %v4852
      %v4854 = vpop.f32.mrb[0].mxu0
      %4855 = vmatprep.mubr.f32.mxu0 0.0
      %4856 = vmatmul.mubr.f32.gmra.mrb[0].mxu0 %v4672
      %v4857 = vpop.f32.mrb[0].mxu0
      %v4858 = vadd.f32 0.0, %v4857
      %v4859 = vpop.f32.mrb[0].mxu0
      %4860 = vmatprep.mubr.f32.mxu0 0.0
      %4861 = vmatmul.mubr.f32.gmra.mrb[0].mxu0 %v4674
      %v4862 = vpop.f32.mrb[0].mxu0
      %v4863 = vadd.f32 0.0, %v4862
      %v4864 = vpop.f32.mrb[0].mxu0
      %4865 = vmatprep.mubr.f32.mxu0 0.0
      %4866 = vmatmul.mubr.f32.gmra.mrb[0].mxu0 %v4676
      %v4867 = vpop.f32.mrb[0].mxu0
      %v4868 = vadd.f32 0.0, %v4867
      %v4869 = vpop.f32.mrb[0].mxu0
      %4870 = vmatprep.mubr.f32.mxu0 0.0
      %4871 = vmatmul.mubr.f32.gmra.mrb[0].mxu0 %v4678
      %v4872 = vpop.f32.mrb[0].mxu0
      %v4873 = vadd.f32 0.0, %v4872
      %v4874 = vpop.f32.mrb[0].mxu0
      %4875 = vmatprep.mubr.f32.mxu0 0.0
      %4876 = vmatmul.mubr.f32.gmra.mrb[0].mxu0 %v4680
      %v4877 = vpop.f32.mrb[0].mxu0
      %v4878 = vadd.f32 0.0, %v4877
      %v4879 = vpop.f32.mrb[0].mxu0
      %4880 = vmatprep.mubr.f32.mxu0 0.0
      %4881 = vmatmul.mubr.f32.gmra.mrb[0].mxu0 %v4682
      %v4882 = vpop.f32.mrb[0].mxu0
      %v4883 = vadd.f32 0.0, %v4882
      %v4884 = vpop.f32.mrb[0].mxu0
      %4885 = vmatprep.mubr.f32.mxu0 0.0
      %4886 = vmatmul.mubr.f32.gmra.mrb[0].mxu0 %v4684
      %v4887 = vpop.f32.mrb[0].mxu0
      %v4888 = vadd.f32 0.0, %v4887
      %v4889 = vpop.f32.mrb[0].mxu0
      %4890 = vmatprep.mubr.f32.mxu0 0.0
      %4891 = vmatmul.mubr.f32.gmra.mrb[0].mxu0 %v4686
      %v4892 = vpop.f32.mrb[0].mxu0
      %v4893 = vadd.f32 0.0, %v4892
      %v4894 = vpop.f32.mrb[0].mxu0
      %4895 = vmatprep.mubr.f32.mxu0 0.0
      %4896 = vmatmul.mubr.f32.gmra.mrb[0].mxu0 %v4688
      %v4897 = vpop.f32.mrb[0].mxu0
      %v4898 = vadd.f32 0.0, %v4897
      %v4899 = vpop.f32.mrb[0].mxu0
      %4900 = vmatprep.mubr.f32.mxu0 0.0
      %4901 = vmatmul.mubr.f32.gmra.mrb[0].mxu0 %v4690
      %v4902 = vpop.f32.mrb[0].mxu0
      %v4903 = vadd.f32 0.0, %v4902
      %v4904 = vpop.f32.mrb[0].mxu0
      %4905 = vmatprep.mubr.f32.mxu0 0.0
      %4906 = vmatmul.mubr.f32.gmra.mrb[0].mxu0 %v4692
      %v4907 = vpop.f32.mrb[0].mxu0
      %v4908 = vadd.f32 0.0, %v4907
      %v4909 = vpop.f32.mrb[0].mxu0
      %4910 = vmatprep.mubr.f32.mxu0 0.0
      %4911 = vmatmul.mubr.f32.gmra.mrb[0].mxu0 %v4694
      %v4912 = vpop.f32.mrb[0].mxu0
      %v4913 = vadd.f32 0.0, %v4912
      %v4914 = vpop.f32.mrb[0].mxu0
      %4915 = vmatprep.mubr.f32.mxu0 0.0
      %4916 = vmatmul.mubr.f32.gmra.mrb[0].mxu0 %v4696
      %v4917 = vpop.f32.mrb[0].mxu0
      %v4918 = vadd.f32 0.0, %v4917
      %v4919 = vpop.f32.mrb[0].mxu0
      %4920 = vmatprep.mubr.f32.mxu0 0.0
      %4921 = vmatmul.mubr.f32.gmra.mrb[0].mxu0 %v4698
      %v4922 = vpop.f32.mrb[0].mxu0
      %v4923 = vadd.f32 0.0, %v4922
      %v4924 = vpop.f32.mrb[0].mxu0
      %4925 = vmatprep.mubr.f32.mxu0 0.0
      %4926 = vmatmul.mubr.f32.gmra.mrb[0].mxu0 %v4700
      %v4927 = vpop.f32.mrb[0].mxu0
      %v4928 = vadd.f32 0.0, %v4927
      %v4929 = vpop.f32.mrb[0].mxu0
      %4930 = vmatprep.mubr.f32.mxu0 0.0
      %4931 = vmatmul.mubr.f32.gmra.mrb[0].mxu0 %v4702
      %v4932 = vpop.f32.mrb[0].mxu0
      %v4933 = vadd.f32 0.0, %v4932
      %v4934 = vpop.f32.mrb[0].mxu0
      %4935 = vmatprep.mubr.f32.mxu0 0.0
      %4936 = vmatmul.mubr.f32.gmra.mrb[0].mxu0 %v4704
      %v4937 = vpop.f32.mrb[0].mxu0
      %v4938 = vadd.f32 0.0, %v4937
      %v4939 = vpop.f32.mrb[0].mxu0
      %4940 = vmatprep.mubr.f32.mxu0 0.0
      %4941 = vmatmul.mubr.f32.gmra.mrb[0].mxu0 %v4706
      %v4942 = vpop.f32.mrb[0].mxu0
      %v4943 = vadd.f32 0.0, %v4942
      %v4944 = vpop.f32.mrb[0].mxu0
      %4945 = vmatprep.mubr.f32.mxu0 0.0
      %4946 = vmatmul.mubr.f32.gmra.mrb[0].mxu0 %v4708
      %v4947 = vpop.f32.mrb[0].mxu0
      %v4948 = vadd.f32 0.0, %v4947
      %v4949 = vpop.f32.mrb[0].mxu0
      %4950 = vdwg.mxu0
      %v4951 = vadd.f32 %v4614, %v4793
      %v4952 = vadd.f32 %v4615, %v4798
      %v4953 = vadd.f32 %v4616, %v4803
      %v4954 = vadd.f32 %v4617, %v4808
      %v4955 = vadd.f32 %v4618, %v4813
      %v4956 = vadd.f32 %v4619, %v4818
      %v4957 = vadd.f32 %v4620, %v4823
      %v4958 = vadd.f32 %v4621, %v4828
      %v4959 = vadd.f32 %v4622, %v4833
      %v4960 = vadd.f32 %v4623, %v4838
      %v4961 = vadd.f32 %v4624, %v4843
      %v4962 = vadd.f32 %v4625, %v4848
      %v4963 = vadd.f32 %v4626, %v4853
      %v4964 = vadd.f32 %v4627, %v4858
      %v4965 = vadd.f32 %v4628, %v4863
      %v4966 = vadd.f32 %v4629, %v4868
      %v4967 = vadd.f32 %v4630, %v4873
      %v4968 = vadd.f32 %v4631, %v4878
      %v4969 = vadd.f32 %v4632, %v4883
      %v4970 = vadd.f32 %v4633, %v4888
      %v4971 = vadd.f32 %v4634, %v4893
      %v4972 = vadd.f32 %v4635, %v4898
      %v4973 = vadd.f32 %v4636, %v4903
      %v4974 = vadd.f32 %v4637, %v4908
      %v4975 = vadd.f32 %v4638, %v4913
      %v4976 = vadd.f32 %v4639, %v4918
      %v4977 = vadd.f32 %v4640, %v4923
      %v4978 = vadd.f32 %v4641, %v4928
      %v4979 = vadd.f32 %v4642, %v4933
      %v4980 = vadd.f32 %v4643, %v4938
      %v4981 = vadd.f32 %v4644, %v4943
      %v4982 = vadd.f32 %v4645, %v4948
      %s4983 = scalar_lea.vmem %s3633, 1 [#allocation2]
      %v4984 = vld [vmem:[%s4983] ss:$2 sm:$0xff]
      %s4985 = scalar_lea.vmem %s3633, 25 [#allocation2]
      %v4986 = vld [vmem:[%s4985] ss:$2 sm:$0xff]
      %s4987 = scalar_lea.vmem %s3633, 49 [#allocation2]
      %v4988 = vld [vmem:[%s4987] ss:$2 sm:$0xff]
      %s4989 = scalar_lea.vmem %s3633, 73 [#allocation2]
      %v4990 = vld [vmem:[%s4989] ss:$2 sm:$0xff]
      %s4991 = scalar_lea.vmem %s3633, 97 [#allocation2]
      %v4992 = vld [vmem:[%s4991] ss:$2 sm:$0xff]
      %s4993 = scalar_lea.vmem %s3633, 121 [#allocation2]
      %v4994 = vld [vmem:[%s4993] ss:$2 sm:$0xff]
      %s4995 = scalar_lea.vmem %s3633, 145 [#allocation2]
      %v4996 = vld [vmem:[%s4995] ss:$2 sm:$0xff]
      %s4997 = scalar_lea.vmem %s3633, 169 [#allocation2]
      %v4998 = vld [vmem:[%s4997] ss:$2 sm:$0xff]
      %s4999 = scalar_lea.vmem %s3633, 193 [#allocation2]
      %v5000 = vld [vmem:[%s4999] ss:$2 sm:$0xff]
      %s5001 = scalar_lea.vmem %s3633, 217 [#allocation2]
      %v5002 = vld [vmem:[%s5001] ss:$2 sm:$0xff]
      %s5003 = scalar_lea.vmem %s3633, 241 [#allocation2]
      %v5004 = vld [vmem:[%s5003] ss:$2 sm:$0xff]
      %s5005 = scalar_lea.vmem %s3633, 265 [#allocation2]
      %v5006 = vld [vmem:[%s5005] ss:$2 sm:$0xff]
      %s5007 = scalar_lea.vmem %s3633, 289 [#allocation2]
      %v5008 = vld [vmem:[%s5007] ss:$2 sm:$0xff]
      %s5009 = scalar_lea.vmem %s3633, 313 [#allocation2]
      %v5010 = vld [vmem:[%s5009] ss:$2 sm:$0xff]
      %s5011 = scalar_lea.vmem %s3633, 337 [#allocation2]
      %v5012 = vld [vmem:[%s5011] ss:$2 sm:$0xff]
      %s5013 = scalar_lea.vmem %s3633, 361 [#allocation2]
      %v5014 = vld [vmem:[%s5013] ss:$2 sm:$0xff]
      %s5015 = scalar_lea.vmem %s3633, 433 [#allocation2]
      %v5016 = vld [vmem:[%s5015] ss:$2 sm:$0xff]
      %s5017 = scalar_lea.vmem %s3633, 457 [#allocation2]
      %v5018 = vld [vmem:[%s5017] ss:$2 sm:$0xff]
      %s5019 = scalar_lea.vmem %s3633, 481 [#allocation2]
      %v5020 = vld [vmem:[%s5019] ss:$2 sm:$0xff]
      %s5021 = scalar_lea.vmem %s3633, 505 [#allocation2]
      %v5022 = vld [vmem:[%s5021] ss:$2 sm:$0xff]
      %s5023 = scalar_lea.vmem %s3633, 529 [#allocation2]
      %v5024 = vld [vmem:[%s5023] ss:$2 sm:$0xff]
      %s5025 = scalar_lea.vmem %s3633, 553 [#allocation2]
      %v5026 = vld [vmem:[%s5025] ss:$2 sm:$0xff]
      %s5027 = scalar_lea.vmem %s3633, 577 [#allocation2]
      %v5028 = vld [vmem:[%s5027] ss:$2 sm:$0xff]
      %s5029 = scalar_lea.vmem %s3633, 601 [#allocation2]
      %v5030 = vld [vmem:[%s5029] ss:$2 sm:$0xff]
      %s5031 = scalar_lea.vmem %s3633, 625 [#allocation2]
      %v5032 = vld [vmem:[%s5031] ss:$2 sm:$0xff]
      %s5033 = scalar_lea.vmem %s3633, 649 [#allocation2]
      %v5034 = vld [vmem:[%s5033] ss:$2 sm:$0xff]
      %s5035 = scalar_lea.vmem %s3633, 673 [#allocation2]
      %v5036 = vld [vmem:[%s5035] ss:$2 sm:$0xff]
      %s5037 = scalar_lea.vmem %s3633, 697 [#allocation2]
      %v5038 = vld [vmem:[%s5037] ss:$2 sm:$0xff]
      %s5039 = scalar_lea.vmem %s3633, 721 [#allocation2]
      %v5040 = vld [vmem:[%s5039] ss:$2 sm:$0xff]
      %s5041 = scalar_lea.vmem %s3633, 745 [#allocation2]
      %v5042 = vld [vmem:[%s5041] ss:$2 sm:$0xff]
      %s5043 = scalar_lea.vmem %s3633, 769 [#allocation2]
      %v5044 = vld [vmem:[%s5043] ss:$2 sm:$0xff]
      %s5045 = scalar_lea.vmem %s3633, 793 [#allocation2]
      %v5046 = vld [vmem:[%s5045] ss:$2 sm:$0xff]
      %s5047 = scalar_lea.vmem %s3, 512
      %v5048 = vld [vmem:[%s5047] sm:$0xff]
      %v5049 = vld [vmem:[%s5047 + $0x8] sm:$0xff]
      %v5050 = vld [vmem:[%s5047 + $0x10] sm:$0xff]
      %v5051 = vld [vmem:[%s5047 + $0x18] sm:$0xff]
      %v5052 = vld [vmem:[%s5047 + $0x20] sm:$0xff]
      %v5053 = vld [vmem:[%s5047 + $0x28] sm:$0xff]
      %v5054 = vld [vmem:[%s5047 + $0x30] sm:$0xff]
      %v5055 = vld [vmem:[%s5047 + $0x38] sm:$0xff]
      %v5056 = vld [vmem:[%s5047 + $0x40] sm:$0xff]
      %v5057 = vld [vmem:[%s5047 + $0x48] sm:$0xff]
      %v5058 = vld [vmem:[%s5047 + $0x50] sm:$0xff]
      %v5059 = vld [vmem:[%s5047 + $0x58] sm:$0xff]
      %v5060 = vld [vmem:[%s5047 + $0x60] sm:$0xff]
      %v5061 = vld [vmem:[%s5047 + $0x68] sm:$0xff]
      %v5062 = vld [vmem:[%s5047 + $0x70] sm:$0xff]
      %v5063 = vld [vmem:[%s5047 + $0x78] sm:$0xff]
      %5064 = vmatprep.subr.mxu0 0.0
      %5065 = vmatpush1.msra.mxu0 %v5048
      %5066 = vmatprep.subr.mxu0 0.0
      %5067 = vmatpush1.msra.mxu0 %v5049
      %5068 = vmatprep.subr.mxu0 0.0
      %5069 = vmatpush1.msra.mxu0 %v5050
      %5070 = vmatprep.subr.mxu0 0.0
      %5071 = vmatpush1.msra.mxu0 %v5051
      %5072 = vmatprep.subr.mxu0 0.0
      %5073 = vmatpush1.msra.mxu0 %v5052
      %5074 = vmatprep.subr.mxu0 0.0
      %5075 = vmatpush1.msra.mxu0 %v5053
      %5076 = vmatprep.subr.mxu0 0.0
      %5077 = vmatpush1.msra.mxu0 %v5054
      %5078 = vmatprep.subr.mxu0 0.0
      %5079 = vmatpush1.msra.mxu0 %v5055
      %5080 = vmatprep.subr.mxu0 0.0
      %5081 = vmatpush1.msra.mxu0 %v5056
      %5082 = vmatprep.subr.mxu0 0.0
      %5083 = vmatpush1.msra.mxu0 %v5057
      %5084 = vmatprep.subr.mxu0 0.0
      %5085 = vmatpush1.msra.mxu0 %v5058
      %5086 = vmatprep.subr.mxu0 0.0
      %5087 = vmatpush1.msra.mxu0 %v5059
      %5088 = vmatprep.subr.mxu0 0.0
      %5089 = vmatpush1.msra.mxu0 %v5060
      %5090 = vmatprep.subr.mxu0 0.0
      %5091 = vmatpush1.msra.mxu0 %v5061
      %5092 = vmatprep.subr.mxu0 0.0
      %5093 = vmatpush1.msra.mxu0 %v5062
      %5094 = vmatprep.subr.mxu0 0.0
      %5095 = vmatpush1.msra.mxu0 %v5063
      %5096 = vmatprep.subr.mxu0 0.0
      %5097 = vmatpush1.msra.mxu0 0.0
      %5098 = vmatprep.subr.mxu0 0.0
      %5099 = vmatpush1.msra.mxu0 0.0
      %5100 = vmatprep.subr.mxu0 0.0
      %5101 = vmatpush1.msra.mxu0 0.0
      %5102 = vmatprep.subr.mxu0 0.0
      %5103 = vmatpush1.msra.mxu0 0.0
      %5104 = vmatprep.subr.mxu0 0.0
      %5105 = vmatpush1.msra.mxu0 0.0
      %5106 = vmatprep.subr.mxu0 0.0
      %5107 = vmatpush1.msra.mxu0 0.0
      %5108 = vmatprep.subr.mxu0 0.0
      %5109 = vmatpush1.msra.mxu0 0.0
      %5110 = vmatprep.subr.mxu0 0.0
      %5111 = vmatpush1.msra.mxu0 0.0
      %5112 = vmatprep.subr.mxu0 0.0
      %5113 = vmatpush1.msra.mxu0 0.0
      %5114 = vmatprep.subr.mxu0 0.0
      %5115 = vmatpush1.msra.mxu0 0.0
      %5116 = vmatprep.subr.mxu0 0.0
      %5117 = vmatpush1.msra.mxu0 0.0
      %5118 = vmatprep.subr.mxu0 0.0
      %5119 = vmatpush1.msra.mxu0 0.0
      %5120 = vmatprep.subr.mxu0 0.0
      %5121 = vmatpush1.msra.mxu0 0.0
      %5122 = vmatprep.subr.mxu0 0.0
      %5123 = vmatpush1.msra.mxu0 0.0
      %5124 = vmatprep.subr.mxu0 0.0
      %5125 = vmatpush1.msra.mxu0 0.0
      %5126 = vmatprep.subr.mxu0 0.0
      %5127 = vmatpush1.msra.mxu0 0.0
      %5128 = vmatprep.mubr.f32.mxu0 0.0
      %5129 = vmatmul.mubr.f32.gmra.mrb[0].mxu0 %v4984
      %v5130 = vpop.f32.mrb[0].mxu0
      %v5131 = vadd.f32 0.0, %v5130
      %v5132 = vpop.f32.mrb[0].mxu0
      %5133 = vmatprep.mubr.f32.mxu0 0.0
      %5134 = vmatmul.mubr.f32.gmra.mrb[0].mxu0 %v4986
      %v5135 = vpop.f32.mrb[0].mxu0
      %v5136 = vadd.f32 0.0, %v5135
      %v5137 = vpop.f32.mrb[0].mxu0
      %5138 = vmatprep.mubr.f32.mxu0 0.0
      %5139 = vmatmul.mubr.f32.gmra.mrb[0].mxu0 %v4988
      %v5140 = vpop.f32.mrb[0].mxu0
      %v5141 = vadd.f32 0.0, %v5140
      %v5142 = vpop.f32.mrb[0].mxu0
      %5143 = vmatprep.mubr.f32.mxu0 0.0
      %5144 = vmatmul.mubr.f32.gmra.mrb[0].mxu0 %v4990
      %v5145 = vpop.f32.mrb[0].mxu0
      %v5146 = vadd.f32 0.0, %v5145
      %v5147 = vpop.f32.mrb[0].mxu0
      %5148 = vmatprep.mubr.f32.mxu0 0.0
      %5149 = vmatmul.mubr.f32.gmra.mrb[0].mxu0 %v4992
      %v5150 = vpop.f32.mrb[0].mxu0
      %v5151 = vadd.f32 0.0, %v5150
      %v5152 = vpop.f32.mrb[0].mxu0
      %5153 = vmatprep.mubr.f32.mxu0 0.0
      %5154 = vmatmul.mubr.f32.gmra.mrb[0].mxu0 %v4994
      %v5155 = vpop.f32.mrb[0].mxu0
      %v5156 = vadd.f32 0.0, %v5155
      %v5157 = vpop.f32.mrb[0].mxu0
      %5158 = vmatprep.mubr.f32.mxu0 0.0
      %5159 = vmatmul.mubr.f32.gmra.mrb[0].mxu0 %v4996
      %v5160 = vpop.f32.mrb[0].mxu0
      %v5161 = vadd.f32 0.0, %v5160
      %v5162 = vpop.f32.mrb[0].mxu0
      %5163 = vmatprep.mubr.f32.mxu0 0.0
      %5164 = vmatmul.mubr.f32.gmra.mrb[0].mxu0 %v4998
      %v5165 = vpop.f32.mrb[0].mxu0
      %v5166 = vadd.f32 0.0, %v5165
      %v5167 = vpop.f32.mrb[0].mxu0
      %5168 = vmatprep.mubr.f32.mxu0 0.0
      %5169 = vmatmul.mubr.f32.gmra.mrb[0].mxu0 %v5000
      %v5170 = vpop.f32.mrb[0].mxu0
      %v5171 = vadd.f32 0.0, %v5170
      %v5172 = vpop.f32.mrb[0].mxu0
      %5173 = vmatprep.mubr.f32.mxu0 0.0
      %5174 = vmatmul.mubr.f32.gmra.mrb[0].mxu0 %v5002
      %v5175 = vpop.f32.mrb[0].mxu0
      %v5176 = vadd.f32 0.0, %v5175
      %v5177 = vpop.f32.mrb[0].mxu0
      %5178 = vmatprep.mubr.f32.mxu0 0.0
      %5179 = vmatmul.mubr.f32.gmra.mrb[0].mxu0 %v5004
      %v5180 = vpop.f32.mrb[0].mxu0
      %v5181 = vadd.f32 0.0, %v5180
      %v5182 = vpop.f32.mrb[0].mxu0
      %5183 = vmatprep.mubr.f32.mxu0 0.0
      %5184 = vmatmul.mubr.f32.gmra.mrb[0].mxu0 %v5006
      %v5185 = vpop.f32.mrb[0].mxu0
      %v5186 = vadd.f32 0.0, %v5185
      %v5187 = vpop.f32.mrb[0].mxu0
      %5188 = vmatprep.mubr.f32.mxu0 0.0
      %5189 = vmatmul.mubr.f32.gmra.mrb[0].mxu0 %v5008
      %v5190 = vpop.f32.mrb[0].mxu0
      %v5191 = vadd.f32 0.0, %v5190
      %v5192 = vpop.f32.mrb[0].mxu0
      %5193 = vmatprep.mubr.f32.mxu0 0.0
      %5194 = vmatmul.mubr.f32.gmra.mrb[0].mxu0 %v5010
      %v5195 = vpop.f32.mrb[0].mxu0
      %v5196 = vadd.f32 0.0, %v5195
      %v5197 = vpop.f32.mrb[0].mxu0
      %5198 = vmatprep.mubr.f32.mxu0 0.0
      %5199 = vmatmul.mubr.f32.gmra.mrb[0].mxu0 %v5012
      %v5200 = vpop.f32.mrb[0].mxu0
      %v5201 = vadd.f32 0.0, %v5200
      %v5202 = vpop.f32.mrb[0].mxu0
      %5203 = vmatprep.mubr.f32.mxu0 0.0
      %5204 = vmatmul.mubr.f32.gmra.mrb[0].mxu0 %v5014
      %v5205 = vpop.f32.mrb[0].mxu0
      %v5206 = vadd.f32 0.0, %v5205
      %v5207 = vpop.f32.mrb[0].mxu0
      %5208 = vmatprep.mubr.f32.mxu0 0.0
      %5209 = vmatmul.mubr.f32.gmra.mrb[0].mxu0 %v5016
      %v5210 = vpop.f32.mrb[0].mxu0
      %v5211 = vadd.f32 0.0, %v5210
      %v5212 = vpop.f32.mrb[0].mxu0
      %5213 = vmatprep.mubr.f32.mxu0 0.0
      %5214 = vmatmul.mubr.f32.gmra.mrb[0].mxu0 %v5018
      %v5215 = vpop.f32.mrb[0].mxu0
      %v5216 = vadd.f32 0.0, %v5215
      %v5217 = vpop.f32.mrb[0].mxu0
      %5218 = vmatprep.mubr.f32.mxu0 0.0
      %5219 = vmatmul.mubr.f32.gmra.mrb[0].mxu0 %v5020
      %v5220 = vpop.f32.mrb[0].mxu0
      %v5221 = vadd.f32 0.0, %v5220
      %v5222 = vpop.f32.mrb[0].mxu0
      %5223 = vmatprep.mubr.f32.mxu0 0.0
      %5224 = vmatmul.mubr.f32.gmra.mrb[0].mxu0 %v5022
      %v5225 = vpop.f32.mrb[0].mxu0
      %v5226 = vadd.f32 0.0, %v5225
      %v5227 = vpop.f32.mrb[0].mxu0
      %5228 = vmatprep.mubr.f32.mxu0 0.0
      %5229 = vmatmul.mubr.f32.gmra.mrb[0].mxu0 %v5024
      %v5230 = vpop.f32.mrb[0].mxu0
      %v5231 = vadd.f32 0.0, %v5230
      %v5232 = vpop.f32.mrb[0].mxu0
      %5233 = vmatprep.mubr.f32.mxu0 0.0
      %5234 = vmatmul.mubr.f32.gmra.mrb[0].mxu0 %v5026
      %v5235 = vpop.f32.mrb[0].mxu0
      %v5236 = vadd.f32 0.0, %v5235
      %v5237 = vpop.f32.mrb[0].mxu0
      %5238 = vmatprep.mubr.f32.mxu0 0.0
      %5239 = vmatmul.mubr.f32.gmra.mrb[0].mxu0 %v5028
      %v5240 = vpop.f32.mrb[0].mxu0
      %v5241 = vadd.f32 0.0, %v5240
      %v5242 = vpop.f32.mrb[0].mxu0
      %5243 = vmatprep.mubr.f32.mxu0 0.0
      %5244 = vmatmul.mubr.f32.gmra.mrb[0].mxu0 %v5030
      %v5245 = vpop.f32.mrb[0].mxu0
      %v5246 = vadd.f32 0.0, %v5245
      %v5247 = vpop.f32.mrb[0].mxu0
      %5248 = vmatprep.mubr.f32.mxu0 0.0
      %5249 = vmatmul.mubr.f32.gmra.mrb[0].mxu0 %v5032
      %v5250 = vpop.f32.mrb[0].mxu0
      %v5251 = vadd.f32 0.0, %v5250
      %v5252 = vpop.f32.mrb[0].mxu0
      %5253 = vmatprep.mubr.f32.mxu0 0.0
      %5254 = vmatmul.mubr.f32.gmra.mrb[0].mxu0 %v5034
      %v5255 = vpop.f32.mrb[0].mxu0
      %v5256 = vadd.f32 0.0, %v5255
      %v5257 = vpop.f32.mrb[0].mxu0
      %5258 = vmatprep.mubr.f32.mxu0 0.0
      %5259 = vmatmul.mubr.f32.gmra.mrb[0].mxu0 %v5036
      %v5260 = vpop.f32.mrb[0].mxu0
      %v5261 = vadd.f32 0.0, %v5260
      %v5262 = vpop.f32.mrb[0].mxu0
      %5263 = vmatprep.mubr.f32.mxu0 0.0
      %5264 = vmatmul.mubr.f32.gmra.mrb[0].mxu0 %v5038
      %v5265 = vpop.f32.mrb[0].mxu0
      %v5266 = vadd.f32 0.0, %v5265
      %v5267 = vpop.f32.mrb[0].mxu0
      %5268 = vmatprep.mubr.f32.mxu0 0.0
      %5269 = vmatmul.mubr.f32.gmra.mrb[0].mxu0 %v5040
      %v5270 = vpop.f32.mrb[0].mxu0
      %v5271 = vadd.f32 0.0, %v5270
      %v5272 = vpop.f32.mrb[0].mxu0
      %5273 = vmatprep.mubr.f32.mxu0 0.0
      %5274 = vmatmul.mubr.f32.gmra.mrb[0].mxu0 %v5042
      %v5275 = vpop.f32.mrb[0].mxu0
      %v5276 = vadd.f32 0.0, %v5275
      %v5277 = vpop.f32.mrb[0].mxu0
      %5278 = vmatprep.mubr.f32.mxu0 0.0
      %5279 = vmatmul.mubr.f32.gmra.mrb[0].mxu0 %v5044
      %v5280 = vpop.f32.mrb[0].mxu0
      %v5281 = vadd.f32 0.0, %v5280
      %v5282 = vpop.f32.mrb[0].mxu0
      %5283 = vmatprep.mubr.f32.mxu0 0.0
      %5284 = vmatmul.mubr.f32.gmra.mrb[0].mxu0 %v5046
      %v5285 = vpop.f32.mrb[0].mxu0
      %v5286 = vadd.f32 0.0, %v5285
      %v5287 = vpop.f32.mrb[0].mxu0
      %5288 = vdwg.mxu0
      %v5289 = vadd.f32 %v4951, %v5131
      %v5290 = vadd.f32 %v4952, %v5136
      %v5291 = vadd.f32 %v4953, %v5141
      %v5292 = vadd.f32 %v4954, %v5146
      %v5293 = vadd.f32 %v4955, %v5151
      %v5294 = vadd.f32 %v4956, %v5156
      %v5295 = vadd.f32 %v4957, %v5161
      %v5296 = vadd.f32 %v4958, %v5166
      %v5297 = vadd.f32 %v4959, %v5171
      %v5298 = vadd.f32 %v4960, %v5176
      %v5299 = vadd.f32 %v4961, %v5181
      %v5300 = vadd.f32 %v4962, %v5186
      %v5301 = vadd.f32 %v4963, %v5191
      %v5302 = vadd.f32 %v4964, %v5196
      %v5303 = vadd.f32 %v4965, %v5201
      %v5304 = vadd.f32 %v4966, %v5206
      %v5305 = vadd.f32 %v4967, %v5211
      %v5306 = vadd.f32 %v4968, %v5216
      %v5307 = vadd.f32 %v4969, %v5221
      %v5308 = vadd.f32 %v4970, %v5226
      %v5309 = vadd.f32 %v4971, %v5231
      %v5310 = vadd.f32 %v4972, %v5236
      %v5311 = vadd.f32 %v4973, %v5241
      %v5312 = vadd.f32 %v4974, %v5246
      %v5313 = vadd.f32 %v4975, %v5251
      %v5314 = vadd.f32 %v4976, %v5256
      %v5315 = vadd.f32 %v4977, %v5261
      %v5316 = vadd.f32 %v4978, %v5266
      %v5317 = vadd.f32 %v4979, %v5271
      %v5318 = vadd.f32 %v4980, %v5276
      %v5319 = vadd.f32 %v4981, %v5281
      %v5320 = vadd.f32 %v4982, %v5286
      %s5321 = scalar_lea.vmem %s3633, 2 [#allocation2]
      %v5322 = vld [vmem:[%s5321] ss:$2 sm:$0xff]
      %s5323 = scalar_lea.vmem %s3633, 26 [#allocation2]
      %v5324 = vld [vmem:[%s5323] ss:$2 sm:$0xff]
      %s5325 = scalar_lea.vmem %s3633, 50 [#allocation2]
      %v5326 = vld [vmem:[%s5325] ss:$2 sm:$0xff]
      %s5327 = scalar_lea.vmem %s3633, 74 [#allocation2]
      %v5328 = vld [vmem:[%s5327] ss:$2 sm:$0xff]
      %s5329 = scalar_lea.vmem %s3633, 98 [#allocation2]
      %v5330 = vld [vmem:[%s5329] ss:$2 sm:$0xff]
      %s5331 = scalar_lea.vmem %s3633, 122 [#allocation2]
      %v5332 = vld [vmem:[%s5331] ss:$2 sm:$0xff]
      %s5333 = scalar_lea.vmem %s3633, 146 [#allocation2]
      %v5334 = vld [vmem:[%s5333] ss:$2 sm:$0xff]
      %s5335 = scalar_lea.vmem %s3633, 170 [#allocation2]
      %v5336 = vld [vmem:[%s5335] ss:$2 sm:$0xff]
      %s5337 = scalar_lea.vmem %s3633, 194 [#allocation2]
      %v5338 = vld [vmem:[%s5337] ss:$2 sm:$0xff]
      %s5339 = scalar_lea.vmem %s3633, 218 [#allocation2]
      %v5340 = vld [vmem:[%s5339] ss:$2 sm:$0xff]
      %s5341 = scalar_lea.vmem %s3633, 242 [#allocation2]
      %v5342 = vld [vmem:[%s5341] ss:$2 sm:$0xff]
      %s5343 = scalar_lea.vmem %s3633, 266 [#allocation2]
      %v5344 = vld [vmem:[%s5343] ss:$2 sm:$0xff]
      %s5345 = scalar_lea.vmem %s3633, 290 [#allocation2]
      %v5346 = vld [vmem:[%s5345] ss:$2 sm:$0xff]
      %s5347 = scalar_lea.vmem %s3633, 314 [#allocation2]
      %v5348 = vld [vmem:[%s5347] ss:$2 sm:$0xff]
      %s5349 = scalar_lea.vmem %s3633, 338 [#allocation2]
      %v5350 = vld [vmem:[%s5349] ss:$2 sm:$0xff]
      %s5351 = scalar_lea.vmem %s3633, 362 [#allocation2]
      %v5352 = vld [vmem:[%s5351] ss:$2 sm:$0xff]
      %s5353 = scalar_lea.vmem %s3633, 434 [#allocation2]
      %v5354 = vld [vmem:[%s5353] ss:$2 sm:$0xff]
      %s5355 = scalar_lea.vmem %s3633, 458 [#allocation2]
      %v5356 = vld [vmem:[%s5355] ss:$2 sm:$0xff]
      %s5357 = scalar_lea.vmem %s3633, 482 [#allocation2]
      %v5358 = vld [vmem:[%s5357] ss:$2 sm:$0xff]
      %s5359 = scalar_lea.vmem %s3633, 506 [#allocation2]
      %v5360 = vld [vmem:[%s5359] ss:$2 sm:$0xff]
      %s5361 = scalar_lea.vmem %s3633, 530 [#allocation2]
      %v5362 = vld [vmem:[%s5361] ss:$2 sm:$0xff]
      %s5363 = scalar_lea.vmem %s3633, 554 [#allocation2]
      %v5364 = vld [vmem:[%s5363] ss:$2 sm:$0xff]
      %s5365 = scalar_lea.vmem %s3633, 578 [#allocation2]
      %v5366 = vld [vmem:[%s5365] ss:$2 sm:$0xff]
      %s5367 = scalar_lea.vmem %s3633, 602 [#allocation2]
      %v5368 = vld [vmem:[%s5367] ss:$2 sm:$0xff]
      %s5369 = scalar_lea.vmem %s3633, 626 [#allocation2]
      %v5370 = vld [vmem:[%s5369] ss:$2 sm:$0xff]
      %s5371 = scalar_lea.vmem %s3633, 650 [#allocation2]
      %v5372 = vld [vmem:[%s5371] ss:$2 sm:$0xff]
      %s5373 = scalar_lea.vmem %s3633, 674 [#allocation2]
      %v5374 = vld [vmem:[%s5373] ss:$2 sm:$0xff]
      %s5375 = scalar_lea.vmem %s3633, 698 [#allocation2]
      %v5376 = vld [vmem:[%s5375] ss:$2 sm:$0xff]
      %s5377 = scalar_lea.vmem %s3633, 722 [#allocation2]
      %v5378 = vld [vmem:[%s5377] ss:$2 sm:$0xff]
      %s5379 = scalar_lea.vmem %s3633, 746 [#allocation2]
      %v5380 = vld [vmem:[%s5379] ss:$2 sm:$0xff]
      %s5381 = scalar_lea.vmem %s3633, 770 [#allocation2]
      %v5382 = vld [vmem:[%s5381] ss:$2 sm:$0xff]
      %s5383 = scalar_lea.vmem %s3633, 794 [#allocation2]
      %v5384 = vld [vmem:[%s5383] ss:$2 sm:$0xff]
      %s5385 = scalar_lea.vmem %s3, 640
      %v5386 = vld [vmem:[%s5385] sm:$0xff]
      %v5387 = vld [vmem:[%s5385 + $0x8] sm:$0xff]
      %v5388 = vld [vmem:[%s5385 + $0x10] sm:$0xff]
      %v5389 = vld [vmem:[%s5385 + $0x18] sm:$0xff]
      %v5390 = vld [vmem:[%s5385 + $0x20] sm:$0xff]
      %v5391 = vld [vmem:[%s5385 + $0x28] sm:$0xff]
      %v5392 = vld [vmem:[%s5385 + $0x30] sm:$0xff]
      %v5393 = vld [vmem:[%s5385 + $0x38] sm:$0xff]
      %v5394 = vld [vmem:[%s5385 + $0x40] sm:$0xff]
      %v5395 = vld [vmem:[%s5385 + $0x48] sm:$0xff]
      %v5396 = vld [vmem:[%s5385 + $0x50] sm:$0xff]
      %v5397 = vld [vmem:[%s5385 + $0x58] sm:$0xff]
      %v5398 = vld [vmem:[%s5385 + $0x60] sm:$0xff]
      %v5399 = vld [vmem:[%s5385 + $0x68] sm:$0xff]
      %v5400 = vld [vmem:[%s5385 + $0x70] sm:$0xff]
      %v5401 = vld [vmem:[%s5385 + $0x78] sm:$0xff]
      %5402 = vmatprep.subr.mxu0 0.0
      %5403 = vmatpush1.msra.mxu0 %v5386
      %5404 = vmatprep.subr.mxu0 0.0
      %5405 = vmatpush1.msra.mxu0 %v5387
      %5406 = vmatprep.subr.mxu0 0.0
      %5407 = vmatpush1.msra.mxu0 %v5388
      %5408 = vmatprep.subr.mxu0 0.0
      %5409 = vmatpush1.msra.mxu0 %v5389
      %5410 = vmatprep.subr.mxu0 0.0
      %5411 = vmatpush1.msra.mxu0 %v5390
      %5412 = vmatprep.subr.mxu0 0.0
      %5413 = vmatpush1.msra.mxu0 %v5391
      %5414 = vmatprep.subr.mxu0 0.0
      %5415 = vmatpush1.msra.mxu0 %v5392
      %5416 = vmatprep.subr.mxu0 0.0
      %5417 = vmatpush1.msra.mxu0 %v5393
      %5418 = vmatprep.subr.mxu0 0.0
      %5419 = vmatpush1.msra.mxu0 %v5394
      %5420 = vmatprep.subr.mxu0 0.0
      %5421 = vmatpush1.msra.mxu0 %v5395
      %5422 = vmatprep.subr.mxu0 0.0
      %5423 = vmatpush1.msra.mxu0 %v5396
      %5424 = vmatprep.subr.mxu0 0.0
      %5425 = vmatpush1.msra.mxu0 %v5397
      %5426 = vmatprep.subr.mxu0 0.0
      %5427 = vmatpush1.msra.mxu0 %v5398
      %5428 = vmatprep.subr.mxu0 0.0
      %5429 = vmatpush1.msra.mxu0 %v5399
      %5430 = vmatprep.subr.mxu0 0.0
      %5431 = vmatpush1.msra.mxu0 %v5400
      %5432 = vmatprep.subr.mxu0 0.0
      %5433 = vmatpush1.msra.mxu0 %v5401
      %5434 = vmatprep.subr.mxu0 0.0
      %5435 = vmatpush1.msra.mxu0 0.0
      %5436 = vmatprep.subr.mxu0 0.0
      %5437 = vmatpush1.msra.mxu0 0.0
      %5438 = vmatprep.subr.mxu0 0.0
      %5439 = vmatpush1.msra.mxu0 0.0
      %5440 = vmatprep.subr.mxu0 0.0
      %5441 = vmatpush1.msra.mxu0 0.0
      %5442 = vmatprep.subr.mxu0 0.0
      %5443 = vmatpush1.msra.mxu0 0.0
      %5444 = vmatprep.subr.mxu0 0.0
      %5445 = vmatpush1.msra.mxu0 0.0
      %5446 = vmatprep.subr.mxu0 0.0
      %5447 = vmatpush1.msra.mxu0 0.0
      %5448 = vmatprep.subr.mxu0 0.0
      %5449 = vmatpush1.msra.mxu0 0.0
      %5450 = vmatprep.subr.mxu0 0.0
      %5451 = vmatpush1.msra.mxu0 0.0
      %5452 = vmatprep.subr.mxu0 0.0
      %5453 = vmatpush1.msra.mxu0 0.0
      %5454 = vmatprep.subr.mxu0 0.0
      %5455 = vmatpush1.msra.mxu0 0.0
      %5456 = vmatprep.subr.mxu0 0.0
      %5457 = vmatpush1.msra.mxu0 0.0
      %5458 = vmatprep.subr.mxu0 0.0
      %5459 = vmatpush1.msra.mxu0 0.0
      %5460 = vmatprep.subr.mxu0 0.0
      %5461 = vmatpush1.msra.mxu0 0.0
      %5462 = vmatprep.subr.mxu0 0.0
      %5463 = vmatpush1.msra.mxu0 0.0
      %5464 = vmatprep.subr.mxu0 0.0
      %5465 = vmatpush1.msra.mxu0 0.0
      %5466 = vmatprep.mubr.f32.mxu0 0.0
      %5467 = vmatmul.mubr.f32.gmra.mrb[0].mxu0 %v5322
      %v5468 = vpop.f32.mrb[0].mxu0
      %v5469 = vadd.f32 0.0, %v5468
      %v5470 = vpop.f32.mrb[0].mxu0
      %5471 = vmatprep.mubr.f32.mxu0 0.0
      %5472 = vmatmul.mubr.f32.gmra.mrb[0].mxu0 %v5324
      %v5473 = vpop.f32.mrb[0].mxu0
      %v5474 = vadd.f32 0.0, %v5473
      %v5475 = vpop.f32.mrb[0].mxu0
      %5476 = vmatprep.mubr.f32.mxu0 0.0
      %5477 = vmatmul.mubr.f32.gmra.mrb[0].mxu0 %v5326
      %v5478 = vpop.f32.mrb[0].mxu0
      %v5479 = vadd.f32 0.0, %v5478
      %v5480 = vpop.f32.mrb[0].mxu0
      %5481 = vmatprep.mubr.f32.mxu0 0.0
      %5482 = vmatmul.mubr.f32.gmra.mrb[0].mxu0 %v5328
      %v5483 = vpop.f32.mrb[0].mxu0
      %v5484 = vadd.f32 0.0, %v5483
      %v5485 = vpop.f32.mrb[0].mxu0
      %5486 = vmatprep.mubr.f32.mxu0 0.0
      %5487 = vmatmul.mubr.f32.gmra.mrb[0].mxu0 %v5330
      %v5488 = vpop.f32.mrb[0].mxu0
      %v5489 = vadd.f32 0.0, %v5488
      %v5490 = vpop.f32.mrb[0].mxu0
      %5491 = vmatprep.mubr.f32.mxu0 0.0
      %5492 = vmatmul.mubr.f32.gmra.mrb[0].mxu0 %v5332
      %v5493 = vpop.f32.mrb[0].mxu0
      %v5494 = vadd.f32 0.0, %v5493
      %v5495 = vpop.f32.mrb[0].mxu0
      %5496 = vmatprep.mubr.f32.mxu0 0.0
      %5497 = vmatmul.mubr.f32.gmra.mrb[0].mxu0 %v5334
      %v5498 = vpop.f32.mrb[0].mxu0
      %v5499 = vadd.f32 0.0, %v5498
      %v5500 = vpop.f32.mrb[0].mxu0
      %5501 = vmatprep.mubr.f32.mxu0 0.0
      %5502 = vmatmul.mubr.f32.gmra.mrb[0].mxu0 %v5336
      %v5503 = vpop.f32.mrb[0].mxu0
      %v5504 = vadd.f32 0.0, %v5503
      %v5505 = vpop.f32.mrb[0].mxu0
      %5506 = vmatprep.mubr.f32.mxu0 0.0
      %5507 = vmatmul.mubr.f32.gmra.mrb[0].mxu0 %v5338
      %v5508 = vpop.f32.mrb[0].mxu0
      %v5509 = vadd.f32 0.0, %v5508
      %v5510 = vpop.f32.mrb[0].mxu0
      %5511 = vmatprep.mubr.f32.mxu0 0.0
      %5512 = vmatmul.mubr.f32.gmra.mrb[0].mxu0 %v5340
      %v5513 = vpop.f32.mrb[0].mxu0
      %v5514 = vadd.f32 0.0, %v5513
      %v5515 = vpop.f32.mrb[0].mxu0
      %5516 = vmatprep.mubr.f32.mxu0 0.0
      %5517 = vmatmul.mubr.f32.gmra.mrb[0].mxu0 %v5342
      %v5518 = vpop.f32.mrb[0].mxu0
      %v5519 = vadd.f32 0.0, %v5518
      %v5520 = vpop.f32.mrb[0].mxu0
      %5521 = vmatprep.mubr.f32.mxu0 0.0
      %5522 = vmatmul.mubr.f32.gmra.mrb[0].mxu0 %v5344
      %v5523 = vpop.f32.mrb[0].mxu0
      %v5524 = vadd.f32 0.0, %v5523
      %v5525 = vpop.f32.mrb[0].mxu0
      %5526 = vmatprep.mubr.f32.mxu0 0.0
      %5527 = vmatmul.mubr.f32.gmra.mrb[0].mxu0 %v5346
      %v5528 = vpop.f32.mrb[0].mxu0
      %v5529 = vadd.f32 0.0, %v5528
      %v5530 = vpop.f32.mrb[0].mxu0
      %5531 = vmatprep.mubr.f32.mxu0 0.0
      %5532 = vmatmul.mubr.f32.gmra.mrb[0].mxu0 %v5348
      %v5533 = vpop.f32.mrb[0].mxu0
      %v5534 = vadd.f32 0.0, %v5533
      %v5535 = vpop.f32.mrb[0].mxu0
      %5536 = vmatprep.mubr.f32.mxu0 0.0
      %5537 = vmatmul.mubr.f32.gmra.mrb[0].mxu0 %v5350
      %v5538 = vpop.f32.mrb[0].mxu0
      %v5539 = vadd.f32 0.0, %v5538
      %v5540 = vpop.f32.mrb[0].mxu0
      %5541 = vmatprep.mubr.f32.mxu0 0.0
      %5542 = vmatmul.mubr.f32.gmra.mrb[0].mxu0 %v5352
      %v5543 = vpop.f32.mrb[0].mxu0
      %v5544 = vadd.f32 0.0, %v5543
      %v5545 = vpop.f32.mrb[0].mxu0
      %5546 = vmatprep.mubr.f32.mxu0 0.0
      %5547 = vmatmul.mubr.f32.gmra.mrb[0].mxu0 %v5354
      %v5548 = vpop.f32.mrb[0].mxu0
      %v5549 = vadd.f32 0.0, %v5548
      %v5550 = vpop.f32.mrb[0].mxu0
      %5551 = vmatprep.mubr.f32.mxu0 0.0
      %5552 = vmatmul.mubr.f32.gmra.mrb[0].mxu0 %v5356
      %v5553 = vpop.f32.mrb[0].mxu0
      %v5554 = vadd.f32 0.0, %v5553
      %v5555 = vpop.f32.mrb[0].mxu0
      %5556 = vmatprep.mubr.f32.mxu0 0.0
      %5557 = vmatmul.mubr.f32.gmra.mrb[0].mxu0 %v5358
      %v5558 = vpop.f32.mrb[0].mxu0
      %v5559 = vadd.f32 0.0, %v5558
      %v5560 = vpop.f32.mrb[0].mxu0
      %5561 = vmatprep.mubr.f32.mxu0 0.0
      %5562 = vmatmul.mubr.f32.gmra.mrb[0].mxu0 %v5360
      %v5563 = vpop.f32.mrb[0].mxu0
      %v5564 = vadd.f32 0.0, %v5563
      %v5565 = vpop.f32.mrb[0].mxu0
      %5566 = vmatprep.mubr.f32.mxu0 0.0
      %5567 = vmatmul.mubr.f32.gmra.mrb[0].mxu0 %v5362
      %v5568 = vpop.f32.mrb[0].mxu0
      %v5569 = vadd.f32 0.0, %v5568
      %v5570 = vpop.f32.mrb[0].mxu0
      %5571 = vmatprep.mubr.f32.mxu0 0.0
      %5572 = vmatmul.mubr.f32.gmra.mrb[0].mxu0 %v5364
      %v5573 = vpop.f32.mrb[0].mxu0
      %v5574 = vadd.f32 0.0, %v5573
      %v5575 = vpop.f32.mrb[0].mxu0
      %5576 = vmatprep.mubr.f32.mxu0 0.0
      %5577 = vmatmul.mubr.f32.gmra.mrb[0].mxu0 %v5366
      %v5578 = vpop.f32.mrb[0].mxu0
      %v5579 = vadd.f32 0.0, %v5578
      %v5580 = vpop.f32.mrb[0].mxu0
      %5581 = vmatprep.mubr.f32.mxu0 0.0
      %5582 = vmatmul.mubr.f32.gmra.mrb[0].mxu0 %v5368
      %v5583 = vpop.f32.mrb[0].mxu0
      %v5584 = vadd.f32 0.0, %v5583
      %v5585 = vpop.f32.mrb[0].mxu0
      %5586 = vmatprep.mubr.f32.mxu0 0.0
      %5587 = vmatmul.mubr.f32.gmra.mrb[0].mxu0 %v5370
      %v5588 = vpop.f32.mrb[0].mxu0
      %v5589 = vadd.f32 0.0, %v5588
      %v5590 = vpop.f32.mrb[0].mxu0
      %5591 = vmatprep.mubr.f32.mxu0 0.0
      %5592 = vmatmul.mubr.f32.gmra.mrb[0].mxu0 %v5372
      %v5593 = vpop.f32.mrb[0].mxu0
      %v5594 = vadd.f32 0.0, %v5593
      %v5595 = vpop.f32.mrb[0].mxu0
      %5596 = vmatprep.mubr.f32.mxu0 0.0
      %5597 = vmatmul.mubr.f32.gmra.mrb[0].mxu0 %v5374
      %v5598 = vpop.f32.mrb[0].mxu0
      %v5599 = vadd.f32 0.0, %v5598
      %v5600 = vpop.f32.mrb[0].mxu0
      %5601 = vmatprep.mubr.f32.mxu0 0.0
      %5602 = vmatmul.mubr.f32.gmra.mrb[0].mxu0 %v5376
      %v5603 = vpop.f32.mrb[0].mxu0
      %v5604 = vadd.f32 0.0, %v5603
      %v5605 = vpop.f32.mrb[0].mxu0
      %5606 = vmatprep.mubr.f32.mxu0 0.0
      %5607 = vmatmul.mubr.f32.gmra.mrb[0].mxu0 %v5378
      %v5608 = vpop.f32.mrb[0].mxu0
      %v5609 = vadd.f32 0.0, %v5608
      %v5610 = vpop.f32.mrb[0].mxu0
      %5611 = vmatprep.mubr.f32.mxu0 0.0
      %5612 = vmatmul.mubr.f32.gmra.mrb[0].mxu0 %v5380
      %v5613 = vpop.f32.mrb[0].mxu0
      %v5614 = vadd.f32 0.0, %v5613
      %v5615 = vpop.f32.mrb[0].mxu0
      %5616 = vmatprep.mubr.f32.mxu0 0.0
      %5617 = vmatmul.mubr.f32.gmra.mrb[0].mxu0 %v5382
      %v5618 = vpop.f32.mrb[0].mxu0
      %v5619 = vadd.f32 0.0, %v5618
      %v5620 = vpop.f32.mrb[0].mxu0
      %5621 = vmatprep.mubr.f32.mxu0 0.0
      %5622 = vmatmul.mubr.f32.gmra.mrb[0].mxu0 %v5384
      %v5623 = vpop.f32.mrb[0].mxu0
      %v5624 = vadd.f32 0.0, %v5623
      %v5625 = vpop.f32.mrb[0].mxu0
      %5626 = vdwg.mxu0
      %v5627 = vadd.f32 %v5289, %v5469
      %v5628 = vadd.f32 %v5290, %v5474
      %v5629 = vadd.f32 %v5291, %v5479
      %v5630 = vadd.f32 %v5292, %v5484
      %v5631 = vadd.f32 %v5293, %v5489
      %v5632 = vadd.f32 %v5294, %v5494
      %v5633 = vadd.f32 %v5295, %v5499
      %v5634 = vadd.f32 %v5296, %v5504
      %v5635 = vadd.f32 %v5297, %v5509
      %v5636 = vadd.f32 %v5298, %v5514
      %v5637 = vadd.f32 %v5299, %v5519
      %v5638 = vadd.f32 %v5300, %v5524
      %v5639 = vadd.f32 %v5301, %v5529
      %v5640 = vadd.f32 %v5302, %v5534
      %v5641 = vadd.f32 %v5303, %v5539
      %v5642 = vadd.f32 %v5304, %v5544
      %v5643 = vadd.f32 %v5305, %v5549
      %v5644 = vadd.f32 %v5306, %v5554
      %v5645 = vadd.f32 %v5307, %v5559
      %v5646 = vadd.f32 %v5308, %v5564
      %v5647 = vadd.f32 %v5309, %v5569
      %v5648 = vadd.f32 %v5310, %v5574
      %v5649 = vadd.f32 %v5311, %v5579
      %v5650 = vadd.f32 %v5312, %v5584
      %v5651 = vadd.f32 %v5313, %v5589
      %v5652 = vadd.f32 %v5314, %v5594
      %v5653 = vadd.f32 %v5315, %v5599
      %v5654 = vadd.f32 %v5316, %v5604
      %v5655 = vadd.f32 %v5317, %v5609
      %v5656 = vadd.f32 %v5318, %v5614
      %v5657 = vadd.f32 %v5319, %v5619
      %v5658 = vadd.f32 %v5320, %v5624
      %s5659 = scalar_lea.vmem [#allocation2], 48
      %v5660 = vld [vmem:[%s5659] ss:$2 sm:$0xff]
      %s5661 = scalar_lea.vmem %s5659, 24 [#allocation2]
      %v5662 = vld [vmem:[%s5661] ss:$2 sm:$0xff]
      %s5663 = scalar_lea.vmem %s5659, 48 [#allocation2]
      %v5664 = vld [vmem:[%s5663] ss:$2 sm:$0xff]
      %s5665 = scalar_lea.vmem %s5659, 72 [#allocation2]
      %v5666 = vld [vmem:[%s5665] ss:$2 sm:$0xff]
      %s5667 = scalar_lea.vmem %s5659, 96 [#allocation2]
      %v5668 = vld [vmem:[%s5667] ss:$2 sm:$0xff]
      %s5669 = scalar_lea.vmem %s5659, 120 [#allocation2]
      %v5670 = vld [vmem:[%s5669] ss:$2 sm:$0xff]
      %s5671 = scalar_lea.vmem %s5659, 144 [#allocation2]
      %v5672 = vld [vmem:[%s5671] ss:$2 sm:$0xff]
      %s5673 = scalar_lea.vmem %s5659, 168 [#allocation2]
      %v5674 = vld [vmem:[%s5673] ss:$2 sm:$0xff]
      %s5675 = scalar_lea.vmem %s5659, 192 [#allocation2]
      %v5676 = vld [vmem:[%s5675] ss:$2 sm:$0xff]
      %s5677 = scalar_lea.vmem %s5659, 216 [#allocation2]
      %v5678 = vld [vmem:[%s5677] ss:$2 sm:$0xff]
      %s5679 = scalar_lea.vmem %s5659, 240 [#allocation2]
      %v5680 = vld [vmem:[%s5679] ss:$2 sm:$0xff]
      %s5681 = scalar_lea.vmem %s5659, 264 [#allocation2]
      %v5682 = vld [vmem:[%s5681] ss:$2 sm:$0xff]
      %s5683 = scalar_lea.vmem %s5659, 288 [#allocation2]
      %v5684 = vld [vmem:[%s5683] ss:$2 sm:$0xff]
      %s5685 = scalar_lea.vmem %s5659, 312 [#allocation2]
      %v5686 = vld [vmem:[%s5685] ss:$2 sm:$0xff]
      %s5687 = scalar_lea.vmem %s5659, 336 [#allocation2]
      %v5688 = vld [vmem:[%s5687] ss:$2 sm:$0xff]
      %s5689 = scalar_lea.vmem %s5659, 360 [#allocation2]
      %v5690 = vld [vmem:[%s5689] ss:$2 sm:$0xff]
      %s5691 = scalar_lea.vmem %s5659, 432 [#allocation2]
      %v5692 = vld [vmem:[%s5691] ss:$2 sm:$0xff]
      %s5693 = scalar_lea.vmem %s5659, 456 [#allocation2]
      %v5694 = vld [vmem:[%s5693] ss:$2 sm:$0xff]
      %s5695 = scalar_lea.vmem %s5659, 480 [#allocation2]
      %v5696 = vld [vmem:[%s5695] ss:$2 sm:$0xff]
      %s5697 = scalar_lea.vmem %s5659, 504 [#allocation2]
      %v5698 = vld [vmem:[%s5697] ss:$2 sm:$0xff]
      %s5699 = scalar_lea.vmem %s5659, 528 [#allocation2]
      %v5700 = vld [vmem:[%s5699] ss:$2 sm:$0xff]
      %s5701 = scalar_lea.vmem %s5659, 552 [#allocation2]
      %v5702 = vld [vmem:[%s5701] ss:$2 sm:$0xff]
      %s5703 = scalar_lea.vmem %s5659, 576 [#allocation2]
      %v5704 = vld [vmem:[%s5703] ss:$2 sm:$0xff]
      %s5705 = scalar_lea.vmem %s5659, 600 [#allocation2]
      %v5706 = vld [vmem:[%s5705] ss:$2 sm:$0xff]
      %s5707 = scalar_lea.vmem %s5659, 624 [#allocation2]
      %v5708 = vld [vmem:[%s5707] ss:$2 sm:$0xff]
      %s5709 = scalar_lea.vmem %s5659, 648 [#allocation2]
      %v5710 = vld [vmem:[%s5709] ss:$2 sm:$0xff]
      %s5711 = scalar_lea.vmem %s5659, 672 [#allocation2]
      %v5712 = vld [vmem:[%s5711] ss:$2 sm:$0xff]
      %s5713 = scalar_lea.vmem %s5659, 696 [#allocation2]
      %v5714 = vld [vmem:[%s5713] ss:$2 sm:$0xff]
      %s5715 = scalar_lea.vmem %s5659, 720 [#allocation2]
      %v5716 = vld [vmem:[%s5715] ss:$2 sm:$0xff]
      %s5717 = scalar_lea.vmem %s5659, 744 [#allocation2]
      %v5718 = vld [vmem:[%s5717] ss:$2 sm:$0xff]
      %s5719 = scalar_lea.vmem %s5659, 768 [#allocation2]
      %v5720 = vld [vmem:[%s5719] ss:$2 sm:$0xff]
      %s5721 = scalar_lea.vmem %s5659, 792 [#allocation2]
      %v5722 = vld [vmem:[%s5721] ss:$2 sm:$0xff]
      %s5723 = scalar_lea.vmem %s3, 768
      %v5724 = vld [vmem:[%s5723] sm:$0xff]
      %v5725 = vld [vmem:[%s5723 + $0x8] sm:$0xff]
      %v5726 = vld [vmem:[%s5723 + $0x10] sm:$0xff]
      %v5727 = vld [vmem:[%s5723 + $0x18] sm:$0xff]
      %v5728 = vld [vmem:[%s5723 + $0x20] sm:$0xff]
      %v5729 = vld [vmem:[%s5723 + $0x28] sm:$0xff]
      %v5730 = vld [vmem:[%s5723 + $0x30] sm:$0xff]
      %v5731 = vld [vmem:[%s5723 + $0x38] sm:$0xff]
      %v5732 = vld [vmem:[%s5723 + $0x40] sm:$0xff]
      %v5733 = vld [vmem:[%s5723 + $0x48] sm:$0xff]
      %v5734 = vld [vmem:[%s5723 + $0x50] sm:$0xff]
      %v5735 = vld [vmem:[%s5723 + $0x58] sm:$0xff]
      %v5736 = vld [vmem:[%s5723 + $0x60] sm:$0xff]
      %v5737 = vld [vmem:[%s5723 + $0x68] sm:$0xff]
      %v5738 = vld [vmem:[%s5723 + $0x70] sm:$0xff]
      %v5739 = vld [vmem:[%s5723 + $0x78] sm:$0xff]
      %5740 = vmatprep.subr.mxu0 0.0
      %5741 = vmatpush1.msra.mxu0 %v5724
      %5742 = vmatprep.subr.mxu0 0.0
      %5743 = vmatpush1.msra.mxu0 %v5725
      %5744 = vmatprep.subr.mxu0 0.0
      %5745 = vmatpush1.msra.mxu0 %v5726
      %5746 = vmatprep.subr.mxu0 0.0
      %5747 = vmatpush1.msra.mxu0 %v5727
      %5748 = vmatprep.subr.mxu0 0.0
      %5749 = vmatpush1.msra.mxu0 %v5728
      %5750 = vmatprep.subr.mxu0 0.0
      %5751 = vmatpush1.msra.mxu0 %v5729
      %5752 = vmatprep.subr.mxu0 0.0
      %5753 = vmatpush1.msra.mxu0 %v5730
      %5754 = vmatprep.subr.mxu0 0.0
      %5755 = vmatpush1.msra.mxu0 %v5731
      %5756 = vmatprep.subr.mxu0 0.0
      %5757 = vmatpush1.msra.mxu0 %v5732
      %5758 = vmatprep.subr.mxu0 0.0
      %5759 = vmatpush1.msra.mxu0 %v5733
      %5760 = vmatprep.subr.mxu0 0.0
      %5761 = vmatpush1.msra.mxu0 %v5734
      %5762 = vmatprep.subr.mxu0 0.0
      %5763 = vmatpush1.msra.mxu0 %v5735
      %5764 = vmatprep.subr.mxu0 0.0
      %5765 = vmatpush1.msra.mxu0 %v5736
      %5766 = vmatprep.subr.mxu0 0.0
      %5767 = vmatpush1.msra.mxu0 %v5737
      %5768 = vmatprep.subr.mxu0 0.0
      %5769 = vmatpush1.msra.mxu0 %v5738
      %5770 = vmatprep.subr.mxu0 0.0
      %5771 = vmatpush1.msra.mxu0 %v5739
      %5772 = vmatprep.subr.mxu0 0.0
      %5773 = vmatpush1.msra.mxu0 0.0
      %5774 = vmatprep.subr.mxu0 0.0
      %5775 = vmatpush1.msra.mxu0 0.0
      %5776 = vmatprep.subr.mxu0 0.0
      %5777 = vmatpush1.msra.mxu0 0.0
      %5778 = vmatprep.subr.mxu0 0.0
      %5779 = vmatpush1.msra.mxu0 0.0
      %5780 = vmatprep.subr.mxu0 0.0
      %5781 = vmatpush1.msra.mxu0 0.0
      %5782 = vmatprep.subr.mxu0 0.0
      %5783 = vmatpush1.msra.mxu0 0.0
      %5784 = vmatprep.subr.mxu0 0.0
      %5785 = vmatpush1.msra.mxu0 0.0
      %5786 = vmatprep.subr.mxu0 0.0
      %5787 = vmatpush1.msra.mxu0 0.0
      %5788 = vmatprep.subr.mxu0 0.0
      %5789 = vmatpush1.msra.mxu0 0.0
      %5790 = vmatprep.subr.mxu0 0.0
      %5791 = vmatpush1.msra.mxu0 0.0
      %5792 = vmatprep.subr.mxu0 0.0
      %5793 = vmatpush1.msra.mxu0 0.0
      %5794 = vmatprep.subr.mxu0 0.0
      %5795 = vmatpush1.msra.mxu0 0.0
      %5796 = vmatprep.subr.mxu0 0.0
      %5797 = vmatpush1.msra.mxu0 0.0
      %5798 = vmatprep.subr.mxu0 0.0
      %5799 = vmatpush1.msra.mxu0 0.0
      %5800 = vmatprep.subr.mxu0 0.0
      %5801 = vmatpush1.msra.mxu0 0.0
      %5802 = vmatprep.subr.mxu0 0.0
      %5803 = vmatpush1.msra.mxu0 0.0
      %5804 = vmatprep.mubr.f32.mxu0 0.0
      %5805 = vmatmul.mubr.f32.gmra.mrb[0].mxu0 %v5660
      %v5806 = vpop.f32.mrb[0].mxu0
      %v5807 = vadd.f32 0.0, %v5806
      %v5808 = vpop.f32.mrb[0].mxu0
      %5809 = vmatprep.mubr.f32.mxu0 0.0
      %5810 = vmatmul.mubr.f32.gmra.mrb[0].mxu0 %v5662
      %v5811 = vpop.f32.mrb[0].mxu0
      %v5812 = vadd.f32 0.0, %v5811
      %v5813 = vpop.f32.mrb[0].mxu0
      %5814 = vmatprep.mubr.f32.mxu0 0.0
      %5815 = vmatmul.mubr.f32.gmra.mrb[0].mxu0 %v5664
      %v5816 = vpop.f32.mrb[0].mxu0
      %v5817 = vadd.f32 0.0, %v5816
      %v5818 = vpop.f32.mrb[0].mxu0
      %5819 = vmatprep.mubr.f32.mxu0 0.0
      %5820 = vmatmul.mubr.f32.gmra.mrb[0].mxu0 %v5666
      %v5821 = vpop.f32.mrb[0].mxu0
      %v5822 = vadd.f32 0.0, %v5821
      %v5823 = vpop.f32.mrb[0].mxu0
      %5824 = vmatprep.mubr.f32.mxu0 0.0
      %5825 = vmatmul.mubr.f32.gmra.mrb[0].mxu0 %v5668
      %v5826 = vpop.f32.mrb[0].mxu0
      %v5827 = vadd.f32 0.0, %v5826
      %v5828 = vpop.f32.mrb[0].mxu0
      %5829 = vmatprep.mubr.f32.mxu0 0.0
      %5830 = vmatmul.mubr.f32.gmra.mrb[0].mxu0 %v5670
      %v5831 = vpop.f32.mrb[0].mxu0
      %v5832 = vadd.f32 0.0, %v5831
      %v5833 = vpop.f32.mrb[0].mxu0
      %5834 = vmatprep.mubr.f32.mxu0 0.0
      %5835 = vmatmul.mubr.f32.gmra.mrb[0].mxu0 %v5672
      %v5836 = vpop.f32.mrb[0].mxu0
      %v5837 = vadd.f32 0.0, %v5836
      %v5838 = vpop.f32.mrb[0].mxu0
      %5839 = vmatprep.mubr.f32.mxu0 0.0
      %5840 = vmatmul.mubr.f32.gmra.mrb[0].mxu0 %v5674
      %v5841 = vpop.f32.mrb[0].mxu0
      %v5842 = vadd.f32 0.0, %v5841
      %v5843 = vpop.f32.mrb[0].mxu0
      %5844 = vmatprep.mubr.f32.mxu0 0.0
      %5845 = vmatmul.mubr.f32.gmra.mrb[0].mxu0 %v5676
      %v5846 = vpop.f32.mrb[0].mxu0
      %v5847 = vadd.f32 0.0, %v5846
      %v5848 = vpop.f32.mrb[0].mxu0
      %5849 = vmatprep.mubr.f32.mxu0 0.0
      %5850 = vmatmul.mubr.f32.gmra.mrb[0].mxu0 %v5678
      %v5851 = vpop.f32.mrb[0].mxu0
      %v5852 = vadd.f32 0.0, %v5851
      %v5853 = vpop.f32.mrb[0].mxu0
      %5854 = vmatprep.mubr.f32.mxu0 0.0
      %5855 = vmatmul.mubr.f32.gmra.mrb[0].mxu0 %v5680
      %v5856 = vpop.f32.mrb[0].mxu0
      %v5857 = vadd.f32 0.0, %v5856
      %v5858 = vpop.f32.mrb[0].mxu0
      %5859 = vmatprep.mubr.f32.mxu0 0.0
      %5860 = vmatmul.mubr.f32.gmra.mrb[0].mxu0 %v5682
      %v5861 = vpop.f32.mrb[0].mxu0
      %v5862 = vadd.f32 0.0, %v5861
      %v5863 = vpop.f32.mrb[0].mxu0
      %5864 = vmatprep.mubr.f32.mxu0 0.0
      %5865 = vmatmul.mubr.f32.gmra.mrb[0].mxu0 %v5684
      %v5866 = vpop.f32.mrb[0].mxu0
      %v5867 = vadd.f32 0.0, %v5866
      %v5868 = vpop.f32.mrb[0].mxu0
      %5869 = vmatprep.mubr.f32.mxu0 0.0
      %5870 = vmatmul.mubr.f32.gmra.mrb[0].mxu0 %v5686
      %v5871 = vpop.f32.mrb[0].mxu0
      %v5872 = vadd.f32 0.0, %v5871
      %v5873 = vpop.f32.mrb[0].mxu0
      %5874 = vmatprep.mubr.f32.mxu0 0.0
      %5875 = vmatmul.mubr.f32.gmra.mrb[0].mxu0 %v5688
      %v5876 = vpop.f32.mrb[0].mxu0
      %v5877 = vadd.f32 0.0, %v5876
      %v5878 = vpop.f32.mrb[0].mxu0
      %5879 = vmatprep.mubr.f32.mxu0 0.0
      %5880 = vmatmul.mubr.f32.gmra.mrb[0].mxu0 %v5690
      %v5881 = vpop.f32.mrb[0].mxu0
      %v5882 = vadd.f32 0.0, %v5881
      %v5883 = vpop.f32.mrb[0].mxu0
      %5884 = vmatprep.mubr.f32.mxu0 0.0
      %5885 = vmatmul.mubr.f32.gmra.mrb[0].mxu0 %v5692
      %v5886 = vpop.f32.mrb[0].mxu0
      %v5887 = vadd.f32 0.0, %v5886
      %v5888 = vpop.f32.mrb[0].mxu0
      %5889 = vmatprep.mubr.f32.mxu0 0.0
      %5890 = vmatmul.mubr.f32.gmra.mrb[0].mxu0 %v5694
      %v5891 = vpop.f32.mrb[0].mxu0
      %v5892 = vadd.f32 0.0, %v5891
      %v5893 = vpop.f32.mrb[0].mxu0
      %5894 = vmatprep.mubr.f32.mxu0 0.0
      %5895 = vmatmul.mubr.f32.gmra.mrb[0].mxu0 %v5696
      %v5896 = vpop.f32.mrb[0].mxu0
      %v5897 = vadd.f32 0.0, %v5896
      %v5898 = vpop.f32.mrb[0].mxu0
      %5899 = vmatprep.mubr.f32.mxu0 0.0
      %5900 = vmatmul.mubr.f32.gmra.mrb[0].mxu0 %v5698
      %v5901 = vpop.f32.mrb[0].mxu0
      %v5902 = vadd.f32 0.0, %v5901
      %v5903 = vpop.f32.mrb[0].mxu0
      %5904 = vmatprep.mubr.f32.mxu0 0.0
      %5905 = vmatmul.mubr.f32.gmra.mrb[0].mxu0 %v5700
      %v5906 = vpop.f32.mrb[0].mxu0
      %v5907 = vadd.f32 0.0, %v5906
      %v5908 = vpop.f32.mrb[0].mxu0
      %5909 = vmatprep.mubr.f32.mxu0 0.0
      %5910 = vmatmul.mubr.f32.gmra.mrb[0].mxu0 %v5702
      %v5911 = vpop.f32.mrb[0].mxu0
      %v5912 = vadd.f32 0.0, %v5911
      %v5913 = vpop.f32.mrb[0].mxu0
      %5914 = vmatprep.mubr.f32.mxu0 0.0
      %5915 = vmatmul.mubr.f32.gmra.mrb[0].mxu0 %v5704
      %v5916 = vpop.f32.mrb[0].mxu0
      %v5917 = vadd.f32 0.0, %v5916
      %v5918 = vpop.f32.mrb[0].mxu0
      %5919 = vmatprep.mubr.f32.mxu0 0.0
      %5920 = vmatmul.mubr.f32.gmra.mrb[0].mxu0 %v5706
      %v5921 = vpop.f32.mrb[0].mxu0
      %v5922 = vadd.f32 0.0, %v5921
      %v5923 = vpop.f32.mrb[0].mxu0
      %5924 = vmatprep.mubr.f32.mxu0 0.0
      %5925 = vmatmul.mubr.f32.gmra.mrb[0].mxu0 %v5708
      %v5926 = vpop.f32.mrb[0].mxu0
      %v5927 = vadd.f32 0.0, %v5926
      %v5928 = vpop.f32.mrb[0].mxu0
      %5929 = vmatprep.mubr.f32.mxu0 0.0
      %5930 = vmatmul.mubr.f32.gmra.mrb[0].mxu0 %v5710
      %v5931 = vpop.f32.mrb[0].mxu0
      %v5932 = vadd.f32 0.0, %v5931
      %v5933 = vpop.f32.mrb[0].mxu0
      %5934 = vmatprep.mubr.f32.mxu0 0.0
      %5935 = vmatmul.mubr.f32.gmra.mrb[0].mxu0 %v5712
      %v5936 = vpop.f32.mrb[0].mxu0
      %v5937 = vadd.f32 0.0, %v5936
      %v5938 = vpop.f32.mrb[0].mxu0
      %5939 = vmatprep.mubr.f32.mxu0 0.0
      %5940 = vmatmul.mubr.f32.gmra.mrb[0].mxu0 %v5714
      %v5941 = vpop.f32.mrb[0].mxu0
      %v5942 = vadd.f32 0.0, %v5941
      %v5943 = vpop.f32.mrb[0].mxu0
      %5944 = vmatprep.mubr.f32.mxu0 0.0
      %5945 = vmatmul.mubr.f32.gmra.mrb[0].mxu0 %v5716
      %v5946 = vpop.f32.mrb[0].mxu0
      %v5947 = vadd.f32 0.0, %v5946
      %v5948 = vpop.f32.mrb[0].mxu0
      %5949 = vmatprep.mubr.f32.mxu0 0.0
      %5950 = vmatmul.mubr.f32.gmra.mrb[0].mxu0 %v5718
      %v5951 = vpop.f32.mrb[0].mxu0
      %v5952 = vadd.f32 0.0, %v5951
      %v5953 = vpop.f32.mrb[0].mxu0
      %5954 = vmatprep.mubr.f32.mxu0 0.0
      %5955 = vmatmul.mubr.f32.gmra.mrb[0].mxu0 %v5720
      %v5956 = vpop.f32.mrb[0].mxu0
      %v5957 = vadd.f32 0.0, %v5956
      %v5958 = vpop.f32.mrb[0].mxu0
      %5959 = vmatprep.mubr.f32.mxu0 0.0
      %5960 = vmatmul.mubr.f32.gmra.mrb[0].mxu0 %v5722
      %v5961 = vpop.f32.mrb[0].mxu0
      %v5962 = vadd.f32 0.0, %v5961
      %v5963 = vpop.f32.mrb[0].mxu0
      %5964 = vdwg.mxu0
      %v5965 = vadd.f32 %v5627, %v5807
      %v5966 = vadd.f32 %v5628, %v5812
      %v5967 = vadd.f32 %v5629, %v5817
      %v5968 = vadd.f32 %v5630, %v5822
      %v5969 = vadd.f32 %v5631, %v5827
      %v5970 = vadd.f32 %v5632, %v5832
      %v5971 = vadd.f32 %v5633, %v5837
      %v5972 = vadd.f32 %v5634, %v5842
      %v5973 = vadd.f32 %v5635, %v5847
      %v5974 = vadd.f32 %v5636, %v5852
      %v5975 = vadd.f32 %v5637, %v5857
      %v5976 = vadd.f32 %v5638, %v5862
      %v5977 = vadd.f32 %v5639, %v5867
      %v5978 = vadd.f32 %v5640, %v5872
      %v5979 = vadd.f32 %v5641, %v5877
      %v5980 = vadd.f32 %v5642, %v5882
      %v5981 = vadd.f32 %v5643, %v5887
      %v5982 = vadd.f32 %v5644, %v5892
      %v5983 = vadd.f32 %v5645, %v5897
      %v5984 = vadd.f32 %v5646, %v5902
      %v5985 = vadd.f32 %v5647, %v5907
      %v5986 = vadd.f32 %v5648, %v5912
      %v5987 = vadd.f32 %v5649, %v5917
      %v5988 = vadd.f32 %v5650, %v5922
      %v5989 = vadd.f32 %v5651, %v5927
      %v5990 = vadd.f32 %v5652, %v5932
      %v5991 = vadd.f32 %v5653, %v5937
      %v5992 = vadd.f32 %v5654, %v5942
      %v5993 = vadd.f32 %v5655, %v5947
      %v5994 = vadd.f32 %v5656, %v5952
      %v5995 = vadd.f32 %v5657, %v5957
      %v5996 = vadd.f32 %v5658, %v5962
      %s5997 = scalar_lea.vmem %s5659, 1 [#allocation2]
      %v5998 = vld [vmem:[%s5997] ss:$2 sm:$0xff]
      %s5999 = scalar_lea.vmem %s5659, 25 [#allocation2]
      %v6000 = vld [vmem:[%s5999] ss:$2 sm:$0xff]
      %s6001 = scalar_lea.vmem %s5659, 49 [#allocation2]
      %v6002 = vld [vmem:[%s6001] ss:$2 sm:$0xff]
      %s6003 = scalar_lea.vmem %s5659, 73 [#allocation2]
      %v6004 = vld [vmem:[%s6003] ss:$2 sm:$0xff]
      %s6005 = scalar_lea.vmem %s5659, 97 [#allocation2]
      %v6006 = vld [vmem:[%s6005] ss:$2 sm:$0xff]
      %s6007 = scalar_lea.vmem %s5659, 121 [#allocation2]
      %v6008 = vld [vmem:[%s6007] ss:$2 sm:$0xff]
      %s6009 = scalar_lea.vmem %s5659, 145 [#allocation2]
      %v6010 = vld [vmem:[%s6009] ss:$2 sm:$0xff]
      %s6011 = scalar_lea.vmem %s5659, 169 [#allocation2]
      %v6012 = vld [vmem:[%s6011] ss:$2 sm:$0xff]
      %s6013 = scalar_lea.vmem %s5659, 193 [#allocation2]
      %v6014 = vld [vmem:[%s6013] ss:$2 sm:$0xff]
      %s6015 = scalar_lea.vmem %s5659, 217 [#allocation2]
      %v6016 = vld [vmem:[%s6015] ss:$2 sm:$0xff]
      %s6017 = scalar_lea.vmem %s5659, 241 [#allocation2]
      %v6018 = vld [vmem:[%s6017] ss:$2 sm:$0xff]
      %s6019 = scalar_lea.vmem %s5659, 265 [#allocation2]
      %v6020 = vld [vmem:[%s6019] ss:$2 sm:$0xff]
      %s6021 = scalar_lea.vmem %s5659, 289 [#allocation2]
      %v6022 = vld [vmem:[%s6021] ss:$2 sm:$0xff]
      %s6023 = scalar_lea.vmem %s5659, 313 [#allocation2]
      %v6024 = vld [vmem:[%s6023] ss:$2 sm:$0xff]
      %s6025 = scalar_lea.vmem %s5659, 337 [#allocation2]
      %v6026 = vld [vmem:[%s6025] ss:$2 sm:$0xff]
      %s6027 = scalar_lea.vmem %s5659, 361 [#allocation2]
      %v6028 = vld [vmem:[%s6027] ss:$2 sm:$0xff]
      %s6029 = scalar_lea.vmem %s5659, 433 [#allocation2]
      %v6030 = vld [vmem:[%s6029] ss:$2 sm:$0xff]
      %s6031 = scalar_lea.vmem %s5659, 457 [#allocation2]
      %v6032 = vld [vmem:[%s6031] ss:$2 sm:$0xff]
      %s6033 = scalar_lea.vmem %s5659, 481 [#allocation2]
      %v6034 = vld [vmem:[%s6033] ss:$2 sm:$0xff]
      %s6035 = scalar_lea.vmem %s5659, 505 [#allocation2]
      %v6036 = vld [vmem:[%s6035] ss:$2 sm:$0xff]
      %s6037 = scalar_lea.vmem %s5659, 529 [#allocation2]
      %v6038 = vld [vmem:[%s6037] ss:$2 sm:$0xff]
      %s6039 = scalar_lea.vmem %s5659, 553 [#allocation2]
      %v6040 = vld [vmem:[%s6039] ss:$2 sm:$0xff]
      %s6041 = scalar_lea.vmem %s5659, 577 [#allocation2]
      %v6042 = vld [vmem:[%s6041] ss:$2 sm:$0xff]
      %s6043 = scalar_lea.vmem %s5659, 601 [#allocation2]
      %v6044 = vld [vmem:[%s6043] ss:$2 sm:$0xff]
      %s6045 = scalar_lea.vmem %s5659, 625 [#allocation2]
      %v6046 = vld [vmem:[%s6045] ss:$2 sm:$0xff]
      %s6047 = scalar_lea.vmem %s5659, 649 [#allocation2]
      %v6048 = vld [vmem:[%s6047] ss:$2 sm:$0xff]
      %s6049 = scalar_lea.vmem %s5659, 673 [#allocation2]
      %v6050 = vld [vmem:[%s6049] ss:$2 sm:$0xff]
      %s6051 = scalar_lea.vmem %s5659, 697 [#allocation2]
      %v6052 = vld [vmem:[%s6051] ss:$2 sm:$0xff]
      %s6053 = scalar_lea.vmem %s5659, 721 [#allocation2]
      %v6054 = vld [vmem:[%s6053] ss:$2 sm:$0xff]
      %s6055 = scalar_lea.vmem %s5659, 745 [#allocation2]
      %v6056 = vld [vmem:[%s6055] ss:$2 sm:$0xff]
      %s6057 = scalar_lea.vmem %s5659, 769 [#allocation2]
      %v6058 = vld [vmem:[%s6057] ss:$2 sm:$0xff]
      %s6059 = scalar_lea.vmem %s5659, 793 [#allocation2]
      %v6060 = vld [vmem:[%s6059] ss:$2 sm:$0xff]
      %s6061 = scalar_lea.vmem %s3, 896
      %v6062 = vld [vmem:[%s6061] sm:$0xff]
      %v6063 = vld [vmem:[%s6061 + $0x8] sm:$0xff]
      %v6064 = vld [vmem:[%s6061 + $0x10] sm:$0xff]
      %v6065 = vld [vmem:[%s6061 + $0x18] sm:$0xff]
      %v6066 = vld [vmem:[%s6061 + $0x20] sm:$0xff]
      %v6067 = vld [vmem:[%s6061 + $0x28] sm:$0xff]
      %v6068 = vld [vmem:[%s6061 + $0x30] sm:$0xff]
      %v6069 = vld [vmem:[%s6061 + $0x38] sm:$0xff]
      %v6070 = vld [vmem:[%s6061 + $0x40] sm:$0xff]
      %v6071 = vld [vmem:[%s6061 + $0x48] sm:$0xff]
      %v6072 = vld [vmem:[%s6061 + $0x50] sm:$0xff]
      %v6073 = vld [vmem:[%s6061 + $0x58] sm:$0xff]
      %v6074 = vld [vmem:[%s6061 + $0x60] sm:$0xff]
      %v6075 = vld [vmem:[%s6061 + $0x68] sm:$0xff]
      %v6076 = vld [vmem:[%s6061 + $0x70] sm:$0xff]
      %v6077 = vld [vmem:[%s6061 + $0x78] sm:$0xff]
      %6078 = vmatprep.subr.mxu0 0.0
      %6079 = vmatpush1.msra.mxu0 %v6062
      %6080 = vmatprep.subr.mxu0 0.0
      %6081 = vmatpush1.msra.mxu0 %v6063
      %6082 = vmatprep.subr.mxu0 0.0
      %6083 = vmatpush1.msra.mxu0 %v6064
      %6084 = vmatprep.subr.mxu0 0.0
      %6085 = vmatpush1.msra.mxu0 %v6065
      %6086 = vmatprep.subr.mxu0 0.0
      %6087 = vmatpush1.msra.mxu0 %v6066
      %6088 = vmatprep.subr.mxu0 0.0
      %6089 = vmatpush1.msra.mxu0 %v6067
      %6090 = vmatprep.subr.mxu0 0.0
      %6091 = vmatpush1.msra.mxu0 %v6068
      %6092 = vmatprep.subr.mxu0 0.0
      %6093 = vmatpush1.msra.mxu0 %v6069
      %6094 = vmatprep.subr.mxu0 0.0
      %6095 = vmatpush1.msra.mxu0 %v6070
      %6096 = vmatprep.subr.mxu0 0.0
      %6097 = vmatpush1.msra.mxu0 %v6071
      %6098 = vmatprep.subr.mxu0 0.0
      %6099 = vmatpush1.msra.mxu0 %v6072
      %6100 = vmatprep.subr.mxu0 0.0
      %6101 = vmatpush1.msra.mxu0 %v6073
      %6102 = vmatprep.subr.mxu0 0.0
      %6103 = vmatpush1.msra.mxu0 %v6074
      %6104 = vmatprep.subr.mxu0 0.0
      %6105 = vmatpush1.msra.mxu0 %v6075
      %6106 = vmatprep.subr.mxu0 0.0
      %6107 = vmatpush1.msra.mxu0 %v6076
      %6108 = vmatprep.subr.mxu0 0.0
      %6109 = vmatpush1.msra.mxu0 %v6077
      %6110 = vmatprep.subr.mxu0 0.0
      %6111 = vmatpush1.msra.mxu0 0.0
      %6112 = vmatprep.subr.mxu0 0.0
      %6113 = vmatpush1.msra.mxu0 0.0
      %6114 = vmatprep.subr.mxu0 0.0
      %6115 = vmatpush1.msra.mxu0 0.0
      %6116 = vmatprep.subr.mxu0 0.0
      %6117 = vmatpush1.msra.mxu0 0.0
      %6118 = vmatprep.subr.mxu0 0.0
      %6119 = vmatpush1.msra.mxu0 0.0
      %6120 = vmatprep.subr.mxu0 0.0
      %6121 = vmatpush1.msra.mxu0 0.0
      %6122 = vmatprep.subr.mxu0 0.0
      %6123 = vmatpush1.msra.mxu0 0.0
      %6124 = vmatprep.subr.mxu0 0.0
      %6125 = vmatpush1.msra.mxu0 0.0
      %6126 = vmatprep.subr.mxu0 0.0
      %6127 = vmatpush1.msra.mxu0 0.0
      %6128 = vmatprep.subr.mxu0 0.0
      %6129 = vmatpush1.msra.mxu0 0.0
      %6130 = vmatprep.subr.mxu0 0.0
      %6131 = vmatpush1.msra.mxu0 0.0
      %6132 = vmatprep.subr.mxu0 0.0
      %6133 = vmatpush1.msra.mxu0 0.0
      %6134 = vmatprep.subr.mxu0 0.0
      %6135 = vmatpush1.msra.mxu0 0.0
      %6136 = vmatprep.subr.mxu0 0.0
      %6137 = vmatpush1.msra.mxu0 0.0
      %6138 = vmatprep.subr.mxu0 0.0
      %6139 = vmatpush1.msra.mxu0 0.0
      %6140 = vmatprep.subr.mxu0 0.0
      %6141 = vmatpush1.msra.mxu0 0.0
      %6142 = vmatprep.mubr.f32.mxu0 0.0
      %6143 = vmatmul.mubr.f32.gmra.mrb[0].mxu0 %v5998
      %v6144 = vpop.f32.mrb[0].mxu0
      %v6145 = vadd.f32 0.0, %v6144
      %v6146 = vpop.f32.mrb[0].mxu0
      %6147 = vmatprep.mubr.f32.mxu0 0.0
      %6148 = vmatmul.mubr.f32.gmra.mrb[0].mxu0 %v6000
      %v6149 = vpop.f32.mrb[0].mxu0
      %v6150 = vadd.f32 0.0, %v6149
      %v6151 = vpop.f32.mrb[0].mxu0
      %6152 = vmatprep.mubr.f32.mxu0 0.0
      %6153 = vmatmul.mubr.f32.gmra.mrb[0].mxu0 %v6002
      %v6154 = vpop.f32.mrb[0].mxu0
      %v6155 = vadd.f32 0.0, %v6154
      %v6156 = vpop.f32.mrb[0].mxu0
      %6157 = vmatprep.mubr.f32.mxu0 0.0
      %6158 = vmatmul.mubr.f32.gmra.mrb[0].mxu0 %v6004
      %v6159 = vpop.f32.mrb[0].mxu0
      %v6160 = vadd.f32 0.0, %v6159
      %v6161 = vpop.f32.mrb[0].mxu0
      %6162 = vmatprep.mubr.f32.mxu0 0.0
      %6163 = vmatmul.mubr.f32.gmra.mrb[0].mxu0 %v6006
      %v6164 = vpop.f32.mrb[0].mxu0
      %v6165 = vadd.f32 0.0, %v6164
      %v6166 = vpop.f32.mrb[0].mxu0
      %6167 = vmatprep.mubr.f32.mxu0 0.0
      %6168 = vmatmul.mubr.f32.gmra.mrb[0].mxu0 %v6008
      %v6169 = vpop.f32.mrb[0].mxu0
      %v6170 = vadd.f32 0.0, %v6169
      %v6171 = vpop.f32.mrb[0].mxu0
      %6172 = vmatprep.mubr.f32.mxu0 0.0
      %6173 = vmatmul.mubr.f32.gmra.mrb[0].mxu0 %v6010
      %v6174 = vpop.f32.mrb[0].mxu0
      %v6175 = vadd.f32 0.0, %v6174
      %v6176 = vpop.f32.mrb[0].mxu0
      %6177 = vmatprep.mubr.f32.mxu0 0.0
      %6178 = vmatmul.mubr.f32.gmra.mrb[0].mxu0 %v6012
      %v6179 = vpop.f32.mrb[0].mxu0
      %v6180 = vadd.f32 0.0, %v6179
      %v6181 = vpop.f32.mrb[0].mxu0
      %6182 = vmatprep.mubr.f32.mxu0 0.0
      %6183 = vmatmul.mubr.f32.gmra.mrb[0].mxu0 %v6014
      %v6184 = vpop.f32.mrb[0].mxu0
      %v6185 = vadd.f32 0.0, %v6184
      %v6186 = vpop.f32.mrb[0].mxu0
      %6187 = vmatprep.mubr.f32.mxu0 0.0
      %6188 = vmatmul.mubr.f32.gmra.mrb[0].mxu0 %v6016
      %v6189 = vpop.f32.mrb[0].mxu0
      %v6190 = vadd.f32 0.0, %v6189
      %v6191 = vpop.f32.mrb[0].mxu0
      %6192 = vmatprep.mubr.f32.mxu0 0.0
      %6193 = vmatmul.mubr.f32.gmra.mrb[0].mxu0 %v6018
      %v6194 = vpop.f32.mrb[0].mxu0
      %v6195 = vadd.f32 0.0, %v6194
      %v6196 = vpop.f32.mrb[0].mxu0
      %6197 = vmatprep.mubr.f32.mxu0 0.0
      %6198 = vmatmul.mubr.f32.gmra.mrb[0].mxu0 %v6020
      %v6199 = vpop.f32.mrb[0].mxu0
      %v6200 = vadd.f32 0.0, %v6199
      %v6201 = vpop.f32.mrb[0].mxu0
      %6202 = vmatprep.mubr.f32.mxu0 0.0
      %6203 = vmatmul.mubr.f32.gmra.mrb[0].mxu0 %v6022
      %v6204 = vpop.f32.mrb[0].mxu0
      %v6205 = vadd.f32 0.0, %v6204
      %v6206 = vpop.f32.mrb[0].mxu0
      %6207 = vmatprep.mubr.f32.mxu0 0.0
      %6208 = vmatmul.mubr.f32.gmra.mrb[0].mxu0 %v6024
      %v6209 = vpop.f32.mrb[0].mxu0
      %v6210 = vadd.f32 0.0, %v6209
      %v6211 = vpop.f32.mrb[0].mxu0
      %6212 = vmatprep.mubr.f32.mxu0 0.0
      %6213 = vmatmul.mubr.f32.gmra.mrb[0].mxu0 %v6026
      %v6214 = vpop.f32.mrb[0].mxu0
      %v6215 = vadd.f32 0.0, %v6214
      %v6216 = vpop.f32.mrb[0].mxu0
      %6217 = vmatprep.mubr.f32.mxu0 0.0
      %6218 = vmatmul.mubr.f32.gmra.mrb[0].mxu0 %v6028
      %v6219 = vpop.f32.mrb[0].mxu0
      %v6220 = vadd.f32 0.0, %v6219
      %v6221 = vpop.f32.mrb[0].mxu0
      %6222 = vmatprep.mubr.f32.mxu0 0.0
      %6223 = vmatmul.mubr.f32.gmra.mrb[0].mxu0 %v6030
      %v6224 = vpop.f32.mrb[0].mxu0
      %v6225 = vadd.f32 0.0, %v6224
      %v6226 = vpop.f32.mrb[0].mxu0
      %6227 = vmatprep.mubr.f32.mxu0 0.0
      %6228 = vmatmul.mubr.f32.gmra.mrb[0].mxu0 %v6032
      %v6229 = vpop.f32.mrb[0].mxu0
      %v6230 = vadd.f32 0.0, %v6229
      %v6231 = vpop.f32.mrb[0].mxu0
      %6232 = vmatprep.mubr.f32.mxu0 0.0
      %6233 = vmatmul.mubr.f32.gmra.mrb[0].mxu0 %v6034
      %v6234 = vpop.f32.mrb[0].mxu0
      %v6235 = vadd.f32 0.0, %v6234
      %v6236 = vpop.f32.mrb[0].mxu0
      %6237 = vmatprep.mubr.f32.mxu0 0.0
      %6238 = vmatmul.mubr.f32.gmra.mrb[0].mxu0 %v6036
      %v6239 = vpop.f32.mrb[0].mxu0
      %v6240 = vadd.f32 0.0, %v6239
      %v6241 = vpop.f32.mrb[0].mxu0
      %6242 = vmatprep.mubr.f32.mxu0 0.0
      %6243 = vmatmul.mubr.f32.gmra.mrb[0].mxu0 %v6038
      %v6244 = vpop.f32.mrb[0].mxu0
      %v6245 = vadd.f32 0.0, %v6244
      %v6246 = vpop.f32.mrb[0].mxu0
      %6247 = vmatprep.mubr.f32.mxu0 0.0
      %6248 = vmatmul.mubr.f32.gmra.mrb[0].mxu0 %v6040
      %v6249 = vpop.f32.mrb[0].mxu0
      %v6250 = vadd.f32 0.0, %v6249
      %v6251 = vpop.f32.mrb[0].mxu0
      %6252 = vmatprep.mubr.f32.mxu0 0.0
      %6253 = vmatmul.mubr.f32.gmra.mrb[0].mxu0 %v6042
      %v6254 = vpop.f32.mrb[0].mxu0
      %v6255 = vadd.f32 0.0, %v6254
      %v6256 = vpop.f32.mrb[0].mxu0
      %6257 = vmatprep.mubr.f32.mxu0 0.0
      %6258 = vmatmul.mubr.f32.gmra.mrb[0].mxu0 %v6044
      %v6259 = vpop.f32.mrb[0].mxu0
      %v6260 = vadd.f32 0.0, %v6259
      %v6261 = vpop.f32.mrb[0].mxu0
      %6262 = vmatprep.mubr.f32.mxu0 0.0
      %6263 = vmatmul.mubr.f32.gmra.mrb[0].mxu0 %v6046
      %v6264 = vpop.f32.mrb[0].mxu0
      %v6265 = vadd.f32 0.0, %v6264
      %v6266 = vpop.f32.mrb[0].mxu0
      %6267 = vmatprep.mubr.f32.mxu0 0.0
      %6268 = vmatmul.mubr.f32.gmra.mrb[0].mxu0 %v6048
      %v6269 = vpop.f32.mrb[0].mxu0
      %v6270 = vadd.f32 0.0, %v6269
      %v6271 = vpop.f32.mrb[0].mxu0
      %6272 = vmatprep.mubr.f32.mxu0 0.0
      %6273 = vmatmul.mubr.f32.gmra.mrb[0].mxu0 %v6050
      %v6274 = vpop.f32.mrb[0].mxu0
      %v6275 = vadd.f32 0.0, %v6274
      %v6276 = vpop.f32.mrb[0].mxu0
      %6277 = vmatprep.mubr.f32.mxu0 0.0
      %6278 = vmatmul.mubr.f32.gmra.mrb[0].mxu0 %v6052
      %v6279 = vpop.f32.mrb[0].mxu0
      %v6280 = vadd.f32 0.0, %v6279
      %v6281 = vpop.f32.mrb[0].mxu0
      %6282 = vmatprep.mubr.f32.mxu0 0.0
      %6283 = vmatmul.mubr.f32.gmra.mrb[0].mxu0 %v6054
      %v6284 = vpop.f32.mrb[0].mxu0
      %v6285 = vadd.f32 0.0, %v6284
      %v6286 = vpop.f32.mrb[0].mxu0
      %6287 = vmatprep.mubr.f32.mxu0 0.0
      %6288 = vmatmul.mubr.f32.gmra.mrb[0].mxu0 %v6056
      %v6289 = vpop.f32.mrb[0].mxu0
      %v6290 = vadd.f32 0.0, %v6289
      %v6291 = vpop.f32.mrb[0].mxu0
      %6292 = vmatprep.mubr.f32.mxu0 0.0
      %6293 = vmatmul.mubr.f32.gmra.mrb[0].mxu0 %v6058
      %v6294 = vpop.f32.mrb[0].mxu0
      %v6295 = vadd.f32 0.0, %v6294
      %v6296 = vpop.f32.mrb[0].mxu0
      %6297 = vmatprep.mubr.f32.mxu0 0.0
      %6298 = vmatmul.mubr.f32.gmra.mrb[0].mxu0 %v6060
      %v6299 = vpop.f32.mrb[0].mxu0
      %v6300 = vadd.f32 0.0, %v6299
      %v6301 = vpop.f32.mrb[0].mxu0
      %6302 = vdwg.mxu0
      %v6303 = vadd.f32 %v5965, %v6145
      %v6304 = vadd.f32 %v5966, %v6150
      %v6305 = vadd.f32 %v5967, %v6155
      %v6306 = vadd.f32 %v5968, %v6160
      %v6307 = vadd.f32 %v5969, %v6165
      %v6308 = vadd.f32 %v5970, %v6170
      %v6309 = vadd.f32 %v5971, %v6175
      %v6310 = vadd.f32 %v5972, %v6180
      %v6311 = vadd.f32 %v5973, %v6185
      %v6312 = vadd.f32 %v5974, %v6190
      %v6313 = vadd.f32 %v5975, %v6195
      %v6314 = vadd.f32 %v5976, %v6200
      %v6315 = vadd.f32 %v5977, %v6205
      %v6316 = vadd.f32 %v5978, %v6210
      %v6317 = vadd.f32 %v5979, %v6215
      %v6318 = vadd.f32 %v5980, %v6220
      %v6319 = vadd.f32 %v5981, %v6225
      %v6320 = vadd.f32 %v5982, %v6230
      %v6321 = vadd.f32 %v5983, %v6235
      %v6322 = vadd.f32 %v5984, %v6240
      %v6323 = vadd.f32 %v5985, %v6245
      %v6324 = vadd.f32 %v5986, %v6250
      %v6325 = vadd.f32 %v5987, %v6255
      %v6326 = vadd.f32 %v5988, %v6260
      %v6327 = vadd.f32 %v5989, %v6265
      %v6328 = vadd.f32 %v5990, %v6270
      %v6329 = vadd.f32 %v5991, %v6275
      %v6330 = vadd.f32 %v5992, %v6280
      %v6331 = vadd.f32 %v5993, %v6285
      %v6332 = vadd.f32 %v5994, %v6290
      %v6333 = vadd.f32 %v5995, %v6295
      %v6334 = vadd.f32 %v5996, %v6300
      %s6335 = scalar_lea.vmem %s5659, 2 [#allocation2]
      %v6336 = vld [vmem:[%s6335] ss:$2 sm:$0xff]
      %s6337 = scalar_lea.vmem %s5659, 26 [#allocation2]
      %v6338 = vld [vmem:[%s6337] ss:$2 sm:$0xff]
      %s6339 = scalar_lea.vmem %s5659, 50 [#allocation2]
      %v6340 = vld [vmem:[%s6339] ss:$2 sm:$0xff]
      %s6341 = scalar_lea.vmem %s5659, 74 [#allocation2]
      %v6342 = vld [vmem:[%s6341] ss:$2 sm:$0xff]
      %s6343 = scalar_lea.vmem %s5659, 98 [#allocation2]
      %v6344 = vld [vmem:[%s6343] ss:$2 sm:$0xff]
      %s6345 = scalar_lea.vmem %s5659, 122 [#allocation2]
      %v6346 = vld [vmem:[%s6345] ss:$2 sm:$0xff]
      %s6347 = scalar_lea.vmem %s5659, 146 [#allocation2]
      %v6348 = vld [vmem:[%s6347] ss:$2 sm:$0xff]
      %s6349 = scalar_lea.vmem %s5659, 170 [#allocation2]
      %v6350 = vld [vmem:[%s6349] ss:$2 sm:$0xff]
      %s6351 = scalar_lea.vmem %s5659, 194 [#allocation2]
      %v6352 = vld [vmem:[%s6351] ss:$2 sm:$0xff]
      %s6353 = scalar_lea.vmem %s5659, 218 [#allocation2]
      %v6354 = vld [vmem:[%s6353] ss:$2 sm:$0xff]
      %s6355 = scalar_lea.vmem %s5659, 242 [#allocation2]
      %v6356 = vld [vmem:[%s6355] ss:$2 sm:$0xff]
      %s6357 = scalar_lea.vmem %s5659, 266 [#allocation2]
      %v6358 = vld [vmem:[%s6357] ss:$2 sm:$0xff]
      %s6359 = scalar_lea.vmem %s5659, 290 [#allocation2]
      %v6360 = vld [vmem:[%s6359] ss:$2 sm:$0xff]
      %s6361 = scalar_lea.vmem %s5659, 314 [#allocation2]
      %v6362 = vld [vmem:[%s6361] ss:$2 sm:$0xff]
      %s6363 = scalar_lea.vmem %s5659, 338 [#allocation2]
      %v6364 = vld [vmem:[%s6363] ss:$2 sm:$0xff]
      %s6365 = scalar_lea.vmem %s5659, 362 [#allocation2]
      %v6366 = vld [vmem:[%s6365] ss:$2 sm:$0xff]
      %s6367 = scalar_lea.vmem %s5659, 434 [#allocation2]
      %v6368 = vld [vmem:[%s6367] ss:$2 sm:$0xff]
      %s6369 = scalar_lea.vmem %s5659, 458 [#allocation2]
      %v6370 = vld [vmem:[%s6369] ss:$2 sm:$0xff]
      %s6371 = scalar_lea.vmem %s5659, 482 [#allocation2]
      %v6372 = vld [vmem:[%s6371] ss:$2 sm:$0xff]
      %s6373 = scalar_lea.vmem %s5659, 506 [#allocation2]
      %v6374 = vld [vmem:[%s6373] ss:$2 sm:$0xff]
      %s6375 = scalar_lea.vmem %s5659, 530 [#allocation2]
      %v6376 = vld [vmem:[%s6375] ss:$2 sm:$0xff]
      %s6377 = scalar_lea.vmem %s5659, 554 [#allocation2]
      %v6378 = vld [vmem:[%s6377] ss:$2 sm:$0xff]
      %s6379 = scalar_lea.vmem %s5659, 578 [#allocation2]
      %v6380 = vld [vmem:[%s6379] ss:$2 sm:$0xff]
      %s6381 = scalar_lea.vmem %s5659, 602 [#allocation2]
      %v6382 = vld [vmem:[%s6381] ss:$2 sm:$0xff]
      %s6383 = scalar_lea.vmem %s5659, 626 [#allocation2]
      %v6384 = vld [vmem:[%s6383] ss:$2 sm:$0xff]
      %s6385 = scalar_lea.vmem %s5659, 650 [#allocation2]
      %v6386 = vld [vmem:[%s6385] ss:$2 sm:$0xff]
      %s6387 = scalar_lea.vmem %s5659, 674 [#allocation2]
      %v6388 = vld [vmem:[%s6387] ss:$2 sm:$0xff]
      %s6389 = scalar_lea.vmem %s5659, 698 [#allocation2]
      %v6390 = vld [vmem:[%s6389] ss:$2 sm:$0xff]
      %s6391 = scalar_lea.vmem %s5659, 722 [#allocation2]
      %v6392 = vld [vmem:[%s6391] ss:$2 sm:$0xff]
      %s6393 = scalar_lea.vmem %s5659, 746 [#allocation2]
      %v6394 = vld [vmem:[%s6393] ss:$2 sm:$0xff]
      %s6395 = scalar_lea.vmem %s5659, 770 [#allocation2]
      %v6396 = vld [vmem:[%s6395] ss:$2 sm:$0xff]
      %s6397 = scalar_lea.vmem %s5659, 794 [#allocation2]
      %v6398 = vld [vmem:[%s6397] ss:$2 sm:$0xff]
      %s6399 = scalar_lea.vmem %s3, 1024
      %v6400 = vld [vmem:[%s6399] sm:$0xff]
      %v6401 = vld [vmem:[%s6399 + $0x8] sm:$0xff]
      %v6402 = vld [vmem:[%s6399 + $0x10] sm:$0xff]
      %v6403 = vld [vmem:[%s6399 + $0x18] sm:$0xff]
      %v6404 = vld [vmem:[%s6399 + $0x20] sm:$0xff]
      %v6405 = vld [vmem:[%s6399 + $0x28] sm:$0xff]
      %v6406 = vld [vmem:[%s6399 + $0x30] sm:$0xff]
      %v6407 = vld [vmem:[%s6399 + $0x38] sm:$0xff]
      %v6408 = vld [vmem:[%s6399 + $0x40] sm:$0xff]
      %v6409 = vld [vmem:[%s6399 + $0x48] sm:$0xff]
      %v6410 = vld [vmem:[%s6399 + $0x50] sm:$0xff]
      %v6411 = vld [vmem:[%s6399 + $0x58] sm:$0xff]
      %v6412 = vld [vmem:[%s6399 + $0x60] sm:$0xff]
      %v6413 = vld [vmem:[%s6399 + $0x68] sm:$0xff]
      %v6414 = vld [vmem:[%s6399 + $0x70] sm:$0xff]
      %v6415 = vld [vmem:[%s6399 + $0x78] sm:$0xff]
      %6416 = vmatprep.subr.mxu0 0.0
      %6417 = vmatpush1.msra.mxu0 %v6400
      %6418 = vmatprep.subr.mxu0 0.0
      %6419 = vmatpush1.msra.mxu0 %v6401
      %6420 = vmatprep.subr.mxu0 0.0
      %6421 = vmatpush1.msra.mxu0 %v6402
      %6422 = vmatprep.subr.mxu0 0.0
      %6423 = vmatpush1.msra.mxu0 %v6403
      %6424 = vmatprep.subr.mxu0 0.0
      %6425 = vmatpush1.msra.mxu0 %v6404
      %6426 = vmatprep.subr.mxu0 0.0
      %6427 = vmatpush1.msra.mxu0 %v6405
      %6428 = vmatprep.subr.mxu0 0.0
      %6429 = vmatpush1.msra.mxu0 %v6406
      %6430 = vmatprep.subr.mxu0 0.0
      %6431 = vmatpush1.msra.mxu0 %v6407
      %6432 = vmatprep.subr.mxu0 0.0
      %6433 = vmatpush1.msra.mxu0 %v6408
      %6434 = vmatprep.subr.mxu0 0.0
      %6435 = vmatpush1.msra.mxu0 %v6409
      %6436 = vmatprep.subr.mxu0 0.0
      %6437 = vmatpush1.msra.mxu0 %v6410
      %6438 = vmatprep.subr.mxu0 0.0
      %6439 = vmatpush1.msra.mxu0 %v6411
      %6440 = vmatprep.subr.mxu0 0.0
      %6441 = vmatpush1.msra.mxu0 %v6412
      %6442 = vmatprep.subr.mxu0 0.0
      %6443 = vmatpush1.msra.mxu0 %v6413
      %6444 = vmatprep.subr.mxu0 0.0
      %6445 = vmatpush1.msra.mxu0 %v6414
      %6446 = vmatprep.subr.mxu0 0.0
      %6447 = vmatpush1.msra.mxu0 %v6415
      %6448 = vmatprep.subr.mxu0 0.0
      %6449 = vmatpush1.msra.mxu0 0.0
      %6450 = vmatprep.subr.mxu0 0.0
      %6451 = vmatpush1.msra.mxu0 0.0
      %6452 = vmatprep.subr.mxu0 0.0
      %6453 = vmatpush1.msra.mxu0 0.0
      %6454 = vmatprep.subr.mxu0 0.0
      %6455 = vmatpush1.msra.mxu0 0.0
      %6456 = vmatprep.subr.mxu0 0.0
      %6457 = vmatpush1.msra.mxu0 0.0
      %6458 = vmatprep.subr.mxu0 0.0
      %6459 = vmatpush1.msra.mxu0 0.0
      %6460 = vmatprep.subr.mxu0 0.0
      %6461 = vmatpush1.msra.mxu0 0.0
      %6462 = vmatprep.subr.mxu0 0.0
      %6463 = vmatpush1.msra.mxu0 0.0
      %6464 = vmatprep.subr.mxu0 0.0
      %6465 = vmatpush1.msra.mxu0 0.0
      %6466 = vmatprep.subr.mxu0 0.0
      %6467 = vmatpush1.msra.mxu0 0.0
      %6468 = vmatprep.subr.mxu0 0.0
      %6469 = vmatpush1.msra.mxu0 0.0
      %6470 = vmatprep.subr.mxu0 0.0
      %6471 = vmatpush1.msra.mxu0 0.0
      %6472 = vmatprep.subr.mxu0 0.0
      %6473 = vmatpush1.msra.mxu0 0.0
      %6474 = vmatprep.subr.mxu0 0.0
      %6475 = vmatpush1.msra.mxu0 0.0
      %6476 = vmatprep.subr.mxu0 0.0
      %6477 = vmatpush1.msra.mxu0 0.0
      %6478 = vmatprep.subr.mxu0 0.0
      %6479 = vmatpush1.msra.mxu0 0.0
      %6480 = vmatprep.mubr.f32.mxu0 0.0
      %6481 = vmatmul.mubr.f32.gmra.mrb[0].mxu0 %v6336
      %v6482 = vpop.f32.mrb[0].mxu0
      %v6483 = vadd.f32 0.0, %v6482
      %v6484 = vpop.f32.mrb[0].mxu0
      %6485 = vmatprep.mubr.f32.mxu0 0.0
      %6486 = vmatmul.mubr.f32.gmra.mrb[0].mxu0 %v6338
      %v6487 = vpop.f32.mrb[0].mxu0
      %v6488 = vadd.f32 0.0, %v6487
      %v6489 = vpop.f32.mrb[0].mxu0
      %6490 = vmatprep.mubr.f32.mxu0 0.0
      %6491 = vmatmul.mubr.f32.gmra.mrb[0].mxu0 %v6340
      %v6492 = vpop.f32.mrb[0].mxu0
      %v6493 = vadd.f32 0.0, %v6492
      %v6494 = vpop.f32.mrb[0].mxu0
      %6495 = vmatprep.mubr.f32.mxu0 0.0
      %6496 = vmatmul.mubr.f32.gmra.mrb[0].mxu0 %v6342
      %v6497 = vpop.f32.mrb[0].mxu0
      %v6498 = vadd.f32 0.0, %v6497
      %v6499 = vpop.f32.mrb[0].mxu0
      %6500 = vmatprep.mubr.f32.mxu0 0.0
      %6501 = vmatmul.mubr.f32.gmra.mrb[0].mxu0 %v6344
      %v6502 = vpop.f32.mrb[0].mxu0
      %v6503 = vadd.f32 0.0, %v6502
      %v6504 = vpop.f32.mrb[0].mxu0
      %6505 = vmatprep.mubr.f32.mxu0 0.0
      %6506 = vmatmul.mubr.f32.gmra.mrb[0].mxu0 %v6346
      %v6507 = vpop.f32.mrb[0].mxu0
      %v6508 = vadd.f32 0.0, %v6507
      %v6509 = vpop.f32.mrb[0].mxu0
      %6510 = vmatprep.mubr.f32.mxu0 0.0
      %6511 = vmatmul.mubr.f32.gmra.mrb[0].mxu0 %v6348
      %v6512 = vpop.f32.mrb[0].mxu0
      %v6513 = vadd.f32 0.0, %v6512
      %v6514 = vpop.f32.mrb[0].mxu0
      %6515 = vmatprep.mubr.f32.mxu0 0.0
      %6516 = vmatmul.mubr.f32.gmra.mrb[0].mxu0 %v6350
      %v6517 = vpop.f32.mrb[0].mxu0
      %v6518 = vadd.f32 0.0, %v6517
      %v6519 = vpop.f32.mrb[0].mxu0
      %6520 = vmatprep.mubr.f32.mxu0 0.0
      %6521 = vmatmul.mubr.f32.gmra.mrb[0].mxu0 %v6352
      %v6522 = vpop.f32.mrb[0].mxu0
      %v6523 = vadd.f32 0.0, %v6522
      %v6524 = vpop.f32.mrb[0].mxu0
      %6525 = vmatprep.mubr.f32.mxu0 0.0
      %6526 = vmatmul.mubr.f32.gmra.mrb[0].mxu0 %v6354
      %v6527 = vpop.f32.mrb[0].mxu0
      %v6528 = vadd.f32 0.0, %v6527
      %v6529 = vpop.f32.mrb[0].mxu0
      %6530 = vmatprep.mubr.f32.mxu0 0.0
      %6531 = vmatmul.mubr.f32.gmra.mrb[0].mxu0 %v6356
      %v6532 = vpop.f32.mrb[0].mxu0
      %v6533 = vadd.f32 0.0, %v6532
      %v6534 = vpop.f32.mrb[0].mxu0
      %6535 = vmatprep.mubr.f32.mxu0 0.0
      %6536 = vmatmul.mubr.f32.gmra.mrb[0].mxu0 %v6358
      %v6537 = vpop.f32.mrb[0].mxu0
      %v6538 = vadd.f32 0.0, %v6537
      %v6539 = vpop.f32.mrb[0].mxu0
      %6540 = vmatprep.mubr.f32.mxu0 0.0
      %6541 = vmatmul.mubr.f32.gmra.mrb[0].mxu0 %v6360
      %v6542 = vpop.f32.mrb[0].mxu0
      %v6543 = vadd.f32 0.0, %v6542
      %v6544 = vpop.f32.mrb[0].mxu0
      %6545 = vmatprep.mubr.f32.mxu0 0.0
      %6546 = vmatmul.mubr.f32.gmra.mrb[0].mxu0 %v6362
      %v6547 = vpop.f32.mrb[0].mxu0
      %v6548 = vadd.f32 0.0, %v6547
      %v6549 = vpop.f32.mrb[0].mxu0
      %6550 = vmatprep.mubr.f32.mxu0 0.0
      %6551 = vmatmul.mubr.f32.gmra.mrb[0].mxu0 %v6364
      %v6552 = vpop.f32.mrb[0].mxu0
      %v6553 = vadd.f32 0.0, %v6552
      %v6554 = vpop.f32.mrb[0].mxu0
      %6555 = vmatprep.mubr.f32.mxu0 0.0
      %6556 = vmatmul.mubr.f32.gmra.mrb[0].mxu0 %v6366
      %v6557 = vpop.f32.mrb[0].mxu0
      %v6558 = vadd.f32 0.0, %v6557
      %v6559 = vpop.f32.mrb[0].mxu0
      %6560 = vmatprep.mubr.f32.mxu0 0.0
      %6561 = vmatmul.mubr.f32.gmra.mrb[0].mxu0 %v6368
      %v6562 = vpop.f32.mrb[0].mxu0
      %v6563 = vadd.f32 0.0, %v6562
      %v6564 = vpop.f32.mrb[0].mxu0
      %6565 = vmatprep.mubr.f32.mxu0 0.0
      %6566 = vmatmul.mubr.f32.gmra.mrb[0].mxu0 %v6370
      %v6567 = vpop.f32.mrb[0].mxu0
      %v6568 = vadd.f32 0.0, %v6567
      %v6569 = vpop.f32.mrb[0].mxu0
      %6570 = vmatprep.mubr.f32.mxu0 0.0
      %6571 = vmatmul.mubr.f32.gmra.mrb[0].mxu0 %v6372
      %v6572 = vpop.f32.mrb[0].mxu0
      %v6573 = vadd.f32 0.0, %v6572
      %v6574 = vpop.f32.mrb[0].mxu0
      %6575 = vmatprep.mubr.f32.mxu0 0.0
      %6576 = vmatmul.mubr.f32.gmra.mrb[0].mxu0 %v6374
      %v6577 = vpop.f32.mrb[0].mxu0
      %v6578 = vadd.f32 0.0, %v6577
      %v6579 = vpop.f32.mrb[0].mxu0
      %6580 = vmatprep.mubr.f32.mxu0 0.0
      %6581 = vmatmul.mubr.f32.gmra.mrb[0].mxu0 %v6376
      %v6582 = vpop.f32.mrb[0].mxu0
      %v6583 = vadd.f32 0.0, %v6582
      %v6584 = vpop.f32.mrb[0].mxu0
      %6585 = vmatprep.mubr.f32.mxu0 0.0
      %6586 = vmatmul.mubr.f32.gmra.mrb[0].mxu0 %v6378
      %v6587 = vpop.f32.mrb[0].mxu0
      %v6588 = vadd.f32 0.0, %v6587
      %v6589 = vpop.f32.mrb[0].mxu0
      %6590 = vmatprep.mubr.f32.mxu0 0.0
      %6591 = vmatmul.mubr.f32.gmra.mrb[0].mxu0 %v6380
      %v6592 = vpop.f32.mrb[0].mxu0
      %v6593 = vadd.f32 0.0, %v6592
      %v6594 = vpop.f32.mrb[0].mxu0
      %6595 = vmatprep.mubr.f32.mxu0 0.0
      %6596 = vmatmul.mubr.f32.gmra.mrb[0].mxu0 %v6382
      %v6597 = vpop.f32.mrb[0].mxu0
      %v6598 = vadd.f32 0.0, %v6597
      %v6599 = vpop.f32.mrb[0].mxu0
      %6600 = vmatprep.mubr.f32.mxu0 0.0
      %6601 = vmatmul.mubr.f32.gmra.mrb[0].mxu0 %v6384
      %v6602 = vpop.f32.mrb[0].mxu0
      %v6603 = vadd.f32 0.0, %v6602
      %v6604 = vpop.f32.mrb[0].mxu0
      %6605 = vmatprep.mubr.f32.mxu0 0.0
      %6606 = vmatmul.mubr.f32.gmra.mrb[0].mxu0 %v6386
      %v6607 = vpop.f32.mrb[0].mxu0
      %v6608 = vadd.f32 0.0, %v6607
      %v6609 = vpop.f32.mrb[0].mxu0
      %6610 = vmatprep.mubr.f32.mxu0 0.0
      %6611 = vmatmul.mubr.f32.gmra.mrb[0].mxu0 %v6388
      %v6612 = vpop.f32.mrb[0].mxu0
      %v6613 = vadd.f32 0.0, %v6612
      %v6614 = vpop.f32.mrb[0].mxu0
      %6615 = vmatprep.mubr.f32.mxu0 0.0
      %6616 = vmatmul.mubr.f32.gmra.mrb[0].mxu0 %v6390
      %v6617 = vpop.f32.mrb[0].mxu0
      %v6618 = vadd.f32 0.0, %v6617
      %v6619 = vpop.f32.mrb[0].mxu0
      %6620 = vmatprep.mubr.f32.mxu0 0.0
      %6621 = vmatmul.mubr.f32.gmra.mrb[0].mxu0 %v6392
      %v6622 = vpop.f32.mrb[0].mxu0
      %v6623 = vadd.f32 0.0, %v6622
      %v6624 = vpop.f32.mrb[0].mxu0
      %6625 = vmatprep.mubr.f32.mxu0 0.0
      %6626 = vmatmul.mubr.f32.gmra.mrb[0].mxu0 %v6394
      %v6627 = vpop.f32.mrb[0].mxu0
      %v6628 = vadd.f32 0.0, %v6627
      %v6629 = vpop.f32.mrb[0].mxu0
      %6630 = vmatprep.mubr.f32.mxu0 0.0
      %6631 = vmatmul.mubr.f32.gmra.mrb[0].mxu0 %v6396
      %v6632 = vpop.f32.mrb[0].mxu0
      %v6633 = vadd.f32 0.0, %v6632
      %v6634 = vpop.f32.mrb[0].mxu0
      %6635 = vmatprep.mubr.f32.mxu0 0.0
      %6636 = vmatmul.mubr.f32.gmra.mrb[0].mxu0 %v6398
      %v6637 = vpop.f32.mrb[0].mxu0
      %v6638 = vadd.f32 0.0, %v6637
      %v6639 = vpop.f32.mrb[0].mxu0
      %6640 = vdwg.mxu0
      %v6641 = vadd.f32 %v6303, %v6483
      %v6642 = vadd.f32 %v6304, %v6488
      %v6643 = vadd.f32 %v6305, %v6493
      %v6644 = vadd.f32 %v6306, %v6498
      %v6645 = vadd.f32 %v6307, %v6503
      %v6646 = vadd.f32 %v6308, %v6508
      %v6647 = vadd.f32 %v6309, %v6513
      %v6648 = vadd.f32 %v6310, %v6518
      %v6649 = vadd.f32 %v6311, %v6523
      %v6650 = vadd.f32 %v6312, %v6528
      %v6651 = vadd.f32 %v6313, %v6533
      %v6652 = vadd.f32 %v6314, %v6538
      %v6653 = vadd.f32 %v6315, %v6543
      %v6654 = vadd.f32 %v6316, %v6548
      %v6655 = vadd.f32 %v6317, %v6553
      %v6656 = vadd.f32 %v6318, %v6558
      %v6657 = vadd.f32 %v6319, %v6563
      %v6658 = vadd.f32 %v6320, %v6568
      %v6659 = vadd.f32 %v6321, %v6573
      %v6660 = vadd.f32 %v6322, %v6578
      %v6661 = vadd.f32 %v6323, %v6583
      %v6662 = vadd.f32 %v6324, %v6588
      %v6663 = vadd.f32 %v6325, %v6593
      %v6664 = vadd.f32 %v6326, %v6598
      %v6665 = vadd.f32 %v6327, %v6603
      %v6666 = vadd.f32 %v6328, %v6608
      %v6667 = vadd.f32 %v6329, %v6613
      %v6668 = vadd.f32 %v6330, %v6618
      %v6669 = vadd.f32 %v6331, %v6623
      %v6670 = vadd.f32 %v6332, %v6628
      %v6671 = vadd.f32 %v6333, %v6633
      %v6672 = vadd.f32 %v6334, %v6638
      %v6673 = vld [vmem:[%s4] sm:$0x1]
      %v6675 = vlaneseq
      %v6676 = vshrl.u32 %v6675, 7
      %v6677 = vsub.s32 0, %v6676
      %v6678 = vrot.slane %v6673, %v6677
      %v6680 = vadd.f32 %v6641, %v6678
      %v6681 = vadd.f32 %v6642, %v6678
      %v6682 = vadd.f32 %v6643, %v6678
      %v6683 = vadd.f32 %v6644, %v6678
      %v6684 = vadd.f32 %v6645, %v6678
      %v6685 = vadd.f32 %v6646, %v6678
      %v6686 = vadd.f32 %v6647, %v6678
      %v6687 = vadd.f32 %v6648, %v6678
      %v6688 = vadd.f32 %v6649, %v6678
      %v6689 = vadd.f32 %v6650, %v6678
      %v6690 = vadd.f32 %v6651, %v6678
      %v6691 = vadd.f32 %v6652, %v6678
      %v6692 = vadd.f32 %v6653, %v6678
      %v6693 = vadd.f32 %v6654, %v6678
      %v6694 = vadd.f32 %v6655, %v6678
      %v6695 = vadd.f32 %v6656, %v6678
      %v6696 = vadd.f32 %v6657, %v6678
      %v6697 = vadd.f32 %v6658, %v6678
      %v6698 = vadd.f32 %v6659, %v6678
      %v6699 = vadd.f32 %v6660, %v6678
      %v6700 = vadd.f32 %v6661, %v6678
      %v6701 = vadd.f32 %v6662, %v6678
      %v6702 = vadd.f32 %v6663, %v6678
      %v6703 = vadd.f32 %v6664, %v6678
      %v6704 = vadd.f32 %v6665, %v6678
      %v6705 = vadd.f32 %v6666, %v6678
      %v6706 = vadd.f32 %v6667, %v6678
      %v6707 = vadd.f32 %v6668, %v6678
      %v6708 = vadd.f32 %v6669, %v6678
      %v6709 = vadd.f32 %v6670, %v6678
      %v6710 = vadd.f32 %v6671, %v6678
      %v6711 = vadd.f32 %v6672, %v6678
      %v6712 = vmax.f32 %v6680, 0.0
      %v6713 = vmax.f32 %v6681, 0.0
      %v6714 = vmax.f32 %v6682, 0.0
      %v6715 = vmax.f32 %v6683, 0.0
      %v6716 = vmax.f32 %v6684, 0.0
      %v6717 = vmax.f32 %v6685, 0.0
      %v6718 = vmax.f32 %v6686, 0.0
      %v6719 = vmax.f32 %v6687, 0.0
      %v6720 = vmax.f32 %v6688, 0.0
      %v6721 = vmax.f32 %v6689, 0.0
      %v6722 = vmax.f32 %v6690, 0.0
      %v6723 = vmax.f32 %v6691, 0.0
      %v6724 = vmax.f32 %v6692, 0.0
      %v6725 = vmax.f32 %v6693, 0.0
      %v6726 = vmax.f32 %v6694, 0.0
      %v6727 = vmax.f32 %v6695, 0.0
      %v6728 = vmax.f32 %v6696, 0.0
      %v6729 = vmax.f32 %v6697, 0.0
      %v6730 = vmax.f32 %v6698, 0.0
      %v6731 = vmax.f32 %v6699, 0.0
      %v6732 = vmax.f32 %v6700, 0.0
      %v6733 = vmax.f32 %v6701, 0.0
      %v6734 = vmax.f32 %v6702, 0.0
      %v6735 = vmax.f32 %v6703, 0.0
      %v6736 = vmax.f32 %v6704, 0.0
      %v6737 = vmax.f32 %v6705, 0.0
      %v6738 = vmax.f32 %v6706, 0.0
      %v6739 = vmax.f32 %v6707, 0.0
      %v6740 = vmax.f32 %v6708, 0.0
      %v6741 = vmax.f32 %v6709, 0.0
      %v6742 = vmax.f32 %v6710, 0.0
      %v6743 = vmax.f32 %v6711, 0.0
      %6744 = vmatprep.subr.mxu0 0.0
      %6745 = vmatpush1.msra.mxu0 %v3842
      %6746 = vmatprep.subr.mxu0 0.0
      %6747 = vmatpush1.msra.mxu0 %v3843
      %6748 = vmatprep.subr.mxu0 0.0
      %6749 = vmatpush1.msra.mxu0 %v3844
      %6750 = vmatprep.subr.mxu0 0.0
      %6751 = vmatpush1.msra.mxu0 %v3845
      %6752 = vmatprep.subr.mxu0 0.0
      %6753 = vmatpush1.msra.mxu0 %v3846
      %6754 = vmatprep.subr.mxu0 0.0
      %6755 = vmatpush1.msra.mxu0 %v3847
      %6756 = vmatprep.subr.mxu0 0.0
      %6757 = vmatpush1.msra.mxu0 %v3848
      %6758 = vmatprep.subr.mxu0 0.0
      %6759 = vmatpush1.msra.mxu0 %v3849
      %6760 = vmatprep.subr.mxu0 0.0
      %6761 = vmatpush1.msra.mxu0 %v3850
      %6762 = vmatprep.subr.mxu0 0.0
      %6763 = vmatpush1.msra.mxu0 %v3851
      %6764 = vmatprep.subr.mxu0 0.0
      %6765 = vmatpush1.msra.mxu0 %v3852
      %6766 = vmatprep.subr.mxu0 0.0
      %6767 = vmatpush1.msra.mxu0 %v3853
      %6768 = vmatprep.subr.mxu0 0.0
      %6769 = vmatpush1.msra.mxu0 %v3854
      %6770 = vmatprep.subr.mxu0 0.0
      %6771 = vmatpush1.msra.mxu0 %v3855
      %6772 = vmatprep.subr.mxu0 0.0
      %6773 = vmatpush1.msra.mxu0 %v3856
      %6774 = vmatprep.subr.mxu0 0.0
      %6775 = vmatpush1.msra.mxu0 %v3857
      %6776 = vmatprep.subr.mxu0 0.0
      %6777 = vmatpush1.msra.mxu0 0.0
      %6778 = vmatprep.subr.mxu0 0.0
      %6779 = vmatpush1.msra.mxu0 0.0
      %6780 = vmatprep.subr.mxu0 0.0
      %6781 = vmatpush1.msra.mxu0 0.0
      %6782 = vmatprep.subr.mxu0 0.0
      %6783 = vmatpush1.msra.mxu0 0.0
      %6784 = vmatprep.subr.mxu0 0.0
      %6785 = vmatpush1.msra.mxu0 0.0
      %6786 = vmatprep.subr.mxu0 0.0
      %6787 = vmatpush1.msra.mxu0 0.0
      %6788 = vmatprep.subr.mxu0 0.0
      %6789 = vmatpush1.msra.mxu0 0.0
      %6790 = vmatprep.subr.mxu0 0.0
      %6791 = vmatpush1.msra.mxu0 0.0
      %6792 = vmatprep.subr.mxu0 0.0
      %6793 = vmatpush1.msra.mxu0 0.0
      %6794 = vmatprep.subr.mxu0 0.0
      %6795 = vmatpush1.msra.mxu0 0.0
      %6796 = vmatprep.subr.mxu0 0.0
      %6797 = vmatpush1.msra.mxu0 0.0
      %6798 = vmatprep.subr.mxu0 0.0
      %6799 = vmatpush1.msra.mxu0 0.0
      %6800 = vmatprep.subr.mxu0 0.0
      %6801 = vmatpush1.msra.mxu0 0.0
      %6802 = vmatprep.subr.mxu0 0.0
      %6803 = vmatpush1.msra.mxu0 0.0
      %6804 = vmatprep.subr.mxu0 0.0
      %6805 = vmatpush1.msra.mxu0 0.0
      %6806 = vmatprep.subr.mxu0 0.0
      %6807 = vmatpush1.msra.mxu0 0.0
      %6808 = vmatprep.mubr.f32.mxu0 0.0
      %6809 = vmatmul.mubr.f32.gmra.mrb[0].mxu0 %v4309
      %v6810 = vpop.f32.mrb[0].mxu0
      %v6811 = vadd.f32 0.0, %v6810
      %v6812 = vpop.f32.mrb[0].mxu0
      %6813 = vmatprep.mubr.f32.mxu0 0.0
      %6814 = vmatmul.mubr.f32.gmra.mrb[0].mxu0 %v4311
      %v6815 = vpop.f32.mrb[0].mxu0
      %v6816 = vadd.f32 0.0, %v6815
      %v6817 = vpop.f32.mrb[0].mxu0
      %6818 = vmatprep.mubr.f32.mxu0 0.0
      %6819 = vmatmul.mubr.f32.gmra.mrb[0].mxu0 %v4313
      %v6820 = vpop.f32.mrb[0].mxu0
      %v6821 = vadd.f32 0.0, %v6820
      %v6822 = vpop.f32.mrb[0].mxu0
      %6823 = vmatprep.mubr.f32.mxu0 0.0
      %6824 = vmatmul.mubr.f32.gmra.mrb[0].mxu0 %v4315
      %v6825 = vpop.f32.mrb[0].mxu0
      %v6826 = vadd.f32 0.0, %v6825
      %v6827 = vpop.f32.mrb[0].mxu0
      %6828 = vmatprep.mubr.f32.mxu0 0.0
      %6829 = vmatmul.mubr.f32.gmra.mrb[0].mxu0 %v4317
      %v6830 = vpop.f32.mrb[0].mxu0
      %v6831 = vadd.f32 0.0, %v6830
      %v6832 = vpop.f32.mrb[0].mxu0
      %6833 = vmatprep.mubr.f32.mxu0 0.0
      %6834 = vmatmul.mubr.f32.gmra.mrb[0].mxu0 %v4319
      %v6835 = vpop.f32.mrb[0].mxu0
      %v6836 = vadd.f32 0.0, %v6835
      %v6837 = vpop.f32.mrb[0].mxu0
      %6838 = vmatprep.mubr.f32.mxu0 0.0
      %6839 = vmatmul.mubr.f32.gmra.mrb[0].mxu0 %v4321
      %v6840 = vpop.f32.mrb[0].mxu0
      %v6841 = vadd.f32 0.0, %v6840
      %v6842 = vpop.f32.mrb[0].mxu0
      %6843 = vmatprep.mubr.f32.mxu0 0.0
      %6844 = vmatmul.mubr.f32.gmra.mrb[0].mxu0 %v4323
      %v6845 = vpop.f32.mrb[0].mxu0
      %v6846 = vadd.f32 0.0, %v6845
      %v6847 = vpop.f32.mrb[0].mxu0
      %6848 = vmatprep.mubr.f32.mxu0 0.0
      %6849 = vmatmul.mubr.f32.gmra.mrb[0].mxu0 %v4325
      %v6850 = vpop.f32.mrb[0].mxu0
      %v6851 = vadd.f32 0.0, %v6850
      %v6852 = vpop.f32.mrb[0].mxu0
      %6853 = vmatprep.mubr.f32.mxu0 0.0
      %6854 = vmatmul.mubr.f32.gmra.mrb[0].mxu0 %v4327
      %v6855 = vpop.f32.mrb[0].mxu0
      %v6856 = vadd.f32 0.0, %v6855
      %v6857 = vpop.f32.mrb[0].mxu0
      %6858 = vmatprep.mubr.f32.mxu0 0.0
      %6859 = vmatmul.mubr.f32.gmra.mrb[0].mxu0 %v4329
      %v6860 = vpop.f32.mrb[0].mxu0
      %v6861 = vadd.f32 0.0, %v6860
      %v6862 = vpop.f32.mrb[0].mxu0
      %6863 = vmatprep.mubr.f32.mxu0 0.0
      %6864 = vmatmul.mubr.f32.gmra.mrb[0].mxu0 %v4331
      %v6865 = vpop.f32.mrb[0].mxu0
      %v6866 = vadd.f32 0.0, %v6865
      %v6867 = vpop.f32.mrb[0].mxu0
      %6868 = vmatprep.mubr.f32.mxu0 0.0
      %6869 = vmatmul.mubr.f32.gmra.mrb[0].mxu0 %v4333
      %v6870 = vpop.f32.mrb[0].mxu0
      %v6871 = vadd.f32 0.0, %v6870
      %v6872 = vpop.f32.mrb[0].mxu0
      %6873 = vmatprep.mubr.f32.mxu0 0.0
      %6874 = vmatmul.mubr.f32.gmra.mrb[0].mxu0 %v4335
      %v6875 = vpop.f32.mrb[0].mxu0
      %v6876 = vadd.f32 0.0, %v6875
      %v6877 = vpop.f32.mrb[0].mxu0
      %6878 = vmatprep.mubr.f32.mxu0 0.0
      %6879 = vmatmul.mubr.f32.gmra.mrb[0].mxu0 %v4337
      %v6880 = vpop.f32.mrb[0].mxu0
      %v6881 = vadd.f32 0.0, %v6880
      %v6882 = vpop.f32.mrb[0].mxu0
      %6883 = vmatprep.mubr.f32.mxu0 0.0
      %6884 = vmatmul.mubr.f32.gmra.mrb[0].mxu0 %v4339
      %v6885 = vpop.f32.mrb[0].mxu0
      %v6886 = vadd.f32 0.0, %v6885
      %v6887 = vpop.f32.mrb[0].mxu0
      %6888 = vmatprep.mubr.f32.mxu0 0.0
      %6889 = vmatmul.mubr.f32.gmra.mrb[0].mxu0 %v4341
      %v6890 = vpop.f32.mrb[0].mxu0
      %v6891 = vadd.f32 0.0, %v6890
      %v6892 = vpop.f32.mrb[0].mxu0
      %6893 = vmatprep.mubr.f32.mxu0 0.0
      %6894 = vmatmul.mubr.f32.gmra.mrb[0].mxu0 %v4343
      %v6895 = vpop.f32.mrb[0].mxu0
      %v6896 = vadd.f32 0.0, %v6895
      %v6897 = vpop.f32.mrb[0].mxu0
      %6898 = vmatprep.mubr.f32.mxu0 0.0
      %6899 = vmatmul.mubr.f32.gmra.mrb[0].mxu0 %v4345
      %v6900 = vpop.f32.mrb[0].mxu0
      %v6901 = vadd.f32 0.0, %v6900
      %v6902 = vpop.f32.mrb[0].mxu0
      %6903 = vmatprep.mubr.f32.mxu0 0.0
      %6904 = vmatmul.mubr.f32.gmra.mrb[0].mxu0 %v4347
      %v6905 = vpop.f32.mrb[0].mxu0
      %v6906 = vadd.f32 0.0, %v6905
      %v6907 = vpop.f32.mrb[0].mxu0
      %6908 = vmatprep.mubr.f32.mxu0 0.0
      %6909 = vmatmul.mubr.f32.gmra.mrb[0].mxu0 %v4349
      %v6910 = vpop.f32.mrb[0].mxu0
      %v6911 = vadd.f32 0.0, %v6910
      %v6912 = vpop.f32.mrb[0].mxu0
      %6913 = vmatprep.mubr.f32.mxu0 0.0
      %6914 = vmatmul.mubr.f32.gmra.mrb[0].mxu0 %v4351
      %v6915 = vpop.f32.mrb[0].mxu0
      %v6916 = vadd.f32 0.0, %v6915
      %v6917 = vpop.f32.mrb[0].mxu0
      %6918 = vmatprep.mubr.f32.mxu0 0.0
      %6919 = vmatmul.mubr.f32.gmra.mrb[0].mxu0 %v4353
      %v6920 = vpop.f32.mrb[0].mxu0
      %v6921 = vadd.f32 0.0, %v6920
      %v6922 = vpop.f32.mrb[0].mxu0
      %6923 = vmatprep.mubr.f32.mxu0 0.0
      %6924 = vmatmul.mubr.f32.gmra.mrb[0].mxu0 %v4355
      %v6925 = vpop.f32.mrb[0].mxu0
      %v6926 = vadd.f32 0.0, %v6925
      %v6927 = vpop.f32.mrb[0].mxu0
      %6928 = vmatprep.mubr.f32.mxu0 0.0
      %6929 = vmatmul.mubr.f32.gmra.mrb[0].mxu0 %v4357
      %v6930 = vpop.f32.mrb[0].mxu0
      %v6931 = vadd.f32 0.0, %v6930
      %v6932 = vpop.f32.mrb[0].mxu0
      %6933 = vmatprep.mubr.f32.mxu0 0.0
      %6934 = vmatmul.mubr.f32.gmra.mrb[0].mxu0 %v4359
      %v6935 = vpop.f32.mrb[0].mxu0
      %v6936 = vadd.f32 0.0, %v6935
      %v6937 = vpop.f32.mrb[0].mxu0
      %6938 = vmatprep.mubr.f32.mxu0 0.0
      %6939 = vmatmul.mubr.f32.gmra.mrb[0].mxu0 %v4361
      %v6940 = vpop.f32.mrb[0].mxu0
      %v6941 = vadd.f32 0.0, %v6940
      %v6942 = vpop.f32.mrb[0].mxu0
      %6943 = vmatprep.mubr.f32.mxu0 0.0
      %6944 = vmatmul.mubr.f32.gmra.mrb[0].mxu0 %v4363
      %v6945 = vpop.f32.mrb[0].mxu0
      %v6946 = vadd.f32 0.0, %v6945
      %v6947 = vpop.f32.mrb[0].mxu0
      %6948 = vmatprep.mubr.f32.mxu0 0.0
      %6949 = vmatmul.mubr.f32.gmra.mrb[0].mxu0 %v4365
      %v6950 = vpop.f32.mrb[0].mxu0
      %v6951 = vadd.f32 0.0, %v6950
      %v6952 = vpop.f32.mrb[0].mxu0
      %6953 = vmatprep.mubr.f32.mxu0 0.0
      %6954 = vmatmul.mubr.f32.gmra.mrb[0].mxu0 %v4367
      %v6955 = vpop.f32.mrb[0].mxu0
      %v6956 = vadd.f32 0.0, %v6955
      %v6957 = vpop.f32.mrb[0].mxu0
      %6958 = vmatprep.mubr.f32.mxu0 0.0
      %6959 = vmatmul.mubr.f32.gmra.mrb[0].mxu0 %v4369
      %v6960 = vpop.f32.mrb[0].mxu0
      %v6961 = vadd.f32 0.0, %v6960
      %v6962 = vpop.f32.mrb[0].mxu0
      %6963 = vmatprep.mubr.f32.mxu0 0.0
      %6964 = vmatmul.mubr.f32.gmra.mrb[0].mxu0 %v4371
      %v6965 = vpop.f32.mrb[0].mxu0
      %v6966 = vadd.f32 0.0, %v6965
      %v6967 = vpop.f32.mrb[0].mxu0
      %6968 = vdwg.mxu0
      %6969 = vmatprep.subr.mxu0 0.0
      %6970 = vmatpush1.msra.mxu0 %v3761
      %6971 = vmatprep.subr.mxu0 0.0
      %6972 = vmatpush1.msra.mxu0 %v3762
      %6973 = vmatprep.subr.mxu0 0.0
      %6974 = vmatpush1.msra.mxu0 %v3763
      %6975 = vmatprep.subr.mxu0 0.0
      %6976 = vmatpush1.msra.mxu0 %v3764
      %6977 = vmatprep.subr.mxu0 0.0
      %6978 = vmatpush1.msra.mxu0 %v3765
      %6979 = vmatprep.subr.mxu0 0.0
      %6980 = vmatpush1.msra.mxu0 %v3766
      %6981 = vmatprep.subr.mxu0 0.0
      %6982 = vmatpush1.msra.mxu0 %v3767
      %6983 = vmatprep.subr.mxu0 0.0
      %6984 = vmatpush1.msra.mxu0 %v3768
      %6985 = vmatprep.subr.mxu0 0.0
      %6986 = vmatpush1.msra.mxu0 %v3769
      %6987 = vmatprep.subr.mxu0 0.0
      %6988 = vmatpush1.msra.mxu0 %v3770
      %6989 = vmatprep.subr.mxu0 0.0
      %6990 = vmatpush1.msra.mxu0 %v3771
      %6991 = vmatprep.subr.mxu0 0.0
      %6992 = vmatpush1.msra.mxu0 %v3772
      %6993 = vmatprep.subr.mxu0 0.0
      %6994 = vmatpush1.msra.mxu0 %v3773
      %6995 = vmatprep.subr.mxu0 0.0
      %6996 = vmatpush1.msra.mxu0 %v3774
      %6997 = vmatprep.subr.mxu0 0.0
      %6998 = vmatpush1.msra.mxu0 %v3775
      %6999 = vmatprep.subr.mxu0 0.0
      %7000 = vmatpush1.msra.mxu0 %v3776
      %7001 = vmatprep.subr.mxu0 0.0
      %7002 = vmatpush1.msra.mxu0 0.0
      %7003 = vmatprep.subr.mxu0 0.0
      %7004 = vmatpush1.msra.mxu0 0.0
      %7005 = vmatprep.subr.mxu0 0.0
      %7006 = vmatpush1.msra.mxu0 0.0
      %7007 = vmatprep.subr.mxu0 0.0
      %7008 = vmatpush1.msra.mxu0 0.0
      %7009 = vmatprep.subr.mxu0 0.0
      %7010 = vmatpush1.msra.mxu0 0.0
      %7011 = vmatprep.subr.mxu0 0.0
      %7012 = vmatpush1.msra.mxu0 0.0
      %7013 = vmatprep.subr.mxu0 0.0
      %7014 = vmatpush1.msra.mxu0 0.0
      %7015 = vmatprep.subr.mxu0 0.0
      %7016 = vmatpush1.msra.mxu0 0.0
      %7017 = vmatprep.subr.mxu0 0.0
      %7018 = vmatpush1.msra.mxu0 0.0
      %7019 = vmatprep.subr.mxu0 0.0
      %7020 = vmatpush1.msra.mxu0 0.0
      %7021 = vmatprep.subr.mxu0 0.0
      %7022 = vmatpush1.msra.mxu0 0.0
      %7023 = vmatprep.subr.mxu0 0.0
      %7024 = vmatpush1.msra.mxu0 0.0
      %7025 = vmatprep.subr.mxu0 0.0
      %7026 = vmatpush1.msra.mxu0 0.0
      %7027 = vmatprep.subr.mxu0 0.0
      %7028 = vmatpush1.msra.mxu0 0.0
      %7029 = vmatprep.subr.mxu0 0.0
      %7030 = vmatpush1.msra.mxu0 0.0
      %7031 = vmatprep.subr.mxu0 0.0
      %7032 = vmatpush1.msra.mxu0 0.0
      %7033 = vmatprep.mubr.f32.mxu0 0.0
      %7034 = vmatmul.mubr.f32.gmra.mrb[0].mxu0 %v3778
      %v7035 = vpop.f32.mrb[0].mxu0
      %v7036 = vadd.f32 %v6811, %v7035
      %v7037 = vpop.f32.mrb[0].mxu0
      %7038 = vmatprep.mubr.f32.mxu0 0.0
      %7039 = vmatmul.mubr.f32.gmra.mrb[0].mxu0 %v3780
      %v7040 = vpop.f32.mrb[0].mxu0
      %v7041 = vadd.f32 %v6816, %v7040
      %v7042 = vpop.f32.mrb[0].mxu0
      %7043 = vmatprep.mubr.f32.mxu0 0.0
      %7044 = vmatmul.mubr.f32.gmra.mrb[0].mxu0 %v3782
      %v7045 = vpop.f32.mrb[0].mxu0
      %v7046 = vadd.f32 %v6821, %v7045
      %v7047 = vpop.f32.mrb[0].mxu0
      %7048 = vmatprep.mubr.f32.mxu0 0.0
      %7049 = vmatmul.mubr.f32.gmra.mrb[0].mxu0 %v3784
      %v7050 = vpop.f32.mrb[0].mxu0
      %v7051 = vadd.f32 %v6826, %v7050
      %v7052 = vpop.f32.mrb[0].mxu0
      %7053 = vmatprep.mubr.f32.mxu0 0.0
      %7054 = vmatmul.mubr.f32.gmra.mrb[0].mxu0 %v3786
      %v7055 = vpop.f32.mrb[0].mxu0
      %v7056 = vadd.f32 %v6831, %v7055
      %v7057 = vpop.f32.mrb[0].mxu0
      %7058 = vmatprep.mubr.f32.mxu0 0.0
      %7059 = vmatmul.mubr.f32.gmra.mrb[0].mxu0 %v3788
      %v7060 = vpop.f32.mrb[0].mxu0
      %v7061 = vadd.f32 %v6836, %v7060
      %v7062 = vpop.f32.mrb[0].mxu0
      %7063 = vmatprep.mubr.f32.mxu0 0.0
      %7064 = vmatmul.mubr.f32.gmra.mrb[0].mxu0 %v3790
      %v7065 = vpop.f32.mrb[0].mxu0
      %v7066 = vadd.f32 %v6841, %v7065
      %v7067 = vpop.f32.mrb[0].mxu0
      %7068 = vmatprep.mubr.f32.mxu0 0.0
      %7069 = vmatmul.mubr.f32.gmra.mrb[0].mxu0 %v3792
      %v7070 = vpop.f32.mrb[0].mxu0
      %v7071 = vadd.f32 %v6846, %v7070
      %v7072 = vpop.f32.mrb[0].mxu0
      %7073 = vmatprep.mubr.f32.mxu0 0.0
      %7074 = vmatmul.mubr.f32.gmra.mrb[0].mxu0 %v3794
      %v7075 = vpop.f32.mrb[0].mxu0
      %v7076 = vadd.f32 %v6851, %v7075
      %v7077 = vpop.f32.mrb[0].mxu0
      %7078 = vmatprep.mubr.f32.mxu0 0.0
      %7079 = vmatmul.mubr.f32.gmra.mrb[0].mxu0 %v3796
      %v7080 = vpop.f32.mrb[0].mxu0
      %v7081 = vadd.f32 %v6856, %v7080
      %v7082 = vpop.f32.mrb[0].mxu0
      %7083 = vmatprep.mubr.f32.mxu0 0.0
      %7084 = vmatmul.mubr.f32.gmra.mrb[0].mxu0 %v3798
      %v7085 = vpop.f32.mrb[0].mxu0
      %v7086 = vadd.f32 %v6861, %v7085
      %v7087 = vpop.f32.mrb[0].mxu0
      %7088 = vmatprep.mubr.f32.mxu0 0.0
      %7089 = vmatmul.mubr.f32.gmra.mrb[0].mxu0 %v3800
      %v7090 = vpop.f32.mrb[0].mxu0
      %v7091 = vadd.f32 %v6866, %v7090
      %v7092 = vpop.f32.mrb[0].mxu0
      %7093 = vmatprep.mubr.f32.mxu0 0.0
      %7094 = vmatmul.mubr.f32.gmra.mrb[0].mxu0 %v3802
      %v7095 = vpop.f32.mrb[0].mxu0
      %v7096 = vadd.f32 %v6871, %v7095
      %v7097 = vpop.f32.mrb[0].mxu0
      %7098 = vmatprep.mubr.f32.mxu0 0.0
      %7099 = vmatmul.mubr.f32.gmra.mrb[0].mxu0 %v3804
      %v7100 = vpop.f32.mrb[0].mxu0
      %v7101 = vadd.f32 %v6876, %v7100
      %v7102 = vpop.f32.mrb[0].mxu0
      %7103 = vmatprep.mubr.f32.mxu0 0.0
      %7104 = vmatmul.mubr.f32.gmra.mrb[0].mxu0 %v3806
      %v7105 = vpop.f32.mrb[0].mxu0
      %v7106 = vadd.f32 %v6881, %v7105
      %v7107 = vpop.f32.mrb[0].mxu0
      %7108 = vmatprep.mubr.f32.mxu0 0.0
      %7109 = vmatmul.mubr.f32.gmra.mrb[0].mxu0 %v3808
      %v7110 = vpop.f32.mrb[0].mxu0
      %v7111 = vadd.f32 %v6886, %v7110
      %v7112 = vpop.f32.mrb[0].mxu0
      %7113 = vmatprep.mubr.f32.mxu0 0.0
      %7114 = vmatmul.mubr.f32.gmra.mrb[0].mxu0 %v3810
      %v7115 = vpop.f32.mrb[0].mxu0
      %v7116 = vadd.f32 %v6891, %v7115
      %v7117 = vpop.f32.mrb[0].mxu0
      %7118 = vmatprep.mubr.f32.mxu0 0.0
      %7119 = vmatmul.mubr.f32.gmra.mrb[0].mxu0 %v3812
      %v7120 = vpop.f32.mrb[0].mxu0
      %v7121 = vadd.f32 %v6896, %v7120
      %v7122 = vpop.f32.mrb[0].mxu0
      %7123 = vmatprep.mubr.f32.mxu0 0.0
      %7124 = vmatmul.mubr.f32.gmra.mrb[0].mxu0 %v3814
      %v7125 = vpop.f32.mrb[0].mxu0
      %v7126 = vadd.f32 %v6901, %v7125
      %v7127 = vpop.f32.mrb[0].mxu0
      %7128 = vmatprep.mubr.f32.mxu0 0.0
      %7129 = vmatmul.mubr.f32.gmra.mrb[0].mxu0 %v3816
      %v7130 = vpop.f32.mrb[0].mxu0
      %v7131 = vadd.f32 %v6906, %v7130
      %v7132 = vpop.f32.mrb[0].mxu0
      %7133 = vmatprep.mubr.f32.mxu0 0.0
      %7134 = vmatmul.mubr.f32.gmra.mrb[0].mxu0 %v3818
      %v7135 = vpop.f32.mrb[0].mxu0
      %v7136 = vadd.f32 %v6911, %v7135
      %v7137 = vpop.f32.mrb[0].mxu0
      %7138 = vmatprep.mubr.f32.mxu0 0.0
      %7139 = vmatmul.mubr.f32.gmra.mrb[0].mxu0 %v3820
      %v7140 = vpop.f32.mrb[0].mxu0
      %v7141 = vadd.f32 %v6916, %v7140
      %v7142 = vpop.f32.mrb[0].mxu0
      %7143 = vmatprep.mubr.f32.mxu0 0.0
      %7144 = vmatmul.mubr.f32.gmra.mrb[0].mxu0 %v3822
      %v7145 = vpop.f32.mrb[0].mxu0
      %v7146 = vadd.f32 %v6921, %v7145
      %v7147 = vpop.f32.mrb[0].mxu0
      %7148 = vmatprep.mubr.f32.mxu0 0.0
      %7149 = vmatmul.mubr.f32.gmra.mrb[0].mxu0 %v3824
      %v7150 = vpop.f32.mrb[0].mxu0
      %v7151 = vadd.f32 %v6926, %v7150
      %v7152 = vpop.f32.mrb[0].mxu0
      %7153 = vmatprep.mubr.f32.mxu0 0.0
      %7154 = vmatmul.mubr.f32.gmra.mrb[0].mxu0 %v3826
      %v7155 = vpop.f32.mrb[0].mxu0
      %v7156 = vadd.f32 %v6931, %v7155
      %v7157 = vpop.f32.mrb[0].mxu0
      %7158 = vmatprep.mubr.f32.mxu0 0.0
      %7159 = vmatmul.mubr.f32.gmra.mrb[0].mxu0 %v3828
      %v7160 = vpop.f32.mrb[0].mxu0
      %v7161 = vadd.f32 %v6936, %v7160
      %v7162 = vpop.f32.mrb[0].mxu0
      %7163 = vmatprep.mubr.f32.mxu0 0.0
      %7164 = vmatmul.mubr.f32.gmra.mrb[0].mxu0 %v3830
      %v7165 = vpop.f32.mrb[0].mxu0
      %v7166 = vadd.f32 %v6941, %v7165
      %v7167 = vpop.f32.mrb[0].mxu0
      %7168 = vmatprep.mubr.f32.mxu0 0.0
      %7169 = vmatmul.mubr.f32.gmra.mrb[0].mxu0 %v3832
      %v7170 = vpop.f32.mrb[0].mxu0
      %v7171 = vadd.f32 %v6946, %v7170
      %v7172 = vpop.f32.mrb[0].mxu0
      %7173 = vmatprep.mubr.f32.mxu0 0.0
      %7174 = vmatmul.mubr.f32.gmra.mrb[0].mxu0 %v3834
      %v7175 = vpop.f32.mrb[0].mxu0
      %v7176 = vadd.f32 %v6951, %v7175
      %v7177 = vpop.f32.mrb[0].mxu0
      %7178 = vmatprep.mubr.f32.mxu0 0.0
      %7179 = vmatmul.mubr.f32.gmra.mrb[0].mxu0 %v3836
      %v7180 = vpop.f32.mrb[0].mxu0
      %v7181 = vadd.f32 %v6956, %v7180
      %v7182 = vpop.f32.mrb[0].mxu0
      %7183 = vmatprep.mubr.f32.mxu0 0.0
      %7184 = vmatmul.mubr.f32.gmra.mrb[0].mxu0 %v3838
      %v7185 = vpop.f32.mrb[0].mxu0
      %v7186 = vadd.f32 %v6961, %v7185
      %v7187 = vpop.f32.mrb[0].mxu0
      %7188 = vmatprep.mubr.f32.mxu0 0.0
      %7189 = vmatmul.mubr.f32.gmra.mrb[0].mxu0 %v3840
      %v7190 = vpop.f32.mrb[0].mxu0
      %v7191 = vadd.f32 %v6966, %v7190
      %v7192 = vpop.f32.mrb[0].mxu0
      %7193 = vdwg.mxu0
      %s7194 = scalar_lea.vmem [#allocation2], 3
      %v7195 = vld [vmem:[%s7194] ss:$2 sm:$0xff]
      %s7196 = scalar_lea.vmem [#allocation2], 27
      %v7197 = vld [vmem:[%s7196] ss:$2 sm:$0xff]
      %s7198 = scalar_lea.vmem [#allocation2], 51
      %v7199 = vld [vmem:[%s7198] ss:$2 sm:$0xff]
      %s7200 = scalar_lea.vmem [#allocation2], 75
      %v7201 = vld [vmem:[%s7200] ss:$2 sm:$0xff]
      %s7202 = scalar_lea.vmem [#allocation2], 99
      %v7203 = vld [vmem:[%s7202] ss:$2 sm:$0xff]
      %s7204 = scalar_lea.vmem [#allocation2], 123
      %v7205 = vld [vmem:[%s7204] ss:$2 sm:$0xff]
      %s7206 = scalar_lea.vmem [#allocation2], 147
      %v7207 = vld [vmem:[%s7206] ss:$2 sm:$0xff]
      %s7208 = scalar_lea.vmem [#allocation2], 171
      %v7209 = vld [vmem:[%s7208] ss:$2 sm:$0xff]
      %s7210 = scalar_lea.vmem [#allocation2], 195
      %v7211 = vld [vmem:[%s7210] ss:$2 sm:$0xff]
      %s7212 = scalar_lea.vmem [#allocation2], 219
      %v7213 = vld [vmem:[%s7212] ss:$2 sm:$0xff]
      %s7214 = scalar_lea.vmem [#allocation2], 243
      %v7215 = vld [vmem:[%s7214] ss:$2 sm:$0xff]
      %s7216 = scalar_lea.vmem [#allocation2], 267
      %v7217 = vld [vmem:[%s7216] ss:$2 sm:$0xff]
      %s7218 = scalar_lea.vmem [#allocation2], 291
      %v7219 = vld [vmem:[%s7218] ss:$2 sm:$0xff]
      %s7220 = scalar_lea.vmem [#allocation2], 315
      %v7221 = vld [vmem:[%s7220] ss:$2 sm:$0xff]
      %s7222 = scalar_lea.vmem [#allocation2], 339
      %v7223 = vld [vmem:[%s7222] ss:$2 sm:$0xff]
      %s7224 = scalar_lea.vmem [#allocation2], 363
      %v7225 = vld [vmem:[%s7224] ss:$2 sm:$0xff]
      %s7226 = scalar_lea.vmem [#allocation2], 435
      %v7227 = vld [vmem:[%s7226] ss:$2 sm:$0xff]
      %s7228 = scalar_lea.vmem [#allocation2], 459
      %v7229 = vld [vmem:[%s7228] ss:$2 sm:$0xff]
      %s7230 = scalar_lea.vmem [#allocation2], 483
      %v7231 = vld [vmem:[%s7230] ss:$2 sm:$0xff]
      %s7232 = scalar_lea.vmem [#allocation2], 507
      %v7233 = vld [vmem:[%s7232] ss:$2 sm:$0xff]
      %s7234 = scalar_lea.vmem [#allocation2], 531
      %v7235 = vld [vmem:[%s7234] ss:$2 sm:$0xff]
      %s7236 = scalar_lea.vmem [#allocation2], 555
      %v7237 = vld [vmem:[%s7236] ss:$2 sm:$0xff]
      %s7238 = scalar_lea.vmem [#allocation2], 579
      %v7239 = vld [vmem:[%s7238] ss:$2 sm:$0xff]
      %s7240 = scalar_lea.vmem [#allocation2], 603
      %v7241 = vld [vmem:[%s7240] ss:$2 sm:$0xff]
      %s7242 = scalar_lea.vmem [#allocation2], 627
      %v7243 = vld [vmem:[%s7242] ss:$2 sm:$0xff]
      %s7244 = scalar_lea.vmem [#allocation2], 651
      %v7245 = vld [vmem:[%s7244] ss:$2 sm:$0xff]
      %s7246 = scalar_lea.vmem [#allocation2], 675
      %v7247 = vld [vmem:[%s7246] ss:$2 sm:$0xff]
      %s7248 = scalar_lea.vmem [#allocation2], 699
      %v7249 = vld [vmem:[%s7248] ss:$2 sm:$0xff]
      %s7250 = scalar_lea.vmem [#allocation2], 723
      %v7251 = vld [vmem:[%s7250] ss:$2 sm:$0xff]
      %s7252 = scalar_lea.vmem [#allocation2], 747
      %v7253 = vld [vmem:[%s7252] ss:$2 sm:$0xff]
      %s7254 = scalar_lea.vmem [#allocation2], 771
      %v7255 = vld [vmem:[%s7254] ss:$2 sm:$0xff]
      %s7256 = scalar_lea.vmem [#allocation2], 795
      %v7257 = vld [vmem:[%s7256] ss:$2 sm:$0xff]
      %7258 = vmatprep.subr.mxu0 0.0
      %7259 = vmatpush1.msra.mxu0 %v4373
      %7260 = vmatprep.subr.mxu0 0.0
      %7261 = vmatpush1.msra.mxu0 %v4374
      %7262 = vmatprep.subr.mxu0 0.0
      %7263 = vmatpush1.msra.mxu0 %v4375
      %7264 = vmatprep.subr.mxu0 0.0
      %7265 = vmatpush1.msra.mxu0 %v4376
      %7266 = vmatprep.subr.mxu0 0.0
      %7267 = vmatpush1.msra.mxu0 %v4377
      %7268 = vmatprep.subr.mxu0 0.0
      %7269 = vmatpush1.msra.mxu0 %v4378
      %7270 = vmatprep.subr.mxu0 0.0
      %7271 = vmatpush1.msra.mxu0 %v4379
      %7272 = vmatprep.subr.mxu0 0.0
      %7273 = vmatpush1.msra.mxu0 %v4380
      %7274 = vmatprep.subr.mxu0 0.0
      %7275 = vmatpush1.msra.mxu0 %v4381
      %7276 = vmatprep.subr.mxu0 0.0
      %7277 = vmatpush1.msra.mxu0 %v4382
      %7278 = vmatprep.subr.mxu0 0.0
      %7279 = vmatpush1.msra.mxu0 %v4383
      %7280 = vmatprep.subr.mxu0 0.0
      %7281 = vmatpush1.msra.mxu0 %v4384
      %7282 = vmatprep.subr.mxu0 0.0
      %7283 = vmatpush1.msra.mxu0 %v4385
      %7284 = vmatprep.subr.mxu0 0.0
      %7285 = vmatpush1.msra.mxu0 %v4386
      %7286 = vmatprep.subr.mxu0 0.0
      %7287 = vmatpush1.msra.mxu0 %v4387
      %7288 = vmatprep.subr.mxu0 0.0
      %7289 = vmatpush1.msra.mxu0 %v4388
      %7290 = vmatprep.subr.mxu0 0.0
      %7291 = vmatpush1.msra.mxu0 0.0
      %7292 = vmatprep.subr.mxu0 0.0
      %7293 = vmatpush1.msra.mxu0 0.0
      %7294 = vmatprep.subr.mxu0 0.0
      %7295 = vmatpush1.msra.mxu0 0.0
      %7296 = vmatprep.subr.mxu0 0.0
      %7297 = vmatpush1.msra.mxu0 0.0
      %7298 = vmatprep.subr.mxu0 0.0
      %7299 = vmatpush1.msra.mxu0 0.0
      %7300 = vmatprep.subr.mxu0 0.0
      %7301 = vmatpush1.msra.mxu0 0.0
      %7302 = vmatprep.subr.mxu0 0.0
      %7303 = vmatpush1.msra.mxu0 0.0
      %7304 = vmatprep.subr.mxu0 0.0
      %7305 = vmatpush1.msra.mxu0 0.0
      %7306 = vmatprep.subr.mxu0 0.0
      %7307 = vmatpush1.msra.mxu0 0.0
      %7308 = vmatprep.subr.mxu0 0.0
      %7309 = vmatpush1.msra.mxu0 0.0
      %7310 = vmatprep.subr.mxu0 0.0
      %7311 = vmatpush1.msra.mxu0 0.0
      %7312 = vmatprep.subr.mxu0 0.0
      %7313 = vmatpush1.msra.mxu0 0.0
      %7314 = vmatprep.subr.mxu0 0.0
      %7315 = vmatpush1.msra.mxu0 0.0
      %7316 = vmatprep.subr.mxu0 0.0
      %7317 = vmatpush1.msra.mxu0 0.0
      %7318 = vmatprep.subr.mxu0 0.0
      %7319 = vmatpush1.msra.mxu0 0.0
      %7320 = vmatprep.subr.mxu0 0.0
      %7321 = vmatpush1.msra.mxu0 0.0
      %7322 = vmatprep.mubr.f32.mxu0 0.0
      %7323 = vmatmul.mubr.f32.gmra.mrb[0].mxu0 %v7195
      %v7324 = vpop.f32.mrb[0].mxu0
      %v7325 = vadd.f32 0.0, %v7324
      %v7326 = vpop.f32.mrb[0].mxu0
      %7327 = vmatprep.mubr.f32.mxu0 0.0
      %7328 = vmatmul.mubr.f32.gmra.mrb[0].mxu0 %v7197
      %v7329 = vpop.f32.mrb[0].mxu0
      %v7330 = vadd.f32 0.0, %v7329
      %v7331 = vpop.f32.mrb[0].mxu0
      %7332 = vmatprep.mubr.f32.mxu0 0.0
      %7333 = vmatmul.mubr.f32.gmra.mrb[0].mxu0 %v7199
      %v7334 = vpop.f32.mrb[0].mxu0
      %v7335 = vadd.f32 0.0, %v7334
      %v7336 = vpop.f32.mrb[0].mxu0
      %7337 = vmatprep.mubr.f32.mxu0 0.0
      %7338 = vmatmul.mubr.f32.gmra.mrb[0].mxu0 %v7201
      %v7339 = vpop.f32.mrb[0].mxu0
      %v7340 = vadd.f32 0.0, %v7339
      %v7341 = vpop.f32.mrb[0].mxu0
      %7342 = vmatprep.mubr.f32.mxu0 0.0
      %7343 = vmatmul.mubr.f32.gmra.mrb[0].mxu0 %v7203
      %v7344 = vpop.f32.mrb[0].mxu0
      %v7345 = vadd.f32 0.0, %v7344
      %v7346 = vpop.f32.mrb[0].mxu0
      %7347 = vmatprep.mubr.f32.mxu0 0.0
      %7348 = vmatmul.mubr.f32.gmra.mrb[0].mxu0 %v7205
      %v7349 = vpop.f32.mrb[0].mxu0
      %v7350 = vadd.f32 0.0, %v7349
      %v7351 = vpop.f32.mrb[0].mxu0
      %7352 = vmatprep.mubr.f32.mxu0 0.0
      %7353 = vmatmul.mubr.f32.gmra.mrb[0].mxu0 %v7207
      %v7354 = vpop.f32.mrb[0].mxu0
      %v7355 = vadd.f32 0.0, %v7354
      %v7356 = vpop.f32.mrb[0].mxu0
      %7357 = vmatprep.mubr.f32.mxu0 0.0
      %7358 = vmatmul.mubr.f32.gmra.mrb[0].mxu0 %v7209
      %v7359 = vpop.f32.mrb[0].mxu0
      %v7360 = vadd.f32 0.0, %v7359
      %v7361 = vpop.f32.mrb[0].mxu0
      %7362 = vmatprep.mubr.f32.mxu0 0.0
      %7363 = vmatmul.mubr.f32.gmra.mrb[0].mxu0 %v7211
      %v7364 = vpop.f32.mrb[0].mxu0
      %v7365 = vadd.f32 0.0, %v7364
      %v7366 = vpop.f32.mrb[0].mxu0
      %7367 = vmatprep.mubr.f32.mxu0 0.0
      %7368 = vmatmul.mubr.f32.gmra.mrb[0].mxu0 %v7213
      %v7369 = vpop.f32.mrb[0].mxu0
      %v7370 = vadd.f32 0.0, %v7369
      %v7371 = vpop.f32.mrb[0].mxu0
      %7372 = vmatprep.mubr.f32.mxu0 0.0
      %7373 = vmatmul.mubr.f32.gmra.mrb[0].mxu0 %v7215
      %v7374 = vpop.f32.mrb[0].mxu0
      %v7375 = vadd.f32 0.0, %v7374
      %v7376 = vpop.f32.mrb[0].mxu0
      %7377 = vmatprep.mubr.f32.mxu0 0.0
      %7378 = vmatmul.mubr.f32.gmra.mrb[0].mxu0 %v7217
      %v7379 = vpop.f32.mrb[0].mxu0
      %v7380 = vadd.f32 0.0, %v7379
      %v7381 = vpop.f32.mrb[0].mxu0
      %7382 = vmatprep.mubr.f32.mxu0 0.0
      %7383 = vmatmul.mubr.f32.gmra.mrb[0].mxu0 %v7219
      %v7384 = vpop.f32.mrb[0].mxu0
      %v7385 = vadd.f32 0.0, %v7384
      %v7386 = vpop.f32.mrb[0].mxu0
      %7387 = vmatprep.mubr.f32.mxu0 0.0
      %7388 = vmatmul.mubr.f32.gmra.mrb[0].mxu0 %v7221
      %v7389 = vpop.f32.mrb[0].mxu0
      %v7390 = vadd.f32 0.0, %v7389
      %v7391 = vpop.f32.mrb[0].mxu0
      %7392 = vmatprep.mubr.f32.mxu0 0.0
      %7393 = vmatmul.mubr.f32.gmra.mrb[0].mxu0 %v7223
      %v7394 = vpop.f32.mrb[0].mxu0
      %v7395 = vadd.f32 0.0, %v7394
      %v7396 = vpop.f32.mrb[0].mxu0
      %7397 = vmatprep.mubr.f32.mxu0 0.0
      %7398 = vmatmul.mubr.f32.gmra.mrb[0].mxu0 %v7225
      %v7399 = vpop.f32.mrb[0].mxu0
      %v7400 = vadd.f32 0.0, %v7399
      %v7401 = vpop.f32.mrb[0].mxu0
      %7402 = vmatprep.mubr.f32.mxu0 0.0
      %7403 = vmatmul.mubr.f32.gmra.mrb[0].mxu0 %v7227
      %v7404 = vpop.f32.mrb[0].mxu0
      %v7405 = vadd.f32 0.0, %v7404
      %v7406 = vpop.f32.mrb[0].mxu0
      %7407 = vmatprep.mubr.f32.mxu0 0.0
      %7408 = vmatmul.mubr.f32.gmra.mrb[0].mxu0 %v7229
      %v7409 = vpop.f32.mrb[0].mxu0
      %v7410 = vadd.f32 0.0, %v7409
      %v7411 = vpop.f32.mrb[0].mxu0
      %7412 = vmatprep.mubr.f32.mxu0 0.0
      %7413 = vmatmul.mubr.f32.gmra.mrb[0].mxu0 %v7231
      %v7414 = vpop.f32.mrb[0].mxu0
      %v7415 = vadd.f32 0.0, %v7414
      %v7416 = vpop.f32.mrb[0].mxu0
      %7417 = vmatprep.mubr.f32.mxu0 0.0
      %7418 = vmatmul.mubr.f32.gmra.mrb[0].mxu0 %v7233
      %v7419 = vpop.f32.mrb[0].mxu0
      %v7420 = vadd.f32 0.0, %v7419
      %v7421 = vpop.f32.mrb[0].mxu0
      %7422 = vmatprep.mubr.f32.mxu0 0.0
      %7423 = vmatmul.mubr.f32.gmra.mrb[0].mxu0 %v7235
      %v7424 = vpop.f32.mrb[0].mxu0
      %v7425 = vadd.f32 0.0, %v7424
      %v7426 = vpop.f32.mrb[0].mxu0
      %7427 = vmatprep.mubr.f32.mxu0 0.0
      %7428 = vmatmul.mubr.f32.gmra.mrb[0].mxu0 %v7237
      %v7429 = vpop.f32.mrb[0].mxu0
      %v7430 = vadd.f32 0.0, %v7429
      %v7431 = vpop.f32.mrb[0].mxu0
      %7432 = vmatprep.mubr.f32.mxu0 0.0
      %7433 = vmatmul.mubr.f32.gmra.mrb[0].mxu0 %v7239
      %v7434 = vpop.f32.mrb[0].mxu0
      %v7435 = vadd.f32 0.0, %v7434
      %v7436 = vpop.f32.mrb[0].mxu0
      %7437 = vmatprep.mubr.f32.mxu0 0.0
      %7438 = vmatmul.mubr.f32.gmra.mrb[0].mxu0 %v7241
      %v7439 = vpop.f32.mrb[0].mxu0
      %v7440 = vadd.f32 0.0, %v7439
      %v7441 = vpop.f32.mrb[0].mxu0
      %7442 = vmatprep.mubr.f32.mxu0 0.0
      %7443 = vmatmul.mubr.f32.gmra.mrb[0].mxu0 %v7243
      %v7444 = vpop.f32.mrb[0].mxu0
      %v7445 = vadd.f32 0.0, %v7444
      %v7446 = vpop.f32.mrb[0].mxu0
      %7447 = vmatprep.mubr.f32.mxu0 0.0
      %7448 = vmatmul.mubr.f32.gmra.mrb[0].mxu0 %v7245
      %v7449 = vpop.f32.mrb[0].mxu0
      %v7450 = vadd.f32 0.0, %v7449
      %v7451 = vpop.f32.mrb[0].mxu0
      %7452 = vmatprep.mubr.f32.mxu0 0.0
      %7453 = vmatmul.mubr.f32.gmra.mrb[0].mxu0 %v7247
      %v7454 = vpop.f32.mrb[0].mxu0
      %v7455 = vadd.f32 0.0, %v7454
      %v7456 = vpop.f32.mrb[0].mxu0
      %7457 = vmatprep.mubr.f32.mxu0 0.0
      %7458 = vmatmul.mubr.f32.gmra.mrb[0].mxu0 %v7249
      %v7459 = vpop.f32.mrb[0].mxu0
      %v7460 = vadd.f32 0.0, %v7459
      %v7461 = vpop.f32.mrb[0].mxu0
      %7462 = vmatprep.mubr.f32.mxu0 0.0
      %7463 = vmatmul.mubr.f32.gmra.mrb[0].mxu0 %v7251
      %v7464 = vpop.f32.mrb[0].mxu0
      %v7465 = vadd.f32 0.0, %v7464
      %v7466 = vpop.f32.mrb[0].mxu0
      %7467 = vmatprep.mubr.f32.mxu0 0.0
      %7468 = vmatmul.mubr.f32.gmra.mrb[0].mxu0 %v7253
      %v7469 = vpop.f32.mrb[0].mxu0
      %v7470 = vadd.f32 0.0, %v7469
      %v7471 = vpop.f32.mrb[0].mxu0
      %7472 = vmatprep.mubr.f32.mxu0 0.0
      %7473 = vmatmul.mubr.f32.gmra.mrb[0].mxu0 %v7255
      %v7474 = vpop.f32.mrb[0].mxu0
      %v7475 = vadd.f32 0.0, %v7474
      %v7476 = vpop.f32.mrb[0].mxu0
      %7477 = vmatprep.mubr.f32.mxu0 0.0
      %7478 = vmatmul.mubr.f32.gmra.mrb[0].mxu0 %v7257
      %v7479 = vpop.f32.mrb[0].mxu0
      %v7480 = vadd.f32 0.0, %v7479
      %v7481 = vpop.f32.mrb[0].mxu0
      %7482 = vdwg.mxu0
      %v7483 = vadd.f32 %v7036, %v7325
      %v7484 = vadd.f32 %v7041, %v7330
      %v7485 = vadd.f32 %v7046, %v7335
      %v7486 = vadd.f32 %v7051, %v7340
      %v7487 = vadd.f32 %v7056, %v7345
      %v7488 = vadd.f32 %v7061, %v7350
      %v7489 = vadd.f32 %v7066, %v7355
      %v7490 = vadd.f32 %v7071, %v7360
      %v7491 = vadd.f32 %v7076, %v7365
      %v7492 = vadd.f32 %v7081, %v7370
      %v7493 = vadd.f32 %v7086, %v7375
      %v7494 = vadd.f32 %v7091, %v7380
      %v7495 = vadd.f32 %v7096, %v7385
      %v7496 = vadd.f32 %v7101, %v7390
      %v7497 = vadd.f32 %v7106, %v7395
      %v7498 = vadd.f32 %v7111, %v7400
      %v7499 = vadd.f32 %v7116, %v7405
      %v7500 = vadd.f32 %v7121, %v7410
      %v7501 = vadd.f32 %v7126, %v7415
      %v7502 = vadd.f32 %v7131, %v7420
      %v7503 = vadd.f32 %v7136, %v7425
      %v7504 = vadd.f32 %v7141, %v7430
      %v7505 = vadd.f32 %v7146, %v7435
      %v7506 = vadd.f32 %v7151, %v7440
      %v7507 = vadd.f32 %v7156, %v7445
      %v7508 = vadd.f32 %v7161, %v7450
      %v7509 = vadd.f32 %v7166, %v7455
      %v7510 = vadd.f32 %v7171, %v7460
      %v7511 = vadd.f32 %v7176, %v7465
      %v7512 = vadd.f32 %v7181, %v7470
      %v7513 = vadd.f32 %v7186, %v7475
      %v7514 = vadd.f32 %v7191, %v7480
      %7515 = vmatprep.subr.mxu0 0.0
      %7516 = vmatpush1.msra.mxu0 %v4710
      %7517 = vmatprep.subr.mxu0 0.0
      %7518 = vmatpush1.msra.mxu0 %v4711
      %7519 = vmatprep.subr.mxu0 0.0
      %7520 = vmatpush1.msra.mxu0 %v4712
      %7521 = vmatprep.subr.mxu0 0.0
      %7522 = vmatpush1.msra.mxu0 %v4713
      %7523 = vmatprep.subr.mxu0 0.0
      %7524 = vmatpush1.msra.mxu0 %v4714
      %7525 = vmatprep.subr.mxu0 0.0
      %7526 = vmatpush1.msra.mxu0 %v4715
      %7527 = vmatprep.subr.mxu0 0.0
      %7528 = vmatpush1.msra.mxu0 %v4716
      %7529 = vmatprep.subr.mxu0 0.0
      %7530 = vmatpush1.msra.mxu0 %v4717
      %7531 = vmatprep.subr.mxu0 0.0
      %7532 = vmatpush1.msra.mxu0 %v4718
      %7533 = vmatprep.subr.mxu0 0.0
      %7534 = vmatpush1.msra.mxu0 %v4719
      %7535 = vmatprep.subr.mxu0 0.0
      %7536 = vmatpush1.msra.mxu0 %v4720
      %7537 = vmatprep.subr.mxu0 0.0
      %7538 = vmatpush1.msra.mxu0 %v4721
      %7539 = vmatprep.subr.mxu0 0.0
      %7540 = vmatpush1.msra.mxu0 %v4722
      %7541 = vmatprep.subr.mxu0 0.0
      %7542 = vmatpush1.msra.mxu0 %v4723
      %7543 = vmatprep.subr.mxu0 0.0
      %7544 = vmatpush1.msra.mxu0 %v4724
      %7545 = vmatprep.subr.mxu0 0.0
      %7546 = vmatpush1.msra.mxu0 %v4725
      %7547 = vmatprep.subr.mxu0 0.0
      %7548 = vmatpush1.msra.mxu0 0.0
      %7549 = vmatprep.subr.mxu0 0.0
      %7550 = vmatpush1.msra.mxu0 0.0
      %7551 = vmatprep.subr.mxu0 0.0
      %7552 = vmatpush1.msra.mxu0 0.0
      %7553 = vmatprep.subr.mxu0 0.0
      %7554 = vmatpush1.msra.mxu0 0.0
      %7555 = vmatprep.subr.mxu0 0.0
      %7556 = vmatpush1.msra.mxu0 0.0
      %7557 = vmatprep.subr.mxu0 0.0
      %7558 = vmatpush1.msra.mxu0 0.0
      %7559 = vmatprep.subr.mxu0 0.0
      %7560 = vmatpush1.msra.mxu0 0.0
      %7561 = vmatprep.subr.mxu0 0.0
      %7562 = vmatpush1.msra.mxu0 0.0
      %7563 = vmatprep.subr.mxu0 0.0
      %7564 = vmatpush1.msra.mxu0 0.0
      %7565 = vmatprep.subr.mxu0 0.0
      %7566 = vmatpush1.msra.mxu0 0.0
      %7567 = vmatprep.subr.mxu0 0.0
      %7568 = vmatpush1.msra.mxu0 0.0
      %7569 = vmatprep.subr.mxu0 0.0
      %7570 = vmatpush1.msra.mxu0 0.0
      %7571 = vmatprep.subr.mxu0 0.0
      %7572 = vmatpush1.msra.mxu0 0.0
      %7573 = vmatprep.subr.mxu0 0.0
      %7574 = vmatpush1.msra.mxu0 0.0
      %7575 = vmatprep.subr.mxu0 0.0
      %7576 = vmatpush1.msra.mxu0 0.0
      %7577 = vmatprep.subr.mxu0 0.0
      %7578 = vmatpush1.msra.mxu0 0.0
      %7579 = vmatprep.mubr.f32.mxu0 0.0
      %7580 = vmatmul.mubr.f32.gmra.mrb[0].mxu0 %v4984
      %v7581 = vpop.f32.mrb[0].mxu0
      %v7582 = vadd.f32 0.0, %v7581
      %v7583 = vpop.f32.mrb[0].mxu0
      %7584 = vmatprep.mubr.f32.mxu0 0.0
      %7585 = vmatmul.mubr.f32.gmra.mrb[0].mxu0 %v4986
      %v7586 = vpop.f32.mrb[0].mxu0
      %v7587 = vadd.f32 0.0, %v7586
      %v7588 = vpop.f32.mrb[0].mxu0
      %7589 = vmatprep.mubr.f32.mxu0 0.0
      %7590 = vmatmul.mubr.f32.gmra.mrb[0].mxu0 %v4988
      %v7591 = vpop.f32.mrb[0].mxu0
      %v7592 = vadd.f32 0.0, %v7591
      %v7593 = vpop.f32.mrb[0].mxu0
      %7594 = vmatprep.mubr.f32.mxu0 0.0
      %7595 = vmatmul.mubr.f32.gmra.mrb[0].mxu0 %v4990
      %v7596 = vpop.f32.mrb[0].mxu0
      %v7597 = vadd.f32 0.0, %v7596
      %v7598 = vpop.f32.mrb[0].mxu0
      %7599 = vmatprep.mubr.f32.mxu0 0.0
      %7600 = vmatmul.mubr.f32.gmra.mrb[0].mxu0 %v4992
      %v7601 = vpop.f32.mrb[0].mxu0
      %v7602 = vadd.f32 0.0, %v7601
      %v7603 = vpop.f32.mrb[0].mxu0
      %7604 = vmatprep.mubr.f32.mxu0 0.0
      %7605 = vmatmul.mubr.f32.gmra.mrb[0].mxu0 %v4994
      %v7606 = vpop.f32.mrb[0].mxu0
      %v7607 = vadd.f32 0.0, %v7606
      %v7608 = vpop.f32.mrb[0].mxu0
      %7609 = vmatprep.mubr.f32.mxu0 0.0
      %7610 = vmatmul.mubr.f32.gmra.mrb[0].mxu0 %v4996
      %v7611 = vpop.f32.mrb[0].mxu0
      %v7612 = vadd.f32 0.0, %v7611
      %v7613 = vpop.f32.mrb[0].mxu0
      %7614 = vmatprep.mubr.f32.mxu0 0.0
      %7615 = vmatmul.mubr.f32.gmra.mrb[0].mxu0 %v4998
      %v7616 = vpop.f32.mrb[0].mxu0
      %v7617 = vadd.f32 0.0, %v7616
      %v7618 = vpop.f32.mrb[0].mxu0
      %7619 = vmatprep.mubr.f32.mxu0 0.0
      %7620 = vmatmul.mubr.f32.gmra.mrb[0].mxu0 %v5000
      %v7621 = vpop.f32.mrb[0].mxu0
      %v7622 = vadd.f32 0.0, %v7621
      %v7623 = vpop.f32.mrb[0].mxu0
      %7624 = vmatprep.mubr.f32.mxu0 0.0
      %7625 = vmatmul.mubr.f32.gmra.mrb[0].mxu0 %v5002
      %v7626 = vpop.f32.mrb[0].mxu0
      %v7627 = vadd.f32 0.0, %v7626
      %v7628 = vpop.f32.mrb[0].mxu0
      %7629 = vmatprep.mubr.f32.mxu0 0.0
      %7630 = vmatmul.mubr.f32.gmra.mrb[0].mxu0 %v5004
      %v7631 = vpop.f32.mrb[0].mxu0
      %v7632 = vadd.f32 0.0, %v7631
      %v7633 = vpop.f32.mrb[0].mxu0
      %7634 = vmatprep.mubr.f32.mxu0 0.0
      %7635 = vmatmul.mubr.f32.gmra.mrb[0].mxu0 %v5006
      %v7636 = vpop.f32.mrb[0].mxu0
      %v7637 = vadd.f32 0.0, %v7636
      %v7638 = vpop.f32.mrb[0].mxu0
      %7639 = vmatprep.mubr.f32.mxu0 0.0
      %7640 = vmatmul.mubr.f32.gmra.mrb[0].mxu0 %v5008
      %v7641 = vpop.f32.mrb[0].mxu0
      %v7642 = vadd.f32 0.0, %v7641
      %v7643 = vpop.f32.mrb[0].mxu0
      %7644 = vmatprep.mubr.f32.mxu0 0.0
      %7645 = vmatmul.mubr.f32.gmra.mrb[0].mxu0 %v5010
      %v7646 = vpop.f32.mrb[0].mxu0
      %v7647 = vadd.f32 0.0, %v7646
      %v7648 = vpop.f32.mrb[0].mxu0
      %7649 = vmatprep.mubr.f32.mxu0 0.0
      %7650 = vmatmul.mubr.f32.gmra.mrb[0].mxu0 %v5012
      %v7651 = vpop.f32.mrb[0].mxu0
      %v7652 = vadd.f32 0.0, %v7651
      %v7653 = vpop.f32.mrb[0].mxu0
      %7654 = vmatprep.mubr.f32.mxu0 0.0
      %7655 = vmatmul.mubr.f32.gmra.mrb[0].mxu0 %v5014
      %v7656 = vpop.f32.mrb[0].mxu0
      %v7657 = vadd.f32 0.0, %v7656
      %v7658 = vpop.f32.mrb[0].mxu0
      %7659 = vmatprep.mubr.f32.mxu0 0.0
      %7660 = vmatmul.mubr.f32.gmra.mrb[0].mxu0 %v5016
      %v7661 = vpop.f32.mrb[0].mxu0
      %v7662 = vadd.f32 0.0, %v7661
      %v7663 = vpop.f32.mrb[0].mxu0
      %7664 = vmatprep.mubr.f32.mxu0 0.0
      %7665 = vmatmul.mubr.f32.gmra.mrb[0].mxu0 %v5018
      %v7666 = vpop.f32.mrb[0].mxu0
      %v7667 = vadd.f32 0.0, %v7666
      %v7668 = vpop.f32.mrb[0].mxu0
      %7669 = vmatprep.mubr.f32.mxu0 0.0
      %7670 = vmatmul.mubr.f32.gmra.mrb[0].mxu0 %v5020
      %v7671 = vpop.f32.mrb[0].mxu0
      %v7672 = vadd.f32 0.0, %v7671
      %v7673 = vpop.f32.mrb[0].mxu0
      %7674 = vmatprep.mubr.f32.mxu0 0.0
      %7675 = vmatmul.mubr.f32.gmra.mrb[0].mxu0 %v5022
      %v7676 = vpop.f32.mrb[0].mxu0
      %v7677 = vadd.f32 0.0, %v7676
      %v7678 = vpop.f32.mrb[0].mxu0
      %7679 = vmatprep.mubr.f32.mxu0 0.0
      %7680 = vmatmul.mubr.f32.gmra.mrb[0].mxu0 %v5024
      %v7681 = vpop.f32.mrb[0].mxu0
      %v7682 = vadd.f32 0.0, %v7681
      %v7683 = vpop.f32.mrb[0].mxu0
      %7684 = vmatprep.mubr.f32.mxu0 0.0
      %7685 = vmatmul.mubr.f32.gmra.mrb[0].mxu0 %v5026
      %v7686 = vpop.f32.mrb[0].mxu0
      %v7687 = vadd.f32 0.0, %v7686
      %v7688 = vpop.f32.mrb[0].mxu0
      %7689 = vmatprep.mubr.f32.mxu0 0.0
      %7690 = vmatmul.mubr.f32.gmra.mrb[0].mxu0 %v5028
      %v7691 = vpop.f32.mrb[0].mxu0
      %v7692 = vadd.f32 0.0, %v7691
      %v7693 = vpop.f32.mrb[0].mxu0
      %7694 = vmatprep.mubr.f32.mxu0 0.0
      %7695 = vmatmul.mubr.f32.gmra.mrb[0].mxu0 %v5030
      %v7696 = vpop.f32.mrb[0].mxu0
      %v7697 = vadd.f32 0.0, %v7696
      %v7698 = vpop.f32.mrb[0].mxu0
      %7699 = vmatprep.mubr.f32.mxu0 0.0
      %7700 = vmatmul.mubr.f32.gmra.mrb[0].mxu0 %v5032
      %v7701 = vpop.f32.mrb[0].mxu0
      %v7702 = vadd.f32 0.0, %v7701
      %v7703 = vpop.f32.mrb[0].mxu0
      %7704 = vmatprep.mubr.f32.mxu0 0.0
      %7705 = vmatmul.mubr.f32.gmra.mrb[0].mxu0 %v5034
      %v7706 = vpop.f32.mrb[0].mxu0
      %v7707 = vadd.f32 0.0, %v7706
      %v7708 = vpop.f32.mrb[0].mxu0
      %7709 = vmatprep.mubr.f32.mxu0 0.0
      %7710 = vmatmul.mubr.f32.gmra.mrb[0].mxu0 %v5036
      %v7711 = vpop.f32.mrb[0].mxu0
      %v7712 = vadd.f32 0.0, %v7711
      %v7713 = vpop.f32.mrb[0].mxu0
      %7714 = vmatprep.mubr.f32.mxu0 0.0
      %7715 = vmatmul.mubr.f32.gmra.mrb[0].mxu0 %v5038
      %v7716 = vpop.f32.mrb[0].mxu0
      %v7717 = vadd.f32 0.0, %v7716
      %v7718 = vpop.f32.mrb[0].mxu0
      %7719 = vmatprep.mubr.f32.mxu0 0.0
      %7720 = vmatmul.mubr.f32.gmra.mrb[0].mxu0 %v5040
      %v7721 = vpop.f32.mrb[0].mxu0
      %v7722 = vadd.f32 0.0, %v7721
      %v7723 = vpop.f32.mrb[0].mxu0
      %7724 = vmatprep.mubr.f32.mxu0 0.0
      %7725 = vmatmul.mubr.f32.gmra.mrb[0].mxu0 %v5042
      %v7726 = vpop.f32.mrb[0].mxu0
      %v7727 = vadd.f32 0.0, %v7726
      %v7728 = vpop.f32.mrb[0].mxu0
      %7729 = vmatprep.mubr.f32.mxu0 0.0
      %7730 = vmatmul.mubr.f32.gmra.mrb[0].mxu0 %v5044
      %v7731 = vpop.f32.mrb[0].mxu0
      %v7732 = vadd.f32 0.0, %v7731
      %v7733 = vpop.f32.mrb[0].mxu0
      %7734 = vmatprep.mubr.f32.mxu0 0.0
      %7735 = vmatmul.mubr.f32.gmra.mrb[0].mxu0 %v5046
      %v7736 = vpop.f32.mrb[0].mxu0
      %v7737 = vadd.f32 0.0, %v7736
      %v7738 = vpop.f32.mrb[0].mxu0
      %7739 = vdwg.mxu0
      %v7740 = vadd.f32 %v7483, %v7582
      %v7741 = vadd.f32 %v7484, %v7587
      %v7742 = vadd.f32 %v7485, %v7592
      %v7743 = vadd.f32 %v7486, %v7597
      %v7744 = vadd.f32 %v7487, %v7602
      %v7745 = vadd.f32 %v7488, %v7607
      %v7746 = vadd.f32 %v7489, %v7612
      %v7747 = vadd.f32 %v7490, %v7617
      %v7748 = vadd.f32 %v7491, %v7622
      %v7749 = vadd.f32 %v7492, %v7627
      %v7750 = vadd.f32 %v7493, %v7632
      %v7751 = vadd.f32 %v7494, %v7637
      %v7752 = vadd.f32 %v7495, %v7642
      %v7753 = vadd.f32 %v7496, %v7647
      %v7754 = vadd.f32 %v7497, %v7652
      %v7755 = vadd.f32 %v7498, %v7657
      %v7756 = vadd.f32 %v7499, %v7662
      %v7757 = vadd.f32 %v7500, %v7667
      %v7758 = vadd.f32 %v7501, %v7672
      %v7759 = vadd.f32 %v7502, %v7677
      %v7760 = vadd.f32 %v7503, %v7682
      %v7761 = vadd.f32 %v7504, %v7687
      %v7762 = vadd.f32 %v7505, %v7692
      %v7763 = vadd.f32 %v7506, %v7697
      %v7764 = vadd.f32 %v7507, %v7702
      %v7765 = vadd.f32 %v7508, %v7707
      %v7766 = vadd.f32 %v7509, %v7712
      %v7767 = vadd.f32 %v7510, %v7717
      %v7768 = vadd.f32 %v7511, %v7722
      %v7769 = vadd.f32 %v7512, %v7727
      %v7770 = vadd.f32 %v7513, %v7732
      %v7771 = vadd.f32 %v7514, %v7737
      %7772 = vmatprep.subr.mxu0 0.0
      %7773 = vmatpush1.msra.mxu0 %v5048
      %7774 = vmatprep.subr.mxu0 0.0
      %7775 = vmatpush1.msra.mxu0 %v5049
      %7776 = vmatprep.subr.mxu0 0.0
      %7777 = vmatpush1.msra.mxu0 %v5050
      %7778 = vmatprep.subr.mxu0 0.0
      %7779 = vmatpush1.msra.mxu0 %v5051
      %7780 = vmatprep.subr.mxu0 0.0
      %7781 = vmatpush1.msra.mxu0 %v5052
      %7782 = vmatprep.subr.mxu0 0.0
      %7783 = vmatpush1.msra.mxu0 %v5053
      %7784 = vmatprep.subr.mxu0 0.0
      %7785 = vmatpush1.msra.mxu0 %v5054
      %7786 = vmatprep.subr.mxu0 0.0
      %7787 = vmatpush1.msra.mxu0 %v5055
      %7788 = vmatprep.subr.mxu0 0.0
      %7789 = vmatpush1.msra.mxu0 %v5056
      %7790 = vmatprep.subr.mxu0 0.0
      %7791 = vmatpush1.msra.mxu0 %v5057
      %7792 = vmatprep.subr.mxu0 0.0
      %7793 = vmatpush1.msra.mxu0 %v5058
      %7794 = vmatprep.subr.mxu0 0.0
      %7795 = vmatpush1.msra.mxu0 %v5059
      %7796 = vmatprep.subr.mxu0 0.0
      %7797 = vmatpush1.msra.mxu0 %v5060
      %7798 = vmatprep.subr.mxu0 0.0
      %7799 = vmatpush1.msra.mxu0 %v5061
      %7800 = vmatprep.subr.mxu0 0.0
      %7801 = vmatpush1.msra.mxu0 %v5062
      %7802 = vmatprep.subr.mxu0 0.0
      %7803 = vmatpush1.msra.mxu0 %v5063
      %7804 = vmatprep.subr.mxu0 0.0
      %7805 = vmatpush1.msra.mxu0 0.0
      %7806 = vmatprep.subr.mxu0 0.0
      %7807 = vmatpush1.msra.mxu0 0.0
      %7808 = vmatprep.subr.mxu0 0.0
      %7809 = vmatpush1.msra.mxu0 0.0
      %7810 = vmatprep.subr.mxu0 0.0
      %7811 = vmatpush1.msra.mxu0 0.0
      %7812 = vmatprep.subr.mxu0 0.0
      %7813 = vmatpush1.msra.mxu0 0.0
      %7814 = vmatprep.subr.mxu0 0.0
      %7815 = vmatpush1.msra.mxu0 0.0
      %7816 = vmatprep.subr.mxu0 0.0
      %7817 = vmatpush1.msra.mxu0 0.0
      %7818 = vmatprep.subr.mxu0 0.0
      %7819 = vmatpush1.msra.mxu0 0.0
      %7820 = vmatprep.subr.mxu0 0.0
      %7821 = vmatpush1.msra.mxu0 0.0
      %7822 = vmatprep.subr.mxu0 0.0
      %7823 = vmatpush1.msra.mxu0 0.0
      %7824 = vmatprep.subr.mxu0 0.0
      %7825 = vmatpush1.msra.mxu0 0.0
      %7826 = vmatprep.subr.mxu0 0.0
      %7827 = vmatpush1.msra.mxu0 0.0
      %7828 = vmatprep.subr.mxu0 0.0
      %7829 = vmatpush1.msra.mxu0 0.0
      %7830 = vmatprep.subr.mxu0 0.0
      %7831 = vmatpush1.msra.mxu0 0.0
      %7832 = vmatprep.subr.mxu0 0.0
      %7833 = vmatpush1.msra.mxu0 0.0
      %7834 = vmatprep.subr.mxu0 0.0
      %7835 = vmatpush1.msra.mxu0 0.0
      %7836 = vmatprep.mubr.f32.mxu0 0.0
      %7837 = vmatmul.mubr.f32.gmra.mrb[0].mxu0 %v5322
      %v7838 = vpop.f32.mrb[0].mxu0
      %v7839 = vadd.f32 0.0, %v7838
      %v7840 = vpop.f32.mrb[0].mxu0
      %7841 = vmatprep.mubr.f32.mxu0 0.0
      %7842 = vmatmul.mubr.f32.gmra.mrb[0].mxu0 %v5324
      %v7843 = vpop.f32.mrb[0].mxu0
      %v7844 = vadd.f32 0.0, %v7843
      %v7845 = vpop.f32.mrb[0].mxu0
      %7846 = vmatprep.mubr.f32.mxu0 0.0
      %7847 = vmatmul.mubr.f32.gmra.mrb[0].mxu0 %v5326
      %v7848 = vpop.f32.mrb[0].mxu0
      %v7849 = vadd.f32 0.0, %v7848
      %v7850 = vpop.f32.mrb[0].mxu0
      %7851 = vmatprep.mubr.f32.mxu0 0.0
      %7852 = vmatmul.mubr.f32.gmra.mrb[0].mxu0 %v5328
      %v7853 = vpop.f32.mrb[0].mxu0
      %v7854 = vadd.f32 0.0, %v7853
      %v7855 = vpop.f32.mrb[0].mxu0
      %7856 = vmatprep.mubr.f32.mxu0 0.0
      %7857 = vmatmul.mubr.f32.gmra.mrb[0].mxu0 %v5330
      %v7858 = vpop.f32.mrb[0].mxu0
      %v7859 = vadd.f32 0.0, %v7858
      %v7860 = vpop.f32.mrb[0].mxu0
      %7861 = vmatprep.mubr.f32.mxu0 0.0
      %7862 = vmatmul.mubr.f32.gmra.mrb[0].mxu0 %v5332
      %v7863 = vpop.f32.mrb[0].mxu0
      %v7864 = vadd.f32 0.0, %v7863
      %v7865 = vpop.f32.mrb[0].mxu0
      %7866 = vmatprep.mubr.f32.mxu0 0.0
      %7867 = vmatmul.mubr.f32.gmra.mrb[0].mxu0 %v5334
      %v7868 = vpop.f32.mrb[0].mxu0
      %v7869 = vadd.f32 0.0, %v7868
      %v7870 = vpop.f32.mrb[0].mxu0
      %7871 = vmatprep.mubr.f32.mxu0 0.0
      %7872 = vmatmul.mubr.f32.gmra.mrb[0].mxu0 %v5336
      %v7873 = vpop.f32.mrb[0].mxu0
      %v7874 = vadd.f32 0.0, %v7873
      %v7875 = vpop.f32.mrb[0].mxu0
      %7876 = vmatprep.mubr.f32.mxu0 0.0
      %7877 = vmatmul.mubr.f32.gmra.mrb[0].mxu0 %v5338
      %v7878 = vpop.f32.mrb[0].mxu0
      %v7879 = vadd.f32 0.0, %v7878
      %v7880 = vpop.f32.mrb[0].mxu0
      %7881 = vmatprep.mubr.f32.mxu0 0.0
      %7882 = vmatmul.mubr.f32.gmra.mrb[0].mxu0 %v5340
      %v7883 = vpop.f32.mrb[0].mxu0
      %v7884 = vadd.f32 0.0, %v7883
      %v7885 = vpop.f32.mrb[0].mxu0
      %7886 = vmatprep.mubr.f32.mxu0 0.0
      %7887 = vmatmul.mubr.f32.gmra.mrb[0].mxu0 %v5342
      %v7888 = vpop.f32.mrb[0].mxu0
      %v7889 = vadd.f32 0.0, %v7888
      %v7890 = vpop.f32.mrb[0].mxu0
      %7891 = vmatprep.mubr.f32.mxu0 0.0
      %7892 = vmatmul.mubr.f32.gmra.mrb[0].mxu0 %v5344
      %v7893 = vpop.f32.mrb[0].mxu0
      %v7894 = vadd.f32 0.0, %v7893
      %v7895 = vpop.f32.mrb[0].mxu0
      %7896 = vmatprep.mubr.f32.mxu0 0.0
      %7897 = vmatmul.mubr.f32.gmra.mrb[0].mxu0 %v5346
      %v7898 = vpop.f32.mrb[0].mxu0
      %v7899 = vadd.f32 0.0, %v7898
      %v7900 = vpop.f32.mrb[0].mxu0
      %7901 = vmatprep.mubr.f32.mxu0 0.0
      %7902 = vmatmul.mubr.f32.gmra.mrb[0].mxu0 %v5348
      %v7903 = vpop.f32.mrb[0].mxu0
      %v7904 = vadd.f32 0.0, %v7903
      %v7905 = vpop.f32.mrb[0].mxu0
      %7906 = vmatprep.mubr.f32.mxu0 0.0
      %7907 = vmatmul.mubr.f32.gmra.mrb[0].mxu0 %v5350
      %v7908 = vpop.f32.mrb[0].mxu0
      %v7909 = vadd.f32 0.0, %v7908
      %v7910 = vpop.f32.mrb[0].mxu0
      %7911 = vmatprep.mubr.f32.mxu0 0.0
      %7912 = vmatmul.mubr.f32.gmra.mrb[0].mxu0 %v5352
      %v7913 = vpop.f32.mrb[0].mxu0
      %v7914 = vadd.f32 0.0, %v7913
      %v7915 = vpop.f32.mrb[0].mxu0
      %7916 = vmatprep.mubr.f32.mxu0 0.0
      %7917 = vmatmul.mubr.f32.gmra.mrb[0].mxu0 %v5354
      %v7918 = vpop.f32.mrb[0].mxu0
      %v7919 = vadd.f32 0.0, %v7918
      %v7920 = vpop.f32.mrb[0].mxu0
      %7921 = vmatprep.mubr.f32.mxu0 0.0
      %7922 = vmatmul.mubr.f32.gmra.mrb[0].mxu0 %v5356
      %v7923 = vpop.f32.mrb[0].mxu0
      %v7924 = vadd.f32 0.0, %v7923
      %v7925 = vpop.f32.mrb[0].mxu0
      %7926 = vmatprep.mubr.f32.mxu0 0.0
      %7927 = vmatmul.mubr.f32.gmra.mrb[0].mxu0 %v5358
      %v7928 = vpop.f32.mrb[0].mxu0
      %v7929 = vadd.f32 0.0, %v7928
      %v7930 = vpop.f32.mrb[0].mxu0
      %7931 = vmatprep.mubr.f32.mxu0 0.0
      %7932 = vmatmul.mubr.f32.gmra.mrb[0].mxu0 %v5360
      %v7933 = vpop.f32.mrb[0].mxu0
      %v7934 = vadd.f32 0.0, %v7933
      %v7935 = vpop.f32.mrb[0].mxu0
      %7936 = vmatprep.mubr.f32.mxu0 0.0
      %7937 = vmatmul.mubr.f32.gmra.mrb[0].mxu0 %v5362
      %v7938 = vpop.f32.mrb[0].mxu0
      %v7939 = vadd.f32 0.0, %v7938
      %v7940 = vpop.f32.mrb[0].mxu0
      %7941 = vmatprep.mubr.f32.mxu0 0.0
      %7942 = vmatmul.mubr.f32.gmra.mrb[0].mxu0 %v5364
      %v7943 = vpop.f32.mrb[0].mxu0
      %v7944 = vadd.f32 0.0, %v7943
      %v7945 = vpop.f32.mrb[0].mxu0
      %7946 = vmatprep.mubr.f32.mxu0 0.0
      %7947 = vmatmul.mubr.f32.gmra.mrb[0].mxu0 %v5366
      %v7948 = vpop.f32.mrb[0].mxu0
      %v7949 = vadd.f32 0.0, %v7948
      %v7950 = vpop.f32.mrb[0].mxu0
      %7951 = vmatprep.mubr.f32.mxu0 0.0
      %7952 = vmatmul.mubr.f32.gmra.mrb[0].mxu0 %v5368
      %v7953 = vpop.f32.mrb[0].mxu0
      %v7954 = vadd.f32 0.0, %v7953
      %v7955 = vpop.f32.mrb[0].mxu0
      %7956 = vmatprep.mubr.f32.mxu0 0.0
      %7957 = vmatmul.mubr.f32.gmra.mrb[0].mxu0 %v5370
      %v7958 = vpop.f32.mrb[0].mxu0
      %v7959 = vadd.f32 0.0, %v7958
      %v7960 = vpop.f32.mrb[0].mxu0
      %7961 = vmatprep.mubr.f32.mxu0 0.0
      %7962 = vmatmul.mubr.f32.gmra.mrb[0].mxu0 %v5372
      %v7963 = vpop.f32.mrb[0].mxu0
      %v7964 = vadd.f32 0.0, %v7963
      %v7965 = vpop.f32.mrb[0].mxu0
      %7966 = vmatprep.mubr.f32.mxu0 0.0
      %7967 = vmatmul.mubr.f32.gmra.mrb[0].mxu0 %v5374
      %v7968 = vpop.f32.mrb[0].mxu0
      %v7969 = vadd.f32 0.0, %v7968
      %v7970 = vpop.f32.mrb[0].mxu0
      %7971 = vmatprep.mubr.f32.mxu0 0.0
      %7972 = vmatmul.mubr.f32.gmra.mrb[0].mxu0 %v5376
      %v7973 = vpop.f32.mrb[0].mxu0
      %v7974 = vadd.f32 0.0, %v7973
      %v7975 = vpop.f32.mrb[0].mxu0
      %7976 = vmatprep.mubr.f32.mxu0 0.0
      %7977 = vmatmul.mubr.f32.gmra.mrb[0].mxu0 %v5378
      %v7978 = vpop.f32.mrb[0].mxu0
      %v7979 = vadd.f32 0.0, %v7978
      %v7980 = vpop.f32.mrb[0].mxu0
      %7981 = vmatprep.mubr.f32.mxu0 0.0
      %7982 = vmatmul.mubr.f32.gmra.mrb[0].mxu0 %v5380
      %v7983 = vpop.f32.mrb[0].mxu0
      %v7984 = vadd.f32 0.0, %v7983
      %v7985 = vpop.f32.mrb[0].mxu0
      %7986 = vmatprep.mubr.f32.mxu0 0.0
      %7987 = vmatmul.mubr.f32.gmra.mrb[0].mxu0 %v5382
      %v7988 = vpop.f32.mrb[0].mxu0
      %v7989 = vadd.f32 0.0, %v7988
      %v7990 = vpop.f32.mrb[0].mxu0
      %7991 = vmatprep.mubr.f32.mxu0 0.0
      %7992 = vmatmul.mubr.f32.gmra.mrb[0].mxu0 %v5384
      %v7993 = vpop.f32.mrb[0].mxu0
      %v7994 = vadd.f32 0.0, %v7993
      %v7995 = vpop.f32.mrb[0].mxu0
      %7996 = vdwg.mxu0
      %v7997 = vadd.f32 %v7740, %v7839
      %v7998 = vadd.f32 %v7741, %v7844
      %v7999 = vadd.f32 %v7742, %v7849
      %v8000 = vadd.f32 %v7743, %v7854
      %v8001 = vadd.f32 %v7744, %v7859
      %v8002 = vadd.f32 %v7745, %v7864
      %v8003 = vadd.f32 %v7746, %v7869
      %v8004 = vadd.f32 %v7747, %v7874
      %v8005 = vadd.f32 %v7748, %v7879
      %v8006 = vadd.f32 %v7749, %v7884
      %v8007 = vadd.f32 %v7750, %v7889
      %v8008 = vadd.f32 %v7751, %v7894
      %v8009 = vadd.f32 %v7752, %v7899
      %v8010 = vadd.f32 %v7753, %v7904
      %v8011 = vadd.f32 %v7754, %v7909
      %v8012 = vadd.f32 %v7755, %v7914
      %v8013 = vadd.f32 %v7756, %v7919
      %v8014 = vadd.f32 %v7757, %v7924
      %v8015 = vadd.f32 %v7758, %v7929
      %v8016 = vadd.f32 %v7759, %v7934
      %v8017 = vadd.f32 %v7760, %v7939
      %v8018 = vadd.f32 %v7761, %v7944
      %v8019 = vadd.f32 %v7762, %v7949
      %v8020 = vadd.f32 %v7763, %v7954
      %v8021 = vadd.f32 %v7764, %v7959
      %v8022 = vadd.f32 %v7765, %v7964
      %v8023 = vadd.f32 %v7766, %v7969
      %v8024 = vadd.f32 %v7767, %v7974
      %v8025 = vadd.f32 %v7768, %v7979
      %v8026 = vadd.f32 %v7769, %v7984
      %v8027 = vadd.f32 %v7770, %v7989
      %v8028 = vadd.f32 %v7771, %v7994
      %s8029 = scalar_lea.vmem %s3633, 3 [#allocation2]
      %v8030 = vld [vmem:[%s8029] ss:$2 sm:$0xff]
      %s8031 = scalar_lea.vmem %s3633, 27 [#allocation2]
      %v8032 = vld [vmem:[%s8031] ss:$2 sm:$0xff]
      %s8033 = scalar_lea.vmem %s3633, 51 [#allocation2]
      %v8034 = vld [vmem:[%s8033] ss:$2 sm:$0xff]
      %s8035 = scalar_lea.vmem %s3633, 75 [#allocation2]
      %v8036 = vld [vmem:[%s8035] ss:$2 sm:$0xff]
      %s8037 = scalar_lea.vmem %s3633, 99 [#allocation2]
      %v8038 = vld [vmem:[%s8037] ss:$2 sm:$0xff]
      %s8039 = scalar_lea.vmem %s3633, 123 [#allocation2]
      %v8040 = vld [vmem:[%s8039] ss:$2 sm:$0xff]
      %s8041 = scalar_lea.vmem %s3633, 147 [#allocation2]
      %v8042 = vld [vmem:[%s8041] ss:$2 sm:$0xff]
      %s8043 = scalar_lea.vmem %s3633, 171 [#allocation2]
      %v8044 = vld [vmem:[%s8043] ss:$2 sm:$0xff]
      %s8045 = scalar_lea.vmem %s3633, 195 [#allocation2]
      %v8046 = vld [vmem:[%s8045] ss:$2 sm:$0xff]
      %s8047 = scalar_lea.vmem %s3633, 219 [#allocation2]
      %v8048 = vld [vmem:[%s8047] ss:$2 sm:$0xff]
      %s8049 = scalar_lea.vmem %s3633, 243 [#allocation2]
      %v8050 = vld [vmem:[%s8049] ss:$2 sm:$0xff]
      %s8051 = scalar_lea.vmem %s3633, 267 [#allocation2]
      %v8052 = vld [vmem:[%s8051] ss:$2 sm:$0xff]
      %s8053 = scalar_lea.vmem %s3633, 291 [#allocation2]
      %v8054 = vld [vmem:[%s8053] ss:$2 sm:$0xff]
      %s8055 = scalar_lea.vmem %s3633, 315 [#allocation2]
      %v8056 = vld [vmem:[%s8055] ss:$2 sm:$0xff]
      %s8057 = scalar_lea.vmem %s3633, 339 [#allocation2]
      %v8058 = vld [vmem:[%s8057] ss:$2 sm:$0xff]
      %s8059 = scalar_lea.vmem %s3633, 363 [#allocation2]
      %v8060 = vld [vmem:[%s8059] ss:$2 sm:$0xff]
      %s8061 = scalar_lea.vmem %s3633, 435 [#allocation2]
      %v8062 = vld [vmem:[%s8061] ss:$2 sm:$0xff]
      %s8063 = scalar_lea.vmem %s3633, 459 [#allocation2]
      %v8064 = vld [vmem:[%s8063] ss:$2 sm:$0xff]
      %s8065 = scalar_lea.vmem %s3633, 483 [#allocation2]
      %v8066 = vld [vmem:[%s8065] ss:$2 sm:$0xff]
      %s8067 = scalar_lea.vmem %s3633, 507 [#allocation2]
      %v8068 = vld [vmem:[%s8067] ss:$2 sm:$0xff]
      %s8069 = scalar_lea.vmem %s3633, 531 [#allocation2]
      %v8070 = vld [vmem:[%s8069] ss:$2 sm:$0xff]
      %s8071 = scalar_lea.vmem %s3633, 555 [#allocation2]
      %v8072 = vld [vmem:[%s8071] ss:$2 sm:$0xff]
      %s8073 = scalar_lea.vmem %s3633, 579 [#allocation2]
      %v8074 = vld [vmem:[%s8073] ss:$2 sm:$0xff]
      %s8075 = scalar_lea.vmem %s3633, 603 [#allocation2]
      %v8076 = vld [vmem:[%s8075] ss:$2 sm:$0xff]
      %s8077 = scalar_lea.vmem %s3633, 627 [#allocation2]
      %v8078 = vld [vmem:[%s8077] ss:$2 sm:$0xff]
      %s8079 = scalar_lea.vmem %s3633, 651 [#allocation2]
      %v8080 = vld [vmem:[%s8079] ss:$2 sm:$0xff]
      %s8081 = scalar_lea.vmem %s3633, 675 [#allocation2]
      %v8082 = vld [vmem:[%s8081] ss:$2 sm:$0xff]
      %s8083 = scalar_lea.vmem %s3633, 699 [#allocation2]
      %v8084 = vld [vmem:[%s8083] ss:$2 sm:$0xff]
      %s8085 = scalar_lea.vmem %s3633, 723 [#allocation2]
      %v8086 = vld [vmem:[%s8085] ss:$2 sm:$0xff]
      %s8087 = scalar_lea.vmem %s3633, 747 [#allocation2]
      %v8088 = vld [vmem:[%s8087] ss:$2 sm:$0xff]
      %s8089 = scalar_lea.vmem %s3633, 771 [#allocation2]
      %v8090 = vld [vmem:[%s8089] ss:$2 sm:$0xff]
      %s8091 = scalar_lea.vmem %s3633, 795 [#allocation2]
      %v8092 = vld [vmem:[%s8091] ss:$2 sm:$0xff]
      %8093 = vmatprep.subr.mxu0 0.0
      %8094 = vmatpush1.msra.mxu0 %v5386
      %8095 = vmatprep.subr.mxu0 0.0
      %8096 = vmatpush1.msra.mxu0 %v5387
      %8097 = vmatprep.subr.mxu0 0.0
      %8098 = vmatpush1.msra.mxu0 %v5388
      %8099 = vmatprep.subr.mxu0 0.0
      %8100 = vmatpush1.msra.mxu0 %v5389
      %8101 = vmatprep.subr.mxu0 0.0
      %8102 = vmatpush1.msra.mxu0 %v5390
      %8103 = vmatprep.subr.mxu0 0.0
      %8104 = vmatpush1.msra.mxu0 %v5391
      %8105 = vmatprep.subr.mxu0 0.0
      %8106 = vmatpush1.msra.mxu0 %v5392
      %8107 = vmatprep.subr.mxu0 0.0
      %8108 = vmatpush1.msra.mxu0 %v5393
      %8109 = vmatprep.subr.mxu0 0.0
      %8110 = vmatpush1.msra.mxu0 %v5394
      %8111 = vmatprep.subr.mxu0 0.0
      %8112 = vmatpush1.msra.mxu0 %v5395
      %8113 = vmatprep.subr.mxu0 0.0
      %8114 = vmatpush1.msra.mxu0 %v5396
      %8115 = vmatprep.subr.mxu0 0.0
      %8116 = vmatpush1.msra.mxu0 %v5397
      %8117 = vmatprep.subr.mxu0 0.0
      %8118 = vmatpush1.msra.mxu0 %v5398
      %8119 = vmatprep.subr.mxu0 0.0
      %8120 = vmatpush1.msra.mxu0 %v5399
      %8121 = vmatprep.subr.mxu0 0.0
      %8122 = vmatpush1.msra.mxu0 %v5400
      %8123 = vmatprep.subr.mxu0 0.0
      %8124 = vmatpush1.msra.mxu0 %v5401
      %8125 = vmatprep.subr.mxu0 0.0
      %8126 = vmatpush1.msra.mxu0 0.0
      %8127 = vmatprep.subr.mxu0 0.0
      %8128 = vmatpush1.msra.mxu0 0.0
      %8129 = vmatprep.subr.mxu0 0.0
      %8130 = vmatpush1.msra.mxu0 0.0
      %8131 = vmatprep.subr.mxu0 0.0
      %8132 = vmatpush1.msra.mxu0 0.0
      %8133 = vmatprep.subr.mxu0 0.0
      %8134 = vmatpush1.msra.mxu0 0.0
      %8135 = vmatprep.subr.mxu0 0.0
      %8136 = vmatpush1.msra.mxu0 0.0
      %8137 = vmatprep.subr.mxu0 0.0
      %8138 = vmatpush1.msra.mxu0 0.0
      %8139 = vmatprep.subr.mxu0 0.0
      %8140 = vmatpush1.msra.mxu0 0.0
      %8141 = vmatprep.subr.mxu0 0.0
      %8142 = vmatpush1.msra.mxu0 0.0
      %8143 = vmatprep.subr.mxu0 0.0
      %8144 = vmatpush1.msra.mxu0 0.0
      %8145 = vmatprep.subr.mxu0 0.0
      %8146 = vmatpush1.msra.mxu0 0.0
      %8147 = vmatprep.subr.mxu0 0.0
      %8148 = vmatpush1.msra.mxu0 0.0
      %8149 = vmatprep.subr.mxu0 0.0
      %8150 = vmatpush1.msra.mxu0 0.0
      %8151 = vmatprep.subr.mxu0 0.0
      %8152 = vmatpush1.msra.mxu0 0.0
      %8153 = vmatprep.subr.mxu0 0.0
      %8154 = vmatpush1.msra.mxu0 0.0
      %8155 = vmatprep.subr.mxu0 0.0
      %8156 = vmatpush1.msra.mxu0 0.0
      %8157 = vmatprep.mubr.f32.mxu0 0.0
      %8158 = vmatmul.mubr.f32.gmra.mrb[0].mxu0 %v8030
      %v8159 = vpop.f32.mrb[0].mxu0
      %v8160 = vadd.f32 0.0, %v8159
      %v8161 = vpop.f32.mrb[0].mxu0
      %8162 = vmatprep.mubr.f32.mxu0 0.0
      %8163 = vmatmul.mubr.f32.gmra.mrb[0].mxu0 %v8032
      %v8164 = vpop.f32.mrb[0].mxu0
      %v8165 = vadd.f32 0.0, %v8164
      %v8166 = vpop.f32.mrb[0].mxu0
      %8167 = vmatprep.mubr.f32.mxu0 0.0
      %8168 = vmatmul.mubr.f32.gmra.mrb[0].mxu0 %v8034
      %v8169 = vpop.f32.mrb[0].mxu0
      %v8170 = vadd.f32 0.0, %v8169
      %v8171 = vpop.f32.mrb[0].mxu0
      %8172 = vmatprep.mubr.f32.mxu0 0.0
      %8173 = vmatmul.mubr.f32.gmra.mrb[0].mxu0 %v8036
      %v8174 = vpop.f32.mrb[0].mxu0
      %v8175 = vadd.f32 0.0, %v8174
      %v8176 = vpop.f32.mrb[0].mxu0
      %8177 = vmatprep.mubr.f32.mxu0 0.0
      %8178 = vmatmul.mubr.f32.gmra.mrb[0].mxu0 %v8038
      %v8179 = vpop.f32.mrb[0].mxu0
      %v8180 = vadd.f32 0.0, %v8179
      %v8181 = vpop.f32.mrb[0].mxu0
      %8182 = vmatprep.mubr.f32.mxu0 0.0
      %8183 = vmatmul.mubr.f32.gmra.mrb[0].mxu0 %v8040
      %v8184 = vpop.f32.mrb[0].mxu0
      %v8185 = vadd.f32 0.0, %v8184
      %v8186 = vpop.f32.mrb[0].mxu0
      %8187 = vmatprep.mubr.f32.mxu0 0.0
      %8188 = vmatmul.mubr.f32.gmra.mrb[0].mxu0 %v8042
      %v8189 = vpop.f32.mrb[0].mxu0
      %v8190 = vadd.f32 0.0, %v8189
      %v8191 = vpop.f32.mrb[0].mxu0
      %8192 = vmatprep.mubr.f32.mxu0 0.0
      %8193 = vmatmul.mubr.f32.gmra.mrb[0].mxu0 %v8044
      %v8194 = vpop.f32.mrb[0].mxu0
      %v8195 = vadd.f32 0.0, %v8194
      %v8196 = vpop.f32.mrb[0].mxu0
      %8197 = vmatprep.mubr.f32.mxu0 0.0
      %8198 = vmatmul.mubr.f32.gmra.mrb[0].mxu0 %v8046
      %v8199 = vpop.f32.mrb[0].mxu0
      %v8200 = vadd.f32 0.0, %v8199
      %v8201 = vpop.f32.mrb[0].mxu0
      %8202 = vmatprep.mubr.f32.mxu0 0.0
      %8203 = vmatmul.mubr.f32.gmra.mrb[0].mxu0 %v8048
      %v8204 = vpop.f32.mrb[0].mxu0
      %v8205 = vadd.f32 0.0, %v8204
      %v8206 = vpop.f32.mrb[0].mxu0
      %8207 = vmatprep.mubr.f32.mxu0 0.0
      %8208 = vmatmul.mubr.f32.gmra.mrb[0].mxu0 %v8050
      %v8209 = vpop.f32.mrb[0].mxu0
      %v8210 = vadd.f32 0.0, %v8209
      %v8211 = vpop.f32.mrb[0].mxu0
      %8212 = vmatprep.mubr.f32.mxu0 0.0
      %8213 = vmatmul.mubr.f32.gmra.mrb[0].mxu0 %v8052
      %v8214 = vpop.f32.mrb[0].mxu0
      %v8215 = vadd.f32 0.0, %v8214
      %v8216 = vpop.f32.mrb[0].mxu0
      %8217 = vmatprep.mubr.f32.mxu0 0.0
      %8218 = vmatmul.mubr.f32.gmra.mrb[0].mxu0 %v8054
      %v8219 = vpop.f32.mrb[0].mxu0
      %v8220 = vadd.f32 0.0, %v8219
      %v8221 = vpop.f32.mrb[0].mxu0
      %8222 = vmatprep.mubr.f32.mxu0 0.0
      %8223 = vmatmul.mubr.f32.gmra.mrb[0].mxu0 %v8056
      %v8224 = vpop.f32.mrb[0].mxu0
      %v8225 = vadd.f32 0.0, %v8224
      %v8226 = vpop.f32.mrb[0].mxu0
      %8227 = vmatprep.mubr.f32.mxu0 0.0
      %8228 = vmatmul.mubr.f32.gmra.mrb[0].mxu0 %v8058
      %v8229 = vpop.f32.mrb[0].mxu0
      %v8230 = vadd.f32 0.0, %v8229
      %v8231 = vpop.f32.mrb[0].mxu0
      %8232 = vmatprep.mubr.f32.mxu0 0.0
      %8233 = vmatmul.mubr.f32.gmra.mrb[0].mxu0 %v8060
      %v8234 = vpop.f32.mrb[0].mxu0
      %v8235 = vadd.f32 0.0, %v8234
      %v8236 = vpop.f32.mrb[0].mxu0
      %8237 = vmatprep.mubr.f32.mxu0 0.0
      %8238 = vmatmul.mubr.f32.gmra.mrb[0].mxu0 %v8062
      %v8239 = vpop.f32.mrb[0].mxu0
      %v8240 = vadd.f32 0.0, %v8239
      %v8241 = vpop.f32.mrb[0].mxu0
      %8242 = vmatprep.mubr.f32.mxu0 0.0
      %8243 = vmatmul.mubr.f32.gmra.mrb[0].mxu0 %v8064
      %v8244 = vpop.f32.mrb[0].mxu0
      %v8245 = vadd.f32 0.0, %v8244
      %v8246 = vpop.f32.mrb[0].mxu0
      %8247 = vmatprep.mubr.f32.mxu0 0.0
      %8248 = vmatmul.mubr.f32.gmra.mrb[0].mxu0 %v8066
      %v8249 = vpop.f32.mrb[0].mxu0
      %v8250 = vadd.f32 0.0, %v8249
      %v8251 = vpop.f32.mrb[0].mxu0
      %8252 = vmatprep.mubr.f32.mxu0 0.0
      %8253 = vmatmul.mubr.f32.gmra.mrb[0].mxu0 %v8068
      %v8254 = vpop.f32.mrb[0].mxu0
      %v8255 = vadd.f32 0.0, %v8254
      %v8256 = vpop.f32.mrb[0].mxu0
      %8257 = vmatprep.mubr.f32.mxu0 0.0
      %8258 = vmatmul.mubr.f32.gmra.mrb[0].mxu0 %v8070
      %v8259 = vpop.f32.mrb[0].mxu0
      %v8260 = vadd.f32 0.0, %v8259
      %v8261 = vpop.f32.mrb[0].mxu0
      %8262 = vmatprep.mubr.f32.mxu0 0.0
      %8263 = vmatmul.mubr.f32.gmra.mrb[0].mxu0 %v8072
      %v8264 = vpop.f32.mrb[0].mxu0
      %v8265 = vadd.f32 0.0, %v8264
      %v8266 = vpop.f32.mrb[0].mxu0
      %8267 = vmatprep.mubr.f32.mxu0 0.0
      %8268 = vmatmul.mubr.f32.gmra.mrb[0].mxu0 %v8074
      %v8269 = vpop.f32.mrb[0].mxu0
      %v8270 = vadd.f32 0.0, %v8269
      %v8271 = vpop.f32.mrb[0].mxu0
      %8272 = vmatprep.mubr.f32.mxu0 0.0
      %8273 = vmatmul.mubr.f32.gmra.mrb[0].mxu0 %v8076
      %v8274 = vpop.f32.mrb[0].mxu0
      %v8275 = vadd.f32 0.0, %v8274
      %v8276 = vpop.f32.mrb[0].mxu0
      %8277 = vmatprep.mubr.f32.mxu0 0.0
      %8278 = vmatmul.mubr.f32.gmra.mrb[0].mxu0 %v8078
      %v8279 = vpop.f32.mrb[0].mxu0
      %v8280 = vadd.f32 0.0, %v8279
      %v8281 = vpop.f32.mrb[0].mxu0
      %8282 = vmatprep.mubr.f32.mxu0 0.0
      %8283 = vmatmul.mubr.f32.gmra.mrb[0].mxu0 %v8080
      %v8284 = vpop.f32.mrb[0].mxu0
      %v8285 = vadd.f32 0.0, %v8284
      %v8286 = vpop.f32.mrb[0].mxu0
      %8287 = vmatprep.mubr.f32.mxu0 0.0
      %8288 = vmatmul.mubr.f32.gmra.mrb[0].mxu0 %v8082
      %v8289 = vpop.f32.mrb[0].mxu0
      %v8290 = vadd.f32 0.0, %v8289
      %v8291 = vpop.f32.mrb[0].mxu0
      %8292 = vmatprep.mubr.f32.mxu0 0.0
      %8293 = vmatmul.mubr.f32.gmra.mrb[0].mxu0 %v8084
      %v8294 = vpop.f32.mrb[0].mxu0
      %v8295 = vadd.f32 0.0, %v8294
      %v8296 = vpop.f32.mrb[0].mxu0
      %8297 = vmatprep.mubr.f32.mxu0 0.0
      %8298 = vmatmul.mubr.f32.gmra.mrb[0].mxu0 %v8086
      %v8299 = vpop.f32.mrb[0].mxu0
      %v8300 = vadd.f32 0.0, %v8299
      %v8301 = vpop.f32.mrb[0].mxu0
      %8302 = vmatprep.mubr.f32.mxu0 0.0
      %8303 = vmatmul.mubr.f32.gmra.mrb[0].mxu0 %v8088
      %v8304 = vpop.f32.mrb[0].mxu0
      %v8305 = vadd.f32 0.0, %v8304
      %v8306 = vpop.f32.mrb[0].mxu0
      %8307 = vmatprep.mubr.f32.mxu0 0.0
      %8308 = vmatmul.mubr.f32.gmra.mrb[0].mxu0 %v8090
      %v8309 = vpop.f32.mrb[0].mxu0
      %v8310 = vadd.f32 0.0, %v8309
      %v8311 = vpop.f32.mrb[0].mxu0
      %8312 = vmatprep.mubr.f32.mxu0 0.0
      %8313 = vmatmul.mubr.f32.gmra.mrb[0].mxu0 %v8092
      %v8314 = vpop.f32.mrb[0].mxu0
      %v8315 = vadd.f32 0.0, %v8314
      %v8316 = vpop.f32.mrb[0].mxu0
      %8317 = vdwg.mxu0
      %v8318 = vadd.f32 %v7997, %v8160
      %v8319 = vadd.f32 %v7998, %v8165
      %v8320 = vadd.f32 %v7999, %v8170
      %v8321 = vadd.f32 %v8000, %v8175
      %v8322 = vadd.f32 %v8001, %v8180
      %v8323 = vadd.f32 %v8002, %v8185
      %v8324 = vadd.f32 %v8003, %v8190
      %v8325 = vadd.f32 %v8004, %v8195
      %v8326 = vadd.f32 %v8005, %v8200
      %v8327 = vadd.f32 %v8006, %v8205
      %v8328 = vadd.f32 %v8007, %v8210
      %v8329 = vadd.f32 %v8008, %v8215
      %v8330 = vadd.f32 %v8009, %v8220
      %v8331 = vadd.f32 %v8010, %v8225
      %v8332 = vadd.f32 %v8011, %v8230
      %v8333 = vadd.f32 %v8012, %v8235
      %v8334 = vadd.f32 %v8013, %v8240
      %v8335 = vadd.f32 %v8014, %v8245
      %v8336 = vadd.f32 %v8015, %v8250
      %v8337 = vadd.f32 %v8016, %v8255
      %v8338 = vadd.f32 %v8017, %v8260
      %v8339 = vadd.f32 %v8018, %v8265
      %v8340 = vadd.f32 %v8019, %v8270
      %v8341 = vadd.f32 %v8020, %v8275
      %v8342 = vadd.f32 %v8021, %v8280
      %v8343 = vadd.f32 %v8022, %v8285
      %v8344 = vadd.f32 %v8023, %v8290
      %v8345 = vadd.f32 %v8024, %v8295
      %v8346 = vadd.f32 %v8025, %v8300
      %v8347 = vadd.f32 %v8026, %v8305
      %v8348 = vadd.f32 %v8027, %v8310
      %v8349 = vadd.f32 %v8028, %v8315
      %8350 = vmatprep.subr.mxu0 0.0
      %8351 = vmatpush1.msra.mxu0 %v5724
      %8352 = vmatprep.subr.mxu0 0.0
      %8353 = vmatpush1.msra.mxu0 %v5725
      %8354 = vmatprep.subr.mxu0 0.0
      %8355 = vmatpush1.msra.mxu0 %v5726
      %8356 = vmatprep.subr.mxu0 0.0
      %8357 = vmatpush1.msra.mxu0 %v5727
      %8358 = vmatprep.subr.mxu0 0.0
      %8359 = vmatpush1.msra.mxu0 %v5728
      %8360 = vmatprep.subr.mxu0 0.0
      %8361 = vmatpush1.msra.mxu0 %v5729
      %8362 = vmatprep.subr.mxu0 0.0
      %8363 = vmatpush1.msra.mxu0 %v5730
      %8364 = vmatprep.subr.mxu0 0.0
      %8365 = vmatpush1.msra.mxu0 %v5731
      %8366 = vmatprep.subr.mxu0 0.0
      %8367 = vmatpush1.msra.mxu0 %v5732
      %8368 = vmatprep.subr.mxu0 0.0
      %8369 = vmatpush1.msra.mxu0 %v5733
      %8370 = vmatprep.subr.mxu0 0.0
      %8371 = vmatpush1.msra.mxu0 %v5734
      %8372 = vmatprep.subr.mxu0 0.0
      %8373 = vmatpush1.msra.mxu0 %v5735
      %8374 = vmatprep.subr.mxu0 0.0
      %8375 = vmatpush1.msra.mxu0 %v5736
      %8376 = vmatprep.subr.mxu0 0.0
      %8377 = vmatpush1.msra.mxu0 %v5737
      %8378 = vmatprep.subr.mxu0 0.0
      %8379 = vmatpush1.msra.mxu0 %v5738
      %8380 = vmatprep.subr.mxu0 0.0
      %8381 = vmatpush1.msra.mxu0 %v5739
      %8382 = vmatprep.subr.mxu0 0.0
      %8383 = vmatpush1.msra.mxu0 0.0
      %8384 = vmatprep.subr.mxu0 0.0
      %8385 = vmatpush1.msra.mxu0 0.0
      %8386 = vmatprep.subr.mxu0 0.0
      %8387 = vmatpush1.msra.mxu0 0.0
      %8388 = vmatprep.subr.mxu0 0.0
      %8389 = vmatpush1.msra.mxu0 0.0
      %8390 = vmatprep.subr.mxu0 0.0
      %8391 = vmatpush1.msra.mxu0 0.0
      %8392 = vmatprep.subr.mxu0 0.0
      %8393 = vmatpush1.msra.mxu0 0.0
      %8394 = vmatprep.subr.mxu0 0.0
      %8395 = vmatpush1.msra.mxu0 0.0
      %8396 = vmatprep.subr.mxu0 0.0
      %8397 = vmatpush1.msra.mxu0 0.0
      %8398 = vmatprep.subr.mxu0 0.0
      %8399 = vmatpush1.msra.mxu0 0.0
      %8400 = vmatprep.subr.mxu0 0.0
      %8401 = vmatpush1.msra.mxu0 0.0
      %8402 = vmatprep.subr.mxu0 0.0
      %8403 = vmatpush1.msra.mxu0 0.0
      %8404 = vmatprep.subr.mxu0 0.0
      %8405 = vmatpush1.msra.mxu0 0.0
      %8406 = vmatprep.subr.mxu0 0.0
      %8407 = vmatpush1.msra.mxu0 0.0
      %8408 = vmatprep.subr.mxu0 0.0
      %8409 = vmatpush1.msra.mxu0 0.0
      %8410 = vmatprep.subr.mxu0 0.0
      %8411 = vmatpush1.msra.mxu0 0.0
      %8412 = vmatprep.subr.mxu0 0.0
      %8413 = vmatpush1.msra.mxu0 0.0
      %8414 = vmatprep.mubr.f32.mxu0 0.0
      %8415 = vmatmul.mubr.f32.gmra.mrb[0].mxu0 %v5998
      %v8416 = vpop.f32.mrb[0].mxu0
      %v8417 = vadd.f32 0.0, %v8416
      %v8418 = vpop.f32.mrb[0].mxu0
      %8419 = vmatprep.mubr.f32.mxu0 0.0
      %8420 = vmatmul.mubr.f32.gmra.mrb[0].mxu0 %v6000
      %v8421 = vpop.f32.mrb[0].mxu0
      %v8422 = vadd.f32 0.0, %v8421
      %v8423 = vpop.f32.mrb[0].mxu0
      %8424 = vmatprep.mubr.f32.mxu0 0.0
      %8425 = vmatmul.mubr.f32.gmra.mrb[0].mxu0 %v6002
      %v8426 = vpop.f32.mrb[0].mxu0
      %v8427 = vadd.f32 0.0, %v8426
      %v8428 = vpop.f32.mrb[0].mxu0
      %8429 = vmatprep.mubr.f32.mxu0 0.0
      %8430 = vmatmul.mubr.f32.gmra.mrb[0].mxu0 %v6004
      %v8431 = vpop.f32.mrb[0].mxu0
      %v8432 = vadd.f32 0.0, %v8431
      %v8433 = vpop.f32.mrb[0].mxu0
      %8434 = vmatprep.mubr.f32.mxu0 0.0
      %8435 = vmatmul.mubr.f32.gmra.mrb[0].mxu0 %v6006
      %v8436 = vpop.f32.mrb[0].mxu0
      %v8437 = vadd.f32 0.0, %v8436
      %v8438 = vpop.f32.mrb[0].mxu0
      %8439 = vmatprep.mubr.f32.mxu0 0.0
      %8440 = vmatmul.mubr.f32.gmra.mrb[0].mxu0 %v6008
      %v8441 = vpop.f32.mrb[0].mxu0
      %v8442 = vadd.f32 0.0, %v8441
      %v8443 = vpop.f32.mrb[0].mxu0
      %8444 = vmatprep.mubr.f32.mxu0 0.0
      %8445 = vmatmul.mubr.f32.gmra.mrb[0].mxu0 %v6010
      %v8446 = vpop.f32.mrb[0].mxu0
      %v8447 = vadd.f32 0.0, %v8446
      %v8448 = vpop.f32.mrb[0].mxu0
      %8449 = vmatprep.mubr.f32.mxu0 0.0
      %8450 = vmatmul.mubr.f32.gmra.mrb[0].mxu0 %v6012
      %v8451 = vpop.f32.mrb[0].mxu0
      %v8452 = vadd.f32 0.0, %v8451
      %v8453 = vpop.f32.mrb[0].mxu0
      %8454 = vmatprep.mubr.f32.mxu0 0.0
      %8455 = vmatmul.mubr.f32.gmra.mrb[0].mxu0 %v6014
      %v8456 = vpop.f32.mrb[0].mxu0
      %v8457 = vadd.f32 0.0, %v8456
      %v8458 = vpop.f32.mrb[0].mxu0
      %8459 = vmatprep.mubr.f32.mxu0 0.0
      %8460 = vmatmul.mubr.f32.gmra.mrb[0].mxu0 %v6016
      %v8461 = vpop.f32.mrb[0].mxu0
      %v8462 = vadd.f32 0.0, %v8461
      %v8463 = vpop.f32.mrb[0].mxu0
      %8464 = vmatprep.mubr.f32.mxu0 0.0
      %8465 = vmatmul.mubr.f32.gmra.mrb[0].mxu0 %v6018
      %v8466 = vpop.f32.mrb[0].mxu0
      %v8467 = vadd.f32 0.0, %v8466
      %v8468 = vpop.f32.mrb[0].mxu0
      %8469 = vmatprep.mubr.f32.mxu0 0.0
      %8470 = vmatmul.mubr.f32.gmra.mrb[0].mxu0 %v6020
      %v8471 = vpop.f32.mrb[0].mxu0
      %v8472 = vadd.f32 0.0, %v8471
      %v8473 = vpop.f32.mrb[0].mxu0
      %8474 = vmatprep.mubr.f32.mxu0 0.0
      %8475 = vmatmul.mubr.f32.gmra.mrb[0].mxu0 %v6022
      %v8476 = vpop.f32.mrb[0].mxu0
      %v8477 = vadd.f32 0.0, %v8476
      %v8478 = vpop.f32.mrb[0].mxu0
      %8479 = vmatprep.mubr.f32.mxu0 0.0
      %8480 = vmatmul.mubr.f32.gmra.mrb[0].mxu0 %v6024
      %v8481 = vpop.f32.mrb[0].mxu0
      %v8482 = vadd.f32 0.0, %v8481
      %v8483 = vpop.f32.mrb[0].mxu0
      %8484 = vmatprep.mubr.f32.mxu0 0.0
      %8485 = vmatmul.mubr.f32.gmra.mrb[0].mxu0 %v6026
      %v8486 = vpop.f32.mrb[0].mxu0
      %v8487 = vadd.f32 0.0, %v8486
      %v8488 = vpop.f32.mrb[0].mxu0
      %8489 = vmatprep.mubr.f32.mxu0 0.0
      %8490 = vmatmul.mubr.f32.gmra.mrb[0].mxu0 %v6028
      %v8491 = vpop.f32.mrb[0].mxu0
      %v8492 = vadd.f32 0.0, %v8491
      %v8493 = vpop.f32.mrb[0].mxu0
      %8494 = vmatprep.mubr.f32.mxu0 0.0
      %8495 = vmatmul.mubr.f32.gmra.mrb[0].mxu0 %v6030
      %v8496 = vpop.f32.mrb[0].mxu0
      %v8497 = vadd.f32 0.0, %v8496
      %v8498 = vpop.f32.mrb[0].mxu0
      %8499 = vmatprep.mubr.f32.mxu0 0.0
      %8500 = vmatmul.mubr.f32.gmra.mrb[0].mxu0 %v6032
      %v8501 = vpop.f32.mrb[0].mxu0
      %v8502 = vadd.f32 0.0, %v8501
      %v8503 = vpop.f32.mrb[0].mxu0
      %8504 = vmatprep.mubr.f32.mxu0 0.0
      %8505 = vmatmul.mubr.f32.gmra.mrb[0].mxu0 %v6034
      %v8506 = vpop.f32.mrb[0].mxu0
      %v8507 = vadd.f32 0.0, %v8506
      %v8508 = vpop.f32.mrb[0].mxu0
      %8509 = vmatprep.mubr.f32.mxu0 0.0
      %8510 = vmatmul.mubr.f32.gmra.mrb[0].mxu0 %v6036
      %v8511 = vpop.f32.mrb[0].mxu0
      %v8512 = vadd.f32 0.0, %v8511
      %v8513 = vpop.f32.mrb[0].mxu0
      %8514 = vmatprep.mubr.f32.mxu0 0.0
      %8515 = vmatmul.mubr.f32.gmra.mrb[0].mxu0 %v6038
      %v8516 = vpop.f32.mrb[0].mxu0
      %v8517 = vadd.f32 0.0, %v8516
      %v8518 = vpop.f32.mrb[0].mxu0
      %8519 = vmatprep.mubr.f32.mxu0 0.0
      %8520 = vmatmul.mubr.f32.gmra.mrb[0].mxu0 %v6040
      %v8521 = vpop.f32.mrb[0].mxu0
      %v8522 = vadd.f32 0.0, %v8521
      %v8523 = vpop.f32.mrb[0].mxu0
      %8524 = vmatprep.mubr.f32.mxu0 0.0
      %8525 = vmatmul.mubr.f32.gmra.mrb[0].mxu0 %v6042
      %v8526 = vpop.f32.mrb[0].mxu0
      %v8527 = vadd.f32 0.0, %v8526
      %v8528 = vpop.f32.mrb[0].mxu0
      %8529 = vmatprep.mubr.f32.mxu0 0.0
      %8530 = vmatmul.mubr.f32.gmra.mrb[0].mxu0 %v6044
      %v8531 = vpop.f32.mrb[0].mxu0
      %v8532 = vadd.f32 0.0, %v8531
      %v8533 = vpop.f32.mrb[0].mxu0
      %8534 = vmatprep.mubr.f32.mxu0 0.0
      %8535 = vmatmul.mubr.f32.gmra.mrb[0].mxu0 %v6046
      %v8536 = vpop.f32.mrb[0].mxu0
      %v8537 = vadd.f32 0.0, %v8536
      %v8538 = vpop.f32.mrb[0].mxu0
      %8539 = vmatprep.mubr.f32.mxu0 0.0
      %8540 = vmatmul.mubr.f32.gmra.mrb[0].mxu0 %v6048
      %v8541 = vpop.f32.mrb[0].mxu0
      %v8542 = vadd.f32 0.0, %v8541
      %v8543 = vpop.f32.mrb[0].mxu0
      %8544 = vmatprep.mubr.f32.mxu0 0.0
      %8545 = vmatmul.mubr.f32.gmra.mrb[0].mxu0 %v6050
      %v8546 = vpop.f32.mrb[0].mxu0
      %v8547 = vadd.f32 0.0, %v8546
      %v8548 = vpop.f32.mrb[0].mxu0
      %8549 = vmatprep.mubr.f32.mxu0 0.0
      %8550 = vmatmul.mubr.f32.gmra.mrb[0].mxu0 %v6052
      %v8551 = vpop.f32.mrb[0].mxu0
      %v8552 = vadd.f32 0.0, %v8551
      %v8553 = vpop.f32.mrb[0].mxu0
      %8554 = vmatprep.mubr.f32.mxu0 0.0
      %8555 = vmatmul.mubr.f32.gmra.mrb[0].mxu0 %v6054
      %v8556 = vpop.f32.mrb[0].mxu0
      %v8557 = vadd.f32 0.0, %v8556
      %v8558 = vpop.f32.mrb[0].mxu0
      %8559 = vmatprep.mubr.f32.mxu0 0.0
      %8560 = vmatmul.mubr.f32.gmra.mrb[0].mxu0 %v6056
      %v8561 = vpop.f32.mrb[0].mxu0
      %v8562 = vadd.f32 0.0, %v8561
      %v8563 = vpop.f32.mrb[0].mxu0
      %8564 = vmatprep.mubr.f32.mxu0 0.0
      %8565 = vmatmul.mubr.f32.gmra.mrb[0].mxu0 %v6058
      %v8566 = vpop.f32.mrb[0].mxu0
      %v8567 = vadd.f32 0.0, %v8566
      %v8568 = vpop.f32.mrb[0].mxu0
      %8569 = vmatprep.mubr.f32.mxu0 0.0
      %8570 = vmatmul.mubr.f32.gmra.mrb[0].mxu0 %v6060
      %v8571 = vpop.f32.mrb[0].mxu0
      %v8572 = vadd.f32 0.0, %v8571
      %v8573 = vpop.f32.mrb[0].mxu0
      %8574 = vdwg.mxu0
      %v8575 = vadd.f32 %v8318, %v8417
      %v8576 = vadd.f32 %v8319, %v8422
      %v8577 = vadd.f32 %v8320, %v8427
      %v8578 = vadd.f32 %v8321, %v8432
      %v8579 = vadd.f32 %v8322, %v8437
      %v8580 = vadd.f32 %v8323, %v8442
      %v8581 = vadd.f32 %v8324, %v8447
      %v8582 = vadd.f32 %v8325, %v8452
      %v8583 = vadd.f32 %v8326, %v8457
      %v8584 = vadd.f32 %v8327, %v8462
      %v8585 = vadd.f32 %v8328, %v8467
      %v8586 = vadd.f32 %v8329, %v8472
      %v8587 = vadd.f32 %v8330, %v8477
      %v8588 = vadd.f32 %v8331, %v8482
      %v8589 = vadd.f32 %v8332, %v8487
      %v8590 = vadd.f32 %v8333, %v8492
      %v8591 = vadd.f32 %v8334, %v8497
      %v8592 = vadd.f32 %v8335, %v8502
      %v8593 = vadd.f32 %v8336, %v8507
      %v8594 = vadd.f32 %v8337, %v8512
      %v8595 = vadd.f32 %v8338, %v8517
      %v8596 = vadd.f32 %v8339, %v8522
      %v8597 = vadd.f32 %v8340, %v8527
      %v8598 = vadd.f32 %v8341, %v8532
      %v8599 = vadd.f32 %v8342, %v8537
      %v8600 = vadd.f32 %v8343, %v8542
      %v8601 = vadd.f32 %v8344, %v8547
      %v8602 = vadd.f32 %v8345, %v8552
      %v8603 = vadd.f32 %v8346, %v8557
      %v8604 = vadd.f32 %v8347, %v8562
      %v8605 = vadd.f32 %v8348, %v8567
      %v8606 = vadd.f32 %v8349, %v8572
      %8607 = vmatprep.subr.mxu0 0.0
      %8608 = vmatpush1.msra.mxu0 %v6062
      %8609 = vmatprep.subr.mxu0 0.0
      %8610 = vmatpush1.msra.mxu0 %v6063
      %8611 = vmatprep.subr.mxu0 0.0
      %8612 = vmatpush1.msra.mxu0 %v6064
      %8613 = vmatprep.subr.mxu0 0.0
      %8614 = vmatpush1.msra.mxu0 %v6065
      %8615 = vmatprep.subr.mxu0 0.0
      %8616 = vmatpush1.msra.mxu0 %v6066
      %8617 = vmatprep.subr.mxu0 0.0
      %8618 = vmatpush1.msra.mxu0 %v6067
      %8619 = vmatprep.subr.mxu0 0.0
      %8620 = vmatpush1.msra.mxu0 %v6068
      %8621 = vmatprep.subr.mxu0 0.0
      %8622 = vmatpush1.msra.mxu0 %v6069
      %8623 = vmatprep.subr.mxu0 0.0
      %8624 = vmatpush1.msra.mxu0 %v6070
      %8625 = vmatprep.subr.mxu0 0.0
      %8626 = vmatpush1.msra.mxu0 %v6071
      %8627 = vmatprep.subr.mxu0 0.0
      %8628 = vmatpush1.msra.mxu0 %v6072
      %8629 = vmatprep.subr.mxu0 0.0
      %8630 = vmatpush1.msra.mxu0 %v6073
      %8631 = vmatprep.subr.mxu0 0.0
      %8632 = vmatpush1.msra.mxu0 %v6074
      %8633 = vmatprep.subr.mxu0 0.0
      %8634 = vmatpush1.msra.mxu0 %v6075
      %8635 = vmatprep.subr.mxu0 0.0
      %8636 = vmatpush1.msra.mxu0 %v6076
      %8637 = vmatprep.subr.mxu0 0.0
      %8638 = vmatpush1.msra.mxu0 %v6077
      %8639 = vmatprep.subr.mxu0 0.0
      %8640 = vmatpush1.msra.mxu0 0.0
      %8641 = vmatprep.subr.mxu0 0.0
      %8642 = vmatpush1.msra.mxu0 0.0
      %8643 = vmatprep.subr.mxu0 0.0
      %8644 = vmatpush1.msra.mxu0 0.0
      %8645 = vmatprep.subr.mxu0 0.0
      %8646 = vmatpush1.msra.mxu0 0.0
      %8647 = vmatprep.subr.mxu0 0.0
      %8648 = vmatpush1.msra.mxu0 0.0
      %8649 = vmatprep.subr.mxu0 0.0
      %8650 = vmatpush1.msra.mxu0 0.0
      %8651 = vmatprep.subr.mxu0 0.0
      %8652 = vmatpush1.msra.mxu0 0.0
      %8653 = vmatprep.subr.mxu0 0.0
      %8654 = vmatpush1.msra.mxu0 0.0
      %8655 = vmatprep.subr.mxu0 0.0
      %8656 = vmatpush1.msra.mxu0 0.0
      %8657 = vmatprep.subr.mxu0 0.0
      %8658 = vmatpush1.msra.mxu0 0.0
      %8659 = vmatprep.subr.mxu0 0.0
      %8660 = vmatpush1.msra.mxu0 0.0
      %8661 = vmatprep.subr.mxu0 0.0
      %8662 = vmatpush1.msra.mxu0 0.0
      %8663 = vmatprep.subr.mxu0 0.0
      %8664 = vmatpush1.msra.mxu0 0.0
      %8665 = vmatprep.subr.mxu0 0.0
      %8666 = vmatpush1.msra.mxu0 0.0
      %8667 = vmatprep.subr.mxu0 0.0
      %8668 = vmatpush1.msra.mxu0 0.0
      %8669 = vmatprep.subr.mxu0 0.0
      %8670 = vmatpush1.msra.mxu0 0.0
      %8671 = vmatprep.mubr.f32.mxu0 0.0
      %8672 = vmatmul.mubr.f32.gmra.mrb[0].mxu0 %v6336
      %v8673 = vpop.f32.mrb[0].mxu0
      %v8674 = vadd.f32 0.0, %v8673
      %v8675 = vpop.f32.mrb[0].mxu0
      %8676 = vmatprep.mubr.f32.mxu0 0.0
      %8677 = vmatmul.mubr.f32.gmra.mrb[0].mxu0 %v6338
      %v8678 = vpop.f32.mrb[0].mxu0
      %v8679 = vadd.f32 0.0, %v8678
      %v8680 = vpop.f32.mrb[0].mxu0
      %8681 = vmatprep.mubr.f32.mxu0 0.0
      %8682 = vmatmul.mubr.f32.gmra.mrb[0].mxu0 %v6340
      %v8683 = vpop.f32.mrb[0].mxu0
      %v8684 = vadd.f32 0.0, %v8683
      %v8685 = vpop.f32.mrb[0].mxu0
      %8686 = vmatprep.mubr.f32.mxu0 0.0
      %8687 = vmatmul.mubr.f32.gmra.mrb[0].mxu0 %v6342
      %v8688 = vpop.f32.mrb[0].mxu0
      %v8689 = vadd.f32 0.0, %v8688
      %v8690 = vpop.f32.mrb[0].mxu0
      %8691 = vmatprep.mubr.f32.mxu0 0.0
      %8692 = vmatmul.mubr.f32.gmra.mrb[0].mxu0 %v6344
      %v8693 = vpop.f32.mrb[0].mxu0
      %v8694 = vadd.f32 0.0, %v8693
      %v8695 = vpop.f32.mrb[0].mxu0
      %8696 = vmatprep.mubr.f32.mxu0 0.0
      %8697 = vmatmul.mubr.f32.gmra.mrb[0].mxu0 %v6346
      %v8698 = vpop.f32.mrb[0].mxu0
      %v8699 = vadd.f32 0.0, %v8698
      %v8700 = vpop.f32.mrb[0].mxu0
      %8701 = vmatprep.mubr.f32.mxu0 0.0
      %8702 = vmatmul.mubr.f32.gmra.mrb[0].mxu0 %v6348
      %v8703 = vpop.f32.mrb[0].mxu0
      %v8704 = vadd.f32 0.0, %v8703
      %v8705 = vpop.f32.mrb[0].mxu0
      %8706 = vmatprep.mubr.f32.mxu0 0.0
      %8707 = vmatmul.mubr.f32.gmra.mrb[0].mxu0 %v6350
      %v8708 = vpop.f32.mrb[0].mxu0
      %v8709 = vadd.f32 0.0, %v8708
      %v8710 = vpop.f32.mrb[0].mxu0
      %8711 = vmatprep.mubr.f32.mxu0 0.0
      %8712 = vmatmul.mubr.f32.gmra.mrb[0].mxu0 %v6352
      %v8713 = vpop.f32.mrb[0].mxu0
      %v8714 = vadd.f32 0.0, %v8713
      %v8715 = vpop.f32.mrb[0].mxu0
      %8716 = vmatprep.mubr.f32.mxu0 0.0
      %8717 = vmatmul.mubr.f32.gmra.mrb[0].mxu0 %v6354
      %v8718 = vpop.f32.mrb[0].mxu0
      %v8719 = vadd.f32 0.0, %v8718
      %v8720 = vpop.f32.mrb[0].mxu0
      %8721 = vmatprep.mubr.f32.mxu0 0.0
      %8722 = vmatmul.mubr.f32.gmra.mrb[0].mxu0 %v6356
      %v8723 = vpop.f32.mrb[0].mxu0
      %v8724 = vadd.f32 0.0, %v8723
      %v8725 = vpop.f32.mrb[0].mxu0
      %8726 = vmatprep.mubr.f32.mxu0 0.0
      %8727 = vmatmul.mubr.f32.gmra.mrb[0].mxu0 %v6358
      %v8728 = vpop.f32.mrb[0].mxu0
      %v8729 = vadd.f32 0.0, %v8728
      %v8730 = vpop.f32.mrb[0].mxu0
      %8731 = vmatprep.mubr.f32.mxu0 0.0
      %8732 = vmatmul.mubr.f32.gmra.mrb[0].mxu0 %v6360
      %v8733 = vpop.f32.mrb[0].mxu0
      %v8734 = vadd.f32 0.0, %v8733
      %v8735 = vpop.f32.mrb[0].mxu0
      %8736 = vmatprep.mubr.f32.mxu0 0.0
      %8737 = vmatmul.mubr.f32.gmra.mrb[0].mxu0 %v6362
      %v8738 = vpop.f32.mrb[0].mxu0
      %v8739 = vadd.f32 0.0, %v8738
      %v8740 = vpop.f32.mrb[0].mxu0
      %8741 = vmatprep.mubr.f32.mxu0 0.0
      %8742 = vmatmul.mubr.f32.gmra.mrb[0].mxu0 %v6364
      %v8743 = vpop.f32.mrb[0].mxu0
      %v8744 = vadd.f32 0.0, %v8743
      %v8745 = vpop.f32.mrb[0].mxu0
      %8746 = vmatprep.mubr.f32.mxu0 0.0
      %8747 = vmatmul.mubr.f32.gmra.mrb[0].mxu0 %v6366
      %v8748 = vpop.f32.mrb[0].mxu0
      %v8749 = vadd.f32 0.0, %v8748
      %v8750 = vpop.f32.mrb[0].mxu0
      %8751 = vmatprep.mubr.f32.mxu0 0.0
      %8752 = vmatmul.mubr.f32.gmra.mrb[0].mxu0 %v6368
      %v8753 = vpop.f32.mrb[0].mxu0
      %v8754 = vadd.f32 0.0, %v8753
      %v8755 = vpop.f32.mrb[0].mxu0
      %8756 = vmatprep.mubr.f32.mxu0 0.0
      %8757 = vmatmul.mubr.f32.gmra.mrb[0].mxu0 %v6370
      %v8758 = vpop.f32.mrb[0].mxu0
      %v8759 = vadd.f32 0.0, %v8758
      %v8760 = vpop.f32.mrb[0].mxu0
      %8761 = vmatprep.mubr.f32.mxu0 0.0
      %8762 = vmatmul.mubr.f32.gmra.mrb[0].mxu0 %v6372
      %v8763 = vpop.f32.mrb[0].mxu0
      %v8764 = vadd.f32 0.0, %v8763
      %v8765 = vpop.f32.mrb[0].mxu0
      %8766 = vmatprep.mubr.f32.mxu0 0.0
      %8767 = vmatmul.mubr.f32.gmra.mrb[0].mxu0 %v6374
      %v8768 = vpop.f32.mrb[0].mxu0
      %v8769 = vadd.f32 0.0, %v8768
      %v8770 = vpop.f32.mrb[0].mxu0
      %8771 = vmatprep.mubr.f32.mxu0 0.0
      %8772 = vmatmul.mubr.f32.gmra.mrb[0].mxu0 %v6376
      %v8773 = vpop.f32.mrb[0].mxu0
      %v8774 = vadd.f32 0.0, %v8773
      %v8775 = vpop.f32.mrb[0].mxu0
      %8776 = vmatprep.mubr.f32.mxu0 0.0
      %8777 = vmatmul.mubr.f32.gmra.mrb[0].mxu0 %v6378
      %v8778 = vpop.f32.mrb[0].mxu0
      %v8779 = vadd.f32 0.0, %v8778
      %v8780 = vpop.f32.mrb[0].mxu0
      %8781 = vmatprep.mubr.f32.mxu0 0.0
      %8782 = vmatmul.mubr.f32.gmra.mrb[0].mxu0 %v6380
      %v8783 = vpop.f32.mrb[0].mxu0
      %v8784 = vadd.f32 0.0, %v8783
      %v8785 = vpop.f32.mrb[0].mxu0
      %8786 = vmatprep.mubr.f32.mxu0 0.0
      %8787 = vmatmul.mubr.f32.gmra.mrb[0].mxu0 %v6382
      %v8788 = vpop.f32.mrb[0].mxu0
      %v8789 = vadd.f32 0.0, %v8788
      %v8790 = vpop.f32.mrb[0].mxu0
      %8791 = vmatprep.mubr.f32.mxu0 0.0
      %8792 = vmatmul.mubr.f32.gmra.mrb[0].mxu0 %v6384
      %v8793 = vpop.f32.mrb[0].mxu0
      %v8794 = vadd.f32 0.0, %v8793
      %v8795 = vpop.f32.mrb[0].mxu0
      %8796 = vmatprep.mubr.f32.mxu0 0.0
      %8797 = vmatmul.mubr.f32.gmra.mrb[0].mxu0 %v6386
      %v8798 = vpop.f32.mrb[0].mxu0
      %v8799 = vadd.f32 0.0, %v8798
      %v8800 = vpop.f32.mrb[0].mxu0
      %8801 = vmatprep.mubr.f32.mxu0 0.0
      %8802 = vmatmul.mubr.f32.gmra.mrb[0].mxu0 %v6388
      %v8803 = vpop.f32.mrb[0].mxu0
      %v8804 = vadd.f32 0.0, %v8803
      %v8805 = vpop.f32.mrb[0].mxu0
      %8806 = vmatprep.mubr.f32.mxu0 0.0
      %8807 = vmatmul.mubr.f32.gmra.mrb[0].mxu0 %v6390
      %v8808 = vpop.f32.mrb[0].mxu0
      %v8809 = vadd.f32 0.0, %v8808
      %v8810 = vpop.f32.mrb[0].mxu0
      %8811 = vmatprep.mubr.f32.mxu0 0.0
      %8812 = vmatmul.mubr.f32.gmra.mrb[0].mxu0 %v6392
      %v8813 = vpop.f32.mrb[0].mxu0
      %v8814 = vadd.f32 0.0, %v8813
      %v8815 = vpop.f32.mrb[0].mxu0
      %8816 = vmatprep.mubr.f32.mxu0 0.0
      %8817 = vmatmul.mubr.f32.gmra.mrb[0].mxu0 %v6394
      %v8818 = vpop.f32.mrb[0].mxu0
      %v8819 = vadd.f32 0.0, %v8818
      %v8820 = vpop.f32.mrb[0].mxu0
      %8821 = vmatprep.mubr.f32.mxu0 0.0
      %8822 = vmatmul.mubr.f32.gmra.mrb[0].mxu0 %v6396
      %v8823 = vpop.f32.mrb[0].mxu0
      %v8824 = vadd.f32 0.0, %v8823
      %v8825 = vpop.f32.mrb[0].mxu0
      %8826 = vmatprep.mubr.f32.mxu0 0.0
      %8827 = vmatmul.mubr.f32.gmra.mrb[0].mxu0 %v6398
      %v8828 = vpop.f32.mrb[0].mxu0
      %v8829 = vadd.f32 0.0, %v8828
      %v8830 = vpop.f32.mrb[0].mxu0
      %8831 = vdwg.mxu0
      %v8832 = vadd.f32 %v8575, %v8674
      %v8833 = vadd.f32 %v8576, %v8679
      %v8834 = vadd.f32 %v8577, %v8684
      %v8835 = vadd.f32 %v8578, %v8689
      %v8836 = vadd.f32 %v8579, %v8694
      %v8837 = vadd.f32 %v8580, %v8699
      %v8838 = vadd.f32 %v8581, %v8704
      %v8839 = vadd.f32 %v8582, %v8709
      %v8840 = vadd.f32 %v8583, %v8714
      %v8841 = vadd.f32 %v8584, %v8719
      %v8842 = vadd.f32 %v8585, %v8724
      %v8843 = vadd.f32 %v8586, %v8729
      %v8844 = vadd.f32 %v8587, %v8734
      %v8845 = vadd.f32 %v8588, %v8739
      %v8846 = vadd.f32 %v8589, %v8744
      %v8847 = vadd.f32 %v8590, %v8749
      %v8848 = vadd.f32 %v8591, %v8754
      %v8849 = vadd.f32 %v8592, %v8759
      %v8850 = vadd.f32 %v8593, %v8764
      %v8851 = vadd.f32 %v8594, %v8769
      %v8852 = vadd.f32 %v8595, %v8774
      %v8853 = vadd.f32 %v8596, %v8779
      %v8854 = vadd.f32 %v8597, %v8784
      %v8855 = vadd.f32 %v8598, %v8789
      %v8856 = vadd.f32 %v8599, %v8794
      %v8857 = vadd.f32 %v8600, %v8799
      %v8858 = vadd.f32 %v8601, %v8804
      %v8859 = vadd.f32 %v8602, %v8809
      %v8860 = vadd.f32 %v8603, %v8814
      %v8861 = vadd.f32 %v8604, %v8819
      %v8862 = vadd.f32 %v8605, %v8824
      %v8863 = vadd.f32 %v8606, %v8829
      %s8864 = scalar_lea.vmem %s5659, 3 [#allocation2]
      %v8865 = vld [vmem:[%s8864] ss:$2 sm:$0xff]
      %s8866 = scalar_lea.vmem %s5659, 27 [#allocation2]
      %v8867 = vld [vmem:[%s8866] ss:$2 sm:$0xff]
      %s8868 = scalar_lea.vmem %s5659, 51 [#allocation2]
      %v8869 = vld [vmem:[%s8868] ss:$2 sm:$0xff]
      %s8870 = scalar_lea.vmem %s5659, 75 [#allocation2]
      %v8871 = vld [vmem:[%s8870] ss:$2 sm:$0xff]
      %s8872 = scalar_lea.vmem %s5659, 99 [#allocation2]
      %v8873 = vld [vmem:[%s8872] ss:$2 sm:$0xff]
      %s8874 = scalar_lea.vmem %s5659, 123 [#allocation2]
      %v8875 = vld [vmem:[%s8874] ss:$2 sm:$0xff]
      %s8876 = scalar_lea.vmem %s5659, 147 [#allocation2]
      %v8877 = vld [vmem:[%s8876] ss:$2 sm:$0xff]
      %s8878 = scalar_lea.vmem %s5659, 171 [#allocation2]
      %v8879 = vld [vmem:[%s8878] ss:$2 sm:$0xff]
      %s8880 = scalar_lea.vmem %s5659, 195 [#allocation2]
      %v8881 = vld [vmem:[%s8880] ss:$2 sm:$0xff]
      %s8882 = scalar_lea.vmem %s5659, 219 [#allocation2]
      %v8883 = vld [vmem:[%s8882] ss:$2 sm:$0xff]
      %s8884 = scalar_lea.vmem %s5659, 243 [#allocation2]
      %v8885 = vld [vmem:[%s8884] ss:$2 sm:$0xff]
      %s8886 = scalar_lea.vmem %s5659, 267 [#allocation2]
      %v8887 = vld [vmem:[%s8886] ss:$2 sm:$0xff]
      %s8888 = scalar_lea.vmem %s5659, 291 [#allocation2]
      %v8889 = vld [vmem:[%s8888] ss:$2 sm:$0xff]
      %s8890 = scalar_lea.vmem %s5659, 315 [#allocation2]
      %v8891 = vld [vmem:[%s8890] ss:$2 sm:$0xff]
      %s8892 = scalar_lea.vmem %s5659, 339 [#allocation2]
      %v8893 = vld [vmem:[%s8892] ss:$2 sm:$0xff]
      %s8894 = scalar_lea.vmem %s5659, 363 [#allocation2]
      %v8895 = vld [vmem:[%s8894] ss:$2 sm:$0xff]
      %s8896 = scalar_lea.vmem %s5659, 435 [#allocation2]
      %v8897 = vld [vmem:[%s8896] ss:$2 sm:$0xff]
      %s8898 = scalar_lea.vmem %s5659, 459 [#allocation2]
      %v8899 = vld [vmem:[%s8898] ss:$2 sm:$0xff]
      %s8900 = scalar_lea.vmem %s5659, 483 [#allocation2]
      %v8901 = vld [vmem:[%s8900] ss:$2 sm:$0xff]
      %s8902 = scalar_lea.vmem %s5659, 507 [#allocation2]
      %v8903 = vld [vmem:[%s8902] ss:$2 sm:$0xff]
      %s8904 = scalar_lea.vmem %s5659, 531 [#allocation2]
      %v8905 = vld [vmem:[%s8904] ss:$2 sm:$0xff]
      %s8906 = scalar_lea.vmem %s5659, 555 [#allocation2]
      %v8907 = vld [vmem:[%s8906] ss:$2 sm:$0xff]
      %s8908 = scalar_lea.vmem %s5659, 579 [#allocation2]
      %v8909 = vld [vmem:[%s8908] ss:$2 sm:$0xff]
      %s8910 = scalar_lea.vmem %s5659, 603 [#allocation2]
      %v8911 = vld [vmem:[%s8910] ss:$2 sm:$0xff]
      %s8912 = scalar_lea.vmem %s5659, 627 [#allocation2]
      %v8913 = vld [vmem:[%s8912] ss:$2 sm:$0xff]
      %s8914 = scalar_lea.vmem %s5659, 651 [#allocation2]
      %v8915 = vld [vmem:[%s8914] ss:$2 sm:$0xff]
      %s8916 = scalar_lea.vmem %s5659, 675 [#allocation2]
      %v8917 = vld [vmem:[%s8916] ss:$2 sm:$0xff]
      %s8918 = scalar_lea.vmem %s5659, 699 [#allocation2]
      %v8919 = vld [vmem:[%s8918] ss:$2 sm:$0xff]
      %s8920 = scalar_lea.vmem %s5659, 723 [#allocation2]
      %v8921 = vld [vmem:[%s8920] ss:$2 sm:$0xff]
      %s8922 = scalar_lea.vmem %s5659, 747 [#allocation2]
      %v8923 = vld [vmem:[%s8922] ss:$2 sm:$0xff]
      %s8924 = scalar_lea.vmem %s5659, 771 [#allocation2]
      %v8925 = vld [vmem:[%s8924] ss:$2 sm:$0xff]
      %s8926 = scalar_lea.vmem %s5659, 795 [#allocation2]
      %v8927 = vld [vmem:[%s8926] ss:$2 sm:$0xff]
      %8928 = vmatprep.subr.mxu0 0.0
      %8929 = vmatpush1.msra.mxu0 %v6400
      %8930 = vmatprep.subr.mxu0 0.0
      %8931 = vmatpush1.msra.mxu0 %v6401
      %8932 = vmatprep.subr.mxu0 0.0
      %8933 = vmatpush1.msra.mxu0 %v6402
      %8934 = vmatprep.subr.mxu0 0.0
      %8935 = vmatpush1.msra.mxu0 %v6403
      %8936 = vmatprep.subr.mxu0 0.0
      %8937 = vmatpush1.msra.mxu0 %v6404
      %8938 = vmatprep.subr.mxu0 0.0
      %8939 = vmatpush1.msra.mxu0 %v6405
      %8940 = vmatprep.subr.mxu0 0.0
      %8941 = vmatpush1.msra.mxu0 %v6406
      %8942 = vmatprep.subr.mxu0 0.0
      %8943 = vmatpush1.msra.mxu0 %v6407
      %8944 = vmatprep.subr.mxu0 0.0
      %8945 = vmatpush1.msra.mxu0 %v6408
      %8946 = vmatprep.subr.mxu0 0.0
      %8947 = vmatpush1.msra.mxu0 %v6409
      %8948 = vmatprep.subr.mxu0 0.0
      %8949 = vmatpush1.msra.mxu0 %v6410
      %8950 = vmatprep.subr.mxu0 0.0
      %8951 = vmatpush1.msra.mxu0 %v6411
      %8952 = vmatprep.subr.mxu0 0.0
      %8953 = vmatpush1.msra.mxu0 %v6412
      %8954 = vmatprep.subr.mxu0 0.0
      %8955 = vmatpush1.msra.mxu0 %v6413
      %8956 = vmatprep.subr.mxu0 0.0
      %8957 = vmatpush1.msra.mxu0 %v6414
      %8958 = vmatprep.subr.mxu0 0.0
      %8959 = vmatpush1.msra.mxu0 %v6415
      %8960 = vmatprep.subr.mxu0 0.0
      %8961 = vmatpush1.msra.mxu0 0.0
      %8962 = vmatprep.subr.mxu0 0.0
      %8963 = vmatpush1.msra.mxu0 0.0
      %8964 = vmatprep.subr.mxu0 0.0
      %8965 = vmatpush1.msra.mxu0 0.0
      %8966 = vmatprep.subr.mxu0 0.0
      %8967 = vmatpush1.msra.mxu0 0.0
      %8968 = vmatprep.subr.mxu0 0.0
      %8969 = vmatpush1.msra.mxu0 0.0
      %8970 = vmatprep.subr.mxu0 0.0
      %8971 = vmatpush1.msra.mxu0 0.0
      %8972 = vmatprep.subr.mxu0 0.0
      %8973 = vmatpush1.msra.mxu0 0.0
      %8974 = vmatprep.subr.mxu0 0.0
      %8975 = vmatpush1.msra.mxu0 0.0
      %8976 = vmatprep.subr.mxu0 0.0
      %8977 = vmatpush1.msra.mxu0 0.0
      %8978 = vmatprep.subr.mxu0 0.0
      %8979 = vmatpush1.msra.mxu0 0.0
      %8980 = vmatprep.subr.mxu0 0.0
      %8981 = vmatpush1.msra.mxu0 0.0
      %8982 = vmatprep.subr.mxu0 0.0
      %8983 = vmatpush1.msra.mxu0 0.0
      %8984 = vmatprep.subr.mxu0 0.0
      %8985 = vmatpush1.msra.mxu0 0.0
      %8986 = vmatprep.subr.mxu0 0.0
      %8987 = vmatpush1.msra.mxu0 0.0
      %8988 = vmatprep.subr.mxu0 0.0
      %8989 = vmatpush1.msra.mxu0 0.0
      %8990 = vmatprep.subr.mxu0 0.0
      %8991 = vmatpush1.msra.mxu0 0.0
      %8992 = vmatprep.mubr.f32.mxu0 0.0
      %8993 = vmatmul.mubr.f32.gmra.mrb[0].mxu0 %v8865
      %v8994 = vpop.f32.mrb[0].mxu0
      %v8995 = vadd.f32 0.0, %v8994
      %v8996 = vpop.f32.mrb[0].mxu0
      %8997 = vmatprep.mubr.f32.mxu0 0.0
      %8998 = vmatmul.mubr.f32.gmra.mrb[0].mxu0 %v8867
      %v8999 = vpop.f32.mrb[0].mxu0
      %v9000 = vadd.f32 0.0, %v8999
      %v9001 = vpop.f32.mrb[0].mxu0
      %9002 = vmatprep.mubr.f32.mxu0 0.0
      %9003 = vmatmul.mubr.f32.gmra.mrb[0].mxu0 %v8869
      %v9004 = vpop.f32.mrb[0].mxu0
      %v9005 = vadd.f32 0.0, %v9004
      %v9006 = vpop.f32.mrb[0].mxu0
      %9007 = vmatprep.mubr.f32.mxu0 0.0
      %9008 = vmatmul.mubr.f32.gmra.mrb[0].mxu0 %v8871
      %v9009 = vpop.f32.mrb[0].mxu0
      %v9010 = vadd.f32 0.0, %v9009
      %v9011 = vpop.f32.mrb[0].mxu0
      %9012 = vmatprep.mubr.f32.mxu0 0.0
      %9013 = vmatmul.mubr.f32.gmra.mrb[0].mxu0 %v8873
      %v9014 = vpop.f32.mrb[0].mxu0
      %v9015 = vadd.f32 0.0, %v9014
      %v9016 = vpop.f32.mrb[0].mxu0
      %9017 = vmatprep.mubr.f32.mxu0 0.0
      %9018 = vmatmul.mubr.f32.gmra.mrb[0].mxu0 %v8875
      %v9019 = vpop.f32.mrb[0].mxu0
      %v9020 = vadd.f32 0.0, %v9019
      %v9021 = vpop.f32.mrb[0].mxu0
      %9022 = vmatprep.mubr.f32.mxu0 0.0
      %9023 = vmatmul.mubr.f32.gmra.mrb[0].mxu0 %v8877
      %v9024 = vpop.f32.mrb[0].mxu0
      %v9025 = vadd.f32 0.0, %v9024
      %v9026 = vpop.f32.mrb[0].mxu0
      %9027 = vmatprep.mubr.f32.mxu0 0.0
      %9028 = vmatmul.mubr.f32.gmra.mrb[0].mxu0 %v8879
      %v9029 = vpop.f32.mrb[0].mxu0
      %v9030 = vadd.f32 0.0, %v9029
      %v9031 = vpop.f32.mrb[0].mxu0
      %9032 = vmatprep.mubr.f32.mxu0 0.0
      %9033 = vmatmul.mubr.f32.gmra.mrb[0].mxu0 %v8881
      %v9034 = vpop.f32.mrb[0].mxu0
      %v9035 = vadd.f32 0.0, %v9034
      %v9036 = vpop.f32.mrb[0].mxu0
      %9037 = vmatprep.mubr.f32.mxu0 0.0
      %9038 = vmatmul.mubr.f32.gmra.mrb[0].mxu0 %v8883
      %v9039 = vpop.f32.mrb[0].mxu0
      %v9040 = vadd.f32 0.0, %v9039
      %v9041 = vpop.f32.mrb[0].mxu0
      %9042 = vmatprep.mubr.f32.mxu0 0.0
      %9043 = vmatmul.mubr.f32.gmra.mrb[0].mxu0 %v8885
      %v9044 = vpop.f32.mrb[0].mxu0
      %v9045 = vadd.f32 0.0, %v9044
      %v9046 = vpop.f32.mrb[0].mxu0
      %9047 = vmatprep.mubr.f32.mxu0 0.0
      %9048 = vmatmul.mubr.f32.gmra.mrb[0].mxu0 %v8887
      %v9049 = vpop.f32.mrb[0].mxu0
      %v9050 = vadd.f32 0.0, %v9049
      %v9051 = vpop.f32.mrb[0].mxu0
      %9052 = vmatprep.mubr.f32.mxu0 0.0
      %9053 = vmatmul.mubr.f32.gmra.mrb[0].mxu0 %v8889
      %v9054 = vpop.f32.mrb[0].mxu0
      %v9055 = vadd.f32 0.0, %v9054
      %v9056 = vpop.f32.mrb[0].mxu0
      %9057 = vmatprep.mubr.f32.mxu0 0.0
      %9058 = vmatmul.mubr.f32.gmra.mrb[0].mxu0 %v8891
      %v9059 = vpop.f32.mrb[0].mxu0
      %v9060 = vadd.f32 0.0, %v9059
      %v9061 = vpop.f32.mrb[0].mxu0
      %9062 = vmatprep.mubr.f32.mxu0 0.0
      %9063 = vmatmul.mubr.f32.gmra.mrb[0].mxu0 %v8893
      %v9064 = vpop.f32.mrb[0].mxu0
      %v9065 = vadd.f32 0.0, %v9064
      %v9066 = vpop.f32.mrb[0].mxu0
      %9067 = vmatprep.mubr.f32.mxu0 0.0
      %9068 = vmatmul.mubr.f32.gmra.mrb[0].mxu0 %v8895
      %v9069 = vpop.f32.mrb[0].mxu0
      %v9070 = vadd.f32 0.0, %v9069
      %v9071 = vpop.f32.mrb[0].mxu0
      %9072 = vmatprep.mubr.f32.mxu0 0.0
      %9073 = vmatmul.mubr.f32.gmra.mrb[0].mxu0 %v8897
      %v9074 = vpop.f32.mrb[0].mxu0
      %v9075 = vadd.f32 0.0, %v9074
      %v9076 = vpop.f32.mrb[0].mxu0
      %9077 = vmatprep.mubr.f32.mxu0 0.0
      %9078 = vmatmul.mubr.f32.gmra.mrb[0].mxu0 %v8899
      %v9079 = vpop.f32.mrb[0].mxu0
      %v9080 = vadd.f32 0.0, %v9079
      %v9081 = vpop.f32.mrb[0].mxu0
      %9082 = vmatprep.mubr.f32.mxu0 0.0
      %9083 = vmatmul.mubr.f32.gmra.mrb[0].mxu0 %v8901
      %v9084 = vpop.f32.mrb[0].mxu0
      %v9085 = vadd.f32 0.0, %v9084
      %v9086 = vpop.f32.mrb[0].mxu0
      %9087 = vmatprep.mubr.f32.mxu0 0.0
      %9088 = vmatmul.mubr.f32.gmra.mrb[0].mxu0 %v8903
      %v9089 = vpop.f32.mrb[0].mxu0
      %v9090 = vadd.f32 0.0, %v9089
      %v9091 = vpop.f32.mrb[0].mxu0
      %9092 = vmatprep.mubr.f32.mxu0 0.0
      %9093 = vmatmul.mubr.f32.gmra.mrb[0].mxu0 %v8905
      %v9094 = vpop.f32.mrb[0].mxu0
      %v9095 = vadd.f32 0.0, %v9094
      %v9096 = vpop.f32.mrb[0].mxu0
      %9097 = vmatprep.mubr.f32.mxu0 0.0
      %9098 = vmatmul.mubr.f32.gmra.mrb[0].mxu0 %v8907
      %v9099 = vpop.f32.mrb[0].mxu0
      %v9100 = vadd.f32 0.0, %v9099
      %v9101 = vpop.f32.mrb[0].mxu0
      %9102 = vmatprep.mubr.f32.mxu0 0.0
      %9103 = vmatmul.mubr.f32.gmra.mrb[0].mxu0 %v8909
      %v9104 = vpop.f32.mrb[0].mxu0
      %v9105 = vadd.f32 0.0, %v9104
      %v9106 = vpop.f32.mrb[0].mxu0
      %9107 = vmatprep.mubr.f32.mxu0 0.0
      %9108 = vmatmul.mubr.f32.gmra.mrb[0].mxu0 %v8911
      %v9109 = vpop.f32.mrb[0].mxu0
      %v9110 = vadd.f32 0.0, %v9109
      %v9111 = vpop.f32.mrb[0].mxu0
      %9112 = vmatprep.mubr.f32.mxu0 0.0
      %9113 = vmatmul.mubr.f32.gmra.mrb[0].mxu0 %v8913
      %v9114 = vpop.f32.mrb[0].mxu0
      %v9115 = vadd.f32 0.0, %v9114
      %v9116 = vpop.f32.mrb[0].mxu0
      %9117 = vmatprep.mubr.f32.mxu0 0.0
      %9118 = vmatmul.mubr.f32.gmra.mrb[0].mxu0 %v8915
      %v9119 = vpop.f32.mrb[0].mxu0
      %v9120 = vadd.f32 0.0, %v9119
      %v9121 = vpop.f32.mrb[0].mxu0
      %9122 = vmatprep.mubr.f32.mxu0 0.0
      %9123 = vmatmul.mubr.f32.gmra.mrb[0].mxu0 %v8917
      %v9124 = vpop.f32.mrb[0].mxu0
      %v9125 = vadd.f32 0.0, %v9124
      %v9126 = vpop.f32.mrb[0].mxu0
      %9127 = vmatprep.mubr.f32.mxu0 0.0
      %9128 = vmatmul.mubr.f32.gmra.mrb[0].mxu0 %v8919
      %v9129 = vpop.f32.mrb[0].mxu0
      %v9130 = vadd.f32 0.0, %v9129
      %v9131 = vpop.f32.mrb[0].mxu0
      %9132 = vmatprep.mubr.f32.mxu0 0.0
      %9133 = vmatmul.mubr.f32.gmra.mrb[0].mxu0 %v8921
      %v9134 = vpop.f32.mrb[0].mxu0
      %v9135 = vadd.f32 0.0, %v9134
      %v9136 = vpop.f32.mrb[0].mxu0
      %9137 = vmatprep.mubr.f32.mxu0 0.0
      %9138 = vmatmul.mubr.f32.gmra.mrb[0].mxu0 %v8923
      %v9139 = vpop.f32.mrb[0].mxu0
      %v9140 = vadd.f32 0.0, %v9139
      %v9141 = vpop.f32.mrb[0].mxu0
      %9142 = vmatprep.mubr.f32.mxu0 0.0
      %9143 = vmatmul.mubr.f32.gmra.mrb[0].mxu0 %v8925
      %v9144 = vpop.f32.mrb[0].mxu0
      %v9145 = vadd.f32 0.0, %v9144
      %v9146 = vpop.f32.mrb[0].mxu0
      %9147 = vmatprep.mubr.f32.mxu0 0.0
      %9148 = vmatmul.mubr.f32.gmra.mrb[0].mxu0 %v8927
      %v9149 = vpop.f32.mrb[0].mxu0
      %v9150 = vadd.f32 0.0, %v9149
      %v9151 = vpop.f32.mrb[0].mxu0
      %9152 = vdwg.mxu0
      %v9153 = vadd.f32 %v8832, %v8995
      %v9154 = vadd.f32 %v8833, %v9000
      %v9155 = vadd.f32 %v8834, %v9005
      %v9156 = vadd.f32 %v8835, %v9010
      %v9157 = vadd.f32 %v8836, %v9015
      %v9158 = vadd.f32 %v8837, %v9020
      %v9159 = vadd.f32 %v8838, %v9025
      %v9160 = vadd.f32 %v8839, %v9030
      %v9161 = vadd.f32 %v8840, %v9035
      %v9162 = vadd.f32 %v8841, %v9040
      %v9163 = vadd.f32 %v8842, %v9045
      %v9164 = vadd.f32 %v8843, %v9050
      %v9165 = vadd.f32 %v8844, %v9055
      %v9166 = vadd.f32 %v8845, %v9060
      %v9167 = vadd.f32 %v8846, %v9065
      %v9168 = vadd.f32 %v8847, %v9070
      %v9169 = vadd.f32 %v8848, %v9075
      %v9170 = vadd.f32 %v8849, %v9080
      %v9171 = vadd.f32 %v8850, %v9085
      %v9172 = vadd.f32 %v8851, %v9090
      %v9173 = vadd.f32 %v8852, %v9095
      %v9174 = vadd.f32 %v8853, %v9100
      %v9175 = vadd.f32 %v8854, %v9105
      %v9176 = vadd.f32 %v8855, %v9110
      %v9177 = vadd.f32 %v8856, %v9115
      %v9178 = vadd.f32 %v8857, %v9120
      %v9179 = vadd.f32 %v8858, %v9125
      %v9180 = vadd.f32 %v8859, %v9130
      %v9181 = vadd.f32 %v8860, %v9135
      %v9182 = vadd.f32 %v8861, %v9140
      %v9183 = vadd.f32 %v8862, %v9145
      %v9184 = vadd.f32 %v8863, %v9150
      %v9185 = vadd.f32 %v9153, %v6678
      %v9186 = vadd.f32 %v9154, %v6678
      %v9187 = vadd.f32 %v9155, %v6678
      %v9188 = vadd.f32 %v9156, %v6678
      %v9189 = vadd.f32 %v9157, %v6678
      %v9190 = vadd.f32 %v9158, %v6678
      %v9191 = vadd.f32 %v9159, %v6678
      %v9192 = vadd.f32 %v9160, %v6678
      %v9193 = vadd.f32 %v9161, %v6678
      %v9194 = vadd.f32 %v9162, %v6678
      %v9195 = vadd.f32 %v9163, %v6678
      %v9196 = vadd.f32 %v9164, %v6678
      %v9197 = vadd.f32 %v9165, %v6678
      %v9198 = vadd.f32 %v9166, %v6678
      %v9199 = vadd.f32 %v9167, %v6678
      %v9200 = vadd.f32 %v9168, %v6678
      %v9201 = vadd.f32 %v9169, %v6678
      %v9202 = vadd.f32 %v9170, %v6678
      %v9203 = vadd.f32 %v9171, %v6678
      %v9204 = vadd.f32 %v9172, %v6678
      %v9205 = vadd.f32 %v9173, %v6678
      %v9206 = vadd.f32 %v9174, %v6678
      %v9207 = vadd.f32 %v9175, %v6678
      %v9208 = vadd.f32 %v9176, %v6678
      %v9209 = vadd.f32 %v9177, %v6678
      %v9210 = vadd.f32 %v9178, %v6678
      %v9211 = vadd.f32 %v9179, %v6678
      %v9212 = vadd.f32 %v9180, %v6678
      %v9213 = vadd.f32 %v9181, %v6678
      %v9214 = vadd.f32 %v9182, %v6678
      %v9215 = vadd.f32 %v9183, %v6678
      %v9216 = vadd.f32 %v9184, %v6678
      %v9217 = vmax.f32 %v9185, 0.0
      %v9218 = vmax.f32 %v9186, 0.0
      %v9219 = vmax.f32 %v9187, 0.0
      %v9220 = vmax.f32 %v9188, 0.0
      %v9221 = vmax.f32 %v9189, 0.0
      %v9222 = vmax.f32 %v9190, 0.0
      %v9223 = vmax.f32 %v9191, 0.0
      %v9224 = vmax.f32 %v9192, 0.0
      %v9225 = vmax.f32 %v9193, 0.0
      %v9226 = vmax.f32 %v9194, 0.0
      %v9227 = vmax.f32 %v9195, 0.0
      %v9228 = vmax.f32 %v9196, 0.0
      %v9229 = vmax.f32 %v9197, 0.0
      %v9230 = vmax.f32 %v9198, 0.0
      %v9231 = vmax.f32 %v9199, 0.0
      %v9232 = vmax.f32 %v9200, 0.0
      %v9233 = vmax.f32 %v9201, 0.0
      %v9234 = vmax.f32 %v9202, 0.0
      %v9235 = vmax.f32 %v9203, 0.0
      %v9236 = vmax.f32 %v9204, 0.0
      %v9237 = vmax.f32 %v9205, 0.0
      %v9238 = vmax.f32 %v9206, 0.0
      %v9239 = vmax.f32 %v9207, 0.0
      %v9240 = vmax.f32 %v9208, 0.0
      %v9241 = vmax.f32 %v9209, 0.0
      %v9242 = vmax.f32 %v9210, 0.0
      %v9243 = vmax.f32 %v9211, 0.0
      %v9244 = vmax.f32 %v9212, 0.0
      %v9245 = vmax.f32 %v9213, 0.0
      %v9246 = vmax.f32 %v9214, 0.0
      %v9247 = vmax.f32 %v9215, 0.0
      %v9248 = vmax.f32 %v9216, 0.0
      %v9249 = vmax.f32 %v6712, %v9217
      %v9250 = vmax.f32 %v6713, %v9218
      %v9251 = vmax.f32 %v6714, %v9219
      %v9252 = vmax.f32 %v6715, %v9220
      %v9253 = vmax.f32 %v6716, %v9221
      %v9254 = vmax.f32 %v6717, %v9222
      %v9255 = vmax.f32 %v6718, %v9223
      %v9256 = vmax.f32 %v6719, %v9224
      %v9257 = vmax.f32 %v6720, %v9225
      %v9258 = vmax.f32 %v6721, %v9226
      %v9259 = vmax.f32 %v6722, %v9227
      %v9260 = vmax.f32 %v6723, %v9228
      %v9261 = vmax.f32 %v6724, %v9229
      %v9262 = vmax.f32 %v6725, %v9230
      %v9263 = vmax.f32 %v6726, %v9231
      %v9264 = vmax.f32 %v6727, %v9232
      %v9265 = vmax.f32 %v6728, %v9233
      %v9266 = vmax.f32 %v6729, %v9234
      %v9267 = vmax.f32 %v6730, %v9235
      %v9268 = vmax.f32 %v6731, %v9236
      %v9269 = vmax.f32 %v6732, %v9237
      %v9270 = vmax.f32 %v6733, %v9238
      %v9271 = vmax.f32 %v6734, %v9239
      %v9272 = vmax.f32 %v6735, %v9240
      %v9273 = vmax.f32 %v6736, %v9241
      %v9274 = vmax.f32 %v6737, %v9242
      %v9275 = vmax.f32 %v6738, %v9243
      %v9276 = vmax.f32 %v6739, %v9244
      %v9277 = vmax.f32 %v6740, %v9245
      %v9278 = vmax.f32 %v6741, %v9246
      %v9279 = vmax.f32 %v6742, %v9247
      %v9280 = vmax.f32 %v6743, %v9248
      %v9281 = vmax.f32 %v9249, %v9250
      %v9282 = vmax.f32 %v9251, %v9252
      %v9283 = vmax.f32 %v9253, %v9254
      %v9284 = vmax.f32 %v9255, %v9256
      %v9285 = vmax.f32 %v9257, %v9258
      %v9286 = vmax.f32 %v9259, %v9260
      %v9287 = vmax.f32 %v9261, %v9262
      %v9288 = vmax.f32 %v9263, %v9264
      %v9289 = vmax.f32 %v9265, %v9266
      %v9290 = vmax.f32 %v9267, %v9268
      %v9291 = vmax.f32 %v9269, %v9270
      %v9292 = vmax.f32 %v9271, %v9272
      %v9293 = vmax.f32 %v9273, %v9274
      %v9294 = vmax.f32 %v9275, %v9276
      %v9295 = vmax.f32 %v9277, %v9278
      %v9296 = vmax.f32 %v9279, %v9280
      %9297 = vst [vmem:[%s231] sm:$0xff] %v9281
      %9298 = vst [vmem:[%s231 + $0x8] sm:$0xff] %v9282
      %9299 = vst [vmem:[%s231 + $0x10] sm:$0xff] %v9283
      %9300 = vst [vmem:[%s231 + $0x18] sm:$0xff] %v9284
      %9301 = vst [vmem:[%s231 + $0x20] sm:$0xff] %v9285
      %9302 = vst [vmem:[%s231 + $0x28] sm:$0xff] %v9286
      %9303 = vst [vmem:[%s231 + $0x30] sm:$0xff] %v9287
      %9304 = vst [vmem:[%s231 + $0x38] sm:$0xff] %v9288
      %9305 = vst [vmem:[%s231 + $0x40] sm:$0xff] %v9289
      %9306 = vst [vmem:[%s231 + $0x48] sm:$0xff] %v9290
      %9307 = vst [vmem:[%s231 + $0x50] sm:$0xff] %v9291
      %9308 = vst [vmem:[%s231 + $0x58] sm:$0xff] %v9292
      %9309 = vst [vmem:[%s231 + $0x60] sm:$0xff] %v9293
      %9310 = vst [vmem:[%s231 + $0x68] sm:$0xff] %v9294
      %9311 = vst [vmem:[%s231 + $0x70] sm:$0xff] %v9295
      %9312 = vst [vmem:[%s231 + $0x78] sm:$0xff] %v9296
      %s9313 = smul.u32 2, %s16
      %p9314 = scmp.lt.s32.totalorder %s9313, 3
      %s9315 = scalar_select %p9314, %s9313, 3
      %s9316 = smul.addr %s9315, 8
      %s9317 = smul.addr %s9316, 8
      %s9318 = scalar_lea.vmem %s5, %s9317
      // Predicated region
      $region41: #{first_block_forward.1} parent=39 // pred_check
        %p9319 = pneg %p144
      $region42: #{first_block_forward.1} parent=39 // pred_check_branch
        %9321 = sbr.rel (%p9319) target = $region44
      $region43: #{first_block_forward.1} parent=39 // pred_region
        %s9322 = smul.u32 2, %s16
      $region44: #{first_block_forward.1} parent=39 // pred_fallthru
        _
    $region40: #{first_block_forward.1} parent=5 // pred_fallthru
      _
    %p9323 = scmp.le.s32.totalorder 2, %s11
    // Predicated region
    $region45: #{first_block_forward.1} parent=5 // pred_check
      %p9324 = pneg %p9323
    $region46: #{first_block_forward.1} parent=5 // pred_check_branch
      %9326 = sbr.rel (%p9324) target = $region48
    $region47: #{first_block_forward.1} parent=5 // pred_region
      %s9327 = ssub.s32 %s11, 2
      // Predicated region
      $region49: #{first_block_forward.1} parent=47 // pred_check
        %p9328 = pneg %p150
      $region50: #{first_block_forward.1} parent=47 // pred_check_branch
        %9330 = sbr.rel (%p9328) target = $region52
      $region51: #{first_block_forward.1} parent=47 // pred_region
        %s9331 = smul.u32 2, %s17
        %p9332 = scmp.lt.s32.totalorder %s9331, 3
        %s9333 = scalar_select %p9332, %s9331, 3
        %s9334 = smul.addr %s9333, 8
        %s9335 = smul.addr %s9334, 8
        %s9336 = scalar_lea.vmem %s5, %s9335
      $region52: #{first_block_forward.1} parent=47 // pred_fallthru
        _
    $region48: #{first_block_forward.1} parent=5 // pred_fallthru
      _
  $region6: #{first_block_forward.1} parent=0 // loop_footer
    %s15 = sadd.s32 1, %s11
  $region7: #{first_block_forward.1} parent=0 // loop_footer_branch
    %10 = sbr.rel target = $region3
  $region8: #{first_block_forward.1} parent=0 // loop_exit
    _

</llo_original>
